<compile_context>
chip_gen: v7x
topology: tpu7x:2x2x1
jax: 0.10.0
libtpu: 0.0.40
codegen_flags: <defaults>
</compile_context>

<pallas_src>
import functools

import numpy as np
import jax
import jax.numpy as jnp
from jax import lax
from jax.experimental import pallas as pl
from jax.experimental.pallas import tpu as pltpu

LANE = 128


def _round_up(x, m):
    return (x + m - 1) // m * m


# ----------------------------------------------------------------------------
# Fused whole-network kernel.
#
# Gate-major fused lane layout per layer (ghp = num_dirs*Hp, gw = 3*ghp):
#     [ r_fwd | r_bwd | z_fwd | z_bwd | n_fwd | n_bwd ]     each Hp lanes
# so r/z/n are contiguous ghp-wide slices aligned with the concatenated hidden
# state h_cat = [h_fwd | h_bwd]  (1, ghp).
#
# Per layer:
#   gi_all = x @ W_i_cat + b_i            one (T, Dp) @ (Dp, gw) MXU matmul
#   (backward gate columns of gi_all then reversed in time so that step i uses
#    row i for BOTH directions)
#   static loop i = 0..T-1:
#     gh = h_cat @ W_h_blockdiag + b_h    one (1, ghp) @ (ghp, gw) matmul
#     r  = sigmoid(gi_r + gh_r) ; z = sigmoid(gi_z + gh_z)
#     n  = tanh(gi_n + r * gh_n)
#     h_cat = (1 - z) * n + z * h_cat
#   layer output re-assembled in vregs (fwd row t = step t, bwd row t = step
#   T-1-t) and fed straight into the next layer's input matmul.
#
# PyTorch GRU gate order (r, z, n); b_ir+b_hr and b_iz+b_hz are folded into
# the input-projection bias, b_hn stays on the hidden side (r multiplies it).
# ----------------------------------------------------------------------------
def _fused_tagger_kernel(*refs, seq_len, hp, num_dirs, num_layers, num_class):
    x_ref = refs[0]
    layer_refs = refs[1:1 + 4 * num_layers]
    hw_ref, hb_ref, out_ref = refs[1 + 4 * num_layers:]

    ghp = num_dirs * hp
    gw = 3 * ghp

    x = x_ref[...]                                            # (T, Dp)
    for l in range(num_layers):
        wi_ref, wh_ref, bi_ref, bh_ref = layer_refs[4 * l:4 * l + 4]
        bi = bi_ref[...]                                      # (1, gw)
        bh = bh_ref[...]                                      # (1, gw), n-slots only

        # Hoisted input projection: whole sequence, both directions, one matmul.
        gi_all = jnp.dot(x, wi_ref[...],
                         preferred_element_type=jnp.float32) + bi      # (T, gw)

        if num_dirs == 2:
            # Reverse the backward-direction gate columns in time ONCE, so the
            # unrolled recurrence only needs static row indices.
            gi_rev = jnp.concatenate(
                [gi_all[seq_len - 1 - t:seq_len - t, :] for t in range(seq_len)],
                axis=0)
            col = lax.broadcasted_iota(jnp.int32, (1, gw), 1)
            is_fwd_col = (col % ghp) < hp
            gi_all = jnp.where(is_fwd_col, gi_all, gi_rev)

        # TODO(synk): for long sequences, replace this full unroll with a
        # chunked/bounded-unroll loop and T-tiling to bound code size & VMEM.
        # NOTE: keeping W_h resident in the MXU (matmul_push_rhs/acc_lhs/pop)
        # would further shorten the per-step critical path; left as jnp.dot
        # for robustness.
        h = jnp.zeros((1, ghp), jnp.float32)
        hs = []
        for i in range(seq_len):                              # static unroll
            gi = gi_all[i:i + 1, :]
            gh = jnp.dot(h, wh_ref[...],
                         preferred_element_type=jnp.float32) + bh
            r = jax.nn.sigmoid(gi[:, :ghp] + gh[:, :ghp])
            z = jax.nn.sigmoid(gi[:, ghp:2 * ghp] + gh[:, ghp:2 * ghp])
            n = jnp.tanh(gi[:, 2 * ghp:] + r * gh[:, 2 * ghp:])
            h = (1.0 - z) * n + z * h
            hs.append(h)

        # Re-assemble the (T, ghp) layer output entirely in vregs.
        fwd_rows = jnp.concatenate([hs[t][:, :hp] for t in range(seq_len)],
                                   axis=0)
        if num_dirs == 2:
            bwd_rows = jnp.concatenate(
                [hs[seq_len - 1 - t][:, hp:] for t in range(seq_len)], axis=0)
            x = jnp.concatenate([fwd_rows, bwd_rows], axis=1)
        else:
            x = fwd_rows

    # Linear head + log_softmax (padded class lanes masked out of the norm).
    logits = jnp.dot(x, hw_ref[...],
                     preferred_element_type=jnp.float32) + hb_ref[...]
    ccol = lax.broadcasted_iota(jnp.int32, logits.shape, 1)
    logits = jnp.where(ccol < num_class, logits, -1e30)
    m = jnp.max(logits, axis=-1, keepdims=True)
    lse = m + jnp.log(jnp.sum(jnp.exp(logits - m), axis=-1, keepdims=True))
    out_ref[...] = (logits - lse)[:, :num_class]


# ----------------------------------------------------------------------------
# Jittable forward: embedding gather + one fused kernel call.
# ----------------------------------------------------------------------------
def seq_tagger_forward(tokens, packed, *, hidden, num_layers, bidirectional,
                       num_class):
    hp = _round_up(hidden, LANE)
    num_dirs = 2 if bidirectional else 1

    # TODO(synk): the token-indexed embedding lookup stays as one XLA gather
    # (data-dependent); a scalar-prefetch row-gather kernel is not worth a
    # grid over T at these sizes.
    x = packed["emb"][tokens[0]]                              # (T, E_pad); B == 1

    flat = [x]
    for layer_ws in packed["layers"]:
        flat.extend(layer_ws)
    flat.extend([packed["head_w"], packed["head_b"]])

    t_len = x.shape[0]
    kernel = functools.partial(
        _fused_tagger_kernel, seq_len=t_len, hp=hp, num_dirs=num_dirs,
        num_layers=num_layers, num_class=num_class)
    return pl.pallas_call(
        kernel,
        out_shape=jax.ShapeDtypeStruct((t_len, num_class), jnp.float32),
        in_specs=[pl.BlockSpec(memory_space=pltpu.MemorySpace.VMEM)
                  for _ in flat],
        out_specs=pl.BlockSpec(memory_space=pltpu.MemorySpace.VMEM),
    )(*flat)


# ----------------------------------------------------------------------------
# Model-load-time weight packing (numpy, runs ONCE, outside jit).
# PyTorch (3H, D)/(3H, H) GRU weights -> lane-padded, transposed, gate- and
# direction-fused matrices in the layout documented on the kernel.
# ----------------------------------------------------------------------------
def prepare_pallas_params(params, *, hidden, num_layers, bidirectional):
    num_dirs = 2 if bidirectional else 1
    hp = _round_up(hidden, LANE)
    ghp = num_dirs * hp
    suffixes = [""] + (["_rev"] if bidirectional else [])

    emb = np.asarray(params["embeddings"], np.float32)
    vocab, e_dim = emb.shape
    e_pad = _round_up(e_dim, LANE)
    emb_pad = np.zeros((vocab, e_pad), np.float32)
    emb_pad[:, :e_dim] = emb

    layers = []
    for l in range(num_layers):
        if l == 0:
            d_pad, segments = e_pad, [(0, e_dim, 0)]
        else:
            d_pad = ghp
            segments = [(0, hidden, 0)]
            if bidirectional:
                segments.append((hidden, hidden, hp))
        wi = np.zeros((d_pad, 3 * ghp), np.float32)
        wh = np.zeros((ghp, 3 * ghp), np.float32)
        bi = np.zeros((1, 3 * ghp), np.float32)
        bh = np.zeros((1, 3 * ghp), np.float32)
        for d, sfx in enumerate(suffixes):
            w_ih = np.asarray(params[f"w_ih_l{l}{sfx}"], np.float32)  # (3H, Din)
            w_hh = np.asarray(params[f"w_hh_l{l}{sfx}"], np.float32)  # (3H, H)
            b_ih = np.asarray(params[f"b_ih_l{l}{sfx}"], np.float32)  # (3H,)
            b_hh = np.asarray(params[f"b_hh_l{l}{sfx}"], np.float32)  # (3H,)
            for g in range(3):                                # gate order r, z, n
                c0 = g * ghp + d * hp
                wg_t = w_ih[g * hidden:(g + 1) * hidden, :].T          # (Din, H)
                for (src, ln, dst) in segments:
                    wi[dst:dst + ln, c0:c0 + hidden] = wg_t[src:src + ln, :]
                wh[d * hp:d * hp + hidden, c0:c0 + hidden] = \
                    w_hh[g * hidden:(g + 1) * hidden, :].T
                big = b_ih[g * hidden:(g + 1) * hidden]
                bhg = b_hh[g * hidden:(g + 1) * hidden]
                if g < 2:            # r, z: both biases fold into the input side
                    bi[0, c0:c0 + hidden] = big + bhg
                else:                # n: hidden bias stays inside r * (...)
                    bi[0, c0:c0 + hidden] = big
                    bh[0, c0:c0 + hidden] = bhg
        layers.append(tuple(jnp.asarray(a) for a in (wi, wh, bi, bh)))

    lin_w = np.asarray(params["lin_w"], np.float32)            # (C, dirs*H)
    lin_b = np.asarray(params["lin_b"], np.float32)
    num_class = lin_w.shape[0]
    c_pad = _round_up(num_class, LANE)
    hw = np.zeros((ghp, c_pad), np.float32)
    hw[:hidden, :num_class] = lin_w.T[:hidden, :]
    if bidirectional:
        hw[hp:hp + hidden, :num_class] = lin_w.T[hidden:2 * hidden, :]
    hb = np.zeros((1, c_pad), np.float32)
    hb[0, :num_class] = lin_b

    # NOTE: nn.Dropout is constructed but never applied in SeqTagger.forward,
    # and the GRU's dropout kwarg is not passed (defaults to 0) -> no dropout.
    return {"emb": jnp.asarray(emb_pad), "layers": layers,
            "head_w": jnp.asarray(hw), "head_b": jnp.asarray(hb)}


# ----------------------------------------------------------------------------
# Pure-JAX reference (correctness check).
# ----------------------------------------------------------------------------
def _gru_ref_dir(x, w_ih, w_hh, b_ih, b_hh):
    H = w_hh.shape[1]

    def step(h, xt):
        gi = w_ih @ xt + b_ih
        gh = w_hh @ h + b_hh
        r = jax.nn.sigmoid(gi[:H] + gh[:H])
        z = jax.nn.sigmoid(gi[H:2 * H] + gh[H:2 * H])
        n = jnp.tanh(gi[2 * H:] + r * gh[2 * H:])
        h_new = (1.0 - z) * n + z * h
        return h_new, h_new

    _, ys = lax.scan(step, jnp.zeros((H,), jnp.float32), x)
    return ys


def seq_tagger_ref(tokens, params, *, num_layers, bidirectional):
    x = jnp.take(params["embeddings"], tokens, axis=0)[0].astype(jnp.float32)
    for l in range(num_layers):
        fwd = _gru_ref_dir(x, params[f"w_ih_l{l}"], params[f"w_hh_l{l}"],
                           params[f"b_ih_l{l}"], params[f"b_hh_l{l}"])
        if bidirectional:
            bwd = _gru_ref_dir(x[::-1], params[f"w_ih_l{l}_rev"],
                               params[f"w_hh_l{l}_rev"],
                               params[f"b_ih_l{l}_rev"],
                               params[f"b_hh_l{l}_rev"])[::-1]
            x = jnp.concatenate([fwd, bwd], axis=-1)
        else:
            x = fwd
    logits = x @ params["lin_w"].T + params["lin_b"]
    return jax.nn.log_softmax(logits, axis=-1)


# ----------------------------------------------------------------------------
# Deterministic synthetic parameters (PyTorch-shaped).
# ----------------------------------------------------------------------------
def make_params(key, *, vocab, embed_dim, hidden, num_layers, bidirectional,
                num_class):
    def u(k, shape, scale):
        return jax.random.uniform(k, shape, jnp.float32, -scale, scale)

    params = {}
    keys = iter(jax.random.split(key, 64))
    params["embeddings"] = jax.random.normal(next(keys), (vocab, embed_dim),
                                             jnp.float32)
    s = 1.0 / np.sqrt(hidden)
    dirs = 2 if bidirectional else 1
    for l in range(num_layers):
        d_in = embed_dim if l == 0 else dirs * hidden
        for sfx in ([""] + (["_rev"] if bidirectional else [])):
            params[f"w_ih_l{l}{sfx}"] = u(next(keys), (3 * hidden, d_in), s)
            params[f"w_hh_l{l}{sfx}"] = u(next(keys), (3 * hidden, hidden), s)
            params[f"b_ih_l{l}{sfx}"] = u(next(keys), (3 * hidden,), s)
            params[f"b_hh_l{l}{sfx}"] = u(next(keys), (3 * hidden,), s)
    f_in = dirs * hidden
    sl = 1.0 / np.sqrt(f_in)
    params["lin_w"] = u(next(keys), (num_class, f_in), sl)
    params["lin_b"] = u(next(keys), (num_class,), sl)
    return params


if __name__ == "__main__":
    VOCAB, EMBED, HIDDEN, LAYERS, BIDIR, NUM_CLASS = 50, 32, 32, 2, True, 16
    B, T = 1, 8   # B=1: SeqTagger.forward squeezes dim 0 before the linear head

    key = jax.random.PRNGKey(0)
    pkey, tkey = jax.random.split(key)
    params = make_params(pkey, vocab=VOCAB, embed_dim=EMBED, hidden=HIDDEN,
                         num_layers=LAYERS, bidirectional=BIDIR,
                         num_class=NUM_CLASS)
    tokens = jax.random.randint(tkey, (B, T), 0, VOCAB, dtype=jnp.int32)

    # One-time (model-load) weight packing, outside jit.
    packed = prepare_pallas_params(params, hidden=HIDDEN, num_layers=LAYERS,
                                   bidirectional=BIDIR)

    fwd = jax.jit(functools.partial(seq_tagger_forward, hidden=HIDDEN,
                                    num_layers=LAYERS, bidirectional=BIDIR,
                                    num_class=NUM_CLASS))
    out = jax.block_until_ready(fwd(tokens, packed))

    ref = seq_tagger_ref(tokens, params, num_layers=LAYERS, bidirectional=BIDIR)
    # Tolerance covers default MXU matmul precision (bf16 passes) vs the f32
    # XLA reference; structural errors would be orders of magnitude larger.
    np.testing.assert_allclose(np.asarray(out), np.asarray(ref),
                               rtol=5e-3, atol=5e-3)

    print("KERNEL_OK")
</pallas_src>

<mosaic_0001>
module attributes {stable_mosaic.version = 11 : i64} {
  func.func @_fused_tagger_kernel(%arg0: memref<8x128xf32, #tpu.memory_space<vmem>>, %arg1: memref<128x768xf32, #tpu.memory_space<vmem>>, %arg2: memref<256x768xf32, #tpu.memory_space<vmem>>, %arg3: memref<1x768xf32, #tpu.memory_space<vmem>>, %arg4: memref<1x768xf32, #tpu.memory_space<vmem>>, %arg5: memref<256x768xf32, #tpu.memory_space<vmem>>, %arg6: memref<256x768xf32, #tpu.memory_space<vmem>>, %arg7: memref<1x768xf32, #tpu.memory_space<vmem>>, %arg8: memref<1x768xf32, #tpu.memory_space<vmem>>, %arg9: memref<256x128xf32, #tpu.memory_space<vmem>>, %arg10: memref<1x128xf32, #tpu.memory_space<vmem>>, %arg11: memref<8x16xf32, #tpu.memory_space<vmem>>) attributes {dimension_semantics = [], scalar_prefetch = 0 : i64, scratch_operands = 0 : i64, tpu.core_type = #tpu.core_type<tc>} {
    %c0 = arith.constant 0 : index
    %c0_0 = arith.constant 0 : index
    %0 = vector.load %arg0[%c0, %c0_0] : memref<8x128xf32, #tpu.memory_space<vmem>>, vector<8x128xf32>
    %c0_1 = arith.constant 0 : index
    %c0_2 = arith.constant 0 : index
    %1 = vector.load %arg3[%c0_1, %c0_2] : memref<1x768xf32, #tpu.memory_space<vmem>>, vector<1x768xf32>
    %c0_3 = arith.constant 0 : index
    %c0_4 = arith.constant 0 : index
    %2 = vector.load %arg4[%c0_3, %c0_4] : memref<1x768xf32, #tpu.memory_space<vmem>>, vector<1x768xf32>
    %c0_5 = arith.constant 0 : index
    %c0_6 = arith.constant 0 : index
    %3 = vector.load %arg1[%c0_5, %c0_6] : memref<128x768xf32, #tpu.memory_space<vmem>>, vector<128x768xf32>
    %cst = arith.constant dense<0.000000e+00> : vector<8x768xf32>
    %4 = tpu.matmul %0, %3, %cst {dimension_numbers = #tpu.dot_dimension_numbers<[1], [0], [0], [1], [0, 0, 1, 1], [], []>} : vector<8x128xf32>, vector<128x768xf32>, vector<8x768xf32> -> vector<8x768xf32>
    %5 = vector.broadcast %1 : vector<1x768xf32> to vector<8x768xf32>
    %6 = arith.addf %4, %5 : vector<8x768xf32>
    %7 = vector.extract_strided_slice %6 {offsets = [7, 0], sizes = [1, 768], strides = [1, 1]} : vector<8x768xf32> to vector<1x768xf32>
    %8 = vector.extract_strided_slice %6 {offsets = [6, 0], sizes = [1, 768], strides = [1, 1]} : vector<8x768xf32> to vector<1x768xf32>
    %9 = vector.extract_strided_slice %6 {offsets = [5, 0], sizes = [1, 768], strides = [1, 1]} : vector<8x768xf32> to vector<1x768xf32>
    %10 = vector.extract_strided_slice %6 {offsets = [4, 0], sizes = [1, 768], strides = [1, 1]} : vector<8x768xf32> to vector<1x768xf32>
    %11 = vector.extract_strided_slice %6 {offsets = [3, 0], sizes = [1, 768], strides = [1, 1]} : vector<8x768xf32> to vector<1x768xf32>
    %12 = vector.extract_strided_slice %6 {offsets = [2, 0], sizes = [1, 768], strides = [1, 1]} : vector<8x768xf32> to vector<1x768xf32>
    %13 = vector.extract_strided_slice %6 {offsets = [1, 0], sizes = [1, 768], strides = [1, 1]} : vector<8x768xf32> to vector<1x768xf32>
    %14 = vector.extract_strided_slice %6 {offsets = [0, 0], sizes = [1, 768], strides = [1, 1]} : vector<8x768xf32> to vector<1x768xf32>
    %15 = tpu.concatenate %7, %8, %9, %10, %11, %12, %13, %14 in 0 : vector<1x768xf32>, vector<1x768xf32>, vector<1x768xf32>, vector<1x768xf32>, vector<1x768xf32>, vector<1x768xf32>, vector<1x768xf32>, vector<1x768xf32> -> vector<8x768xf32>
    %16 = tpu.iota {dimensions = array<i32: 1>} : vector<1x768xi32>
    %c256_i32 = arith.constant 256 : i32
    %c0_i32 = arith.constant 0 : i32
    %17 = arith.cmpi eq, %c256_i32, %c0_i32 : i32
    %c1_i32 = arith.constant 1 : i32
    %18 = arith.select %17, %c1_i32, %c256_i32 : i32
    %19 = vector.broadcast %18 : i32 to vector<1x768xi32>
    %20 = arith.remsi %16, %19 : vector<1x768xi32>
    %c0_i32_7 = arith.constant 0 : i32
    %21 = vector.broadcast %c0_i32_7 : i32 to vector<1x768xi32>
    %22 = arith.cmpi ne, %20, %21 : vector<1x768xi32>
    %c0_i32_8 = arith.constant 0 : i32
    %23 = vector.broadcast %c0_i32_8 : i32 to vector<1x768xi32>
    %24 = arith.cmpi slt, %20, %23 : vector<1x768xi32>
    %c0_i32_9 = arith.constant 0 : i32
    %25 = arith.cmpi slt, %18, %c0_i32_9 : i32
    %26 = vector.broadcast %25 : i1 to vector<1x768xi1>
    %27 = vector.broadcast %26 : vector<1x768xi1> to vector<1x768xi1>
    %28 = arith.xori %24, %27 : vector<1x768xi1>
    %29 = arith.andi %28, %22 : vector<1x768xi1>
    %30 = vector.broadcast %18 : i32 to vector<1x768xi32>
    %31 = arith.addi %20, %30 : vector<1x768xi32>
    %32 = arith.select %29, %31, %20 : vector<1x768xi1>, vector<1x768xi32>
    %c128_i32 = arith.constant 128 : i32
    %33 = vector.broadcast %c128_i32 : i32 to vector<1x768xi32>
    %34 = arith.cmpi slt, %32, %33 : vector<1x768xi32>
    %35 = vector.shape_cast %34 : vector<1x768xi1> to vector<1x768xi1>
    %36 = vector.broadcast %35 : vector<1x768xi1> to vector<8x768xi1>
    %37 = arith.select %36, %6, %15 : vector<8x768xi1>, vector<8x768xf32>
    %cst_10 = arith.constant 0.000000e+00 : f32
    %38 = vector.broadcast %cst_10 : f32 to vector<1x256xf32>
    %39 = vector.extract_strided_slice %37 {offsets = [0, 0], sizes = [1, 768], strides = [1, 1]} : vector<8x768xf32> to vector<1x768xf32>
    %c0_11 = arith.constant 0 : index
    %c0_12 = arith.constant 0 : index
    %40 = vector.load %arg2[%c0_11, %c0_12] : memref<256x768xf32, #tpu.memory_space<vmem>>, vector<256x768xf32>
    %cst_13 = arith.constant dense<0.000000e+00> : vector<1x768xf32>
    %41 = tpu.matmul %38, %40, %cst_13 {dimension_numbers = #tpu.dot_dimension_numbers<[1], [0], [0], [1], [0, 0, 1, 1], [], []>} : vector<1x256xf32>, vector<256x768xf32>, vector<1x768xf32> -> vector<1x768xf32>
    %42 = arith.addf %41, %2 : vector<1x768xf32>
    %43 = vector.extract_strided_slice %39 {offsets = [0, 0], sizes = [1, 256], strides = [1, 1]} : vector<1x768xf32> to vector<1x256xf32>
    %44 = vector.extract_strided_slice %42 {offsets = [0, 0], sizes = [1, 256], strides = [1, 1]} : vector<1x768xf32> to vector<1x256xf32>
    %45 = arith.addf %43, %44 : vector<1x256xf32>
    %46 = arith.negf %45 : vector<1x256xf32>
    %47 = math.exp %46 : vector<1x256xf32>
    %cst_14 = arith.constant 1.000000e+00 : f32
    %48 = vector.broadcast %cst_14 : f32 to vector<1x256xf32>
    %49 = arith.addf %48, %47 : vector<1x256xf32>
    %50 = arith.divf %48, %49 : vector<1x256xf32>
    %51 = vector.extract_strided_slice %39 {offsets = [0, 256], sizes = [1, 256], strides = [1, 1]} : vector<1x768xf32> to vector<1x256xf32>
    %52 = vector.extract_strided_slice %42 {offsets = [0, 256], sizes = [1, 256], strides = [1, 1]} : vector<1x768xf32> to vector<1x256xf32>
    %53 = arith.addf %51, %52 : vector<1x256xf32>
    %54 = arith.negf %53 : vector<1x256xf32>
    %55 = math.exp %54 : vector<1x256xf32>
    %cst_15 = arith.constant 1.000000e+00 : f32
    %56 = vector.broadcast %cst_15 : f32 to vector<1x256xf32>
    %57 = arith.addf %56, %55 : vector<1x256xf32>
    %58 = arith.divf %56, %57 : vector<1x256xf32>
    %59 = vector.extract_strided_slice %39 {offsets = [0, 512], sizes = [1, 256], strides = [1, 1]} : vector<1x768xf32> to vector<1x256xf32>
    %60 = vector.extract_strided_slice %42 {offsets = [0, 512], sizes = [1, 256], strides = [1, 1]} : vector<1x768xf32> to vector<1x256xf32>
    %61 = arith.mulf %50, %60 : vector<1x256xf32>
    %62 = arith.addf %59, %61 : vector<1x256xf32>
    %63 = math.tanh %62 : vector<1x256xf32>
    %cst_16 = arith.constant 1.000000e+00 : f32
    %64 = vector.broadcast %cst_16 : f32 to vector<1x256xf32>
    %65 = arith.subf %64, %58 : vector<1x256xf32>
    %66 = arith.mulf %65, %63 : vector<1x256xf32>
    %67 = arith.mulf %58, %38 : vector<1x256xf32>
    %68 = arith.addf %66, %67 : vector<1x256xf32>
    %69 = vector.extract_strided_slice %37 {offsets = [1, 0], sizes = [1, 768], strides = [1, 1]} : vector<8x768xf32> to vector<1x768xf32>
    %c0_17 = arith.constant 0 : index
    %c0_18 = arith.constant 0 : index
    %70 = vector.load %arg2[%c0_17, %c0_18] : memref<256x768xf32, #tpu.memory_space<vmem>>, vector<256x768xf32>
    %cst_19 = arith.constant dense<0.000000e+00> : vector<1x768xf32>
    %71 = tpu.matmul %68, %70, %cst_19 {dimension_numbers = #tpu.dot_dimension_numbers<[1], [0], [0], [1], [0, 0, 1, 1], [], []>} : vector<1x256xf32>, vector<256x768xf32>, vector<1x768xf32> -> vector<1x768xf32>
    %72 = arith.addf %71, %2 : vector<1x768xf32>
    %73 = vector.extract_strided_slice %69 {offsets = [0, 0], sizes = [1, 256], strides = [1, 1]} : vector<1x768xf32> to vector<1x256xf32>
    %74 = vector.extract_strided_slice %72 {offsets = [0, 0], sizes = [1, 256], strides = [1, 1]} : vector<1x768xf32> to vector<1x256xf32>
    %75 = arith.addf %73, %74 : vector<1x256xf32>
    %76 = arith.negf %75 : vector<1x256xf32>
    %77 = math.exp %76 : vector<1x256xf32>
    %cst_20 = arith.constant 1.000000e+00 : f32
    %78 = vector.broadcast %cst_20 : f32 to vector<1x256xf32>
    %79 = arith.addf %78, %77 : vector<1x256xf32>
    %80 = arith.divf %78, %79 : vector<1x256xf32>
    %81 = vector.extract_strided_slice %69 {offsets = [0, 256], sizes = [1, 256], strides = [1, 1]} : vector<1x768xf32> to vector<1x256xf32>
    %82 = vector.extract_strided_slice %72 {offsets = [0, 256], sizes = [1, 256], strides = [1, 1]} : vector<1x768xf32> to vector<1x256xf32>
    %83 = arith.addf %81, %82 : vector<1x256xf32>
    %84 = arith.negf %83 : vector<1x256xf32>
    %85 = math.exp %84 : vector<1x256xf32>
    %cst_21 = arith.constant 1.000000e+00 : f32
    %86 = vector.broadcast %cst_21 : f32 to vector<1x256xf32>
    %87 = arith.addf %86, %85 : vector<1x256xf32>
    %88 = arith.divf %86, %87 : vector<1x256xf32>
    %89 = vector.extract_strided_slice %69 {offsets = [0, 512], sizes = [1, 256], strides = [1, 1]} : vector<1x768xf32> to vector<1x256xf32>
    %90 = vector.extract_strided_slice %72 {offsets = [0, 512], sizes = [1, 256], strides = [1, 1]} : vector<1x768xf32> to vector<1x256xf32>
    %91 = arith.mulf %80, %90 : vector<1x256xf32>
    %92 = arith.addf %89, %91 : vector<1x256xf32>
    %93 = math.tanh %92 : vector<1x256xf32>
    %cst_22 = arith.constant 1.000000e+00 : f32
    %94 = vector.broadcast %cst_22 : f32 to vector<1x256xf32>
    %95 = arith.subf %94, %88 : vector<1x256xf32>
    %96 = arith.mulf %95, %93 : vector<1x256xf32>
    %97 = arith.mulf %88, %68 : vector<1x256xf32>
    %98 = arith.addf %96, %97 : vector<1x256xf32>
    %99 = vector.extract_strided_slice %37 {offsets = [2, 0], sizes = [1, 768], strides = [1, 1]} : vector<8x768xf32> to vector<1x768xf32>
    %c0_23 = arith.constant 0 : index
    %c0_24 = arith.constant 0 : index
    %100 = vector.load %arg2[%c0_23, %c0_24] : memref<256x768xf32, #tpu.memory_space<vmem>>, vector<256x768xf32>
    %cst_25 = arith.constant dense<0.000000e+00> : vector<1x768xf32>
    %101 = tpu.matmul %98, %100, %cst_25 {dimension_numbers = #tpu.dot_dimension_numbers<[1], [0], [0], [1], [0, 0, 1, 1], [], []>} : vector<1x256xf32>, vector<256x768xf32>, vector<1x768xf32> -> vector<1x768xf32>
    %102 = arith.addf %101, %2 : vector<1x768xf32>
    %103 = vector.extract_strided_slice %99 {offsets = [0, 0], sizes = [1, 256], strides = [1, 1]} : vector<1x768xf32> to vector<1x256xf32>
    %104 = vector.extract_strided_slice %102 {offsets = [0, 0], sizes = [1, 256], strides = [1, 1]} : vector<1x768xf32> to vector<1x256xf32>
    %105 = arith.addf %103, %104 : vector<1x256xf32>
    %106 = arith.negf %105 : vector<1x256xf32>
    %107 = math.exp %106 : vector<1x256xf32>
    %cst_26 = arith.constant 1.000000e+00 : f32
    %108 = vector.broadcast %cst_26 : f32 to vector<1x256xf32>
    %109 = arith.addf %108, %107 : vector<1x256xf32>
    %110 = arith.divf %108, %109 : vector<1x256xf32>
    %111 = vector.extract_strided_slice %99 {offsets = [0, 256], sizes = [1, 256], strides = [1, 1]} : vector<1x768xf32> to vector<1x256xf32>
    %112 = vector.extract_strided_slice %102 {offsets = [0, 256], sizes = [1, 256], strides = [1, 1]} : vector<1x768xf32> to vector<1x256xf32>
    %113 = arith.addf %111, %112 : vector<1x256xf32>
    %114 = arith.negf %113 : vector<1x256xf32>
    %115 = math.exp %114 : vector<1x256xf32>
    %cst_27 = arith.constant 1.000000e+00 : f32
    %116 = vector.broadcast %cst_27 : f32 to vector<1x256xf32>
    %117 = arith.addf %116, %115 : vector<1x256xf32>
    %118 = arith.divf %116, %117 : vector<1x256xf32>
    %119 = vector.extract_strided_slice %99 {offsets = [0, 512], sizes = [1, 256], strides = [1, 1]} : vector<1x768xf32> to vector<1x256xf32>
    %120 = vector.extract_strided_slice %102 {offsets = [0, 512], sizes = [1, 256], strides = [1, 1]} : vector<1x768xf32> to vector<1x256xf32>
    %121 = arith.mulf %110, %120 : vector<1x256xf32>
    %122 = arith.addf %119, %121 : vector<1x256xf32>
    %123 = math.tanh %122 : vector<1x256xf32>
    %cst_28 = arith.constant 1.000000e+00 : f32
    %124 = vector.broadcast %cst_28 : f32 to vector<1x256xf32>
    %125 = arith.subf %124, %118 : vector<1x256xf32>
    %126 = arith.mulf %125, %123 : vector<1x256xf32>
    %127 = arith.mulf %118, %98 : vector<1x256xf32>
    %128 = arith.addf %126, %127 : vector<1x256xf32>
    %129 = vector.extract_strided_slice %37 {offsets = [3, 0], sizes = [1, 768], strides = [1, 1]} : vector<8x768xf32> to vector<1x768xf32>
    %c0_29 = arith.constant 0 : index
    %c0_30 = arith.constant 0 : index
    %130 = vector.load %arg2[%c0_29, %c0_30] : memref<256x768xf32, #tpu.memory_space<vmem>>, vector<256x768xf32>
    %cst_31 = arith.constant dense<0.000000e+00> : vector<1x768xf32>
    %131 = tpu.matmul %128, %130, %cst_31 {dimension_numbers = #tpu.dot_dimension_numbers<[1], [0], [0], [1], [0, 0, 1, 1], [], []>} : vector<1x256xf32>, vector<256x768xf32>, vector<1x768xf32> -> vector<1x768xf32>
    %132 = arith.addf %131, %2 : vector<1x768xf32>
    %133 = vector.extract_strided_slice %129 {offsets = [0, 0], sizes = [1, 256], strides = [1, 1]} : vector<1x768xf32> to vector<1x256xf32>
    %134 = vector.extract_strided_slice %132 {offsets = [0, 0], sizes = [1, 256], strides = [1, 1]} : vector<1x768xf32> to vector<1x256xf32>
    %135 = arith.addf %133, %134 : vector<1x256xf32>
    %136 = arith.negf %135 : vector<1x256xf32>
    %137 = math.exp %136 : vector<1x256xf32>
    %cst_32 = arith.constant 1.000000e+00 : f32
    %138 = vector.broadcast %cst_32 : f32 to vector<1x256xf32>
    %139 = arith.addf %138, %137 : vector<1x256xf32>
    %140 = arith.divf %138, %139 : vector<1x256xf32>
    %141 = vector.extract_strided_slice %129 {offsets = [0, 256], sizes = [1, 256], strides = [1, 1]} : vector<1x768xf32> to vector<1x256xf32>
    %142 = vector.extract_strided_slice %132 {offsets = [0, 256], sizes = [1, 256], strides = [1, 1]} : vector<1x768xf32> to vector<1x256xf32>
    %143 = arith.addf %141, %142 : vector<1x256xf32>
    %144 = arith.negf %143 : vector<1x256xf32>
    %145 = math.exp %144 : vector<1x256xf32>
    %cst_33 = arith.constant 1.000000e+00 : f32
    %146 = vector.broadcast %cst_33 : f32 to vector<1x256xf32>
    %147 = arith.addf %146, %145 : vector<1x256xf32>
    %148 = arith.divf %146, %147 : vector<1x256xf32>
    %149 = vector.extract_strided_slice %129 {offsets = [0, 512], sizes = [1, 256], strides = [1, 1]} : vector<1x768xf32> to vector<1x256xf32>
    %150 = vector.extract_strided_slice %132 {offsets = [0, 512], sizes = [1, 256], strides = [1, 1]} : vector<1x768xf32> to vector<1x256xf32>
    %151 = arith.mulf %140, %150 : vector<1x256xf32>
    %152 = arith.addf %149, %151 : vector<1x256xf32>
    %153 = math.tanh %152 : vector<1x256xf32>
    %cst_34 = arith.constant 1.000000e+00 : f32
    %154 = vector.broadcast %cst_34 : f32 to vector<1x256xf32>
    %155 = arith.subf %154, %148 : vector<1x256xf32>
    %156 = arith.mulf %155, %153 : vector<1x256xf32>
    %157 = arith.mulf %148, %128 : vector<1x256xf32>
    %158 = arith.addf %156, %157 : vector<1x256xf32>
    %159 = vector.extract_strided_slice %37 {offsets = [4, 0], sizes = [1, 768], strides = [1, 1]} : vector<8x768xf32> to vector<1x768xf32>
    %c0_35 = arith.constant 0 : index
    %c0_36 = arith.constant 0 : index
    %160 = vector.load %arg2[%c0_35, %c0_36] : memref<256x768xf32, #tpu.memory_space<vmem>>, vector<256x768xf32>
    %cst_37 = arith.constant dense<0.000000e+00> : vector<1x768xf32>
    %161 = tpu.matmul %158, %160, %cst_37 {dimension_numbers = #tpu.dot_dimension_numbers<[1], [0], [0], [1], [0, 0, 1, 1], [], []>} : vector<1x256xf32>, vector<256x768xf32>, vector<1x768xf32> -> vector<1x768xf32>
    %162 = arith.addf %161, %2 : vector<1x768xf32>
    %163 = vector.extract_strided_slice %159 {offsets = [0, 0], sizes = [1, 256], strides = [1, 1]} : vector<1x768xf32> to vector<1x256xf32>
    %164 = vector.extract_strided_slice %162 {offsets = [0, 0], sizes = [1, 256], strides = [1, 1]} : vector<1x768xf32> to vector<1x256xf32>
    %165 = arith.addf %163, %164 : vector<1x256xf32>
    %166 = arith.negf %165 : vector<1x256xf32>
    %167 = math.exp %166 : vector<1x256xf32>
    %cst_38 = arith.constant 1.000000e+00 : f32
    %168 = vector.broadcast %cst_38 : f32 to vector<1x256xf32>
    %169 = arith.addf %168, %167 : vector<1x256xf32>
    %170 = arith.divf %168, %169 : vector<1x256xf32>
    %171 = vector.extract_strided_slice %159 {offsets = [0, 256], sizes = [1, 256], strides = [1, 1]} : vector<1x768xf32> to vector<1x256xf32>
    %172 = vector.extract_strided_slice %162 {offsets = [0, 256], sizes = [1, 256], strides = [1, 1]} : vector<1x768xf32> to vector<1x256xf32>
    %173 = arith.addf %171, %172 : vector<1x256xf32>
    %174 = arith.negf %173 : vector<1x256xf32>
    %175 = math.exp %174 : vector<1x256xf32>
    %cst_39 = arith.constant 1.000000e+00 : f32
    %176 = vector.broadcast %cst_39 : f32 to vector<1x256xf32>
    %177 = arith.addf %176, %175 : vector<1x256xf32>
    %178 = arith.divf %176, %177 : vector<1x256xf32>
    %179 = vector.extract_strided_slice %159 {offsets = [0, 512], sizes = [1, 256], strides = [1, 1]} : vector<1x768xf32> to vector<1x256xf32>
    %180 = vector.extract_strided_slice %162 {offsets = [0, 512], sizes = [1, 256], strides = [1, 1]} : vector<1x768xf32> to vector<1x256xf32>
    %181 = arith.mulf %170, %180 : vector<1x256xf32>
    %182 = arith.addf %179, %181 : vector<1x256xf32>
    %183 = math.tanh %182 : vector<1x256xf32>
    %cst_40 = arith.constant 1.000000e+00 : f32
    %184 = vector.broadcast %cst_40 : f32 to vector<1x256xf32>
    %185 = arith.subf %184, %178 : vector<1x256xf32>
    %186 = arith.mulf %185, %183 : vector<1x256xf32>
    %187 = arith.mulf %178, %158 : vector<1x256xf32>
    %188 = arith.addf %186, %187 : vector<1x256xf32>
    %189 = vector.extract_strided_slice %37 {offsets = [5, 0], sizes = [1, 768], strides = [1, 1]} : vector<8x768xf32> to vector<1x768xf32>
    %c0_41 = arith.constant 0 : index
    %c0_42 = arith.constant 0 : index
    %190 = vector.load %arg2[%c0_41, %c0_42] : memref<256x768xf32, #tpu.memory_space<vmem>>, vector<256x768xf32>
    %cst_43 = arith.constant dense<0.000000e+00> : vector<1x768xf32>
    %191 = tpu.matmul %188, %190, %cst_43 {dimension_numbers = #tpu.dot_dimension_numbers<[1], [0], [0], [1], [0, 0, 1, 1], [], []>} : vector<1x256xf32>, vector<256x768xf32>, vector<1x768xf32> -> vector<1x768xf32>
    %192 = arith.addf %191, %2 : vector<1x768xf32>
    %193 = vector.extract_strided_slice %189 {offsets = [0, 0], sizes = [1, 256], strides = [1, 1]} : vector<1x768xf32> to vector<1x256xf32>
    %194 = vector.extract_strided_slice %192 {offsets = [0, 0], sizes = [1, 256], strides = [1, 1]} : vector<1x768xf32> to vector<1x256xf32>
    %195 = arith.addf %193, %194 : vector<1x256xf32>
    %196 = arith.negf %195 : vector<1x256xf32>
    %197 = math.exp %196 : vector<1x256xf32>
    %cst_44 = arith.constant 1.000000e+00 : f32
    %198 = vector.broadcast %cst_44 : f32 to vector<1x256xf32>
    %199 = arith.addf %198, %197 : vector<1x256xf32>
    %200 = arith.divf %198, %199 : vector<1x256xf32>
    %201 = vector.extract_strided_slice %189 {offsets = [0, 256], sizes = [1, 256], strides = [1, 1]} : vector<1x768xf32> to vector<1x256xf32>
    %202 = vector.extract_strided_slice %192 {offsets = [0, 256], sizes = [1, 256], strides = [1, 1]} : vector<1x768xf32> to vector<1x256xf32>
    %203 = arith.addf %201, %202 : vector<1x256xf32>
    %204 = arith.negf %203 : vector<1x256xf32>
    %205 = math.exp %204 : vector<1x256xf32>
    %cst_45 = arith.constant 1.000000e+00 : f32
    %206 = vector.broadcast %cst_45 : f32 to vector<1x256xf32>
    %207 = arith.addf %206, %205 : vector<1x256xf32>
    %208 = arith.divf %206, %207 : vector<1x256xf32>
    %209 = vector.extract_strided_slice %189 {offsets = [0, 512], sizes = [1, 256], strides = [1, 1]} : vector<1x768xf32> to vector<1x256xf32>
    %210 = vector.extract_strided_slice %192 {offsets = [0, 512], sizes = [1, 256], strides = [1, 1]} : vector<1x768xf32> to vector<1x256xf32>
    %211 = arith.mulf %200, %210 : vector<1x256xf32>
    %212 = arith.addf %209, %211 : vector<1x256xf32>
    %213 = math.tanh %212 : vector<1x256xf32>
    %cst_46 = arith.constant 1.000000e+00 : f32
    %214 = vector.broadcast %cst_46 : f32 to vector<1x256xf32>
    %215 = arith.subf %214, %208 : vector<1x256xf32>
    %216 = arith.mulf %215, %213 : vector<1x256xf32>
    %217 = arith.mulf %208, %188 : vector<1x256xf32>
    %218 = arith.addf %216, %217 : vector<1x256xf32>
    %219 = vector.extract_strided_slice %37 {offsets = [6, 0], sizes = [1, 768], strides = [1, 1]} : vector<8x768xf32> to vector<1x768xf32>
    %c0_47 = arith.constant 0 : index
    %c0_48 = arith.constant 0 : index
    %220 = vector.load %arg2[%c0_47, %c0_48] : memref<256x768xf32, #tpu.memory_space<vmem>>, vector<256x768xf32>
    %cst_49 = arith.constant dense<0.000000e+00> : vector<1x768xf32>
    %221 = tpu.matmul %218, %220, %cst_49 {dimension_numbers = #tpu.dot_dimension_numbers<[1], [0], [0], [1], [0, 0, 1, 1], [], []>} : vector<1x256xf32>, vector<256x768xf32>, vector<1x768xf32> -> vector<1x768xf32>
    %222 = arith.addf %221, %2 : vector<1x768xf32>
    %223 = vector.extract_strided_slice %219 {offsets = [0, 0], sizes = [1, 256], strides = [1, 1]} : vector<1x768xf32> to vector<1x256xf32>
    %224 = vector.extract_strided_slice %222 {offsets = [0, 0], sizes = [1, 256], strides = [1, 1]} : vector<1x768xf32> to vector<1x256xf32>
    %225 = arith.addf %223, %224 : vector<1x256xf32>
    %226 = arith.negf %225 : vector<1x256xf32>
    %227 = math.exp %226 : vector<1x256xf32>
    %cst_50 = arith.constant 1.000000e+00 : f32
    %228 = vector.broadcast %cst_50 : f32 to vector<1x256xf32>
    %229 = arith.addf %228, %227 : vector<1x256xf32>
    %230 = arith.divf %228, %229 : vector<1x256xf32>
    %231 = vector.extract_strided_slice %219 {offsets = [0, 256], sizes = [1, 256], strides = [1, 1]} : vector<1x768xf32> to vector<1x256xf32>
    %232 = vector.extract_strided_slice %222 {offsets = [0, 256], sizes = [1, 256], strides = [1, 1]} : vector<1x768xf32> to vector<1x256xf32>
    %233 = arith.addf %231, %232 : vector<1x256xf32>
    %234 = arith.negf %233 : vector<1x256xf32>
    %235 = math.exp %234 : vector<1x256xf32>
    %cst_51 = arith.constant 1.000000e+00 : f32
    %236 = vector.broadcast %cst_51 : f32 to vector<1x256xf32>
    %237 = arith.addf %236, %235 : vector<1x256xf32>
    %238 = arith.divf %236, %237 : vector<1x256xf32>
    %239 = vector.extract_strided_slice %219 {offsets = [0, 512], sizes = [1, 256], strides = [1, 1]} : vector<1x768xf32> to vector<1x256xf32>
    %240 = vector.extract_strided_slice %222 {offsets = [0, 512], sizes = [1, 256], strides = [1, 1]} : vector<1x768xf32> to vector<1x256xf32>
    %241 = arith.mulf %230, %240 : vector<1x256xf32>
    %242 = arith.addf %239, %241 : vector<1x256xf32>
    %243 = math.tanh %242 : vector<1x256xf32>
    %cst_52 = arith.constant 1.000000e+00 : f32
    %244 = vector.broadcast %cst_52 : f32 to vector<1x256xf32>
    %245 = arith.subf %244, %238 : vector<1x256xf32>
    %246 = arith.mulf %245, %243 : vector<1x256xf32>
    %247 = arith.mulf %238, %218 : vector<1x256xf32>
    %248 = arith.addf %246, %247 : vector<1x256xf32>
    %249 = vector.extract_strided_slice %37 {offsets = [7, 0], sizes = [1, 768], strides = [1, 1]} : vector<8x768xf32> to vector<1x768xf32>
    %c0_53 = arith.constant 0 : index
    %c0_54 = arith.constant 0 : index
    %250 = vector.load %arg2[%c0_53, %c0_54] : memref<256x768xf32, #tpu.memory_space<vmem>>, vector<256x768xf32>
    %cst_55 = arith.constant dense<0.000000e+00> : vector<1x768xf32>
    %251 = tpu.matmul %248, %250, %cst_55 {dimension_numbers = #tpu.dot_dimension_numbers<[1], [0], [0], [1], [0, 0, 1, 1], [], []>} : vector<1x256xf32>, vector<256x768xf32>, vector<1x768xf32> -> vector<1x768xf32>
    %252 = arith.addf %251, %2 : vector<1x768xf32>
    %253 = vector.extract_strided_slice %249 {offsets = [0, 0], sizes = [1, 256], strides = [1, 1]} : vector<1x768xf32> to vector<1x256xf32>
    %254 = vector.extract_strided_slice %252 {offsets = [0, 0], sizes = [1, 256], strides = [1, 1]} : vector<1x768xf32> to vector<1x256xf32>
    %255 = arith.addf %253, %254 : vector<1x256xf32>
    %256 = arith.negf %255 : vector<1x256xf32>
    %257 = math.exp %256 : vector<1x256xf32>
    %cst_56 = arith.constant 1.000000e+00 : f32
    %258 = vector.broadcast %cst_56 : f32 to vector<1x256xf32>
    %259 = arith.addf %258, %257 : vector<1x256xf32>
    %260 = arith.divf %258, %259 : vector<1x256xf32>
    %261 = vector.extract_strided_slice %249 {offsets = [0, 256], sizes = [1, 256], strides = [1, 1]} : vector<1x768xf32> to vector<1x256xf32>
    %262 = vector.extract_strided_slice %252 {offsets = [0, 256], sizes = [1, 256], strides = [1, 1]} : vector<1x768xf32> to vector<1x256xf32>
    %263 = arith.addf %261, %262 : vector<1x256xf32>
    %264 = arith.negf %263 : vector<1x256xf32>
    %265 = math.exp %264 : vector<1x256xf32>
    %cst_57 = arith.constant 1.000000e+00 : f32
    %266 = vector.broadcast %cst_57 : f32 to vector<1x256xf32>
    %267 = arith.addf %266, %265 : vector<1x256xf32>
    %268 = arith.divf %266, %267 : vector<1x256xf32>
    %269 = vector.extract_strided_slice %249 {offsets = [0, 512], sizes = [1, 256], strides = [1, 1]} : vector<1x768xf32> to vector<1x256xf32>
    %270 = vector.extract_strided_slice %252 {offsets = [0, 512], sizes = [1, 256], strides = [1, 1]} : vector<1x768xf32> to vector<1x256xf32>
    %271 = arith.mulf %260, %270 : vector<1x256xf32>
    %272 = arith.addf %269, %271 : vector<1x256xf32>
    %273 = math.tanh %272 : vector<1x256xf32>
    %cst_58 = arith.constant 1.000000e+00 : f32
    %274 = vector.broadcast %cst_58 : f32 to vector<1x256xf32>
    %275 = arith.subf %274, %268 : vector<1x256xf32>
    %276 = arith.mulf %275, %273 : vector<1x256xf32>
    %277 = arith.mulf %268, %248 : vector<1x256xf32>
    %278 = arith.addf %276, %277 : vector<1x256xf32>
    %279 = vector.extract_strided_slice %68 {offsets = [0, 0], sizes = [1, 128], strides = [1, 1]} : vector<1x256xf32> to vector<1x128xf32>
    %280 = vector.extract_strided_slice %98 {offsets = [0, 0], sizes = [1, 128], strides = [1, 1]} : vector<1x256xf32> to vector<1x128xf32>
    %281 = vector.extract_strided_slice %128 {offsets = [0, 0], sizes = [1, 128], strides = [1, 1]} : vector<1x256xf32> to vector<1x128xf32>
    %282 = vector.extract_strided_slice %158 {offsets = [0, 0], sizes = [1, 128], strides = [1, 1]} : vector<1x256xf32> to vector<1x128xf32>
    %283 = vector.extract_strided_slice %188 {offsets = [0, 0], sizes = [1, 128], strides = [1, 1]} : vector<1x256xf32> to vector<1x128xf32>
    %284 = vector.extract_strided_slice %218 {offsets = [0, 0], sizes = [1, 128], strides = [1, 1]} : vector<1x256xf32> to vector<1x128xf32>
    %285 = vector.extract_strided_slice %248 {offsets = [0, 0], sizes = [1, 128], strides = [1, 1]} : vector<1x256xf32> to vector<1x128xf32>
    %286 = vector.extract_strided_slice %278 {offsets = [0, 0], sizes = [1, 128], strides = [1, 1]} : vector<1x256xf32> to vector<1x128xf32>
    %287 = tpu.concatenate %279, %280, %281, %282, %283, %284, %285, %286 in 0 : vector<1x128xf32>, vector<1x128xf32>, vector<1x128xf32>, vector<1x128xf32>, vector<1x128xf32>, vector<1x128xf32>, vector<1x128xf32>, vector<1x128xf32> -> vector<8x128xf32>
    %288 = vector.extract_strided_slice %278 {offsets = [0, 128], sizes = [1, 128], strides = [1, 1]} : vector<1x256xf32> to vector<1x128xf32>
    %289 = vector.extract_strided_slice %248 {offsets = [0, 128], sizes = [1, 128], strides = [1, 1]} : vector<1x256xf32> to vector<1x128xf32>
    %290 = vector.extract_strided_slice %218 {offsets = [0, 128], sizes = [1, 128], strides = [1, 1]} : vector<1x256xf32> to vector<1x128xf32>
    %291 = vector.extract_strided_slice %188 {offsets = [0, 128], sizes = [1, 128], strides = [1, 1]} : vector<1x256xf32> to vector<1x128xf32>
    %292 = vector.extract_strided_slice %158 {offsets = [0, 128], sizes = [1, 128], strides = [1, 1]} : vector<1x256xf32> to vector<1x128xf32>
    %293 = vector.extract_strided_slice %128 {offsets = [0, 128], sizes = [1, 128], strides = [1, 1]} : vector<1x256xf32> to vector<1x128xf32>
    %294 = vector.extract_strided_slice %98 {offsets = [0, 128], sizes = [1, 128], strides = [1, 1]} : vector<1x256xf32> to vector<1x128xf32>
    %295 = vector.extract_strided_slice %68 {offsets = [0, 128], sizes = [1, 128], strides = [1, 1]} : vector<1x256xf32> to vector<1x128xf32>
    %296 = tpu.concatenate %288, %289, %290, %291, %292, %293, %294, %295 in 0 : vector<1x128xf32>, vector<1x128xf32>, vector<1x128xf32>, vector<1x128xf32>, vector<1x128xf32>, vector<1x128xf32>, vector<1x128xf32>, vector<1x128xf32> -> vector<8x128xf32>
    %297 = tpu.concatenate %287, %296 in 1 : vector<8x128xf32>, vector<8x128xf32> -> vector<8x256xf32>
    %c0_59 = arith.constant 0 : index
    %c0_60 = arith.constant 0 : index
    %298 = vector.load %arg7[%c0_59, %c0_60] : memref<1x768xf32, #tpu.memory_space<vmem>>, vector<1x768xf32>
    %c0_61 = arith.constant 0 : index
    %c0_62 = arith.constant 0 : index
    %299 = vector.load %arg8[%c0_61, %c0_62] : memref<1x768xf32, #tpu.memory_space<vmem>>, vector<1x768xf32>
    %c0_63 = arith.constant 0 : index
    %c0_64 = arith.constant 0 : index
    %300 = vector.load %arg5[%c0_63, %c0_64] : memref<256x768xf32, #tpu.memory_space<vmem>>, vector<256x768xf32>
    %cst_65 = arith.constant dense<0.000000e+00> : vector<8x768xf32>
    %301 = tpu.matmul %297, %300, %cst_65 {dimension_numbers = #tpu.dot_dimension_numbers<[1], [0], [0], [1], [0, 0, 1, 1], [], []>} : vector<8x256xf32>, vector<256x768xf32>, vector<8x768xf32> -> vector<8x768xf32>
    %302 = vector.broadcast %298 : vector<1x768xf32> to vector<8x768xf32>
    %303 = arith.addf %301, %302 : vector<8x768xf32>
    %304 = vector.extract_strided_slice %303 {offsets = [7, 0], sizes = [1, 768], strides = [1, 1]} : vector<8x768xf32> to vector<1x768xf32>
    %305 = vector.extract_strided_slice %303 {offsets = [6, 0], sizes = [1, 768], strides = [1, 1]} : vector<8x768xf32> to vector<1x768xf32>
    %306 = vector.extract_strided_slice %303 {offsets = [5, 0], sizes = [1, 768], strides = [1, 1]} : vector<8x768xf32> to vector<1x768xf32>
    %307 = vector.extract_strided_slice %303 {offsets = [4, 0], sizes = [1, 768], strides = [1, 1]} : vector<8x768xf32> to vector<1x768xf32>
    %308 = vector.extract_strided_slice %303 {offsets = [3, 0], sizes = [1, 768], strides = [1, 1]} : vector<8x768xf32> to vector<1x768xf32>
    %309 = vector.extract_strided_slice %303 {offsets = [2, 0], sizes = [1, 768], strides = [1, 1]} : vector<8x768xf32> to vector<1x768xf32>
    %310 = vector.extract_strided_slice %303 {offsets = [1, 0], sizes = [1, 768], strides = [1, 1]} : vector<8x768xf32> to vector<1x768xf32>
    %311 = vector.extract_strided_slice %303 {offsets = [0, 0], sizes = [1, 768], strides = [1, 1]} : vector<8x768xf32> to vector<1x768xf32>
    %312 = tpu.concatenate %304, %305, %306, %307, %308, %309, %310, %311 in 0 : vector<1x768xf32>, vector<1x768xf32>, vector<1x768xf32>, vector<1x768xf32>, vector<1x768xf32>, vector<1x768xf32>, vector<1x768xf32>, vector<1x768xf32> -> vector<8x768xf32>
    %313 = tpu.iota {dimensions = array<i32: 1>} : vector<1x768xi32>
    %c256_i32_66 = arith.constant 256 : i32
    %c0_i32_67 = arith.constant 0 : i32
    %314 = arith.cmpi eq, %c256_i32_66, %c0_i32_67 : i32
    %c1_i32_68 = arith.constant 1 : i32
    %315 = arith.select %314, %c1_i32_68, %c256_i32_66 : i32
    %316 = vector.broadcast %315 : i32 to vector<1x768xi32>
    %317 = arith.remsi %313, %316 : vector<1x768xi32>
    %c0_i32_69 = arith.constant 0 : i32
    %318 = vector.broadcast %c0_i32_69 : i32 to vector<1x768xi32>
    %319 = arith.cmpi ne, %317, %318 : vector<1x768xi32>
    %c0_i32_70 = arith.constant 0 : i32
    %320 = vector.broadcast %c0_i32_70 : i32 to vector<1x768xi32>
    %321 = arith.cmpi slt, %317, %320 : vector<1x768xi32>
    %c0_i32_71 = arith.constant 0 : i32
    %322 = arith.cmpi slt, %315, %c0_i32_71 : i32
    %323 = vector.broadcast %322 : i1 to vector<1x768xi1>
    %324 = vector.broadcast %323 : vector<1x768xi1> to vector<1x768xi1>
    %325 = arith.xori %321, %324 : vector<1x768xi1>
    %326 = arith.andi %325, %319 : vector<1x768xi1>
    %327 = vector.broadcast %315 : i32 to vector<1x768xi32>
    %328 = arith.addi %317, %327 : vector<1x768xi32>
    %329 = arith.select %326, %328, %317 : vector<1x768xi1>, vector<1x768xi32>
    %c128_i32_72 = arith.constant 128 : i32
    %330 = vector.broadcast %c128_i32_72 : i32 to vector<1x768xi32>
    %331 = arith.cmpi slt, %329, %330 : vector<1x768xi32>
    %332 = vector.shape_cast %331 : vector<1x768xi1> to vector<1x768xi1>
    %333 = vector.broadcast %332 : vector<1x768xi1> to vector<8x768xi1>
    %334 = arith.select %333, %303, %312 : vector<8x768xi1>, vector<8x768xf32>
    %cst_73 = arith.constant 0.000000e+00 : f32
    %335 = vector.broadcast %cst_73 : f32 to vector<1x256xf32>
    %336 = vector.extract_strided_slice %334 {offsets = [0, 0], sizes = [1, 768], strides = [1, 1]} : vector<8x768xf32> to vector<1x768xf32>
    %c0_74 = arith.constant 0 : index
    %c0_75 = arith.constant 0 : index
    %337 = vector.load %arg6[%c0_74, %c0_75] : memref<256x768xf32, #tpu.memory_space<vmem>>, vector<256x768xf32>
    %cst_76 = arith.constant dense<0.000000e+00> : vector<1x768xf32>
    %338 = tpu.matmul %335, %337, %cst_76 {dimension_numbers = #tpu.dot_dimension_numbers<[1], [0], [0], [1], [0, 0, 1, 1], [], []>} : vector<1x256xf32>, vector<256x768xf32>, vector<1x768xf32> -> vector<1x768xf32>
    %339 = arith.addf %338, %299 : vector<1x768xf32>
    %340 = vector.extract_strided_slice %336 {offsets = [0, 0], sizes = [1, 256], strides = [1, 1]} : vector<1x768xf32> to vector<1x256xf32>
    %341 = vector.extract_strided_slice %339 {offsets = [0, 0], sizes = [1, 256], strides = [1, 1]} : vector<1x768xf32> to vector<1x256xf32>
    %342 = arith.addf %340, %341 : vector<1x256xf32>
    %343 = arith.negf %342 : vector<1x256xf32>
    %344 = math.exp %343 : vector<1x256xf32>
    %cst_77 = arith.constant 1.000000e+00 : f32
    %345 = vector.broadcast %cst_77 : f32 to vector<1x256xf32>
    %346 = arith.addf %345, %344 : vector<1x256xf32>
    %347 = arith.divf %345, %346 : vector<1x256xf32>
    %348 = vector.extract_strided_slice %336 {offsets = [0, 256], sizes = [1, 256], strides = [1, 1]} : vector<1x768xf32> to vector<1x256xf32>
    %349 = vector.extract_strided_slice %339 {offsets = [0, 256], sizes = [1, 256], strides = [1, 1]} : vector<1x768xf32> to vector<1x256xf32>
    %350 = arith.addf %348, %349 : vector<1x256xf32>
    %351 = arith.negf %350 : vector<1x256xf32>
    %352 = math.exp %351 : vector<1x256xf32>
    %cst_78 = arith.constant 1.000000e+00 : f32
    %353 = vector.broadcast %cst_78 : f32 to vector<1x256xf32>
    %354 = arith.addf %353, %352 : vector<1x256xf32>
    %355 = arith.divf %353, %354 : vector<1x256xf32>
    %356 = vector.extract_strided_slice %336 {offsets = [0, 512], sizes = [1, 256], strides = [1, 1]} : vector<1x768xf32> to vector<1x256xf32>
    %357 = vector.extract_strided_slice %339 {offsets = [0, 512], sizes = [1, 256], strides = [1, 1]} : vector<1x768xf32> to vector<1x256xf32>
    %358 = arith.mulf %347, %357 : vector<1x256xf32>
    %359 = arith.addf %356, %358 : vector<1x256xf32>
    %360 = math.tanh %359 : vector<1x256xf32>
    %cst_79 = arith.constant 1.000000e+00 : f32
    %361 = vector.broadcast %cst_79 : f32 to vector<1x256xf32>
    %362 = arith.subf %361, %355 : vector<1x256xf32>
    %363 = arith.mulf %362, %360 : vector<1x256xf32>
    %364 = arith.mulf %355, %335 : vector<1x256xf32>
    %365 = arith.addf %363, %364 : vector<1x256xf32>
    %366 = vector.extract_strided_slice %334 {offsets = [1, 0], sizes = [1, 768], strides = [1, 1]} : vector<8x768xf32> to vector<1x768xf32>
    %c0_80 = arith.constant 0 : index
    %c0_81 = arith.constant 0 : index
    %367 = vector.load %arg6[%c0_80, %c0_81] : memref<256x768xf32, #tpu.memory_space<vmem>>, vector<256x768xf32>
    %cst_82 = arith.constant dense<0.000000e+00> : vector<1x768xf32>
    %368 = tpu.matmul %365, %367, %cst_82 {dimension_numbers = #tpu.dot_dimension_numbers<[1], [0], [0], [1], [0, 0, 1, 1], [], []>} : vector<1x256xf32>, vector<256x768xf32>, vector<1x768xf32> -> vector<1x768xf32>
    %369 = arith.addf %368, %299 : vector<1x768xf32>
    %370 = vector.extract_strided_slice %366 {offsets = [0, 0], sizes = [1, 256], strides = [1, 1]} : vector<1x768xf32> to vector<1x256xf32>
    %371 = vector.extract_strided_slice %369 {offsets = [0, 0], sizes = [1, 256], strides = [1, 1]} : vector<1x768xf32> to vector<1x256xf32>
    %372 = arith.addf %370, %371 : vector<1x256xf32>
    %373 = arith.negf %372 : vector<1x256xf32>
    %374 = math.exp %373 : vector<1x256xf32>
    %cst_83 = arith.constant 1.000000e+00 : f32
    %375 = vector.broadcast %cst_83 : f32 to vector<1x256xf32>
    %376 = arith.addf %375, %374 : vector<1x256xf32>
    %377 = arith.divf %375, %376 : vector<1x256xf32>
    %378 = vector.extract_strided_slice %366 {offsets = [0, 256], sizes = [1, 256], strides = [1, 1]} : vector<1x768xf32> to vector<1x256xf32>
    %379 = vector.extract_strided_slice %369 {offsets = [0, 256], sizes = [1, 256], strides = [1, 1]} : vector<1x768xf32> to vector<1x256xf32>
    %380 = arith.addf %378, %379 : vector<1x256xf32>
    %381 = arith.negf %380 : vector<1x256xf32>
    %382 = math.exp %381 : vector<1x256xf32>
    %cst_84 = arith.constant 1.000000e+00 : f32
    %383 = vector.broadcast %cst_84 : f32 to vector<1x256xf32>
    %384 = arith.addf %383, %382 : vector<1x256xf32>
    %385 = arith.divf %383, %384 : vector<1x256xf32>
    %386 = vector.extract_strided_slice %366 {offsets = [0, 512], sizes = [1, 256], strides = [1, 1]} : vector<1x768xf32> to vector<1x256xf32>
    %387 = vector.extract_strided_slice %369 {offsets = [0, 512], sizes = [1, 256], strides = [1, 1]} : vector<1x768xf32> to vector<1x256xf32>
    %388 = arith.mulf %377, %387 : vector<1x256xf32>
    %389 = arith.addf %386, %388 : vector<1x256xf32>
    %390 = math.tanh %389 : vector<1x256xf32>
    %cst_85 = arith.constant 1.000000e+00 : f32
    %391 = vector.broadcast %cst_85 : f32 to vector<1x256xf32>
    %392 = arith.subf %391, %385 : vector<1x256xf32>
    %393 = arith.mulf %392, %390 : vector<1x256xf32>
    %394 = arith.mulf %385, %365 : vector<1x256xf32>
    %395 = arith.addf %393, %394 : vector<1x256xf32>
    %396 = vector.extract_strided_slice %334 {offsets = [2, 0], sizes = [1, 768], strides = [1, 1]} : vector<8x768xf32> to vector<1x768xf32>
    %c0_86 = arith.constant 0 : index
    %c0_87 = arith.constant 0 : index
    %397 = vector.load %arg6[%c0_86, %c0_87] : memref<256x768xf32, #tpu.memory_space<vmem>>, vector<256x768xf32>
    %cst_88 = arith.constant dense<0.000000e+00> : vector<1x768xf32>
    %398 = tpu.matmul %395, %397, %cst_88 {dimension_numbers = #tpu.dot_dimension_numbers<[1], [0], [0], [1], [0, 0, 1, 1], [], []>} : vector<1x256xf32>, vector<256x768xf32>, vector<1x768xf32> -> vector<1x768xf32>
    %399 = arith.addf %398, %299 : vector<1x768xf32>
    %400 = vector.extract_strided_slice %396 {offsets = [0, 0], sizes = [1, 256], strides = [1, 1]} : vector<1x768xf32> to vector<1x256xf32>
    %401 = vector.extract_strided_slice %399 {offsets = [0, 0], sizes = [1, 256], strides = [1, 1]} : vector<1x768xf32> to vector<1x256xf32>
    %402 = arith.addf %400, %401 : vector<1x256xf32>
    %403 = arith.negf %402 : vector<1x256xf32>
    %404 = math.exp %403 : vector<1x256xf32>
    %cst_89 = arith.constant 1.000000e+00 : f32
    %405 = vector.broadcast %cst_89 : f32 to vector<1x256xf32>
    %406 = arith.addf %405, %404 : vector<1x256xf32>
    %407 = arith.divf %405, %406 : vector<1x256xf32>
    %408 = vector.extract_strided_slice %396 {offsets = [0, 256], sizes = [1, 256], strides = [1, 1]} : vector<1x768xf32> to vector<1x256xf32>
    %409 = vector.extract_strided_slice %399 {offsets = [0, 256], sizes = [1, 256], strides = [1, 1]} : vector<1x768xf32> to vector<1x256xf32>
    %410 = arith.addf %408, %409 : vector<1x256xf32>
    %411 = arith.negf %410 : vector<1x256xf32>
    %412 = math.exp %411 : vector<1x256xf32>
    %cst_90 = arith.constant 1.000000e+00 : f32
    %413 = vector.broadcast %cst_90 : f32 to vector<1x256xf32>
    %414 = arith.addf %413, %412 : vector<1x256xf32>
    %415 = arith.divf %413, %414 : vector<1x256xf32>
    %416 = vector.extract_strided_slice %396 {offsets = [0, 512], sizes = [1, 256], strides = [1, 1]} : vector<1x768xf32> to vector<1x256xf32>
    %417 = vector.extract_strided_slice %399 {offsets = [0, 512], sizes = [1, 256], strides = [1, 1]} : vector<1x768xf32> to vector<1x256xf32>
    %418 = arith.mulf %407, %417 : vector<1x256xf32>
    %419 = arith.addf %416, %418 : vector<1x256xf32>
    %420 = math.tanh %419 : vector<1x256xf32>
    %cst_91 = arith.constant 1.000000e+00 : f32
    %421 = vector.broadcast %cst_91 : f32 to vector<1x256xf32>
    %422 = arith.subf %421, %415 : vector<1x256xf32>
    %423 = arith.mulf %422, %420 : vector<1x256xf32>
    %424 = arith.mulf %415, %395 : vector<1x256xf32>
    %425 = arith.addf %423, %424 : vector<1x256xf32>
    %426 = vector.extract_strided_slice %334 {offsets = [3, 0], sizes = [1, 768], strides = [1, 1]} : vector<8x768xf32> to vector<1x768xf32>
    %c0_92 = arith.constant 0 : index
    %c0_93 = arith.constant 0 : index
    %427 = vector.load %arg6[%c0_92, %c0_93] : memref<256x768xf32, #tpu.memory_space<vmem>>, vector<256x768xf32>
    %cst_94 = arith.constant dense<0.000000e+00> : vector<1x768xf32>
    %428 = tpu.matmul %425, %427, %cst_94 {dimension_numbers = #tpu.dot_dimension_numbers<[1], [0], [0], [1], [0, 0, 1, 1], [], []>} : vector<1x256xf32>, vector<256x768xf32>, vector<1x768xf32> -> vector<1x768xf32>
    %429 = arith.addf %428, %299 : vector<1x768xf32>
    %430 = vector.extract_strided_slice %426 {offsets = [0, 0], sizes = [1, 256], strides = [1, 1]} : vector<1x768xf32> to vector<1x256xf32>
    %431 = vector.extract_strided_slice %429 {offsets = [0, 0], sizes = [1, 256], strides = [1, 1]} : vector<1x768xf32> to vector<1x256xf32>
    %432 = arith.addf %430, %431 : vector<1x256xf32>
    %433 = arith.negf %432 : vector<1x256xf32>
    %434 = math.exp %433 : vector<1x256xf32>
    %cst_95 = arith.constant 1.000000e+00 : f32
    %435 = vector.broadcast %cst_95 : f32 to vector<1x256xf32>
    %436 = arith.addf %435, %434 : vector<1x256xf32>
    %437 = arith.divf %435, %436 : vector<1x256xf32>
    %438 = vector.extract_strided_slice %426 {offsets = [0, 256], sizes = [1, 256], strides = [1, 1]} : vector<1x768xf32> to vector<1x256xf32>
    %439 = vector.extract_strided_slice %429 {offsets = [0, 256], sizes = [1, 256], strides = [1, 1]} : vector<1x768xf32> to vector<1x256xf32>
    %440 = arith.addf %438, %439 : vector<1x256xf32>
    %441 = arith.negf %440 : vector<1x256xf32>
    %442 = math.exp %441 : vector<1x256xf32>
    %cst_96 = arith.constant 1.000000e+00 : f32
    %443 = vector.broadcast %cst_96 : f32 to vector<1x256xf32>
    %444 = arith.addf %443, %442 : vector<1x256xf32>
    %445 = arith.divf %443, %444 : vector<1x256xf32>
    %446 = vector.extract_strided_slice %426 {offsets = [0, 512], sizes = [1, 256], strides = [1, 1]} : vector<1x768xf32> to vector<1x256xf32>
    %447 = vector.extract_strided_slice %429 {offsets = [0, 512], sizes = [1, 256], strides = [1, 1]} : vector<1x768xf32> to vector<1x256xf32>
    %448 = arith.mulf %437, %447 : vector<1x256xf32>
    %449 = arith.addf %446, %448 : vector<1x256xf32>
    %450 = math.tanh %449 : vector<1x256xf32>
    %cst_97 = arith.constant 1.000000e+00 : f32
    %451 = vector.broadcast %cst_97 : f32 to vector<1x256xf32>
    %452 = arith.subf %451, %445 : vector<1x256xf32>
    %453 = arith.mulf %452, %450 : vector<1x256xf32>
    %454 = arith.mulf %445, %425 : vector<1x256xf32>
    %455 = arith.addf %453, %454 : vector<1x256xf32>
    %456 = vector.extract_strided_slice %334 {offsets = [4, 0], sizes = [1, 768], strides = [1, 1]} : vector<8x768xf32> to vector<1x768xf32>
    %c0_98 = arith.constant 0 : index
    %c0_99 = arith.constant 0 : index
    %457 = vector.load %arg6[%c0_98, %c0_99] : memref<256x768xf32, #tpu.memory_space<vmem>>, vector<256x768xf32>
    %cst_100 = arith.constant dense<0.000000e+00> : vector<1x768xf32>
    %458 = tpu.matmul %455, %457, %cst_100 {dimension_numbers = #tpu.dot_dimension_numbers<[1], [0], [0], [1], [0, 0, 1, 1], [], []>} : vector<1x256xf32>, vector<256x768xf32>, vector<1x768xf32> -> vector<1x768xf32>
    %459 = arith.addf %458, %299 : vector<1x768xf32>
    %460 = vector.extract_strided_slice %456 {offsets = [0, 0], sizes = [1, 256], strides = [1, 1]} : vector<1x768xf32> to vector<1x256xf32>
    %461 = vector.extract_strided_slice %459 {offsets = [0, 0], sizes = [1, 256], strides = [1, 1]} : vector<1x768xf32> to vector<1x256xf32>
    %462 = arith.addf %460, %461 : vector<1x256xf32>
    %463 = arith.negf %462 : vector<1x256xf32>
    %464 = math.exp %463 : vector<1x256xf32>
    %cst_101 = arith.constant 1.000000e+00 : f32
    %465 = vector.broadcast %cst_101 : f32 to vector<1x256xf32>
    %466 = arith.addf %465, %464 : vector<1x256xf32>
    %467 = arith.divf %465, %466 : vector<1x256xf32>
    %468 = vector.extract_strided_slice %456 {offsets = [0, 256], sizes = [1, 256], strides = [1, 1]} : vector<1x768xf32> to vector<1x256xf32>
    %469 = vector.extract_strided_slice %459 {offsets = [0, 256], sizes = [1, 256], strides = [1, 1]} : vector<1x768xf32> to vector<1x256xf32>
    %470 = arith.addf %468, %469 : vector<1x256xf32>
    %471 = arith.negf %470 : vector<1x256xf32>
    %472 = math.exp %471 : vector<1x256xf32>
    %cst_102 = arith.constant 1.000000e+00 : f32
    %473 = vector.broadcast %cst_102 : f32 to vector<1x256xf32>
    %474 = arith.addf %473, %472 : vector<1x256xf32>
    %475 = arith.divf %473, %474 : vector<1x256xf32>
    %476 = vector.extract_strided_slice %456 {offsets = [0, 512], sizes = [1, 256], strides = [1, 1]} : vector<1x768xf32> to vector<1x256xf32>
    %477 = vector.extract_strided_slice %459 {offsets = [0, 512], sizes = [1, 256], strides = [1, 1]} : vector<1x768xf32> to vector<1x256xf32>
    %478 = arith.mulf %467, %477 : vector<1x256xf32>
    %479 = arith.addf %476, %478 : vector<1x256xf32>
    %480 = math.tanh %479 : vector<1x256xf32>
    %cst_103 = arith.constant 1.000000e+00 : f32
    %481 = vector.broadcast %cst_103 : f32 to vector<1x256xf32>
    %482 = arith.subf %481, %475 : vector<1x256xf32>
    %483 = arith.mulf %482, %480 : vector<1x256xf32>
    %484 = arith.mulf %475, %455 : vector<1x256xf32>
    %485 = arith.addf %483, %484 : vector<1x256xf32>
    %486 = vector.extract_strided_slice %334 {offsets = [5, 0], sizes = [1, 768], strides = [1, 1]} : vector<8x768xf32> to vector<1x768xf32>
    %c0_104 = arith.constant 0 : index
    %c0_105 = arith.constant 0 : index
    %487 = vector.load %arg6[%c0_104, %c0_105] : memref<256x768xf32, #tpu.memory_space<vmem>>, vector<256x768xf32>
    %cst_106 = arith.constant dense<0.000000e+00> : vector<1x768xf32>
    %488 = tpu.matmul %485, %487, %cst_106 {dimension_numbers = #tpu.dot_dimension_numbers<[1], [0], [0], [1], [0, 0, 1, 1], [], []>} : vector<1x256xf32>, vector<256x768xf32>, vector<1x768xf32> -> vector<1x768xf32>
    %489 = arith.addf %488, %299 : vector<1x768xf32>
    %490 = vector.extract_strided_slice %486 {offsets = [0, 0], sizes = [1, 256], strides = [1, 1]} : vector<1x768xf32> to vector<1x256xf32>
    %491 = vector.extract_strided_slice %489 {offsets = [0, 0], sizes = [1, 256], strides = [1, 1]} : vector<1x768xf32> to vector<1x256xf32>
    %492 = arith.addf %490, %491 : vector<1x256xf32>
    %493 = arith.negf %492 : vector<1x256xf32>
    %494 = math.exp %493 : vector<1x256xf32>
    %cst_107 = arith.constant 1.000000e+00 : f32
    %495 = vector.broadcast %cst_107 : f32 to vector<1x256xf32>
    %496 = arith.addf %495, %494 : vector<1x256xf32>
    %497 = arith.divf %495, %496 : vector<1x256xf32>
    %498 = vector.extract_strided_slice %486 {offsets = [0, 256], sizes = [1, 256], strides = [1, 1]} : vector<1x768xf32> to vector<1x256xf32>
    %499 = vector.extract_strided_slice %489 {offsets = [0, 256], sizes = [1, 256], strides = [1, 1]} : vector<1x768xf32> to vector<1x256xf32>
    %500 = arith.addf %498, %499 : vector<1x256xf32>
    %501 = arith.negf %500 : vector<1x256xf32>
    %502 = math.exp %501 : vector<1x256xf32>
    %cst_108 = arith.constant 1.000000e+00 : f32
    %503 = vector.broadcast %cst_108 : f32 to vector<1x256xf32>
    %504 = arith.addf %503, %502 : vector<1x256xf32>
    %505 = arith.divf %503, %504 : vector<1x256xf32>
    %506 = vector.extract_strided_slice %486 {offsets = [0, 512], sizes = [1, 256], strides = [1, 1]} : vector<1x768xf32> to vector<1x256xf32>
    %507 = vector.extract_strided_slice %489 {offsets = [0, 512], sizes = [1, 256], strides = [1, 1]} : vector<1x768xf32> to vector<1x256xf32>
    %508 = arith.mulf %497, %507 : vector<1x256xf32>
    %509 = arith.addf %506, %508 : vector<1x256xf32>
    %510 = math.tanh %509 : vector<1x256xf32>
    %cst_109 = arith.constant 1.000000e+00 : f32
    %511 = vector.broadcast %cst_109 : f32 to vector<1x256xf32>
    %512 = arith.subf %511, %505 : vector<1x256xf32>
    %513 = arith.mulf %512, %510 : vector<1x256xf32>
    %514 = arith.mulf %505, %485 : vector<1x256xf32>
    %515 = arith.addf %513, %514 : vector<1x256xf32>
    %516 = vector.extract_strided_slice %334 {offsets = [6, 0], sizes = [1, 768], strides = [1, 1]} : vector<8x768xf32> to vector<1x768xf32>
    %c0_110 = arith.constant 0 : index
    %c0_111 = arith.constant 0 : index
    %517 = vector.load %arg6[%c0_110, %c0_111] : memref<256x768xf32, #tpu.memory_space<vmem>>, vector<256x768xf32>
    %cst_112 = arith.constant dense<0.000000e+00> : vector<1x768xf32>
    %518 = tpu.matmul %515, %517, %cst_112 {dimension_numbers = #tpu.dot_dimension_numbers<[1], [0], [0], [1], [0, 0, 1, 1], [], []>} : vector<1x256xf32>, vector<256x768xf32>, vector<1x768xf32> -> vector<1x768xf32>
    %519 = arith.addf %518, %299 : vector<1x768xf32>
    %520 = vector.extract_strided_slice %516 {offsets = [0, 0], sizes = [1, 256], strides = [1, 1]} : vector<1x768xf32> to vector<1x256xf32>
    %521 = vector.extract_strided_slice %519 {offsets = [0, 0], sizes = [1, 256], strides = [1, 1]} : vector<1x768xf32> to vector<1x256xf32>
    %522 = arith.addf %520, %521 : vector<1x256xf32>
    %523 = arith.negf %522 : vector<1x256xf32>
    %524 = math.exp %523 : vector<1x256xf32>
    %cst_113 = arith.constant 1.000000e+00 : f32
    %525 = vector.broadcast %cst_113 : f32 to vector<1x256xf32>
    %526 = arith.addf %525, %524 : vector<1x256xf32>
    %527 = arith.divf %525, %526 : vector<1x256xf32>
    %528 = vector.extract_strided_slice %516 {offsets = [0, 256], sizes = [1, 256], strides = [1, 1]} : vector<1x768xf32> to vector<1x256xf32>
    %529 = vector.extract_strided_slice %519 {offsets = [0, 256], sizes = [1, 256], strides = [1, 1]} : vector<1x768xf32> to vector<1x256xf32>
    %530 = arith.addf %528, %529 : vector<1x256xf32>
    %531 = arith.negf %530 : vector<1x256xf32>
    %532 = math.exp %531 : vector<1x256xf32>
    %cst_114 = arith.constant 1.000000e+00 : f32
    %533 = vector.broadcast %cst_114 : f32 to vector<1x256xf32>
    %534 = arith.addf %533, %532 : vector<1x256xf32>
    %535 = arith.divf %533, %534 : vector<1x256xf32>
    %536 = vector.extract_strided_slice %516 {offsets = [0, 512], sizes = [1, 256], strides = [1, 1]} : vector<1x768xf32> to vector<1x256xf32>
    %537 = vector.extract_strided_slice %519 {offsets = [0, 512], sizes = [1, 256], strides = [1, 1]} : vector<1x768xf32> to vector<1x256xf32>
    %538 = arith.mulf %527, %537 : vector<1x256xf32>
    %539 = arith.addf %536, %538 : vector<1x256xf32>
    %540 = math.tanh %539 : vector<1x256xf32>
    %cst_115 = arith.constant 1.000000e+00 : f32
    %541 = vector.broadcast %cst_115 : f32 to vector<1x256xf32>
    %542 = arith.subf %541, %535 : vector<1x256xf32>
    %543 = arith.mulf %542, %540 : vector<1x256xf32>
    %544 = arith.mulf %535, %515 : vector<1x256xf32>
    %545 = arith.addf %543, %544 : vector<1x256xf32>
    %546 = vector.extract_strided_slice %334 {offsets = [7, 0], sizes = [1, 768], strides = [1, 1]} : vector<8x768xf32> to vector<1x768xf32>
    %c0_116 = arith.constant 0 : index
    %c0_117 = arith.constant 0 : index
    %547 = vector.load %arg6[%c0_116, %c0_117] : memref<256x768xf32, #tpu.memory_space<vmem>>, vector<256x768xf32>
    %cst_118 = arith.constant dense<0.000000e+00> : vector<1x768xf32>
    %548 = tpu.matmul %545, %547, %cst_118 {dimension_numbers = #tpu.dot_dimension_numbers<[1], [0], [0], [1], [0, 0, 1, 1], [], []>} : vector<1x256xf32>, vector<256x768xf32>, vector<1x768xf32> -> vector<1x768xf32>
    %549 = arith.addf %548, %299 : vector<1x768xf32>
    %550 = vector.extract_strided_slice %546 {offsets = [0, 0], sizes = [1, 256], strides = [1, 1]} : vector<1x768xf32> to vector<1x256xf32>
    %551 = vector.extract_strided_slice %549 {offsets = [0, 0], sizes = [1, 256], strides = [1, 1]} : vector<1x768xf32> to vector<1x256xf32>
    %552 = arith.addf %550, %551 : vector<1x256xf32>
    %553 = arith.negf %552 : vector<1x256xf32>
    %554 = math.exp %553 : vector<1x256xf32>
    %cst_119 = arith.constant 1.000000e+00 : f32
    %555 = vector.broadcast %cst_119 : f32 to vector<1x256xf32>
    %556 = arith.addf %555, %554 : vector<1x256xf32>
    %557 = arith.divf %555, %556 : vector<1x256xf32>
    %558 = vector.extract_strided_slice %546 {offsets = [0, 256], sizes = [1, 256], strides = [1, 1]} : vector<1x768xf32> to vector<1x256xf32>
    %559 = vector.extract_strided_slice %549 {offsets = [0, 256], sizes = [1, 256], strides = [1, 1]} : vector<1x768xf32> to vector<1x256xf32>
    %560 = arith.addf %558, %559 : vector<1x256xf32>
    %561 = arith.negf %560 : vector<1x256xf32>
    %562 = math.exp %561 : vector<1x256xf32>
    %cst_120 = arith.constant 1.000000e+00 : f32
    %563 = vector.broadcast %cst_120 : f32 to vector<1x256xf32>
    %564 = arith.addf %563, %562 : vector<1x256xf32>
    %565 = arith.divf %563, %564 : vector<1x256xf32>
    %566 = vector.extract_strided_slice %546 {offsets = [0, 512], sizes = [1, 256], strides = [1, 1]} : vector<1x768xf32> to vector<1x256xf32>
    %567 = vector.extract_strided_slice %549 {offsets = [0, 512], sizes = [1, 256], strides = [1, 1]} : vector<1x768xf32> to vector<1x256xf32>
    %568 = arith.mulf %557, %567 : vector<1x256xf32>
    %569 = arith.addf %566, %568 : vector<1x256xf32>
    %570 = math.tanh %569 : vector<1x256xf32>
    %cst_121 = arith.constant 1.000000e+00 : f32
    %571 = vector.broadcast %cst_121 : f32 to vector<1x256xf32>
    %572 = arith.subf %571, %565 : vector<1x256xf32>
    %573 = arith.mulf %572, %570 : vector<1x256xf32>
    %574 = arith.mulf %565, %545 : vector<1x256xf32>
    %575 = arith.addf %573, %574 : vector<1x256xf32>
    %576 = vector.extract_strided_slice %365 {offsets = [0, 0], sizes = [1, 128], strides = [1, 1]} : vector<1x256xf32> to vector<1x128xf32>
    %577 = vector.extract_strided_slice %395 {offsets = [0, 0], sizes = [1, 128], strides = [1, 1]} : vector<1x256xf32> to vector<1x128xf32>
    %578 = vector.extract_strided_slice %425 {offsets = [0, 0], sizes = [1, 128], strides = [1, 1]} : vector<1x256xf32> to vector<1x128xf32>
    %579 = vector.extract_strided_slice %455 {offsets = [0, 0], sizes = [1, 128], strides = [1, 1]} : vector<1x256xf32> to vector<1x128xf32>
    %580 = vector.extract_strided_slice %485 {offsets = [0, 0], sizes = [1, 128], strides = [1, 1]} : vector<1x256xf32> to vector<1x128xf32>
    %581 = vector.extract_strided_slice %515 {offsets = [0, 0], sizes = [1, 128], strides = [1, 1]} : vector<1x256xf32> to vector<1x128xf32>
    %582 = vector.extract_strided_slice %545 {offsets = [0, 0], sizes = [1, 128], strides = [1, 1]} : vector<1x256xf32> to vector<1x128xf32>
    %583 = vector.extract_strided_slice %575 {offsets = [0, 0], sizes = [1, 128], strides = [1, 1]} : vector<1x256xf32> to vector<1x128xf32>
    %584 = tpu.concatenate %576, %577, %578, %579, %580, %581, %582, %583 in 0 : vector<1x128xf32>, vector<1x128xf32>, vector<1x128xf32>, vector<1x128xf32>, vector<1x128xf32>, vector<1x128xf32>, vector<1x128xf32>, vector<1x128xf32> -> vector<8x128xf32>
    %585 = vector.extract_strided_slice %575 {offsets = [0, 128], sizes = [1, 128], strides = [1, 1]} : vector<1x256xf32> to vector<1x128xf32>
    %586 = vector.extract_strided_slice %545 {offsets = [0, 128], sizes = [1, 128], strides = [1, 1]} : vector<1x256xf32> to vector<1x128xf32>
    %587 = vector.extract_strided_slice %515 {offsets = [0, 128], sizes = [1, 128], strides = [1, 1]} : vector<1x256xf32> to vector<1x128xf32>
    %588 = vector.extract_strided_slice %485 {offsets = [0, 128], sizes = [1, 128], strides = [1, 1]} : vector<1x256xf32> to vector<1x128xf32>
    %589 = vector.extract_strided_slice %455 {offsets = [0, 128], sizes = [1, 128], strides = [1, 1]} : vector<1x256xf32> to vector<1x128xf32>
    %590 = vector.extract_strided_slice %425 {offsets = [0, 128], sizes = [1, 128], strides = [1, 1]} : vector<1x256xf32> to vector<1x128xf32>
    %591 = vector.extract_strided_slice %395 {offsets = [0, 128], sizes = [1, 128], strides = [1, 1]} : vector<1x256xf32> to vector<1x128xf32>
    %592 = vector.extract_strided_slice %365 {offsets = [0, 128], sizes = [1, 128], strides = [1, 1]} : vector<1x256xf32> to vector<1x128xf32>
    %593 = tpu.concatenate %585, %586, %587, %588, %589, %590, %591, %592 in 0 : vector<1x128xf32>, vector<1x128xf32>, vector<1x128xf32>, vector<1x128xf32>, vector<1x128xf32>, vector<1x128xf32>, vector<1x128xf32>, vector<1x128xf32> -> vector<8x128xf32>
    %594 = tpu.concatenate %584, %593 in 1 : vector<8x128xf32>, vector<8x128xf32> -> vector<8x256xf32>
    %c0_122 = arith.constant 0 : index
    %c0_123 = arith.constant 0 : index
    %595 = vector.load %arg9[%c0_122, %c0_123] : memref<256x128xf32, #tpu.memory_space<vmem>>, vector<256x128xf32>
    %cst_124 = arith.constant dense<0.000000e+00> : vector<8x128xf32>
    %596 = tpu.matmul %594, %595, %cst_124 {dimension_numbers = #tpu.dot_dimension_numbers<[1], [0], [0], [1], [0, 0, 1, 1], [], []>} : vector<8x256xf32>, vector<256x128xf32>, vector<8x128xf32> -> vector<8x128xf32>
    %c0_125 = arith.constant 0 : index
    %c0_126 = arith.constant 0 : index
    %597 = vector.load %arg10[%c0_125, %c0_126] : memref<1x128xf32, #tpu.memory_space<vmem>>, vector<1x128xf32>
    %598 = vector.broadcast %597 : vector<1x128xf32> to vector<8x128xf32>
    %599 = arith.addf %596, %598 : vector<8x128xf32>
    %600 = tpu.iota {dimensions = array<i32: 1>} : vector<8x128xi32>
    %c16_i32 = arith.constant 16 : i32
    %601 = vector.broadcast %c16_i32 : i32 to vector<8x128xi32>
    %602 = arith.cmpi slt, %600, %601 : vector<8x128xi32>
    %cst_127 = arith.constant -1.000000e+30 : f32
    %603 = vector.broadcast %cst_127 : f32 to vector<8x128xf32>
    %604 = arith.select %602, %599, %603 : vector<8x128xi1>, vector<8x128xf32>
    %cst_128 = arith.constant dense<0xFF800000> : vector<8xf32>
    %605 = vector.multi_reduction <maximumf>, %604, %cst_128 [1] : vector<8x128xf32> to vector<8xf32>
    %606 = vector.shape_cast %605 : vector<8xf32> to vector<8x1xf32>
    %607 = vector.broadcast %606 : vector<8x1xf32> to vector<8x128xf32>
    %608 = arith.subf %604, %607 : vector<8x128xf32>
    %609 = math.exp %608 : vector<8x128xf32>
    %cst_129 = arith.constant dense<0.000000e+00> : vector<8xf32>
    %610 = vector.multi_reduction <add>, %609, %cst_129 [1] : vector<8x128xf32> to vector<8xf32>
    %611 = vector.shape_cast %610 : vector<8xf32> to vector<8x1xf32>
    %612 = math.log %611 : vector<8x1xf32>
    %613 = arith.addf %606, %612 : vector<8x1xf32>
    %614 = vector.broadcast %613 : vector<8x1xf32> to vector<8x128xf32>
    %615 = arith.subf %604, %614 : vector<8x128xf32>
    %616 = vector.extract_strided_slice %615 {offsets = [0, 0], sizes = [8, 16], strides = [1, 1]} : vector<8x128xf32> to vector<8x16xf32>
    %c0_130 = arith.constant 0 : index
    %c0_131 = arith.constant 0 : index
    %617 = vector.load %arg11[%c0_130, %c0_131] : memref<8x16xf32, #tpu.memory_space<vmem>>, vector<8x16xf32>
    tpu.vector_store %arg11[%c0_130, %c0_131], %616 {strides = array<i32>} : memref<8x16xf32, #tpu.memory_space<vmem>>, vector<8x16xf32>,
    return
  }
}

</mosaic_0001>

<llo_original>
// kernel: seq_tagger_forward.1
$region0: #{seq_tagger_forward.1}
  #allocation0 [shape = 'u32[]', space=smem, size = 0x4, offset = 0x4, fixed_abs, tag = 'smem constant byte address 0x4 - core index']
  #allocation1 [shape = 'u32[144,128]{1,0:T(1,128)}', space=vmem, size = 0x12000, scoped, tag = 'internal scratch']
  %s0 = inlined_call_operand.vmem [shape: f32[8,128], index: 0, kind: input, shape index: {}]
  %s1 = inlined_call_operand.hbm [shape: f32[128,768], index: 1, kind: input, shape index: {}]
  %s2 = inlined_call_operand.hbm [shape: f32[256,768], index: 2, kind: input, shape index: {}]
  %s3 = inlined_call_operand.vmem [shape: f32[1,768], index: 3, kind: input, shape index: {}]
  %s4 = inlined_call_operand.vmem [shape: f32[1,768], index: 4, kind: input, shape index: {}]
  %s5 = inlined_call_operand.hbm [shape: f32[256,768], index: 5, kind: input, shape index: {}]
  %s6 = inlined_call_operand.hbm [shape: f32[256,768], index: 6, kind: input, shape index: {}]
  %s7 = inlined_call_operand.vmem [shape: f32[1,768], index: 7, kind: input, shape index: {}]
  %s8 = inlined_call_operand.vmem [shape: f32[1,768], index: 8, kind: input, shape index: {}]
  %s9 = inlined_call_operand.hbm [shape: f32[256,128], index: 9, kind: input, shape index: {}]
  %s10 = inlined_call_operand.vmem [shape: f32[1,128], index: 10, kind: input, shape index: {}]
  %s11 = inlined_call_operand.hbm [shape: f32[8,16], index: 11, kind: output, shape index: {}]
  %s12 = sld [smem:[#allocation0]]
  $region74: #{seq_tagger_forward.1} parent=0
    _
  %s14 = ssub.s32 1, %s12
  %s15 = scalar_select 0, %s14, %s12
  $region1: #{seq_tagger_forward.1} parent=0
    #allocation2 [shape = 'u8[393216]{0}', space=vmem, size = 0x60000, scoped, tag = 'input window, operand 1, single buffered']
    #allocation3 [shape = 's32[1]{0}', space=sflag, size = 0x4, scoped, tag = 'scoped memory for seq_tagger_forward.1']
    #allocation4 [shape = 's32[1]{0}', space=sflag, size = 0x4, scoped, tag = 'scoped memory for seq_tagger_forward.1']
    #allocation5 [shape = 'u8[786432]{0}', space=vmem, size = 0xc0000, scoped, tag = 'input window, operand 2, single buffered']
    #allocation6 [shape = 's32[1]{0}', space=sflag, size = 0x4, scoped, tag = 'scoped memory for seq_tagger_forward.1']
    #allocation7 [shape = 'u8[786432]{0}', space=vmem, size = 0xc0000, scoped, tag = 'input window, operand 5, single buffered']
    #allocation8 [shape = 'u8[786432]{0}', space=vmem, size = 0xc0000, scoped, tag = 'input window, operand 6, single buffered']
    #allocation9 [shape = 's32[1]{0}', space=sflag, size = 0x4, scoped, tag = 'scoped memory for seq_tagger_forward.1']
    #allocation10 [shape = 'u8[131072]{0}', space=vmem, size = 0x20000, scoped, tag = 'input window, operand 9, single buffered']
    #allocation11 [shape = 'u8[4096]{0}', space=vmem, size = 0x1000, scoped, tag = 'output window, operand 0, single buffered']
    %16 = vsyncpa [#allocation3], 0
    %17 = vsyncpa [#allocation6], 0
    %18 = vsyncpa [#allocation9], 0
    %19 = vsyncpa [#allocation4], 0
    // Predicated region
    $region2: #{seq_tagger_forward.1} parent=1 // pred_check
      _
    $region3: #{seq_tagger_forward.1} parent=1 // pred_check_branch
      %21 = sbr.rel (0) target = $region5
    $region4: #{seq_tagger_forward.1} parent=1 // pred_region
      _
    $region5: #{seq_tagger_forward.1} parent=1 // pred_fallthru
      _
    // Predicated region
    $region6: #{seq_tagger_forward.1} parent=1 // pred_check
      _
    $region7: #{seq_tagger_forward.1} parent=1 // pred_check_branch
      %23 = sbr.rel (0) target = $region9
    $region8: #{seq_tagger_forward.1} parent=1 // pred_region
      %s25 = ssub.s32 12288, 12288
      %26 = vsyncadd [#allocation3], %s25
      %s27 = sshll.u32 [#allocation2], 4
      %s28 = int_to_ptr.vmem [resolvable:$true] %s27
      %33 = dma.hbm_to_vmem [thread:$0]  %s1, 12288, %s28, [#allocation3], 768, 768, 48
    $region9: #{seq_tagger_forward.1} parent=1 // pred_fallthru
      _
    // Predicated region
    $region10: #{seq_tagger_forward.1} parent=1 // pred_check
      _
    $region11: #{seq_tagger_forward.1} parent=1 // pred_check_branch
      %35 = sbr.rel (0) target = $region13
    $region12: #{seq_tagger_forward.1} parent=1 // pred_region
      %s37 = ssub.s32 24576, 24576
      %38 = vsyncadd [#allocation6], %s37
      %s39 = sshll.u32 [#allocation5], 4
      %s40 = int_to_ptr.vmem [resolvable:$true] %s39
      %45 = dma.hbm_to_vmem [thread:$0]  %s2, 24576, %s40, [#allocation6], 768, 768, 48
    $region13: #{seq_tagger_forward.1} parent=1 // pred_fallthru
      _
    // Predicated region
    $region14: #{seq_tagger_forward.1} parent=1 // pred_check
      _
    $region15: #{seq_tagger_forward.1} parent=1 // pred_check_branch
      %47 = sbr.rel (0) target = $region17
    $region16: #{seq_tagger_forward.1} parent=1 // pred_region
      _
    $region17: #{seq_tagger_forward.1} parent=1 // pred_fallthru
      _
    // Predicated region
    $region18: #{seq_tagger_forward.1} parent=1 // pred_check
      _
    $region19: #{seq_tagger_forward.1} parent=1 // pred_check_branch
      %49 = sbr.rel (0) target = $region21
    $region20: #{seq_tagger_forward.1} parent=1 // pred_region
      _
    $region21: #{seq_tagger_forward.1} parent=1 // pred_fallthru
      _
    // Predicated region
    $region22: #{seq_tagger_forward.1} parent=1 // pred_check
      _
    $region23: #{seq_tagger_forward.1} parent=1 // pred_check_branch
      %51 = sbr.rel (0) target = $region25
    $region24: #{seq_tagger_forward.1} parent=1 // pred_region
      %s53 = ssub.s32 24576, 24576
      %54 = vsyncadd [#allocation6], %s53
      %s55 = sshll.u32 [#allocation7], 4
      %s56 = int_to_ptr.vmem [resolvable:$true] %s55
      %61 = dma.hbm_to_vmem [thread:$0]  %s5, 24576, %s56, [#allocation6], 768, 768, 48
    $region25: #{seq_tagger_forward.1} parent=1 // pred_fallthru
      _
    // Predicated region
    $region26: #{seq_tagger_forward.1} parent=1 // pred_check
      _
    $region27: #{seq_tagger_forward.1} parent=1 // pred_check_branch
      %63 = sbr.rel (0) target = $region29
    $region28: #{seq_tagger_forward.1} parent=1 // pred_region
      %s65 = ssub.s32 24576, 24576
      %66 = vsyncadd [#allocation9], %s65
      %s67 = sshll.u32 [#allocation8], 4
      %s68 = int_to_ptr.vmem [resolvable:$true] %s67
      %73 = dma.hbm_to_vmem [thread:$0]  %s6, 24576, %s68, [#allocation9], 768, 768, 48
    $region29: #{seq_tagger_forward.1} parent=1 // pred_fallthru
      _
    // Predicated region
    $region30: #{seq_tagger_forward.1} parent=1 // pred_check
      _
    $region31: #{seq_tagger_forward.1} parent=1 // pred_check_branch
      %75 = sbr.rel (0) target = $region33
    $region32: #{seq_tagger_forward.1} parent=1 // pred_region
      _
    $region33: #{seq_tagger_forward.1} parent=1 // pred_fallthru
      _
    // Predicated region
    $region34: #{seq_tagger_forward.1} parent=1 // pred_check
      _
    $region35: #{seq_tagger_forward.1} parent=1 // pred_check_branch
      %77 = sbr.rel (0) target = $region37
    $region36: #{seq_tagger_forward.1} parent=1 // pred_region
      _
    $region37: #{seq_tagger_forward.1} parent=1 // pred_fallthru
      _
    // Predicated region
    $region38: #{seq_tagger_forward.1} parent=1 // pred_check
      _
    $region39: #{seq_tagger_forward.1} parent=1 // pred_check_branch
      %79 = sbr.rel (0) target = $region41
    $region40: #{seq_tagger_forward.1} parent=1 // pred_region
      %s81 = ssub.s32 4096, 4096
      %82 = vsyncadd [#allocation9], %s81
      %s83 = sshll.u32 [#allocation10], 4
      %s84 = int_to_ptr.vmem [resolvable:$true] %s83
      %89 = dma.hbm_to_vmem [thread:$0]  %s9, 4096, %s84, [#allocation9], 128, 128, 8
    $region41: #{seq_tagger_forward.1} parent=1 // pred_fallthru
      _
    // Predicated region
    $region42: #{seq_tagger_forward.1} parent=1 // pred_check
      _
    $region43: #{seq_tagger_forward.1} parent=1 // pred_check_branch
      %91 = sbr.rel (0) target = $region45
    $region44: #{seq_tagger_forward.1} parent=1 // pred_region
      _
    $region45: #{seq_tagger_forward.1} parent=1 // pred_fallthru
      _
    // Predicated region
    $region46: #{seq_tagger_forward.1} parent=1 // pred_check
      _
    $region47: #{seq_tagger_forward.1} parent=1 // pred_check_branch
      %93 = sbr.rel (0) target = $region49
    $region48: #{seq_tagger_forward.1} parent=1 // pred_region
      %94 = dma.done [#allocation3], 12288
    $region49: #{seq_tagger_forward.1} parent=1 // pred_fallthru
      _
    // Predicated region
    $region50: #{seq_tagger_forward.1} parent=1 // pred_check
      _
    $region51: #{seq_tagger_forward.1} parent=1 // pred_check_branch
      %96 = sbr.rel (0) target = $region53
    $region52: #{seq_tagger_forward.1} parent=1 // pred_region
      %97 = dma.done [#allocation6], 24576
    $region53: #{seq_tagger_forward.1} parent=1 // pred_fallthru
      _
    // Predicated region
    $region54: #{seq_tagger_forward.1} parent=1 // pred_check
      _
    $region55: #{seq_tagger_forward.1} parent=1 // pred_check_branch
      %99 = sbr.rel (0) target = $region57
    $region56: #{seq_tagger_forward.1} parent=1 // pred_region
      %100 = dma.done [#allocation6], 24576
    $region57: #{seq_tagger_forward.1} parent=1 // pred_fallthru
      _
    // Predicated region
    $region58: #{seq_tagger_forward.1} parent=1 // pred_check
      _
    $region59: #{seq_tagger_forward.1} parent=1 // pred_check_branch
      %102 = sbr.rel (0) target = $region61
    $region60: #{seq_tagger_forward.1} parent=1 // pred_region
      %103 = dma.done [#allocation9], 24576
    $region61: #{seq_tagger_forward.1} parent=1 // pred_fallthru
      _
    // Predicated region
    $region62: #{seq_tagger_forward.1} parent=1 // pred_check
      _
    $region63: #{seq_tagger_forward.1} parent=1 // pred_check_branch
      %105 = sbr.rel (0) target = $region65
    $region64: #{seq_tagger_forward.1} parent=1 // pred_region
      %106 = dma.done [#allocation9], 4096
    $region65: #{seq_tagger_forward.1} parent=1 // pred_fallthru
      _
    %v107 = vld [vmem:[%s0] sm:$0xff]
    %v108 = vld [vmem:[%s3] sm:$0x3f]
    %v109 = vld [vmem:[%s4] sm:$0x3f]
    %v110 = vld [vmem:[#allocation2] sm:$0xff]
    %v111 = vld [vmem:[#allocation2 + $0x8] sm:$0xff]
    %v112 = vld [vmem:[#allocation2 + $0x10] sm:$0xff]
    %v113 = vld [vmem:[#allocation2 + $0x18] sm:$0xff]
    %v114 = vld [vmem:[#allocation2 + $0x20] sm:$0xff]
    %v115 = vld [vmem:[#allocation2 + $0x28] sm:$0xff]
    %v116 = vld [vmem:[#allocation2 + $0x30] sm:$0xff]
    %v117 = vld [vmem:[#allocation2 + $0x38] sm:$0xff]
    %v118 = vld [vmem:[#allocation2 + $0x40] sm:$0xff]
    %v119 = vld [vmem:[#allocation2 + $0x48] sm:$0xff]
    %v120 = vld [vmem:[#allocation2 + $0x50] sm:$0xff]
    %v121 = vld [vmem:[#allocation2 + $0x58] sm:$0xff]
    %v122 = vld [vmem:[#allocation2 + $0x60] sm:$0xff]
    %v123 = vld [vmem:[#allocation2 + $0x68] sm:$0xff]
    %v124 = vld [vmem:[#allocation2 + $0x70] sm:$0xff]
    %v125 = vld [vmem:[#allocation2 + $0x78] sm:$0xff]
    %v126 = vld [vmem:[#allocation2 + $0x80] sm:$0xff]
    %v127 = vld [vmem:[#allocation2 + $0x88] sm:$0xff]
    %v128 = vld [vmem:[#allocation2 + $0x90] sm:$0xff]
    %v129 = vld [vmem:[#allocation2 + $0x98] sm:$0xff]
    %v130 = vld [vmem:[#allocation2 + $0xa0] sm:$0xff]
    %v131 = vld [vmem:[#allocation2 + $0xa8] sm:$0xff]
    %v132 = vld [vmem:[#allocation2 + $0xb0] sm:$0xff]
    %v133 = vld [vmem:[#allocation2 + $0xb8] sm:$0xff]
    %v134 = vld [vmem:[#allocation2 + $0xc0] sm:$0xff]
    %v135 = vld [vmem:[#allocation2 + $0xc8] sm:$0xff]
    %v136 = vld [vmem:[#allocation2 + $0xd0] sm:$0xff]
    %v137 = vld [vmem:[#allocation2 + $0xd8] sm:$0xff]
    %v138 = vld [vmem:[#allocation2 + $0xe0] sm:$0xff]
    %v139 = vld [vmem:[#allocation2 + $0xe8] sm:$0xff]
    %v140 = vld [vmem:[#allocation2 + $0xf0] sm:$0xff]
    %v141 = vld [vmem:[#allocation2 + $0xf8] sm:$0xff]
    %v142 = vld [vmem:[#allocation2 + $0x100] sm:$0xff]
    %v143 = vld [vmem:[#allocation2 + $0x108] sm:$0xff]
    %v144 = vld [vmem:[#allocation2 + $0x110] sm:$0xff]
    %v145 = vld [vmem:[#allocation2 + $0x118] sm:$0xff]
    %v146 = vld [vmem:[#allocation2 + $0x120] sm:$0xff]
    %v147 = vld [vmem:[#allocation2 + $0x128] sm:$0xff]
    %v148 = vld [vmem:[#allocation2 + $0x130] sm:$0xff]
    %v149 = vld [vmem:[#allocation2 + $0x138] sm:$0xff]
    %v150 = vld [vmem:[#allocation2 + $0x140] sm:$0xff]
    %v151 = vld [vmem:[#allocation2 + $0x148] sm:$0xff]
    %v152 = vld [vmem:[#allocation2 + $0x150] sm:$0xff]
    %v153 = vld [vmem:[#allocation2 + $0x158] sm:$0xff]
    %v154 = vld [vmem:[#allocation2 + $0x160] sm:$0xff]
    %v155 = vld [vmem:[#allocation2 + $0x168] sm:$0xff]
    %v156 = vld [vmem:[#allocation2 + $0x170] sm:$0xff]
    %v157 = vld [vmem:[#allocation2 + $0x178] sm:$0xff]
    %v158 = vld [vmem:[#allocation2 + $0x180] sm:$0xff]
    %v159 = vld [vmem:[#allocation2 + $0x188] sm:$0xff]
    %v160 = vld [vmem:[#allocation2 + $0x190] sm:$0xff]
    %v161 = vld [vmem:[#allocation2 + $0x198] sm:$0xff]
    %v162 = vld [vmem:[#allocation2 + $0x1a0] sm:$0xff]
    %v163 = vld [vmem:[#allocation2 + $0x1a8] sm:$0xff]
    %v164 = vld [vmem:[#allocation2 + $0x1b0] sm:$0xff]
    %v165 = vld [vmem:[#allocation2 + $0x1b8] sm:$0xff]
    %v166 = vld [vmem:[#allocation2 + $0x1c0] sm:$0xff]
    %v167 = vld [vmem:[#allocation2 + $0x1c8] sm:$0xff]
    %v168 = vld [vmem:[#allocation2 + $0x1d0] sm:$0xff]
    %v169 = vld [vmem:[#allocation2 + $0x1d8] sm:$0xff]
    %v170 = vld [vmem:[#allocation2 + $0x1e0] sm:$0xff]
    %v171 = vld [vmem:[#allocation2 + $0x1e8] sm:$0xff]
    %v172 = vld [vmem:[#allocation2 + $0x1f0] sm:$0xff]
    %v173 = vld [vmem:[#allocation2 + $0x1f8] sm:$0xff]
    %v174 = vld [vmem:[#allocation2 + $0x200] sm:$0xff]
    %v175 = vld [vmem:[#allocation2 + $0x208] sm:$0xff]
    %v176 = vld [vmem:[#allocation2 + $0x210] sm:$0xff]
    %v177 = vld [vmem:[#allocation2 + $0x218] sm:$0xff]
    %v178 = vld [vmem:[#allocation2 + $0x220] sm:$0xff]
    %v179 = vld [vmem:[#allocation2 + $0x228] sm:$0xff]
    %v180 = vld [vmem:[#allocation2 + $0x230] sm:$0xff]
    %v181 = vld [vmem:[#allocation2 + $0x238] sm:$0xff]
    %v182 = vld [vmem:[#allocation2 + $0x240] sm:$0xff]
    %v183 = vld [vmem:[#allocation2 + $0x248] sm:$0xff]
    %v184 = vld [vmem:[#allocation2 + $0x250] sm:$0xff]
    %v185 = vld [vmem:[#allocation2 + $0x258] sm:$0xff]
    %v186 = vld [vmem:[#allocation2 + $0x260] sm:$0xff]
    %v187 = vld [vmem:[#allocation2 + $0x268] sm:$0xff]
    %v188 = vld [vmem:[#allocation2 + $0x270] sm:$0xff]
    %v189 = vld [vmem:[#allocation2 + $0x278] sm:$0xff]
    %v190 = vld [vmem:[#allocation2 + $0x280] sm:$0xff]
    %v191 = vld [vmem:[#allocation2 + $0x288] sm:$0xff]
    %v192 = vld [vmem:[#allocation2 + $0x290] sm:$0xff]
    %v193 = vld [vmem:[#allocation2 + $0x298] sm:$0xff]
    %v194 = vld [vmem:[#allocation2 + $0x2a0] sm:$0xff]
    %v195 = vld [vmem:[#allocation2 + $0x2a8] sm:$0xff]
    %v196 = vld [vmem:[#allocation2 + $0x2b0] sm:$0xff]
    %v197 = vld [vmem:[#allocation2 + $0x2b8] sm:$0xff]
    %v198 = vld [vmem:[#allocation2 + $0x2c0] sm:$0xff]
    %v199 = vld [vmem:[#allocation2 + $0x2c8] sm:$0xff]
    %v200 = vld [vmem:[#allocation2 + $0x2d0] sm:$0xff]
    %v201 = vld [vmem:[#allocation2 + $0x2d8] sm:$0xff]
    %v202 = vld [vmem:[#allocation2 + $0x2e0] sm:$0xff]
    %v203 = vld [vmem:[#allocation2 + $0x2e8] sm:$0xff]
    %v204 = vld [vmem:[#allocation2 + $0x2f0] sm:$0xff]
    %v205 = vld [vmem:[#allocation2 + $0x2f8] sm:$0xff]
    %v207 = vlaneseq
    %v208 = vshrl.u32 %v207, 7
    %v209 = vsub.s32 0, %v208
    %v210 = vrot.slane %v108, %v209
    %v211 = vlaneseq
    %v212 = vshrl.u32 %v211, 7
    %v213 = vsub.s32 1, %v212
    %v214 = vrot.slane %v108, %v213
    %v215 = vlaneseq
    %v216 = vshrl.u32 %v215, 7
    %v217 = vsub.s32 2, %v216
    %v218 = vrot.slane %v108, %v217
    %v219 = vlaneseq
    %v220 = vshrl.u32 %v219, 7
    %v221 = vsub.s32 3, %v220
    %v222 = vrot.slane %v108, %v221
    %v223 = vlaneseq
    %v224 = vshrl.u32 %v223, 7
    %v225 = vsub.s32 4, %v224
    %v226 = vrot.slane %v108, %v225
    %v227 = vlaneseq
    %v228 = vshrl.u32 %v227, 7
    %v229 = vsub.s32 5, %v228
    %v230 = vrot.slane %v108, %v229
    %237 = vmatprep.subr.mxu0 %v111
    %238 = vmatpush1.msra.mxu0 %v110
    %239 = vmatprep.subr.mxu0 %v117
    %240 = vmatpush1.msra.mxu0 %v116
    %241 = vmatprep.subr.mxu0 %v123
    %242 = vmatpush1.msra.mxu0 %v122
    %243 = vmatprep.subr.mxu0 %v129
    %244 = vmatpush1.msra.mxu0 %v128
    %245 = vmatprep.subr.mxu0 %v135
    %246 = vmatpush1.msra.mxu0 %v134
    %247 = vmatprep.subr.mxu0 %v141
    %248 = vmatpush1.msra.mxu0 %v140
    %249 = vmatprep.subr.mxu0 %v147
    %250 = vmatpush1.msra.mxu0 %v146
    %251 = vmatprep.subr.mxu0 %v153
    %252 = vmatpush1.msra.mxu0 %v152
    %253 = vmatprep.subr.mxu0 %v159
    %254 = vmatpush1.msra.mxu0 %v158
    %255 = vmatprep.subr.mxu0 %v165
    %256 = vmatpush1.msra.mxu0 %v164
    %257 = vmatprep.subr.mxu0 %v171
    %258 = vmatpush1.msra.mxu0 %v170
    %259 = vmatprep.subr.mxu0 %v177
    %260 = vmatpush1.msra.mxu0 %v176
    %261 = vmatprep.subr.mxu0 %v183
    %262 = vmatpush1.msra.mxu0 %v182
    %263 = vmatprep.subr.mxu0 %v189
    %264 = vmatpush1.msra.mxu0 %v188
    %265 = vmatprep.subr.mxu0 %v195
    %266 = vmatpush1.msra.mxu0 %v194
    %267 = vmatprep.subr.mxu0 %v201
    %268 = vmatpush1.msra.mxu0 %v200
    %269 = vmatprep.subr.mxu0 0.0
    %270 = vmatpush1.msra.mxu0 0.0
    %271 = vmatprep.subr.mxu0 0.0
    %272 = vmatpush1.msra.mxu0 0.0
    %273 = vmatprep.subr.mxu0 0.0
    %274 = vmatpush1.msra.mxu0 0.0
    %275 = vmatprep.subr.mxu0 0.0
    %276 = vmatpush1.msra.mxu0 0.0
    %277 = vmatprep.subr.mxu0 0.0
    %278 = vmatpush1.msra.mxu0 0.0
    %279 = vmatprep.subr.mxu0 0.0
    %280 = vmatpush1.msra.mxu0 0.0
    %281 = vmatprep.subr.mxu0 0.0
    %282 = vmatpush1.msra.mxu0 0.0
    %283 = vmatprep.subr.mxu0 0.0
    %284 = vmatpush1.msra.mxu0 0.0
    %285 = vmatprep.subr.mxu0 0.0
    %286 = vmatpush1.msra.mxu0 0.0
    %287 = vmatprep.subr.mxu0 0.0
    %288 = vmatpush1.msra.mxu0 0.0
    %289 = vmatprep.subr.mxu0 0.0
    %290 = vmatpush1.msra.mxu0 0.0
    %291 = vmatprep.subr.mxu0 0.0
    %292 = vmatpush1.msra.mxu0 0.0
    %293 = vmatprep.subr.mxu0 0.0
    %294 = vmatpush1.msra.mxu0 0.0
    %295 = vmatprep.subr.mxu0 0.0
    %296 = vmatpush1.msra.mxu0 0.0
    %297 = vmatprep.subr.mxu0 0.0
    %298 = vmatpush1.msra.mxu0 0.0
    %299 = vmatprep.subr.mxu0 0.0
    %300 = vmatpush1.msra.mxu0 0.0
    %301 = vmatprep.mubr.f32.mxu0 0.0
    %302 = vmatmul.mubr.f32.gmra.mrb[0].mxu0 %v107
    %v303 = vpop.f32.mrb[0].mxu0
    %v304 = vadd.f32 %v210, %v303
    %v305 = vpop.f32.mrb[0].mxu0
    %v306 = vadd.f32 %v214, %v305
    %307 = vdwg.mxu0
    %308 = vmatprep.subr.mxu0 %v113
    %309 = vmatpush1.msra.mxu0 %v112
    %310 = vmatprep.subr.mxu0 %v119
    %311 = vmatpush1.msra.mxu0 %v118
    %312 = vmatprep.subr.mxu0 %v125
    %313 = vmatpush1.msra.mxu0 %v124
    %314 = vmatprep.subr.mxu0 %v131
    %315 = vmatpush1.msra.mxu0 %v130
    %316 = vmatprep.subr.mxu0 %v137
    %317 = vmatpush1.msra.mxu0 %v136
    %318 = vmatprep.subr.mxu0 %v143
    %319 = vmatpush1.msra.mxu0 %v142
    %320 = vmatprep.subr.mxu0 %v149
    %321 = vmatpush1.msra.mxu0 %v148
    %322 = vmatprep.subr.mxu0 %v155
    %323 = vmatpush1.msra.mxu0 %v154
    %324 = vmatprep.subr.mxu0 %v161
    %325 = vmatpush1.msra.mxu0 %v160
    %326 = vmatprep.subr.mxu0 %v167
    %327 = vmatpush1.msra.mxu0 %v166
    %328 = vmatprep.subr.mxu0 %v173
    %329 = vmatpush1.msra.mxu0 %v172
    %330 = vmatprep.subr.mxu0 %v179
    %331 = vmatpush1.msra.mxu0 %v178
    %332 = vmatprep.subr.mxu0 %v185
    %333 = vmatpush1.msra.mxu0 %v184
    %334 = vmatprep.subr.mxu0 %v191
    %335 = vmatpush1.msra.mxu0 %v190
    %336 = vmatprep.subr.mxu0 %v197
    %337 = vmatpush1.msra.mxu0 %v196
    %338 = vmatprep.subr.mxu0 %v203
    %339 = vmatpush1.msra.mxu0 %v202
    %340 = vmatprep.subr.mxu0 0.0
    %341 = vmatpush1.msra.mxu0 0.0
    %342 = vmatprep.subr.mxu0 0.0
    %343 = vmatpush1.msra.mxu0 0.0
    %344 = vmatprep.subr.mxu0 0.0
    %345 = vmatpush1.msra.mxu0 0.0
    %346 = vmatprep.subr.mxu0 0.0
    %347 = vmatpush1.msra.mxu0 0.0
    %348 = vmatprep.subr.mxu0 0.0
    %349 = vmatpush1.msra.mxu0 0.0
    %350 = vmatprep.subr.mxu0 0.0
    %351 = vmatpush1.msra.mxu0 0.0
    %352 = vmatprep.subr.mxu0 0.0
    %353 = vmatpush1.msra.mxu0 0.0
    %354 = vmatprep.subr.mxu0 0.0
    %355 = vmatpush1.msra.mxu0 0.0
    %356 = vmatprep.subr.mxu0 0.0
    %357 = vmatpush1.msra.mxu0 0.0
    %358 = vmatprep.subr.mxu0 0.0
    %359 = vmatpush1.msra.mxu0 0.0
    %360 = vmatprep.subr.mxu0 0.0
    %361 = vmatpush1.msra.mxu0 0.0
    %362 = vmatprep.subr.mxu0 0.0
    %363 = vmatpush1.msra.mxu0 0.0
    %364 = vmatprep.subr.mxu0 0.0
    %365 = vmatpush1.msra.mxu0 0.0
    %366 = vmatprep.subr.mxu0 0.0
    %367 = vmatpush1.msra.mxu0 0.0
    %368 = vmatprep.subr.mxu0 0.0
    %369 = vmatpush1.msra.mxu0 0.0
    %370 = vmatprep.subr.mxu0 0.0
    %371 = vmatpush1.msra.mxu0 0.0
    %372 = vmatprep.mubr.f32.mxu0 0.0
    %373 = vmatmul.mubr.f32.gmra.mrb[0].mxu0 %v107
    %v374 = vpop.f32.mrb[0].mxu0
    %v375 = vadd.f32 %v218, %v374
    %v376 = vpop.f32.mrb[0].mxu0
    %v377 = vadd.f32 %v222, %v376
    %378 = vdwg.mxu0
    %379 = vmatprep.subr.mxu0 %v115
    %380 = vmatpush1.msra.mxu0 %v114
    %381 = vmatprep.subr.mxu0 %v121
    %382 = vmatpush1.msra.mxu0 %v120
    %383 = vmatprep.subr.mxu0 %v127
    %384 = vmatpush1.msra.mxu0 %v126
    %385 = vmatprep.subr.mxu0 %v133
    %386 = vmatpush1.msra.mxu0 %v132
    %387 = vmatprep.subr.mxu0 %v139
    %388 = vmatpush1.msra.mxu0 %v138
    %389 = vmatprep.subr.mxu0 %v145
    %390 = vmatpush1.msra.mxu0 %v144
    %391 = vmatprep.subr.mxu0 %v151
    %392 = vmatpush1.msra.mxu0 %v150
    %393 = vmatprep.subr.mxu0 %v157
    %394 = vmatpush1.msra.mxu0 %v156
    %395 = vmatprep.subr.mxu0 %v163
    %396 = vmatpush1.msra.mxu0 %v162
    %397 = vmatprep.subr.mxu0 %v169
    %398 = vmatpush1.msra.mxu0 %v168
    %399 = vmatprep.subr.mxu0 %v175
    %400 = vmatpush1.msra.mxu0 %v174
    %401 = vmatprep.subr.mxu0 %v181
    %402 = vmatpush1.msra.mxu0 %v180
    %403 = vmatprep.subr.mxu0 %v187
    %404 = vmatpush1.msra.mxu0 %v186
    %405 = vmatprep.subr.mxu0 %v193
    %406 = vmatpush1.msra.mxu0 %v192
    %407 = vmatprep.subr.mxu0 %v199
    %408 = vmatpush1.msra.mxu0 %v198
    %409 = vmatprep.subr.mxu0 %v205
    %410 = vmatpush1.msra.mxu0 %v204
    %411 = vmatprep.subr.mxu0 0.0
    %412 = vmatpush1.msra.mxu0 0.0
    %413 = vmatprep.subr.mxu0 0.0
    %414 = vmatpush1.msra.mxu0 0.0
    %415 = vmatprep.subr.mxu0 0.0
    %416 = vmatpush1.msra.mxu0 0.0
    %417 = vmatprep.subr.mxu0 0.0
    %418 = vmatpush1.msra.mxu0 0.0
    %419 = vmatprep.subr.mxu0 0.0
    %420 = vmatpush1.msra.mxu0 0.0
    %421 = vmatprep.subr.mxu0 0.0
    %422 = vmatpush1.msra.mxu0 0.0
    %423 = vmatprep.subr.mxu0 0.0
    %424 = vmatpush1.msra.mxu0 0.0
    %425 = vmatprep.subr.mxu0 0.0
    %426 = vmatpush1.msra.mxu0 0.0
    %427 = vmatprep.subr.mxu0 0.0
    %428 = vmatpush1.msra.mxu0 0.0
    %429 = vmatprep.subr.mxu0 0.0
    %430 = vmatpush1.msra.mxu0 0.0
    %431 = vmatprep.subr.mxu0 0.0
    %432 = vmatpush1.msra.mxu0 0.0
    %433 = vmatprep.subr.mxu0 0.0
    %434 = vmatpush1.msra.mxu0 0.0
    %435 = vmatprep.subr.mxu0 0.0
    %436 = vmatpush1.msra.mxu0 0.0
    %437 = vmatprep.subr.mxu0 0.0
    %438 = vmatpush1.msra.mxu0 0.0
    %439 = vmatprep.subr.mxu0 0.0
    %440 = vmatpush1.msra.mxu0 0.0
    %441 = vmatprep.subr.mxu0 0.0
    %442 = vmatpush1.msra.mxu0 0.0
    %443 = vmatprep.mubr.f32.mxu0 0.0
    %444 = vmatmul.mubr.f32.gmra.mrb[0].mxu0 %v107
    %v445 = vpop.f32.mrb[0].mxu0
    %v446 = vadd.f32 %v226, %v445
    %v447 = vpop.f32.mrb[0].mxu0
    %v448 = vadd.f32 %v230, %v447
    %449 = vdwg.mxu0
    %v456 = vrot.slane %v304, 7
    %v457 = vrot.slane %v306, 7
    %v458 = vrot.slane %v375, 7
    %v459 = vrot.slane %v377, 7
    %v460 = vrot.slane %v446, 7
    %v461 = vrot.slane %v448, 7
    %v468 = vrot.slane %v304, 5
    %v469 = vrot.slane %v306, 5
    %v470 = vrot.slane %v375, 5
    %v471 = vrot.slane %v377, 5
    %v472 = vrot.slane %v446, 5
    %v473 = vrot.slane %v448, 5
    %v480 = vrot.slane %v304, 3
    %v481 = vrot.slane %v306, 3
    %v482 = vrot.slane %v375, 3
    %v483 = vrot.slane %v377, 3
    %v484 = vrot.slane %v446, 3
    %v485 = vrot.slane %v448, 3
    %v492 = vrot.slane %v304, 1
    %v493 = vrot.slane %v306, 1
    %v494 = vrot.slane %v375, 1
    %v495 = vrot.slane %v377, 1
    %v496 = vrot.slane %v446, 1
    %v497 = vrot.slane %v448, 1
    %vm504 = vcmask 1040384
    %v505 = vsel %vm504, %v456, %v468
    %v506 = vsel %vm504, %v457, %v469
    %v507 = vsel %vm504, %v458, %v470
    %v508 = vsel %vm504, %v459, %v471
    %v509 = vsel %vm504, %v460, %v472
    %v510 = vsel %vm504, %v461, %v473
    %vm511 = vcmask 1041408
    %v512 = vsel %vm511, %v505, %v480
    %v513 = vsel %vm511, %v506, %v481
    %v514 = vsel %vm511, %v507, %v482
    %v515 = vsel %vm511, %v508, %v483
    %v516 = vsel %vm511, %v509, %v484
    %v517 = vsel %vm511, %v510, %v485
    %vm518 = vcmask 1042432
    %v519 = vsel %vm518, %v512, %v492
    %v520 = vsel %vm518, %v513, %v493
    %v521 = vsel %vm518, %v514, %v494
    %v522 = vsel %vm518, %v515, %v495
    %v523 = vsel %vm518, %v516, %v496
    %v524 = vsel %vm518, %v517, %v497
    %vm525 = vcmask 1043456
    %v526 = vsel %vm525, %v519, %v456
    %v527 = vsel %vm525, %v520, %v457
    %v528 = vsel %vm525, %v521, %v458
    %v529 = vsel %vm525, %v522, %v459
    %v530 = vsel %vm525, %v523, %v460
    %v531 = vsel %vm525, %v524, %v461
    %vm532 = vcmask 1044480
    %v533 = vsel %vm532, %v526, %v468
    %v534 = vsel %vm532, %v527, %v469
    %v535 = vsel %vm532, %v528, %v470
    %v536 = vsel %vm532, %v529, %v471
    %v537 = vsel %vm532, %v530, %v472
    %v538 = vsel %vm532, %v531, %v473
    %vm539 = vcmask 1045504
    %v540 = vsel %vm539, %v533, %v480
    %v541 = vsel %vm539, %v534, %v481
    %v542 = vsel %vm539, %v535, %v482
    %v543 = vsel %vm539, %v536, %v483
    %v544 = vsel %vm539, %v537, %v484
    %v545 = vsel %vm539, %v538, %v485
    %vm546 = vcmask 1046528
    %v547 = vsel %vm546, %v540, %v492
    %v548 = vsel %vm546, %v541, %v493
    %v549 = vsel %vm546, %v542, %v494
    %v550 = vsel %vm546, %v543, %v495
    %v551 = vsel %vm546, %v544, %v496
    %v552 = vsel %vm546, %v545, %v497
    %v553 = vlaneseq
    %v554 = vand.u32 %v553, 127
    %v555 = vadd.s32 %v554, 128
    %v556 = vadd.s32 %v554, 256
    %v557 = vadd.s32 %v554, 384
    %v558 = vadd.s32 %v554, 512
    %v559 = vadd.s32 %v554, 640
    %vm560 = vcmp.lt.s32.totalorder %v554, 0
    %v561 = vsub.s32 0, %v554
    %v562 = vsel %vm560, %v561, %v554
    %v563 = vshrl.u32 %v562, 8
    %v564 = vand.u32 %v562, 255
    %v565 = vsub.s32 0, %v564
    %v566 = vsel %vm560, %v565, %v564
    %vm567 = vcmp.lt.s32.totalorder %v555, 0
    %v568 = vsub.s32 0, %v555
    %v569 = vsel %vm567, %v568, %v555
    %v570 = vshrl.u32 %v569, 8
    %v571 = vand.u32 %v569, 255
    %v572 = vsub.s32 0, %v571
    %v573 = vsel %vm567, %v572, %v571
    %vm574 = vcmp.lt.s32.totalorder %v556, 0
    %v575 = vsub.s32 0, %v556
    %v576 = vsel %vm574, %v575, %v556
    %v577 = vshrl.u32 %v576, 8
    %v578 = vand.u32 %v576, 255
    %v579 = vsub.s32 0, %v578
    %v580 = vsel %vm574, %v579, %v578
    %vm581 = vcmp.lt.s32.totalorder %v557, 0
    %v582 = vsub.s32 0, %v557
    %v583 = vsel %vm581, %v582, %v557
    %v584 = vshrl.u32 %v583, 8
    %v585 = vand.u32 %v583, 255
    %v586 = vsub.s32 0, %v585
    %v587 = vsel %vm581, %v586, %v585
    %vm588 = vcmp.lt.s32.totalorder %v558, 0
    %v589 = vsub.s32 0, %v558
    %v590 = vsel %vm588, %v589, %v558
    %v591 = vshrl.u32 %v590, 8
    %v592 = vand.u32 %v590, 255
    %v593 = vsub.s32 0, %v592
    %v594 = vsel %vm588, %v593, %v592
    %vm595 = vcmp.lt.s32.totalorder %v559, 0
    %v596 = vsub.s32 0, %v559
    %v597 = vsel %vm595, %v596, %v559
    %v598 = vshrl.u32 %v597, 8
    %v599 = vand.u32 %v597, 255
    %v600 = vsub.s32 0, %v599
    %v601 = vsel %vm595, %v600, %v599
    %vm602 = vcmp.ne.s32.totalorder %v566, 0
    %vm603 = vcmp.ne.s32.totalorder %v573, 0
    %vm604 = vcmp.ne.s32.totalorder %v580, 0
    %vm605 = vcmp.ne.s32.totalorder %v587, 0
    %vm606 = vcmp.ne.s32.totalorder %v594, 0
    %vm607 = vcmp.ne.s32.totalorder %v601, 0
    %vm608 = vcmp.lt.s32.totalorder %v566, 0
    %vm609 = vcmp.lt.s32.totalorder %v573, 0
    %vm610 = vcmp.lt.s32.totalorder %v580, 0
    %vm611 = vcmp.lt.s32.totalorder %v587, 0
    %vm612 = vcmp.lt.s32.totalorder %v594, 0
    %vm613 = vcmp.lt.s32.totalorder %v601, 0
    %vm614 = vmand %vm608, %vm602
    %vm615 = vmand %vm609, %vm603
    %vm616 = vmand %vm610, %vm604
    %vm617 = vmand %vm611, %vm605
    %vm618 = vmand %vm612, %vm606
    %vm619 = vmand %vm613, %vm607
    %v620 = vadd.s32 %v566, 256
    %v621 = vadd.s32 %v573, 256
    %v622 = vadd.s32 %v580, 256
    %v623 = vadd.s32 %v587, 256
    %v624 = vadd.s32 %v594, 256
    %v625 = vadd.s32 %v601, 256
    %v626 = vsel %vm614, %v620, %v566
    %v627 = vsel %vm615, %v621, %v573
    %v628 = vsel %vm616, %v622, %v580
    %v629 = vsel %vm617, %v623, %v587
    %v630 = vsel %vm618, %v624, %v594
    %v631 = vsel %vm619, %v625, %v601
    %vm632 = vcmp.lt.s32.totalorder %v626, 128
    %vm633 = vcmp.lt.s32.totalorder %v627, 128
    %vm634 = vcmp.lt.s32.totalorder %v628, 128
    %vm635 = vcmp.lt.s32.totalorder %v629, 128
    %vm636 = vcmp.lt.s32.totalorder %v630, 128
    %vm637 = vcmp.lt.s32.totalorder %v631, 128
    %v638 = vsel %vm632, 1, 0
    %v639 = vsel %vm633, 1, 0
    %v640 = vsel %vm634, 1, 0
    %v641 = vsel %vm635, 1, 0
    %v642 = vsel %vm636, 1, 0
    %v643 = vsel %vm637, 1, 0
    %vm644 = vcmp.eq.s32.totalorder %v638, 1
    %vm645 = vcmp.eq.s32.totalorder %v639, 1
    %vm646 = vcmp.eq.s32.totalorder %v640, 1
    %vm647 = vcmp.eq.s32.totalorder %v641, 1
    %vm648 = vcmp.eq.s32.totalorder %v642, 1
    %vm649 = vcmp.eq.s32.totalorder %v643, 1
    %v650 = vsel %vm644, %v304, %v547
    %v651 = vsel %vm645, %v306, %v548
    %v652 = vsel %vm646, %v375, %v549
    %v653 = vsel %vm647, %v377, %v550
    %v654 = vsel %vm648, %v446, %v551
    %v655 = vsel %vm649, %v448, %v552
    %v656 = vld [vmem:[#allocation5] sm:$0xff]
    %v657 = vld [vmem:[#allocation5 + $0x8] sm:$0xff]
    %v658 = vld [vmem:[#allocation5 + $0x10] sm:$0xff]
    %v659 = vld [vmem:[#allocation5 + $0x18] sm:$0xff]
    %v660 = vld [vmem:[#allocation5 + $0x20] sm:$0xff]
    %v661 = vld [vmem:[#allocation5 + $0x28] sm:$0xff]
    %v662 = vld [vmem:[#allocation5 + $0x30] sm:$0xff]
    %v663 = vld [vmem:[#allocation5 + $0x38] sm:$0xff]
    %v664 = vld [vmem:[#allocation5 + $0x40] sm:$0xff]
    %v665 = vld [vmem:[#allocation5 + $0x48] sm:$0xff]
    %v666 = vld [vmem:[#allocation5 + $0x50] sm:$0xff]
    %v667 = vld [vmem:[#allocation5 + $0x58] sm:$0xff]
    %v668 = vld [vmem:[#allocation5 + $0x60] sm:$0xff]
    %v669 = vld [vmem:[#allocation5 + $0x68] sm:$0xff]
    %v670 = vld [vmem:[#allocation5 + $0x70] sm:$0xff]
    %v671 = vld [vmem:[#allocation5 + $0x78] sm:$0xff]
    %v672 = vld [vmem:[#allocation5 + $0x80] sm:$0xff]
    %v673 = vld [vmem:[#allocation5 + $0x88] sm:$0xff]
    %v674 = vld [vmem:[#allocation5 + $0x90] sm:$0xff]
    %v675 = vld [vmem:[#allocation5 + $0x98] sm:$0xff]
    %v676 = vld [vmem:[#allocation5 + $0xa0] sm:$0xff]
    %v677 = vld [vmem:[#allocation5 + $0xa8] sm:$0xff]
    %v678 = vld [vmem:[#allocation5 + $0xb0] sm:$0xff]
    %v679 = vld [vmem:[#allocation5 + $0xb8] sm:$0xff]
    %v680 = vld [vmem:[#allocation5 + $0xc0] sm:$0xff]
    %v681 = vld [vmem:[#allocation5 + $0xc8] sm:$0xff]
    %v682 = vld [vmem:[#allocation5 + $0xd0] sm:$0xff]
    %v683 = vld [vmem:[#allocation5 + $0xd8] sm:$0xff]
    %v684 = vld [vmem:[#allocation5 + $0xe0] sm:$0xff]
    %v685 = vld [vmem:[#allocation5 + $0xe8] sm:$0xff]
    %v686 = vld [vmem:[#allocation5 + $0xf0] sm:$0xff]
    %v687 = vld [vmem:[#allocation5 + $0xf8] sm:$0xff]
    %v688 = vld [vmem:[#allocation5 + $0x100] sm:$0xff]
    %v689 = vld [vmem:[#allocation5 + $0x108] sm:$0xff]
    %v690 = vld [vmem:[#allocation5 + $0x110] sm:$0xff]
    %v691 = vld [vmem:[#allocation5 + $0x118] sm:$0xff]
    %v692 = vld [vmem:[#allocation5 + $0x120] sm:$0xff]
    %v693 = vld [vmem:[#allocation5 + $0x128] sm:$0xff]
    %v694 = vld [vmem:[#allocation5 + $0x130] sm:$0xff]
    %v695 = vld [vmem:[#allocation5 + $0x138] sm:$0xff]
    %v696 = vld [vmem:[#allocation5 + $0x140] sm:$0xff]
    %v697 = vld [vmem:[#allocation5 + $0x148] sm:$0xff]
    %v698 = vld [vmem:[#allocation5 + $0x150] sm:$0xff]
    %v699 = vld [vmem:[#allocation5 + $0x158] sm:$0xff]
    %v700 = vld [vmem:[#allocation5 + $0x160] sm:$0xff]
    %v701 = vld [vmem:[#allocation5 + $0x168] sm:$0xff]
    %v702 = vld [vmem:[#allocation5 + $0x170] sm:$0xff]
    %v703 = vld [vmem:[#allocation5 + $0x178] sm:$0xff]
    %v704 = vld [vmem:[#allocation5 + $0x180] sm:$0xff]
    %v705 = vld [vmem:[#allocation5 + $0x188] sm:$0xff]
    %v706 = vld [vmem:[#allocation5 + $0x190] sm:$0xff]
    %v707 = vld [vmem:[#allocation5 + $0x198] sm:$0xff]
    %v708 = vld [vmem:[#allocation5 + $0x1a0] sm:$0xff]
    %v709 = vld [vmem:[#allocation5 + $0x1a8] sm:$0xff]
    %v710 = vld [vmem:[#allocation5 + $0x1b0] sm:$0xff]
    %v711 = vld [vmem:[#allocation5 + $0x1b8] sm:$0xff]
    %v712 = vld [vmem:[#allocation5 + $0x1c0] sm:$0xff]
    %v713 = vld [vmem:[#allocation5 + $0x1c8] sm:$0xff]
    %v714 = vld [vmem:[#allocation5 + $0x1d0] sm:$0xff]
    %v715 = vld [vmem:[#allocation5 + $0x1d8] sm:$0xff]
    %v716 = vld [vmem:[#allocation5 + $0x1e0] sm:$0xff]
    %v717 = vld [vmem:[#allocation5 + $0x1e8] sm:$0xff]
    %v718 = vld [vmem:[#allocation5 + $0x1f0] sm:$0xff]
    %v719 = vld [vmem:[#allocation5 + $0x1f8] sm:$0xff]
    %v720 = vld [vmem:[#allocation5 + $0x200] sm:$0xff]
    %v721 = vld [vmem:[#allocation5 + $0x208] sm:$0xff]
    %v722 = vld [vmem:[#allocation5 + $0x210] sm:$0xff]
    %v723 = vld [vmem:[#allocation5 + $0x218] sm:$0xff]
    %v724 = vld [vmem:[#allocation5 + $0x220] sm:$0xff]
    %v725 = vld [vmem:[#allocation5 + $0x228] sm:$0xff]
    %v726 = vld [vmem:[#allocation5 + $0x230] sm:$0xff]
    %v727 = vld [vmem:[#allocation5 + $0x238] sm:$0xff]
    %v728 = vld [vmem:[#allocation5 + $0x240] sm:$0xff]
    %v729 = vld [vmem:[#allocation5 + $0x248] sm:$0xff]
    %v730 = vld [vmem:[#allocation5 + $0x250] sm:$0xff]
    %v731 = vld [vmem:[#allocation5 + $0x258] sm:$0xff]
    %v732 = vld [vmem:[#allocation5 + $0x260] sm:$0xff]
    %v733 = vld [vmem:[#allocation5 + $0x268] sm:$0xff]
    %v734 = vld [vmem:[#allocation5 + $0x270] sm:$0xff]
    %v735 = vld [vmem:[#allocation5 + $0x278] sm:$0xff]
    %v736 = vld [vmem:[#allocation5 + $0x280] sm:$0xff]
    %v737 = vld [vmem:[#allocation5 + $0x288] sm:$0xff]
    %v738 = vld [vmem:[#allocation5 + $0x290] sm:$0xff]
    %v739 = vld [vmem:[#allocation5 + $0x298] sm:$0xff]
    %v740 = vld [vmem:[#allocation5 + $0x2a0] sm:$0xff]
    %v741 = vld [vmem:[#allocation5 + $0x2a8] sm:$0xff]
    %v742 = vld [vmem:[#allocation5 + $0x2b0] sm:$0xff]
    %v743 = vld [vmem:[#allocation5 + $0x2b8] sm:$0xff]
    %v744 = vld [vmem:[#allocation5 + $0x2c0] sm:$0xff]
    %v745 = vld [vmem:[#allocation5 + $0x2c8] sm:$0xff]
    %v746 = vld [vmem:[#allocation5 + $0x2d0] sm:$0xff]
    %v747 = vld [vmem:[#allocation5 + $0x2d8] sm:$0xff]
    %v748 = vld [vmem:[#allocation5 + $0x2e0] sm:$0xff]
    %v749 = vld [vmem:[#allocation5 + $0x2e8] sm:$0xff]
    %v750 = vld [vmem:[#allocation5 + $0x2f0] sm:$0xff]
    %v751 = vld [vmem:[#allocation5 + $0x2f8] sm:$0xff]
    %v752 = vld [vmem:[#allocation5 + $0x300] sm:$0xff]
    %v753 = vld [vmem:[#allocation5 + $0x308] sm:$0xff]
    %v754 = vld [vmem:[#allocation5 + $0x310] sm:$0xff]
    %v755 = vld [vmem:[#allocation5 + $0x318] sm:$0xff]
    %v756 = vld [vmem:[#allocation5 + $0x320] sm:$0xff]
    %v757 = vld [vmem:[#allocation5 + $0x328] sm:$0xff]
    %v758 = vld [vmem:[#allocation5 + $0x330] sm:$0xff]
    %v759 = vld [vmem:[#allocation5 + $0x338] sm:$0xff]
    %v760 = vld [vmem:[#allocation5 + $0x340] sm:$0xff]
    %v761 = vld [vmem:[#allocation5 + $0x348] sm:$0xff]
    %v762 = vld [vmem:[#allocation5 + $0x350] sm:$0xff]
    %v763 = vld [vmem:[#allocation5 + $0x358] sm:$0xff]
    %v764 = vld [vmem:[#allocation5 + $0x360] sm:$0xff]
    %v765 = vld [vmem:[#allocation5 + $0x368] sm:$0xff]
    %v766 = vld [vmem:[#allocation5 + $0x370] sm:$0xff]
    %v767 = vld [vmem:[#allocation5 + $0x378] sm:$0xff]
    %v768 = vld [vmem:[#allocation5 + $0x380] sm:$0xff]
    %v769 = vld [vmem:[#allocation5 + $0x388] sm:$0xff]
    %v770 = vld [vmem:[#allocation5 + $0x390] sm:$0xff]
    %v771 = vld [vmem:[#allocation5 + $0x398] sm:$0xff]
    %v772 = vld [vmem:[#allocation5 + $0x3a0] sm:$0xff]
    %v773 = vld [vmem:[#allocation5 + $0x3a8] sm:$0xff]
    %v774 = vld [vmem:[#allocation5 + $0x3b0] sm:$0xff]
    %v775 = vld [vmem:[#allocation5 + $0x3b8] sm:$0xff]
    %v776 = vld [vmem:[#allocation5 + $0x3c0] sm:$0xff]
    %v777 = vld [vmem:[#allocation5 + $0x3c8] sm:$0xff]
    %v778 = vld [vmem:[#allocation5 + $0x3d0] sm:$0xff]
    %v779 = vld [vmem:[#allocation5 + $0x3d8] sm:$0xff]
    %v780 = vld [vmem:[#allocation5 + $0x3e0] sm:$0xff]
    %v781 = vld [vmem:[#allocation5 + $0x3e8] sm:$0xff]
    %v782 = vld [vmem:[#allocation5 + $0x3f0] sm:$0xff]
    %v783 = vld [vmem:[#allocation5 + $0x3f8] sm:$0xff]
    %v784 = vld [vmem:[#allocation5 + $0x400] sm:$0xff]
    %v785 = vld [vmem:[#allocation5 + $0x408] sm:$0xff]
    %v786 = vld [vmem:[#allocation5 + $0x410] sm:$0xff]
    %v787 = vld [vmem:[#allocation5 + $0x418] sm:$0xff]
    %v788 = vld [vmem:[#allocation5 + $0x420] sm:$0xff]
    %v789 = vld [vmem:[#allocation5 + $0x428] sm:$0xff]
    %v790 = vld [vmem:[#allocation5 + $0x430] sm:$0xff]
    %v791 = vld [vmem:[#allocation5 + $0x438] sm:$0xff]
    %v792 = vld [vmem:[#allocation5 + $0x440] sm:$0xff]
    %v793 = vld [vmem:[#allocation5 + $0x448] sm:$0xff]
    %v794 = vld [vmem:[#allocation5 + $0x450] sm:$0xff]
    %v795 = vld [vmem:[#allocation5 + $0x458] sm:$0xff]
    %v796 = vld [vmem:[#allocation5 + $0x460] sm:$0xff]
    %v797 = vld [vmem:[#allocation5 + $0x468] sm:$0xff]
    %v798 = vld [vmem:[#allocation5 + $0x470] sm:$0xff]
    %v799 = vld [vmem:[#allocation5 + $0x478] sm:$0xff]
    %v800 = vld [vmem:[#allocation5 + $0x480] sm:$0xff]
    %v801 = vld [vmem:[#allocation5 + $0x488] sm:$0xff]
    %v802 = vld [vmem:[#allocation5 + $0x490] sm:$0xff]
    %v803 = vld [vmem:[#allocation5 + $0x498] sm:$0xff]
    %v804 = vld [vmem:[#allocation5 + $0x4a0] sm:$0xff]
    %v805 = vld [vmem:[#allocation5 + $0x4a8] sm:$0xff]
    %v806 = vld [vmem:[#allocation5 + $0x4b0] sm:$0xff]
    %v807 = vld [vmem:[#allocation5 + $0x4b8] sm:$0xff]
    %v808 = vld [vmem:[#allocation5 + $0x4c0] sm:$0xff]
    %v809 = vld [vmem:[#allocation5 + $0x4c8] sm:$0xff]
    %v810 = vld [vmem:[#allocation5 + $0x4d0] sm:$0xff]
    %v811 = vld [vmem:[#allocation5 + $0x4d8] sm:$0xff]
    %v812 = vld [vmem:[#allocation5 + $0x4e0] sm:$0xff]
    %v813 = vld [vmem:[#allocation5 + $0x4e8] sm:$0xff]
    %v814 = vld [vmem:[#allocation5 + $0x4f0] sm:$0xff]
    %v815 = vld [vmem:[#allocation5 + $0x4f8] sm:$0xff]
    %v816 = vld [vmem:[#allocation5 + $0x500] sm:$0xff]
    %v817 = vld [vmem:[#allocation5 + $0x508] sm:$0xff]
    %v818 = vld [vmem:[#allocation5 + $0x510] sm:$0xff]
    %v819 = vld [vmem:[#allocation5 + $0x518] sm:$0xff]
    %v820 = vld [vmem:[#allocation5 + $0x520] sm:$0xff]
    %v821 = vld [vmem:[#allocation5 + $0x528] sm:$0xff]
    %v822 = vld [vmem:[#allocation5 + $0x530] sm:$0xff]
    %v823 = vld [vmem:[#allocation5 + $0x538] sm:$0xff]
    %v824 = vld [vmem:[#allocation5 + $0x540] sm:$0xff]
    %v825 = vld [vmem:[#allocation5 + $0x548] sm:$0xff]
    %v826 = vld [vmem:[#allocation5 + $0x550] sm:$0xff]
    %v827 = vld [vmem:[#allocation5 + $0x558] sm:$0xff]
    %v828 = vld [vmem:[#allocation5 + $0x560] sm:$0xff]
    %v829 = vld [vmem:[#allocation5 + $0x568] sm:$0xff]
    %v830 = vld [vmem:[#allocation5 + $0x570] sm:$0xff]
    %v831 = vld [vmem:[#allocation5 + $0x578] sm:$0xff]
    %v832 = vld [vmem:[#allocation5 + $0x580] sm:$0xff]
    %v833 = vld [vmem:[#allocation5 + $0x588] sm:$0xff]
    %v834 = vld [vmem:[#allocation5 + $0x590] sm:$0xff]
    %v835 = vld [vmem:[#allocation5 + $0x598] sm:$0xff]
    %v836 = vld [vmem:[#allocation5 + $0x5a0] sm:$0xff]
    %v837 = vld [vmem:[#allocation5 + $0x5a8] sm:$0xff]
    %v838 = vld [vmem:[#allocation5 + $0x5b0] sm:$0xff]
    %v839 = vld [vmem:[#allocation5 + $0x5b8] sm:$0xff]
    %v840 = vld [vmem:[#allocation5 + $0x5c0] sm:$0xff]
    %v841 = vld [vmem:[#allocation5 + $0x5c8] sm:$0xff]
    %v842 = vld [vmem:[#allocation5 + $0x5d0] sm:$0xff]
    %v843 = vld [vmem:[#allocation5 + $0x5d8] sm:$0xff]
    %v844 = vld [vmem:[#allocation5 + $0x5e0] sm:$0xff]
    %v845 = vld [vmem:[#allocation5 + $0x5e8] sm:$0xff]
    %v846 = vld [vmem:[#allocation5 + $0x5f0] sm:$0xff]
    %v847 = vld [vmem:[#allocation5 + $0x5f8] sm:$0xff]
    %v849 = vlaneseq
    %v850 = vshrl.u32 %v849, 7
    %v851 = vsub.s32 0, %v850
    %v852 = vrot.slane %v109, %v851
    %v853 = vlaneseq
    %v854 = vshrl.u32 %v853, 7
    %v855 = vsub.s32 1, %v854
    %v856 = vrot.slane %v109, %v855
    %v857 = vlaneseq
    %v858 = vshrl.u32 %v857, 7
    %v859 = vsub.s32 2, %v858
    %v860 = vrot.slane %v109, %v859
    %v861 = vlaneseq
    %v862 = vshrl.u32 %v861, 7
    %v863 = vsub.s32 3, %v862
    %v864 = vrot.slane %v109, %v863
    %v865 = vlaneseq
    %v866 = vshrl.u32 %v865, 7
    %v867 = vsub.s32 4, %v866
    %v868 = vrot.slane %v109, %v867
    %v869 = vlaneseq
    %v870 = vshrl.u32 %v869, 7
    %v871 = vsub.s32 5, %v870
    %v872 = vrot.slane %v109, %v871
    %879 = vmatprep.subr.mxu0 %v657
    %880 = vmatpush1.msra.mxu0 %v656
    %881 = vmatprep.subr.mxu0 %v663
    %882 = vmatpush1.msra.mxu0 %v662
    %883 = vmatprep.subr.mxu0 %v669
    %884 = vmatpush1.msra.mxu0 %v668
    %885 = vmatprep.subr.mxu0 %v675
    %886 = vmatpush1.msra.mxu0 %v674
    %887 = vmatprep.subr.mxu0 %v681
    %888 = vmatpush1.msra.mxu0 %v680
    %889 = vmatprep.subr.mxu0 %v687
    %890 = vmatpush1.msra.mxu0 %v686
    %891 = vmatprep.subr.mxu0 %v693
    %892 = vmatpush1.msra.mxu0 %v692
    %893 = vmatprep.subr.mxu0 %v699
    %894 = vmatpush1.msra.mxu0 %v698
    %895 = vmatprep.subr.mxu0 %v705
    %896 = vmatpush1.msra.mxu0 %v704
    %897 = vmatprep.subr.mxu0 %v711
    %898 = vmatpush1.msra.mxu0 %v710
    %899 = vmatprep.subr.mxu0 %v717
    %900 = vmatpush1.msra.mxu0 %v716
    %901 = vmatprep.subr.mxu0 %v723
    %902 = vmatpush1.msra.mxu0 %v722
    %903 = vmatprep.subr.mxu0 %v729
    %904 = vmatpush1.msra.mxu0 %v728
    %905 = vmatprep.subr.mxu0 %v735
    %906 = vmatpush1.msra.mxu0 %v734
    %907 = vmatprep.subr.mxu0 %v741
    %908 = vmatpush1.msra.mxu0 %v740
    %909 = vmatprep.subr.mxu0 %v747
    %910 = vmatpush1.msra.mxu0 %v746
    %911 = vmatprep.subr.mxu0 %v753
    %912 = vmatpush1.msra.mxu0 %v752
    %913 = vmatprep.subr.mxu0 %v759
    %914 = vmatpush1.msra.mxu0 %v758
    %915 = vmatprep.subr.mxu0 %v765
    %916 = vmatpush1.msra.mxu0 %v764
    %917 = vmatprep.subr.mxu0 %v771
    %918 = vmatpush1.msra.mxu0 %v770
    %919 = vmatprep.subr.mxu0 %v777
    %920 = vmatpush1.msra.mxu0 %v776
    %921 = vmatprep.subr.mxu0 %v783
    %922 = vmatpush1.msra.mxu0 %v782
    %923 = vmatprep.subr.mxu0 %v789
    %924 = vmatpush1.msra.mxu0 %v788
    %925 = vmatprep.subr.mxu0 %v795
    %926 = vmatpush1.msra.mxu0 %v794
    %927 = vmatprep.subr.mxu0 %v801
    %928 = vmatpush1.msra.mxu0 %v800
    %929 = vmatprep.subr.mxu0 %v807
    %930 = vmatpush1.msra.mxu0 %v806
    %931 = vmatprep.subr.mxu0 %v813
    %932 = vmatpush1.msra.mxu0 %v812
    %933 = vmatprep.subr.mxu0 %v819
    %934 = vmatpush1.msra.mxu0 %v818
    %935 = vmatprep.subr.mxu0 %v825
    %936 = vmatpush1.msra.mxu0 %v824
    %937 = vmatprep.subr.mxu0 %v831
    %938 = vmatpush1.msra.mxu0 %v830
    %939 = vmatprep.subr.mxu0 %v837
    %940 = vmatpush1.msra.mxu0 %v836
    %941 = vmatprep.subr.mxu0 %v843
    %942 = vmatpush1.msra.mxu0 %v842
    %943 = vmatprep.mubr.f32.mxu0 0.0
    %944 = vmatmul.mubr.f32.gmra.mrb[0].mxu0 0.0
    %v945 = vpop.f32.mrb[0].mxu0
    %v946 = vadd.f32 %v852, %v945
    %v947 = vpop.f32.mrb[0].mxu0
    %v948 = vadd.f32 %v856, %v947
    %949 = vdwg.mxu0
    %950 = vmatprep.subr.mxu0 %v659
    %951 = vmatpush1.msra.mxu0 %v658
    %952 = vmatprep.subr.mxu0 %v665
    %953 = vmatpush1.msra.mxu0 %v664
    %954 = vmatprep.subr.mxu0 %v671
    %955 = vmatpush1.msra.mxu0 %v670
    %956 = vmatprep.subr.mxu0 %v677
    %957 = vmatpush1.msra.mxu0 %v676
    %958 = vmatprep.subr.mxu0 %v683
    %959 = vmatpush1.msra.mxu0 %v682
    %960 = vmatprep.subr.mxu0 %v689
    %961 = vmatpush1.msra.mxu0 %v688
    %962 = vmatprep.subr.mxu0 %v695
    %963 = vmatpush1.msra.mxu0 %v694
    %964 = vmatprep.subr.mxu0 %v701
    %965 = vmatpush1.msra.mxu0 %v700
    %966 = vmatprep.subr.mxu0 %v707
    %967 = vmatpush1.msra.mxu0 %v706
    %968 = vmatprep.subr.mxu0 %v713
    %969 = vmatpush1.msra.mxu0 %v712
    %970 = vmatprep.subr.mxu0 %v719
    %971 = vmatpush1.msra.mxu0 %v718
    %972 = vmatprep.subr.mxu0 %v725
    %973 = vmatpush1.msra.mxu0 %v724
    %974 = vmatprep.subr.mxu0 %v731
    %975 = vmatpush1.msra.mxu0 %v730
    %976 = vmatprep.subr.mxu0 %v737
    %977 = vmatpush1.msra.mxu0 %v736
    %978 = vmatprep.subr.mxu0 %v743
    %979 = vmatpush1.msra.mxu0 %v742
    %980 = vmatprep.subr.mxu0 %v749
    %981 = vmatpush1.msra.mxu0 %v748
    %982 = vmatprep.subr.mxu0 %v755
    %983 = vmatpush1.msra.mxu0 %v754
    %984 = vmatprep.subr.mxu0 %v761
    %985 = vmatpush1.msra.mxu0 %v760
    %986 = vmatprep.subr.mxu0 %v767
    %987 = vmatpush1.msra.mxu0 %v766
    %988 = vmatprep.subr.mxu0 %v773
    %989 = vmatpush1.msra.mxu0 %v772
    %990 = vmatprep.subr.mxu0 %v779
    %991 = vmatpush1.msra.mxu0 %v778
    %992 = vmatprep.subr.mxu0 %v785
    %993 = vmatpush1.msra.mxu0 %v784
    %994 = vmatprep.subr.mxu0 %v791
    %995 = vmatpush1.msra.mxu0 %v790
    %996 = vmatprep.subr.mxu0 %v797
    %997 = vmatpush1.msra.mxu0 %v796
    %998 = vmatprep.subr.mxu0 %v803
    %999 = vmatpush1.msra.mxu0 %v802
    %1000 = vmatprep.subr.mxu0 %v809
    %1001 = vmatpush1.msra.mxu0 %v808
    %1002 = vmatprep.subr.mxu0 %v815
    %1003 = vmatpush1.msra.mxu0 %v814
    %1004 = vmatprep.subr.mxu0 %v821
    %1005 = vmatpush1.msra.mxu0 %v820
    %1006 = vmatprep.subr.mxu0 %v827
    %1007 = vmatpush1.msra.mxu0 %v826
    %1008 = vmatprep.subr.mxu0 %v833
    %1009 = vmatpush1.msra.mxu0 %v832
    %1010 = vmatprep.subr.mxu0 %v839
    %1011 = vmatpush1.msra.mxu0 %v838
    %1012 = vmatprep.subr.mxu0 %v845
    %1013 = vmatpush1.msra.mxu0 %v844
    %1014 = vmatprep.mubr.f32.mxu0 0.0
    %1015 = vmatmul.mubr.f32.gmra.mrb[0].mxu0 0.0
    %v1016 = vpop.f32.mrb[0].mxu0
    %v1017 = vadd.f32 %v860, %v1016
    %v1018 = vpop.f32.mrb[0].mxu0
    %v1019 = vadd.f32 %v864, %v1018
    %1020 = vdwg.mxu0
    %1021 = vmatprep.subr.mxu0 %v661
    %1022 = vmatpush1.msra.mxu0 %v660
    %1023 = vmatprep.subr.mxu0 %v667
    %1024 = vmatpush1.msra.mxu0 %v666
    %1025 = vmatprep.subr.mxu0 %v673
    %1026 = vmatpush1.msra.mxu0 %v672
    %1027 = vmatprep.subr.mxu0 %v679
    %1028 = vmatpush1.msra.mxu0 %v678
    %1029 = vmatprep.subr.mxu0 %v685
    %1030 = vmatpush1.msra.mxu0 %v684
    %1031 = vmatprep.subr.mxu0 %v691
    %1032 = vmatpush1.msra.mxu0 %v690
    %1033 = vmatprep.subr.mxu0 %v697
    %1034 = vmatpush1.msra.mxu0 %v696
    %1035 = vmatprep.subr.mxu0 %v703
    %1036 = vmatpush1.msra.mxu0 %v702
    %1037 = vmatprep.subr.mxu0 %v709
    %1038 = vmatpush1.msra.mxu0 %v708
    %1039 = vmatprep.subr.mxu0 %v715
    %1040 = vmatpush1.msra.mxu0 %v714
    %1041 = vmatprep.subr.mxu0 %v721
    %1042 = vmatpush1.msra.mxu0 %v720
    %1043 = vmatprep.subr.mxu0 %v727
    %1044 = vmatpush1.msra.mxu0 %v726
    %1045 = vmatprep.subr.mxu0 %v733
    %1046 = vmatpush1.msra.mxu0 %v732
    %1047 = vmatprep.subr.mxu0 %v739
    %1048 = vmatpush1.msra.mxu0 %v738
    %1049 = vmatprep.subr.mxu0 %v745
    %1050 = vmatpush1.msra.mxu0 %v744
    %1051 = vmatprep.subr.mxu0 %v751
    %1052 = vmatpush1.msra.mxu0 %v750
    %1053 = vmatprep.subr.mxu0 %v757
    %1054 = vmatpush1.msra.mxu0 %v756
    %1055 = vmatprep.subr.mxu0 %v763
    %1056 = vmatpush1.msra.mxu0 %v762
    %1057 = vmatprep.subr.mxu0 %v769
    %1058 = vmatpush1.msra.mxu0 %v768
    %1059 = vmatprep.subr.mxu0 %v775
    %1060 = vmatpush1.msra.mxu0 %v774
    %1061 = vmatprep.subr.mxu0 %v781
    %1062 = vmatpush1.msra.mxu0 %v780
    %1063 = vmatprep.subr.mxu0 %v787
    %1064 = vmatpush1.msra.mxu0 %v786
    %1065 = vmatprep.subr.mxu0 %v793
    %1066 = vmatpush1.msra.mxu0 %v792
    %1067 = vmatprep.subr.mxu0 %v799
    %1068 = vmatpush1.msra.mxu0 %v798
    %1069 = vmatprep.subr.mxu0 %v805
    %1070 = vmatpush1.msra.mxu0 %v804
    %1071 = vmatprep.subr.mxu0 %v811
    %1072 = vmatpush1.msra.mxu0 %v810
    %1073 = vmatprep.subr.mxu0 %v817
    %1074 = vmatpush1.msra.mxu0 %v816
    %1075 = vmatprep.subr.mxu0 %v823
    %1076 = vmatpush1.msra.mxu0 %v822
    %1077 = vmatprep.subr.mxu0 %v829
    %1078 = vmatpush1.msra.mxu0 %v828
    %1079 = vmatprep.subr.mxu0 %v835
    %1080 = vmatpush1.msra.mxu0 %v834
    %1081 = vmatprep.subr.mxu0 %v841
    %1082 = vmatpush1.msra.mxu0 %v840
    %1083 = vmatprep.subr.mxu0 %v847
    %1084 = vmatpush1.msra.mxu0 %v846
    %1085 = vmatprep.mubr.f32.mxu0 0.0
    %1086 = vmatmul.mubr.f32.gmra.mrb[0].mxu0 0.0
    %v1087 = vpop.f32.mrb[0].mxu0
    %v1088 = vadd.f32 %v868, %v1087
    %v1089 = vpop.f32.mrb[0].mxu0
    %v1090 = vadd.f32 %v872, %v1089
    %1091 = vdwg.mxu0
    %v1092 = vadd.f32 %v650, %v946
    %v1093 = vadd.f32 %v651, %v948
    %v1094 = vxor.u32 %v1092, 2147483648
    %v1095 = vxor.u32 %v1093, 2147483648
    %v1096 = vmul.f32 %v1094, 1.442695
    %v1097 = vpow.pop %v1096
    %v1098 = vmul.f32 %v1095, 1.442695
    %v1099 = vpow.pop %v1098
    %v1100 = vadd.f32 %v1097, 1.0
    %v1101 = vadd.f32 %v1099, 1.0
    %v1102 = vrcp.pop %v1100
    %v1103 = vmul.f32 1.0, %v1102
    %v1104 = vrcp.pop %v1101
    %v1105 = vmul.f32 1.0, %v1104
    %v1106 = vadd.f32 %v652, %v1017
    %v1107 = vadd.f32 %v653, %v1019
    %v1108 = vxor.u32 %v1106, 2147483648
    %v1109 = vxor.u32 %v1107, 2147483648
    %v1110 = vmul.f32 %v1108, 1.442695
    %v1111 = vpow.pop %v1110
    %v1112 = vmul.f32 %v1109, 1.442695
    %v1113 = vpow.pop %v1112
    %v1114 = vadd.f32 %v1111, 1.0
    %v1115 = vadd.f32 %v1113, 1.0
    %v1116 = vrcp.pop %v1114
    %v1117 = vmul.f32 1.0, %v1116
    %v1118 = vrcp.pop %v1115
    %v1119 = vmul.f32 1.0, %v1118
    %v1120 = vmul.f32 %v1103, %v1088
    %v1121 = vmul.f32 %v1105, %v1090
    %v1122 = vadd.f32 %v654, %v1120
    %v1123 = vadd.f32 %v655, %v1121
    %v1124 = vtanh.pop %v1122
    %v1125 = vtanh.pop %v1123
    %v1126 = vsub.f32 1.0, %v1117
    %v1127 = vsub.f32 1.0, %v1119
    %v1128 = vmul.f32 %v1126, %v1124
    %v1129 = vmul.f32 %v1127, %v1125
    %v1130 = vmul.f32 %v1117, 0.0
    %v1131 = vmul.f32 %v1119, 0.0
    %v1132 = vadd.f32 %v1128, %v1130
    %v1133 = vadd.f32 %v1129, %v1131
    %1134 = vmatprep.subr.mxu0 %v657
    %1135 = vmatpush1.msra.mxu0 %v656
    %1136 = vmatprep.subr.mxu0 %v663
    %1137 = vmatpush1.msra.mxu0 %v662
    %1138 = vmatprep.subr.mxu0 %v669
    %1139 = vmatpush1.msra.mxu0 %v668
    %1140 = vmatprep.subr.mxu0 %v675
    %1141 = vmatpush1.msra.mxu0 %v674
    %1142 = vmatprep.subr.mxu0 %v681
    %1143 = vmatpush1.msra.mxu0 %v680
    %1144 = vmatprep.subr.mxu0 %v687
    %1145 = vmatpush1.msra.mxu0 %v686
    %1146 = vmatprep.subr.mxu0 %v693
    %1147 = vmatpush1.msra.mxu0 %v692
    %1148 = vmatprep.subr.mxu0 %v699
    %1149 = vmatpush1.msra.mxu0 %v698
    %1150 = vmatprep.subr.mxu0 %v705
    %1151 = vmatpush1.msra.mxu0 %v704
    %1152 = vmatprep.subr.mxu0 %v711
    %1153 = vmatpush1.msra.mxu0 %v710
    %1154 = vmatprep.subr.mxu0 %v717
    %1155 = vmatpush1.msra.mxu0 %v716
    %1156 = vmatprep.subr.mxu0 %v723
    %1157 = vmatpush1.msra.mxu0 %v722
    %1158 = vmatprep.subr.mxu0 %v729
    %1159 = vmatpush1.msra.mxu0 %v728
    %1160 = vmatprep.subr.mxu0 %v735
    %1161 = vmatpush1.msra.mxu0 %v734
    %1162 = vmatprep.subr.mxu0 %v741
    %1163 = vmatpush1.msra.mxu0 %v740
    %1164 = vmatprep.subr.mxu0 %v747
    %1165 = vmatpush1.msra.mxu0 %v746
    %1166 = vmatprep.subr.mxu0 %v753
    %1167 = vmatpush1.msra.mxu0 %v752
    %1168 = vmatprep.subr.mxu0 %v759
    %1169 = vmatpush1.msra.mxu0 %v758
    %1170 = vmatprep.subr.mxu0 %v765
    %1171 = vmatpush1.msra.mxu0 %v764
    %1172 = vmatprep.subr.mxu0 %v771
    %1173 = vmatpush1.msra.mxu0 %v770
    %1174 = vmatprep.subr.mxu0 %v777
    %1175 = vmatpush1.msra.mxu0 %v776
    %1176 = vmatprep.subr.mxu0 %v783
    %1177 = vmatpush1.msra.mxu0 %v782
    %1178 = vmatprep.subr.mxu0 %v789
    %1179 = vmatpush1.msra.mxu0 %v788
    %1180 = vmatprep.subr.mxu0 %v795
    %1181 = vmatpush1.msra.mxu0 %v794
    %1182 = vmatprep.subr.mxu0 %v801
    %1183 = vmatpush1.msra.mxu0 %v800
    %1184 = vmatprep.subr.mxu0 %v807
    %1185 = vmatpush1.msra.mxu0 %v806
    %1186 = vmatprep.subr.mxu0 %v813
    %1187 = vmatpush1.msra.mxu0 %v812
    %1188 = vmatprep.subr.mxu0 %v819
    %1189 = vmatpush1.msra.mxu0 %v818
    %1190 = vmatprep.subr.mxu0 %v825
    %1191 = vmatpush1.msra.mxu0 %v824
    %1192 = vmatprep.subr.mxu0 %v831
    %1193 = vmatpush1.msra.mxu0 %v830
    %1194 = vmatprep.subr.mxu0 %v837
    %1195 = vmatpush1.msra.mxu0 %v836
    %1196 = vmatprep.subr.mxu0 %v843
    %1197 = vmatpush1.msra.mxu0 %v842
    %1198 = vmatprep.mubr.f32.mxu0 %v1133
    %1199 = vmatmul.mubr.f32.gmra.mrb[0].mxu0 %v1132
    %v1200 = vpop.f32.mrb[0].mxu0
    %v1201 = vadd.f32 %v852, %v1200
    %v1202 = vpop.f32.mrb[0].mxu0
    %v1203 = vadd.f32 %v856, %v1202
    %1204 = vdwg.mxu0
    %1205 = vmatprep.subr.mxu0 %v659
    %1206 = vmatpush1.msra.mxu0 %v658
    %1207 = vmatprep.subr.mxu0 %v665
    %1208 = vmatpush1.msra.mxu0 %v664
    %1209 = vmatprep.subr.mxu0 %v671
    %1210 = vmatpush1.msra.mxu0 %v670
    %1211 = vmatprep.subr.mxu0 %v677
    %1212 = vmatpush1.msra.mxu0 %v676
    %1213 = vmatprep.subr.mxu0 %v683
    %1214 = vmatpush1.msra.mxu0 %v682
    %1215 = vmatprep.subr.mxu0 %v689
    %1216 = vmatpush1.msra.mxu0 %v688
    %1217 = vmatprep.subr.mxu0 %v695
    %1218 = vmatpush1.msra.mxu0 %v694
    %1219 = vmatprep.subr.mxu0 %v701
    %1220 = vmatpush1.msra.mxu0 %v700
    %1221 = vmatprep.subr.mxu0 %v707
    %1222 = vmatpush1.msra.mxu0 %v706
    %1223 = vmatprep.subr.mxu0 %v713
    %1224 = vmatpush1.msra.mxu0 %v712
    %1225 = vmatprep.subr.mxu0 %v719
    %1226 = vmatpush1.msra.mxu0 %v718
    %1227 = vmatprep.subr.mxu0 %v725
    %1228 = vmatpush1.msra.mxu0 %v724
    %1229 = vmatprep.subr.mxu0 %v731
    %1230 = vmatpush1.msra.mxu0 %v730
    %1231 = vmatprep.subr.mxu0 %v737
    %1232 = vmatpush1.msra.mxu0 %v736
    %1233 = vmatprep.subr.mxu0 %v743
    %1234 = vmatpush1.msra.mxu0 %v742
    %1235 = vmatprep.subr.mxu0 %v749
    %1236 = vmatpush1.msra.mxu0 %v748
    %1237 = vmatprep.subr.mxu0 %v755
    %1238 = vmatpush1.msra.mxu0 %v754
    %1239 = vmatprep.subr.mxu0 %v761
    %1240 = vmatpush1.msra.mxu0 %v760
    %1241 = vmatprep.subr.mxu0 %v767
    %1242 = vmatpush1.msra.mxu0 %v766
    %1243 = vmatprep.subr.mxu0 %v773
    %1244 = vmatpush1.msra.mxu0 %v772
    %1245 = vmatprep.subr.mxu0 %v779
    %1246 = vmatpush1.msra.mxu0 %v778
    %1247 = vmatprep.subr.mxu0 %v785
    %1248 = vmatpush1.msra.mxu0 %v784
    %1249 = vmatprep.subr.mxu0 %v791
    %1250 = vmatpush1.msra.mxu0 %v790
    %1251 = vmatprep.subr.mxu0 %v797
    %1252 = vmatpush1.msra.mxu0 %v796
    %1253 = vmatprep.subr.mxu0 %v803
    %1254 = vmatpush1.msra.mxu0 %v802
    %1255 = vmatprep.subr.mxu0 %v809
    %1256 = vmatpush1.msra.mxu0 %v808
    %1257 = vmatprep.subr.mxu0 %v815
    %1258 = vmatpush1.msra.mxu0 %v814
    %1259 = vmatprep.subr.mxu0 %v821
    %1260 = vmatpush1.msra.mxu0 %v820
    %1261 = vmatprep.subr.mxu0 %v827
    %1262 = vmatpush1.msra.mxu0 %v826
    %1263 = vmatprep.subr.mxu0 %v833
    %1264 = vmatpush1.msra.mxu0 %v832
    %1265 = vmatprep.subr.mxu0 %v839
    %1266 = vmatpush1.msra.mxu0 %v838
    %1267 = vmatprep.subr.mxu0 %v845
    %1268 = vmatpush1.msra.mxu0 %v844
    %1269 = vmatprep.mubr.f32.mxu0 %v1133
    %1270 = vmatmul.mubr.f32.gmra.mrb[0].mxu0 %v1132
    %v1271 = vpop.f32.mrb[0].mxu0
    %v1272 = vadd.f32 %v860, %v1271
    %v1273 = vpop.f32.mrb[0].mxu0
    %v1274 = vadd.f32 %v864, %v1273
    %1275 = vdwg.mxu0
    %1276 = vmatprep.subr.mxu0 %v661
    %1277 = vmatpush1.msra.mxu0 %v660
    %1278 = vmatprep.subr.mxu0 %v667
    %1279 = vmatpush1.msra.mxu0 %v666
    %1280 = vmatprep.subr.mxu0 %v673
    %1281 = vmatpush1.msra.mxu0 %v672
    %1282 = vmatprep.subr.mxu0 %v679
    %1283 = vmatpush1.msra.mxu0 %v678
    %1284 = vmatprep.subr.mxu0 %v685
    %1285 = vmatpush1.msra.mxu0 %v684
    %1286 = vmatprep.subr.mxu0 %v691
    %1287 = vmatpush1.msra.mxu0 %v690
    %1288 = vmatprep.subr.mxu0 %v697
    %1289 = vmatpush1.msra.mxu0 %v696
    %1290 = vmatprep.subr.mxu0 %v703
    %1291 = vmatpush1.msra.mxu0 %v702
    %1292 = vmatprep.subr.mxu0 %v709
    %1293 = vmatpush1.msra.mxu0 %v708
    %1294 = vmatprep.subr.mxu0 %v715
    %1295 = vmatpush1.msra.mxu0 %v714
    %1296 = vmatprep.subr.mxu0 %v721
    %1297 = vmatpush1.msra.mxu0 %v720
    %1298 = vmatprep.subr.mxu0 %v727
    %1299 = vmatpush1.msra.mxu0 %v726
    %1300 = vmatprep.subr.mxu0 %v733
    %1301 = vmatpush1.msra.mxu0 %v732
    %1302 = vmatprep.subr.mxu0 %v739
    %1303 = vmatpush1.msra.mxu0 %v738
    %1304 = vmatprep.subr.mxu0 %v745
    %1305 = vmatpush1.msra.mxu0 %v744
    %1306 = vmatprep.subr.mxu0 %v751
    %1307 = vmatpush1.msra.mxu0 %v750
    %1308 = vmatprep.subr.mxu0 %v757
    %1309 = vmatpush1.msra.mxu0 %v756
    %1310 = vmatprep.subr.mxu0 %v763
    %1311 = vmatpush1.msra.mxu0 %v762
    %1312 = vmatprep.subr.mxu0 %v769
    %1313 = vmatpush1.msra.mxu0 %v768
    %1314 = vmatprep.subr.mxu0 %v775
    %1315 = vmatpush1.msra.mxu0 %v774
    %1316 = vmatprep.subr.mxu0 %v781
    %1317 = vmatpush1.msra.mxu0 %v780
    %1318 = vmatprep.subr.mxu0 %v787
    %1319 = vmatpush1.msra.mxu0 %v786
    %1320 = vmatprep.subr.mxu0 %v793
    %1321 = vmatpush1.msra.mxu0 %v792
    %1322 = vmatprep.subr.mxu0 %v799
    %1323 = vmatpush1.msra.mxu0 %v798
    %1324 = vmatprep.subr.mxu0 %v805
    %1325 = vmatpush1.msra.mxu0 %v804
    %1326 = vmatprep.subr.mxu0 %v811
    %1327 = vmatpush1.msra.mxu0 %v810
    %1328 = vmatprep.subr.mxu0 %v817
    %1329 = vmatpush1.msra.mxu0 %v816
    %1330 = vmatprep.subr.mxu0 %v823
    %1331 = vmatpush1.msra.mxu0 %v822
    %1332 = vmatprep.subr.mxu0 %v829
    %1333 = vmatpush1.msra.mxu0 %v828
    %1334 = vmatprep.subr.mxu0 %v835
    %1335 = vmatpush1.msra.mxu0 %v834
    %1336 = vmatprep.subr.mxu0 %v841
    %1337 = vmatpush1.msra.mxu0 %v840
    %1338 = vmatprep.subr.mxu0 %v847
    %1339 = vmatpush1.msra.mxu0 %v846
    %1340 = vmatprep.mubr.f32.mxu0 %v1133
    %1341 = vmatmul.mubr.f32.gmra.mrb[0].mxu0 %v1132
    %v1342 = vpop.f32.mrb[0].mxu0
    %v1343 = vadd.f32 %v868, %v1342
    %v1344 = vpop.f32.mrb[0].mxu0
    %v1345 = vadd.f32 %v872, %v1344
    %1346 = vdwg.mxu0
    %v1349 = vrot.slane %v1201, 7
    %v1350 = vrot.slane %v1203, 7
    %v1353 = vadd.f32 %v650, %v1349
    %v1354 = vadd.f32 %v651, %v1350
    %v1355 = vxor.u32 %v1353, 2147483648
    %v1356 = vxor.u32 %v1354, 2147483648
    %v1357 = vmul.f32 %v1355, 1.442695
    %v1358 = vpow.pop %v1357
    %v1359 = vmul.f32 %v1356, 1.442695
    %v1360 = vpow.pop %v1359
    %v1361 = vadd.f32 %v1358, 1.0
    %v1362 = vadd.f32 %v1360, 1.0
    %v1363 = vrcp.pop %v1361
    %v1364 = vmul.f32 1.0, %v1363
    %v1365 = vrcp.pop %v1362
    %v1366 = vmul.f32 1.0, %v1365
    %v1369 = vrot.slane %v1272, 7
    %v1370 = vrot.slane %v1274, 7
    %v1373 = vadd.f32 %v652, %v1369
    %v1374 = vadd.f32 %v653, %v1370
    %v1375 = vxor.u32 %v1373, 2147483648
    %v1376 = vxor.u32 %v1374, 2147483648
    %v1377 = vmul.f32 %v1375, 1.442695
    %v1378 = vpow.pop %v1377
    %v1379 = vmul.f32 %v1376, 1.442695
    %v1380 = vpow.pop %v1379
    %v1381 = vadd.f32 %v1378, 1.0
    %v1382 = vadd.f32 %v1380, 1.0
    %v1383 = vrcp.pop %v1381
    %v1384 = vmul.f32 1.0, %v1383
    %v1385 = vrcp.pop %v1382
    %v1386 = vmul.f32 1.0, %v1385
    %v1389 = vrot.slane %v1343, 7
    %v1390 = vrot.slane %v1345, 7
    %v1393 = vmul.f32 %v1364, %v1389
    %v1394 = vmul.f32 %v1366, %v1390
    %v1395 = vadd.f32 %v654, %v1393
    %v1396 = vadd.f32 %v655, %v1394
    %v1397 = vtanh.pop %v1395
    %v1398 = vtanh.pop %v1396
    %v1399 = vsub.f32 1.0, %v1384
    %v1400 = vsub.f32 1.0, %v1386
    %v1401 = vmul.f32 %v1399, %v1397
    %v1402 = vmul.f32 %v1400, %v1398
    %v1405 = vrot.slane %v1132, 7
    %v1406 = vrot.slane %v1133, 7
    %v1409 = vmul.f32 %v1384, %v1405
    %v1410 = vmul.f32 %v1386, %v1406
    %v1411 = vadd.f32 %v1401, %v1409
    %v1412 = vadd.f32 %v1402, %v1410
    %v1415 = vrot.slane %v1411, 1
    %v1416 = vrot.slane %v1412, 1
    %1419 = vmatprep.subr.mxu0 %v657
    %1420 = vmatpush1.msra.mxu0 %v656
    %1421 = vmatprep.subr.mxu0 %v663
    %1422 = vmatpush1.msra.mxu0 %v662
    %1423 = vmatprep.subr.mxu0 %v669
    %1424 = vmatpush1.msra.mxu0 %v668
    %1425 = vmatprep.subr.mxu0 %v675
    %1426 = vmatpush1.msra.mxu0 %v674
    %1427 = vmatprep.subr.mxu0 %v681
    %1428 = vmatpush1.msra.mxu0 %v680
    %1429 = vmatprep.subr.mxu0 %v687
    %1430 = vmatpush1.msra.mxu0 %v686
    %1431 = vmatprep.subr.mxu0 %v693
    %1432 = vmatpush1.msra.mxu0 %v692
    %1433 = vmatprep.subr.mxu0 %v699
    %1434 = vmatpush1.msra.mxu0 %v698
    %1435 = vmatprep.subr.mxu0 %v705
    %1436 = vmatpush1.msra.mxu0 %v704
    %1437 = vmatprep.subr.mxu0 %v711
    %1438 = vmatpush1.msra.mxu0 %v710
    %1439 = vmatprep.subr.mxu0 %v717
    %1440 = vmatpush1.msra.mxu0 %v716
    %1441 = vmatprep.subr.mxu0 %v723
    %1442 = vmatpush1.msra.mxu0 %v722
    %1443 = vmatprep.subr.mxu0 %v729
    %1444 = vmatpush1.msra.mxu0 %v728
    %1445 = vmatprep.subr.mxu0 %v735
    %1446 = vmatpush1.msra.mxu0 %v734
    %1447 = vmatprep.subr.mxu0 %v741
    %1448 = vmatpush1.msra.mxu0 %v740
    %1449 = vmatprep.subr.mxu0 %v747
    %1450 = vmatpush1.msra.mxu0 %v746
    %1451 = vmatprep.subr.mxu0 %v753
    %1452 = vmatpush1.msra.mxu0 %v752
    %1453 = vmatprep.subr.mxu0 %v759
    %1454 = vmatpush1.msra.mxu0 %v758
    %1455 = vmatprep.subr.mxu0 %v765
    %1456 = vmatpush1.msra.mxu0 %v764
    %1457 = vmatprep.subr.mxu0 %v771
    %1458 = vmatpush1.msra.mxu0 %v770
    %1459 = vmatprep.subr.mxu0 %v777
    %1460 = vmatpush1.msra.mxu0 %v776
    %1461 = vmatprep.subr.mxu0 %v783
    %1462 = vmatpush1.msra.mxu0 %v782
    %1463 = vmatprep.subr.mxu0 %v789
    %1464 = vmatpush1.msra.mxu0 %v788
    %1465 = vmatprep.subr.mxu0 %v795
    %1466 = vmatpush1.msra.mxu0 %v794
    %1467 = vmatprep.subr.mxu0 %v801
    %1468 = vmatpush1.msra.mxu0 %v800
    %1469 = vmatprep.subr.mxu0 %v807
    %1470 = vmatpush1.msra.mxu0 %v806
    %1471 = vmatprep.subr.mxu0 %v813
    %1472 = vmatpush1.msra.mxu0 %v812
    %1473 = vmatprep.subr.mxu0 %v819
    %1474 = vmatpush1.msra.mxu0 %v818
    %1475 = vmatprep.subr.mxu0 %v825
    %1476 = vmatpush1.msra.mxu0 %v824
    %1477 = vmatprep.subr.mxu0 %v831
    %1478 = vmatpush1.msra.mxu0 %v830
    %1479 = vmatprep.subr.mxu0 %v837
    %1480 = vmatpush1.msra.mxu0 %v836
    %1481 = vmatprep.subr.mxu0 %v843
    %1482 = vmatpush1.msra.mxu0 %v842
    %1483 = vmatprep.mubr.f32.mxu0 %v1416
    %1484 = vmatmul.mubr.f32.gmra.mrb[0].mxu0 %v1415
    %v1485 = vpop.f32.mrb[0].mxu0
    %v1486 = vadd.f32 %v852, %v1485
    %v1487 = vpop.f32.mrb[0].mxu0
    %v1488 = vadd.f32 %v856, %v1487
    %1489 = vdwg.mxu0
    %1490 = vmatprep.subr.mxu0 %v659
    %1491 = vmatpush1.msra.mxu0 %v658
    %1492 = vmatprep.subr.mxu0 %v665
    %1493 = vmatpush1.msra.mxu0 %v664
    %1494 = vmatprep.subr.mxu0 %v671
    %1495 = vmatpush1.msra.mxu0 %v670
    %1496 = vmatprep.subr.mxu0 %v677
    %1497 = vmatpush1.msra.mxu0 %v676
    %1498 = vmatprep.subr.mxu0 %v683
    %1499 = vmatpush1.msra.mxu0 %v682
    %1500 = vmatprep.subr.mxu0 %v689
    %1501 = vmatpush1.msra.mxu0 %v688
    %1502 = vmatprep.subr.mxu0 %v695
    %1503 = vmatpush1.msra.mxu0 %v694
    %1504 = vmatprep.subr.mxu0 %v701
    %1505 = vmatpush1.msra.mxu0 %v700
    %1506 = vmatprep.subr.mxu0 %v707
    %1507 = vmatpush1.msra.mxu0 %v706
    %1508 = vmatprep.subr.mxu0 %v713
    %1509 = vmatpush1.msra.mxu0 %v712
    %1510 = vmatprep.subr.mxu0 %v719
    %1511 = vmatpush1.msra.mxu0 %v718
    %1512 = vmatprep.subr.mxu0 %v725
    %1513 = vmatpush1.msra.mxu0 %v724
    %1514 = vmatprep.subr.mxu0 %v731
    %1515 = vmatpush1.msra.mxu0 %v730
    %1516 = vmatprep.subr.mxu0 %v737
    %1517 = vmatpush1.msra.mxu0 %v736
    %1518 = vmatprep.subr.mxu0 %v743
    %1519 = vmatpush1.msra.mxu0 %v742
    %1520 = vmatprep.subr.mxu0 %v749
    %1521 = vmatpush1.msra.mxu0 %v748
    %1522 = vmatprep.subr.mxu0 %v755
    %1523 = vmatpush1.msra.mxu0 %v754
    %1524 = vmatprep.subr.mxu0 %v761
    %1525 = vmatpush1.msra.mxu0 %v760
    %1526 = vmatprep.subr.mxu0 %v767
    %1527 = vmatpush1.msra.mxu0 %v766
    %1528 = vmatprep.subr.mxu0 %v773
    %1529 = vmatpush1.msra.mxu0 %v772
    %1530 = vmatprep.subr.mxu0 %v779
    %1531 = vmatpush1.msra.mxu0 %v778
    %1532 = vmatprep.subr.mxu0 %v785
    %1533 = vmatpush1.msra.mxu0 %v784
    %1534 = vmatprep.subr.mxu0 %v791
    %1535 = vmatpush1.msra.mxu0 %v790
    %1536 = vmatprep.subr.mxu0 %v797
    %1537 = vmatpush1.msra.mxu0 %v796
    %1538 = vmatprep.subr.mxu0 %v803
    %1539 = vmatpush1.msra.mxu0 %v802
    %1540 = vmatprep.subr.mxu0 %v809
    %1541 = vmatpush1.msra.mxu0 %v808
    %1542 = vmatprep.subr.mxu0 %v815
    %1543 = vmatpush1.msra.mxu0 %v814
    %1544 = vmatprep.subr.mxu0 %v821
    %1545 = vmatpush1.msra.mxu0 %v820
    %1546 = vmatprep.subr.mxu0 %v827
    %1547 = vmatpush1.msra.mxu0 %v826
    %1548 = vmatprep.subr.mxu0 %v833
    %1549 = vmatpush1.msra.mxu0 %v832
    %1550 = vmatprep.subr.mxu0 %v839
    %1551 = vmatpush1.msra.mxu0 %v838
    %1552 = vmatprep.subr.mxu0 %v845
    %1553 = vmatpush1.msra.mxu0 %v844
    %1554 = vmatprep.mubr.f32.mxu0 %v1416
    %1555 = vmatmul.mubr.f32.gmra.mrb[0].mxu0 %v1415
    %v1556 = vpop.f32.mrb[0].mxu0
    %v1557 = vadd.f32 %v860, %v1556
    %v1558 = vpop.f32.mrb[0].mxu0
    %v1559 = vadd.f32 %v864, %v1558
    %1560 = vdwg.mxu0
    %1561 = vmatprep.subr.mxu0 %v661
    %1562 = vmatpush1.msra.mxu0 %v660
    %1563 = vmatprep.subr.mxu0 %v667
    %1564 = vmatpush1.msra.mxu0 %v666
    %1565 = vmatprep.subr.mxu0 %v673
    %1566 = vmatpush1.msra.mxu0 %v672
    %1567 = vmatprep.subr.mxu0 %v679
    %1568 = vmatpush1.msra.mxu0 %v678
    %1569 = vmatprep.subr.mxu0 %v685
    %1570 = vmatpush1.msra.mxu0 %v684
    %1571 = vmatprep.subr.mxu0 %v691
    %1572 = vmatpush1.msra.mxu0 %v690
    %1573 = vmatprep.subr.mxu0 %v697
    %1574 = vmatpush1.msra.mxu0 %v696
    %1575 = vmatprep.subr.mxu0 %v703
    %1576 = vmatpush1.msra.mxu0 %v702
    %1577 = vmatprep.subr.mxu0 %v709
    %1578 = vmatpush1.msra.mxu0 %v708
    %1579 = vmatprep.subr.mxu0 %v715
    %1580 = vmatpush1.msra.mxu0 %v714
    %1581 = vmatprep.subr.mxu0 %v721
    %1582 = vmatpush1.msra.mxu0 %v720
    %1583 = vmatprep.subr.mxu0 %v727
    %1584 = vmatpush1.msra.mxu0 %v726
    %1585 = vmatprep.subr.mxu0 %v733
    %1586 = vmatpush1.msra.mxu0 %v732
    %1587 = vmatprep.subr.mxu0 %v739
    %1588 = vmatpush1.msra.mxu0 %v738
    %1589 = vmatprep.subr.mxu0 %v745
    %1590 = vmatpush1.msra.mxu0 %v744
    %1591 = vmatprep.subr.mxu0 %v751
    %1592 = vmatpush1.msra.mxu0 %v750
    %1593 = vmatprep.subr.mxu0 %v757
    %1594 = vmatpush1.msra.mxu0 %v756
    %1595 = vmatprep.subr.mxu0 %v763
    %1596 = vmatpush1.msra.mxu0 %v762
    %1597 = vmatprep.subr.mxu0 %v769
    %1598 = vmatpush1.msra.mxu0 %v768
    %1599 = vmatprep.subr.mxu0 %v775
    %1600 = vmatpush1.msra.mxu0 %v774
    %1601 = vmatprep.subr.mxu0 %v781
    %1602 = vmatpush1.msra.mxu0 %v780
    %1603 = vmatprep.subr.mxu0 %v787
    %1604 = vmatpush1.msra.mxu0 %v786
    %1605 = vmatprep.subr.mxu0 %v793
    %1606 = vmatpush1.msra.mxu0 %v792
    %1607 = vmatprep.subr.mxu0 %v799
    %1608 = vmatpush1.msra.mxu0 %v798
    %1609 = vmatprep.subr.mxu0 %v805
    %1610 = vmatpush1.msra.mxu0 %v804
    %1611 = vmatprep.subr.mxu0 %v811
    %1612 = vmatpush1.msra.mxu0 %v810
    %1613 = vmatprep.subr.mxu0 %v817
    %1614 = vmatpush1.msra.mxu0 %v816
    %1615 = vmatprep.subr.mxu0 %v823
    %1616 = vmatpush1.msra.mxu0 %v822
    %1617 = vmatprep.subr.mxu0 %v829
    %1618 = vmatpush1.msra.mxu0 %v828
    %1619 = vmatprep.subr.mxu0 %v835
    %1620 = vmatpush1.msra.mxu0 %v834
    %1621 = vmatprep.subr.mxu0 %v841
    %1622 = vmatpush1.msra.mxu0 %v840
    %1623 = vmatprep.subr.mxu0 %v847
    %1624 = vmatpush1.msra.mxu0 %v846
    %1625 = vmatprep.mubr.f32.mxu0 %v1416
    %1626 = vmatmul.mubr.f32.gmra.mrb[0].mxu0 %v1415
    %v1627 = vpop.f32.mrb[0].mxu0
    %v1628 = vadd.f32 %v868, %v1627
    %v1629 = vpop.f32.mrb[0].mxu0
    %v1630 = vadd.f32 %v872, %v1629
    %1631 = vdwg.mxu0
    %v1634 = vrot.slane %v1486, 6
    %v1635 = vrot.slane %v1488, 6
    %v1638 = vadd.f32 %v650, %v1634
    %v1639 = vadd.f32 %v651, %v1635
    %v1640 = vxor.u32 %v1638, 2147483648
    %v1641 = vxor.u32 %v1639, 2147483648
    %v1642 = vmul.f32 %v1640, 1.442695
    %v1643 = vpow.pop %v1642
    %v1644 = vmul.f32 %v1641, 1.442695
    %v1645 = vpow.pop %v1644
    %v1646 = vadd.f32 %v1643, 1.0
    %v1647 = vadd.f32 %v1645, 1.0
    %v1648 = vrcp.pop %v1646
    %v1649 = vmul.f32 1.0, %v1648
    %v1650 = vrcp.pop %v1647
    %v1651 = vmul.f32 1.0, %v1650
    %v1654 = vrot.slane %v1557, 6
    %v1655 = vrot.slane %v1559, 6
    %v1658 = vadd.f32 %v652, %v1654
    %v1659 = vadd.f32 %v653, %v1655
    %v1660 = vxor.u32 %v1658, 2147483648
    %v1661 = vxor.u32 %v1659, 2147483648
    %v1662 = vmul.f32 %v1660, 1.442695
    %v1663 = vpow.pop %v1662
    %v1664 = vmul.f32 %v1661, 1.442695
    %v1665 = vpow.pop %v1664
    %v1666 = vadd.f32 %v1663, 1.0
    %v1667 = vadd.f32 %v1665, 1.0
    %v1668 = vrcp.pop %v1666
    %v1669 = vmul.f32 1.0, %v1668
    %v1670 = vrcp.pop %v1667
    %v1671 = vmul.f32 1.0, %v1670
    %v1674 = vrot.slane %v1628, 6
    %v1675 = vrot.slane %v1630, 6
    %v1678 = vmul.f32 %v1649, %v1674
    %v1679 = vmul.f32 %v1651, %v1675
    %v1680 = vadd.f32 %v654, %v1678
    %v1681 = vadd.f32 %v655, %v1679
    %v1682 = vtanh.pop %v1680
    %v1683 = vtanh.pop %v1681
    %v1684 = vsub.f32 1.0, %v1669
    %v1685 = vsub.f32 1.0, %v1671
    %v1686 = vmul.f32 %v1684, %v1682
    %v1687 = vmul.f32 %v1685, %v1683
    %v1688 = vrot.slane %v1411, 7
    %v1689 = vrot.slane %v1412, 7
    %v1692 = vmul.f32 %v1669, %v1688
    %v1693 = vmul.f32 %v1671, %v1689
    %v1694 = vadd.f32 %v1686, %v1692
    %v1695 = vadd.f32 %v1687, %v1693
    %v1698 = vrot.slane %v1694, 2
    %v1699 = vrot.slane %v1695, 2
    %1702 = vmatprep.subr.mxu0 %v657
    %1703 = vmatpush1.msra.mxu0 %v656
    %1704 = vmatprep.subr.mxu0 %v663
    %1705 = vmatpush1.msra.mxu0 %v662
    %1706 = vmatprep.subr.mxu0 %v669
    %1707 = vmatpush1.msra.mxu0 %v668
    %1708 = vmatprep.subr.mxu0 %v675
    %1709 = vmatpush1.msra.mxu0 %v674
    %1710 = vmatprep.subr.mxu0 %v681
    %1711 = vmatpush1.msra.mxu0 %v680
    %1712 = vmatprep.subr.mxu0 %v687
    %1713 = vmatpush1.msra.mxu0 %v686
    %1714 = vmatprep.subr.mxu0 %v693
    %1715 = vmatpush1.msra.mxu0 %v692
    %1716 = vmatprep.subr.mxu0 %v699
    %1717 = vmatpush1.msra.mxu0 %v698
    %1718 = vmatprep.subr.mxu0 %v705
    %1719 = vmatpush1.msra.mxu0 %v704
    %1720 = vmatprep.subr.mxu0 %v711
    %1721 = vmatpush1.msra.mxu0 %v710
    %1722 = vmatprep.subr.mxu0 %v717
    %1723 = vmatpush1.msra.mxu0 %v716
    %1724 = vmatprep.subr.mxu0 %v723
    %1725 = vmatpush1.msra.mxu0 %v722
    %1726 = vmatprep.subr.mxu0 %v729
    %1727 = vmatpush1.msra.mxu0 %v728
    %1728 = vmatprep.subr.mxu0 %v735
    %1729 = vmatpush1.msra.mxu0 %v734
    %1730 = vmatprep.subr.mxu0 %v741
    %1731 = vmatpush1.msra.mxu0 %v740
    %1732 = vmatprep.subr.mxu0 %v747
    %1733 = vmatpush1.msra.mxu0 %v746
    %1734 = vmatprep.subr.mxu0 %v753
    %1735 = vmatpush1.msra.mxu0 %v752
    %1736 = vmatprep.subr.mxu0 %v759
    %1737 = vmatpush1.msra.mxu0 %v758
    %1738 = vmatprep.subr.mxu0 %v765
    %1739 = vmatpush1.msra.mxu0 %v764
    %1740 = vmatprep.subr.mxu0 %v771
    %1741 = vmatpush1.msra.mxu0 %v770
    %1742 = vmatprep.subr.mxu0 %v777
    %1743 = vmatpush1.msra.mxu0 %v776
    %1744 = vmatprep.subr.mxu0 %v783
    %1745 = vmatpush1.msra.mxu0 %v782
    %1746 = vmatprep.subr.mxu0 %v789
    %1747 = vmatpush1.msra.mxu0 %v788
    %1748 = vmatprep.subr.mxu0 %v795
    %1749 = vmatpush1.msra.mxu0 %v794
    %1750 = vmatprep.subr.mxu0 %v801
    %1751 = vmatpush1.msra.mxu0 %v800
    %1752 = vmatprep.subr.mxu0 %v807
    %1753 = vmatpush1.msra.mxu0 %v806
    %1754 = vmatprep.subr.mxu0 %v813
    %1755 = vmatpush1.msra.mxu0 %v812
    %1756 = vmatprep.subr.mxu0 %v819
    %1757 = vmatpush1.msra.mxu0 %v818
    %1758 = vmatprep.subr.mxu0 %v825
    %1759 = vmatpush1.msra.mxu0 %v824
    %1760 = vmatprep.subr.mxu0 %v831
    %1761 = vmatpush1.msra.mxu0 %v830
    %1762 = vmatprep.subr.mxu0 %v837
    %1763 = vmatpush1.msra.mxu0 %v836
    %1764 = vmatprep.subr.mxu0 %v843
    %1765 = vmatpush1.msra.mxu0 %v842
    %1766 = vmatprep.mubr.f32.mxu0 %v1699
    %1767 = vmatmul.mubr.f32.gmra.mrb[0].mxu0 %v1698
    %v1768 = vpop.f32.mrb[0].mxu0
    %v1769 = vadd.f32 %v852, %v1768
    %v1770 = vpop.f32.mrb[0].mxu0
    %v1771 = vadd.f32 %v856, %v1770
    %1772 = vdwg.mxu0
    %1773 = vmatprep.subr.mxu0 %v659
    %1774 = vmatpush1.msra.mxu0 %v658
    %1775 = vmatprep.subr.mxu0 %v665
    %1776 = vmatpush1.msra.mxu0 %v664
    %1777 = vmatprep.subr.mxu0 %v671
    %1778 = vmatpush1.msra.mxu0 %v670
    %1779 = vmatprep.subr.mxu0 %v677
    %1780 = vmatpush1.msra.mxu0 %v676
    %1781 = vmatprep.subr.mxu0 %v683
    %1782 = vmatpush1.msra.mxu0 %v682
    %1783 = vmatprep.subr.mxu0 %v689
    %1784 = vmatpush1.msra.mxu0 %v688
    %1785 = vmatprep.subr.mxu0 %v695
    %1786 = vmatpush1.msra.mxu0 %v694
    %1787 = vmatprep.subr.mxu0 %v701
    %1788 = vmatpush1.msra.mxu0 %v700
    %1789 = vmatprep.subr.mxu0 %v707
    %1790 = vmatpush1.msra.mxu0 %v706
    %1791 = vmatprep.subr.mxu0 %v713
    %1792 = vmatpush1.msra.mxu0 %v712
    %1793 = vmatprep.subr.mxu0 %v719
    %1794 = vmatpush1.msra.mxu0 %v718
    %1795 = vmatprep.subr.mxu0 %v725
    %1796 = vmatpush1.msra.mxu0 %v724
    %1797 = vmatprep.subr.mxu0 %v731
    %1798 = vmatpush1.msra.mxu0 %v730
    %1799 = vmatprep.subr.mxu0 %v737
    %1800 = vmatpush1.msra.mxu0 %v736
    %1801 = vmatprep.subr.mxu0 %v743
    %1802 = vmatpush1.msra.mxu0 %v742
    %1803 = vmatprep.subr.mxu0 %v749
    %1804 = vmatpush1.msra.mxu0 %v748
    %1805 = vmatprep.subr.mxu0 %v755
    %1806 = vmatpush1.msra.mxu0 %v754
    %1807 = vmatprep.subr.mxu0 %v761
    %1808 = vmatpush1.msra.mxu0 %v760
    %1809 = vmatprep.subr.mxu0 %v767
    %1810 = vmatpush1.msra.mxu0 %v766
    %1811 = vmatprep.subr.mxu0 %v773
    %1812 = vmatpush1.msra.mxu0 %v772
    %1813 = vmatprep.subr.mxu0 %v779
    %1814 = vmatpush1.msra.mxu0 %v778
    %1815 = vmatprep.subr.mxu0 %v785
    %1816 = vmatpush1.msra.mxu0 %v784
    %1817 = vmatprep.subr.mxu0 %v791
    %1818 = vmatpush1.msra.mxu0 %v790
    %1819 = vmatprep.subr.mxu0 %v797
    %1820 = vmatpush1.msra.mxu0 %v796
    %1821 = vmatprep.subr.mxu0 %v803
    %1822 = vmatpush1.msra.mxu0 %v802
    %1823 = vmatprep.subr.mxu0 %v809
    %1824 = vmatpush1.msra.mxu0 %v808
    %1825 = vmatprep.subr.mxu0 %v815
    %1826 = vmatpush1.msra.mxu0 %v814
    %1827 = vmatprep.subr.mxu0 %v821
    %1828 = vmatpush1.msra.mxu0 %v820
    %1829 = vmatprep.subr.mxu0 %v827
    %1830 = vmatpush1.msra.mxu0 %v826
    %1831 = vmatprep.subr.mxu0 %v833
    %1832 = vmatpush1.msra.mxu0 %v832
    %1833 = vmatprep.subr.mxu0 %v839
    %1834 = vmatpush1.msra.mxu0 %v838
    %1835 = vmatprep.subr.mxu0 %v845
    %1836 = vmatpush1.msra.mxu0 %v844
    %1837 = vmatprep.mubr.f32.mxu0 %v1699
    %1838 = vmatmul.mubr.f32.gmra.mrb[0].mxu0 %v1698
    %v1839 = vpop.f32.mrb[0].mxu0
    %v1840 = vadd.f32 %v860, %v1839
    %v1841 = vpop.f32.mrb[0].mxu0
    %v1842 = vadd.f32 %v864, %v1841
    %1843 = vdwg.mxu0
    %1844 = vmatprep.subr.mxu0 %v661
    %1845 = vmatpush1.msra.mxu0 %v660
    %1846 = vmatprep.subr.mxu0 %v667
    %1847 = vmatpush1.msra.mxu0 %v666
    %1848 = vmatprep.subr.mxu0 %v673
    %1849 = vmatpush1.msra.mxu0 %v672
    %1850 = vmatprep.subr.mxu0 %v679
    %1851 = vmatpush1.msra.mxu0 %v678
    %1852 = vmatprep.subr.mxu0 %v685
    %1853 = vmatpush1.msra.mxu0 %v684
    %1854 = vmatprep.subr.mxu0 %v691
    %1855 = vmatpush1.msra.mxu0 %v690
    %1856 = vmatprep.subr.mxu0 %v697
    %1857 = vmatpush1.msra.mxu0 %v696
    %1858 = vmatprep.subr.mxu0 %v703
    %1859 = vmatpush1.msra.mxu0 %v702
    %1860 = vmatprep.subr.mxu0 %v709
    %1861 = vmatpush1.msra.mxu0 %v708
    %1862 = vmatprep.subr.mxu0 %v715
    %1863 = vmatpush1.msra.mxu0 %v714
    %1864 = vmatprep.subr.mxu0 %v721
    %1865 = vmatpush1.msra.mxu0 %v720
    %1866 = vmatprep.subr.mxu0 %v727
    %1867 = vmatpush1.msra.mxu0 %v726
    %1868 = vmatprep.subr.mxu0 %v733
    %1869 = vmatpush1.msra.mxu0 %v732
    %1870 = vmatprep.subr.mxu0 %v739
    %1871 = vmatpush1.msra.mxu0 %v738
    %1872 = vmatprep.subr.mxu0 %v745
    %1873 = vmatpush1.msra.mxu0 %v744
    %1874 = vmatprep.subr.mxu0 %v751
    %1875 = vmatpush1.msra.mxu0 %v750
    %1876 = vmatprep.subr.mxu0 %v757
    %1877 = vmatpush1.msra.mxu0 %v756
    %1878 = vmatprep.subr.mxu0 %v763
    %1879 = vmatpush1.msra.mxu0 %v762
    %1880 = vmatprep.subr.mxu0 %v769
    %1881 = vmatpush1.msra.mxu0 %v768
    %1882 = vmatprep.subr.mxu0 %v775
    %1883 = vmatpush1.msra.mxu0 %v774
    %1884 = vmatprep.subr.mxu0 %v781
    %1885 = vmatpush1.msra.mxu0 %v780
    %1886 = vmatprep.subr.mxu0 %v787
    %1887 = vmatpush1.msra.mxu0 %v786
    %1888 = vmatprep.subr.mxu0 %v793
    %1889 = vmatpush1.msra.mxu0 %v792
    %1890 = vmatprep.subr.mxu0 %v799
    %1891 = vmatpush1.msra.mxu0 %v798
    %1892 = vmatprep.subr.mxu0 %v805
    %1893 = vmatpush1.msra.mxu0 %v804
    %1894 = vmatprep.subr.mxu0 %v811
    %1895 = vmatpush1.msra.mxu0 %v810
    %1896 = vmatprep.subr.mxu0 %v817
    %1897 = vmatpush1.msra.mxu0 %v816
    %1898 = vmatprep.subr.mxu0 %v823
    %1899 = vmatpush1.msra.mxu0 %v822
    %1900 = vmatprep.subr.mxu0 %v829
    %1901 = vmatpush1.msra.mxu0 %v828
    %1902 = vmatprep.subr.mxu0 %v835
    %1903 = vmatpush1.msra.mxu0 %v834
    %1904 = vmatprep.subr.mxu0 %v841
    %1905 = vmatpush1.msra.mxu0 %v840
    %1906 = vmatprep.subr.mxu0 %v847
    %1907 = vmatpush1.msra.mxu0 %v846
    %1908 = vmatprep.mubr.f32.mxu0 %v1699
    %1909 = vmatmul.mubr.f32.gmra.mrb[0].mxu0 %v1698
    %v1910 = vpop.f32.mrb[0].mxu0
    %v1911 = vadd.f32 %v868, %v1910
    %v1912 = vpop.f32.mrb[0].mxu0
    %v1913 = vadd.f32 %v872, %v1912
    %1914 = vdwg.mxu0
    %v1917 = vrot.slane %v1769, 5
    %v1918 = vrot.slane %v1771, 5
    %v1921 = vadd.f32 %v650, %v1917
    %v1922 = vadd.f32 %v651, %v1918
    %v1923 = vxor.u32 %v1921, 2147483648
    %v1924 = vxor.u32 %v1922, 2147483648
    %v1925 = vmul.f32 %v1923, 1.442695
    %v1926 = vpow.pop %v1925
    %v1927 = vmul.f32 %v1924, 1.442695
    %v1928 = vpow.pop %v1927
    %v1929 = vadd.f32 %v1926, 1.0
    %v1930 = vadd.f32 %v1928, 1.0
    %v1931 = vrcp.pop %v1929
    %v1932 = vmul.f32 1.0, %v1931
    %v1933 = vrcp.pop %v1930
    %v1934 = vmul.f32 1.0, %v1933
    %v1937 = vrot.slane %v1840, 5
    %v1938 = vrot.slane %v1842, 5
    %v1941 = vadd.f32 %v652, %v1937
    %v1942 = vadd.f32 %v653, %v1938
    %v1943 = vxor.u32 %v1941, 2147483648
    %v1944 = vxor.u32 %v1942, 2147483648
    %v1945 = vmul.f32 %v1943, 1.442695
    %v1946 = vpow.pop %v1945
    %v1947 = vmul.f32 %v1944, 1.442695
    %v1948 = vpow.pop %v1947
    %v1949 = vadd.f32 %v1946, 1.0
    %v1950 = vadd.f32 %v1948, 1.0
    %v1951 = vrcp.pop %v1949
    %v1952 = vmul.f32 1.0, %v1951
    %v1953 = vrcp.pop %v1950
    %v1954 = vmul.f32 1.0, %v1953
    %v1957 = vrot.slane %v1911, 5
    %v1958 = vrot.slane %v1913, 5
    %v1961 = vmul.f32 %v1932, %v1957
    %v1962 = vmul.f32 %v1934, %v1958
    %v1963 = vadd.f32 %v654, %v1961
    %v1964 = vadd.f32 %v655, %v1962
    %v1965 = vtanh.pop %v1963
    %v1966 = vtanh.pop %v1964
    %v1967 = vsub.f32 1.0, %v1952
    %v1968 = vsub.f32 1.0, %v1954
    %v1969 = vmul.f32 %v1967, %v1965
    %v1970 = vmul.f32 %v1968, %v1966
    %v1971 = vrot.slane %v1694, 7
    %v1972 = vrot.slane %v1695, 7
    %v1975 = vmul.f32 %v1952, %v1971
    %v1976 = vmul.f32 %v1954, %v1972
    %v1977 = vadd.f32 %v1969, %v1975
    %v1978 = vadd.f32 %v1970, %v1976
    %v1981 = vrot.slane %v1977, 3
    %v1982 = vrot.slane %v1978, 3
    %1985 = vmatprep.subr.mxu0 %v657
    %1986 = vmatpush1.msra.mxu0 %v656
    %1987 = vmatprep.subr.mxu0 %v663
    %1988 = vmatpush1.msra.mxu0 %v662
    %1989 = vmatprep.subr.mxu0 %v669
    %1990 = vmatpush1.msra.mxu0 %v668
    %1991 = vmatprep.subr.mxu0 %v675
    %1992 = vmatpush1.msra.mxu0 %v674
    %1993 = vmatprep.subr.mxu0 %v681
    %1994 = vmatpush1.msra.mxu0 %v680
    %1995 = vmatprep.subr.mxu0 %v687
    %1996 = vmatpush1.msra.mxu0 %v686
    %1997 = vmatprep.subr.mxu0 %v693
    %1998 = vmatpush1.msra.mxu0 %v692
    %1999 = vmatprep.subr.mxu0 %v699
    %2000 = vmatpush1.msra.mxu0 %v698
    %2001 = vmatprep.subr.mxu0 %v705
    %2002 = vmatpush1.msra.mxu0 %v704
    %2003 = vmatprep.subr.mxu0 %v711
    %2004 = vmatpush1.msra.mxu0 %v710
    %2005 = vmatprep.subr.mxu0 %v717
    %2006 = vmatpush1.msra.mxu0 %v716
    %2007 = vmatprep.subr.mxu0 %v723
    %2008 = vmatpush1.msra.mxu0 %v722
    %2009 = vmatprep.subr.mxu0 %v729
    %2010 = vmatpush1.msra.mxu0 %v728
    %2011 = vmatprep.subr.mxu0 %v735
    %2012 = vmatpush1.msra.mxu0 %v734
    %2013 = vmatprep.subr.mxu0 %v741
    %2014 = vmatpush1.msra.mxu0 %v740
    %2015 = vmatprep.subr.mxu0 %v747
    %2016 = vmatpush1.msra.mxu0 %v746
    %2017 = vmatprep.subr.mxu0 %v753
    %2018 = vmatpush1.msra.mxu0 %v752
    %2019 = vmatprep.subr.mxu0 %v759
    %2020 = vmatpush1.msra.mxu0 %v758
    %2021 = vmatprep.subr.mxu0 %v765
    %2022 = vmatpush1.msra.mxu0 %v764
    %2023 = vmatprep.subr.mxu0 %v771
    %2024 = vmatpush1.msra.mxu0 %v770
    %2025 = vmatprep.subr.mxu0 %v777
    %2026 = vmatpush1.msra.mxu0 %v776
    %2027 = vmatprep.subr.mxu0 %v783
    %2028 = vmatpush1.msra.mxu0 %v782
    %2029 = vmatprep.subr.mxu0 %v789
    %2030 = vmatpush1.msra.mxu0 %v788
    %2031 = vmatprep.subr.mxu0 %v795
    %2032 = vmatpush1.msra.mxu0 %v794
    %2033 = vmatprep.subr.mxu0 %v801
    %2034 = vmatpush1.msra.mxu0 %v800
    %2035 = vmatprep.subr.mxu0 %v807
    %2036 = vmatpush1.msra.mxu0 %v806
    %2037 = vmatprep.subr.mxu0 %v813
    %2038 = vmatpush1.msra.mxu0 %v812
    %2039 = vmatprep.subr.mxu0 %v819
    %2040 = vmatpush1.msra.mxu0 %v818
    %2041 = vmatprep.subr.mxu0 %v825
    %2042 = vmatpush1.msra.mxu0 %v824
    %2043 = vmatprep.subr.mxu0 %v831
    %2044 = vmatpush1.msra.mxu0 %v830
    %2045 = vmatprep.subr.mxu0 %v837
    %2046 = vmatpush1.msra.mxu0 %v836
    %2047 = vmatprep.subr.mxu0 %v843
    %2048 = vmatpush1.msra.mxu0 %v842
    %2049 = vmatprep.mubr.f32.mxu0 %v1982
    %2050 = vmatmul.mubr.f32.gmra.mrb[0].mxu0 %v1981
    %v2051 = vpop.f32.mrb[0].mxu0
    %v2052 = vadd.f32 %v852, %v2051
    %v2053 = vpop.f32.mrb[0].mxu0
    %v2054 = vadd.f32 %v856, %v2053
    %2055 = vdwg.mxu0
    %2056 = vmatprep.subr.mxu0 %v659
    %2057 = vmatpush1.msra.mxu0 %v658
    %2058 = vmatprep.subr.mxu0 %v665
    %2059 = vmatpush1.msra.mxu0 %v664
    %2060 = vmatprep.subr.mxu0 %v671
    %2061 = vmatpush1.msra.mxu0 %v670
    %2062 = vmatprep.subr.mxu0 %v677
    %2063 = vmatpush1.msra.mxu0 %v676
    %2064 = vmatprep.subr.mxu0 %v683
    %2065 = vmatpush1.msra.mxu0 %v682
    %2066 = vmatprep.subr.mxu0 %v689
    %2067 = vmatpush1.msra.mxu0 %v688
    %2068 = vmatprep.subr.mxu0 %v695
    %2069 = vmatpush1.msra.mxu0 %v694
    %2070 = vmatprep.subr.mxu0 %v701
    %2071 = vmatpush1.msra.mxu0 %v700
    %2072 = vmatprep.subr.mxu0 %v707
    %2073 = vmatpush1.msra.mxu0 %v706
    %2074 = vmatprep.subr.mxu0 %v713
    %2075 = vmatpush1.msra.mxu0 %v712
    %2076 = vmatprep.subr.mxu0 %v719
    %2077 = vmatpush1.msra.mxu0 %v718
    %2078 = vmatprep.subr.mxu0 %v725
    %2079 = vmatpush1.msra.mxu0 %v724
    %2080 = vmatprep.subr.mxu0 %v731
    %2081 = vmatpush1.msra.mxu0 %v730
    %2082 = vmatprep.subr.mxu0 %v737
    %2083 = vmatpush1.msra.mxu0 %v736
    %2084 = vmatprep.subr.mxu0 %v743
    %2085 = vmatpush1.msra.mxu0 %v742
    %2086 = vmatprep.subr.mxu0 %v749
    %2087 = vmatpush1.msra.mxu0 %v748
    %2088 = vmatprep.subr.mxu0 %v755
    %2089 = vmatpush1.msra.mxu0 %v754
    %2090 = vmatprep.subr.mxu0 %v761
    %2091 = vmatpush1.msra.mxu0 %v760
    %2092 = vmatprep.subr.mxu0 %v767
    %2093 = vmatpush1.msra.mxu0 %v766
    %2094 = vmatprep.subr.mxu0 %v773
    %2095 = vmatpush1.msra.mxu0 %v772
    %2096 = vmatprep.subr.mxu0 %v779
    %2097 = vmatpush1.msra.mxu0 %v778
    %2098 = vmatprep.subr.mxu0 %v785
    %2099 = vmatpush1.msra.mxu0 %v784
    %2100 = vmatprep.subr.mxu0 %v791
    %2101 = vmatpush1.msra.mxu0 %v790
    %2102 = vmatprep.subr.mxu0 %v797
    %2103 = vmatpush1.msra.mxu0 %v796
    %2104 = vmatprep.subr.mxu0 %v803
    %2105 = vmatpush1.msra.mxu0 %v802
    %2106 = vmatprep.subr.mxu0 %v809
    %2107 = vmatpush1.msra.mxu0 %v808
    %2108 = vmatprep.subr.mxu0 %v815
    %2109 = vmatpush1.msra.mxu0 %v814
    %2110 = vmatprep.subr.mxu0 %v821
    %2111 = vmatpush1.msra.mxu0 %v820
    %2112 = vmatprep.subr.mxu0 %v827
    %2113 = vmatpush1.msra.mxu0 %v826
    %2114 = vmatprep.subr.mxu0 %v833
    %2115 = vmatpush1.msra.mxu0 %v832
    %2116 = vmatprep.subr.mxu0 %v839
    %2117 = vmatpush1.msra.mxu0 %v838
    %2118 = vmatprep.subr.mxu0 %v845
    %2119 = vmatpush1.msra.mxu0 %v844
    %2120 = vmatprep.mubr.f32.mxu0 %v1982
    %2121 = vmatmul.mubr.f32.gmra.mrb[0].mxu0 %v1981
    %v2122 = vpop.f32.mrb[0].mxu0
    %v2123 = vadd.f32 %v860, %v2122
    %v2124 = vpop.f32.mrb[0].mxu0
    %v2125 = vadd.f32 %v864, %v2124
    %2126 = vdwg.mxu0
    %2127 = vmatprep.subr.mxu0 %v661
    %2128 = vmatpush1.msra.mxu0 %v660
    %2129 = vmatprep.subr.mxu0 %v667
    %2130 = vmatpush1.msra.mxu0 %v666
    %2131 = vmatprep.subr.mxu0 %v673
    %2132 = vmatpush1.msra.mxu0 %v672
    %2133 = vmatprep.subr.mxu0 %v679
    %2134 = vmatpush1.msra.mxu0 %v678
    %2135 = vmatprep.subr.mxu0 %v685
    %2136 = vmatpush1.msra.mxu0 %v684
    %2137 = vmatprep.subr.mxu0 %v691
    %2138 = vmatpush1.msra.mxu0 %v690
    %2139 = vmatprep.subr.mxu0 %v697
    %2140 = vmatpush1.msra.mxu0 %v696
    %2141 = vmatprep.subr.mxu0 %v703
    %2142 = vmatpush1.msra.mxu0 %v702
    %2143 = vmatprep.subr.mxu0 %v709
    %2144 = vmatpush1.msra.mxu0 %v708
    %2145 = vmatprep.subr.mxu0 %v715
    %2146 = vmatpush1.msra.mxu0 %v714
    %2147 = vmatprep.subr.mxu0 %v721
    %2148 = vmatpush1.msra.mxu0 %v720
    %2149 = vmatprep.subr.mxu0 %v727
    %2150 = vmatpush1.msra.mxu0 %v726
    %2151 = vmatprep.subr.mxu0 %v733
    %2152 = vmatpush1.msra.mxu0 %v732
    %2153 = vmatprep.subr.mxu0 %v739
    %2154 = vmatpush1.msra.mxu0 %v738
    %2155 = vmatprep.subr.mxu0 %v745
    %2156 = vmatpush1.msra.mxu0 %v744
    %2157 = vmatprep.subr.mxu0 %v751
    %2158 = vmatpush1.msra.mxu0 %v750
    %2159 = vmatprep.subr.mxu0 %v757
    %2160 = vmatpush1.msra.mxu0 %v756
    %2161 = vmatprep.subr.mxu0 %v763
    %2162 = vmatpush1.msra.mxu0 %v762
    %2163 = vmatprep.subr.mxu0 %v769
    %2164 = vmatpush1.msra.mxu0 %v768
    %2165 = vmatprep.subr.mxu0 %v775
    %2166 = vmatpush1.msra.mxu0 %v774
    %2167 = vmatprep.subr.mxu0 %v781
    %2168 = vmatpush1.msra.mxu0 %v780
    %2169 = vmatprep.subr.mxu0 %v787
    %2170 = vmatpush1.msra.mxu0 %v786
    %2171 = vmatprep.subr.mxu0 %v793
    %2172 = vmatpush1.msra.mxu0 %v792
    %2173 = vmatprep.subr.mxu0 %v799
    %2174 = vmatpush1.msra.mxu0 %v798
    %2175 = vmatprep.subr.mxu0 %v805
    %2176 = vmatpush1.msra.mxu0 %v804
    %2177 = vmatprep.subr.mxu0 %v811
    %2178 = vmatpush1.msra.mxu0 %v810
    %2179 = vmatprep.subr.mxu0 %v817
    %2180 = vmatpush1.msra.mxu0 %v816
    %2181 = vmatprep.subr.mxu0 %v823
    %2182 = vmatpush1.msra.mxu0 %v822
    %2183 = vmatprep.subr.mxu0 %v829
    %2184 = vmatpush1.msra.mxu0 %v828
    %2185 = vmatprep.subr.mxu0 %v835
    %2186 = vmatpush1.msra.mxu0 %v834
    %2187 = vmatprep.subr.mxu0 %v841
    %2188 = vmatpush1.msra.mxu0 %v840
    %2189 = vmatprep.subr.mxu0 %v847
    %2190 = vmatpush1.msra.mxu0 %v846
    %2191 = vmatprep.mubr.f32.mxu0 %v1982
    %2192 = vmatmul.mubr.f32.gmra.mrb[0].mxu0 %v1981
    %v2193 = vpop.f32.mrb[0].mxu0
    %v2194 = vadd.f32 %v868, %v2193
    %v2195 = vpop.f32.mrb[0].mxu0
    %v2196 = vadd.f32 %v872, %v2195
    %2197 = vdwg.mxu0
    %v2200 = vrot.slane %v2052, 4
    %v2201 = vrot.slane %v2054, 4
    %v2204 = vadd.f32 %v650, %v2200
    %v2205 = vadd.f32 %v651, %v2201
    %v2206 = vxor.u32 %v2204, 2147483648
    %v2207 = vxor.u32 %v2205, 2147483648
    %v2208 = vmul.f32 %v2206, 1.442695
    %v2209 = vpow.pop %v2208
    %v2210 = vmul.f32 %v2207, 1.442695
    %v2211 = vpow.pop %v2210
    %v2212 = vadd.f32 %v2209, 1.0
    %v2213 = vadd.f32 %v2211, 1.0
    %v2214 = vrcp.pop %v2212
    %v2215 = vmul.f32 1.0, %v2214
    %v2216 = vrcp.pop %v2213
    %v2217 = vmul.f32 1.0, %v2216
    %v2220 = vrot.slane %v2123, 4
    %v2221 = vrot.slane %v2125, 4
    %v2224 = vadd.f32 %v652, %v2220
    %v2225 = vadd.f32 %v653, %v2221
    %v2226 = vxor.u32 %v2224, 2147483648
    %v2227 = vxor.u32 %v2225, 2147483648
    %v2228 = vmul.f32 %v2226, 1.442695
    %v2229 = vpow.pop %v2228
    %v2230 = vmul.f32 %v2227, 1.442695
    %v2231 = vpow.pop %v2230
    %v2232 = vadd.f32 %v2229, 1.0
    %v2233 = vadd.f32 %v2231, 1.0
    %v2234 = vrcp.pop %v2232
    %v2235 = vmul.f32 1.0, %v2234
    %v2236 = vrcp.pop %v2233
    %v2237 = vmul.f32 1.0, %v2236
    %v2240 = vrot.slane %v2194, 4
    %v2241 = vrot.slane %v2196, 4
    %v2244 = vmul.f32 %v2215, %v2240
    %v2245 = vmul.f32 %v2217, %v2241
    %v2246 = vadd.f32 %v654, %v2244
    %v2247 = vadd.f32 %v655, %v2245
    %v2248 = vtanh.pop %v2246
    %v2249 = vtanh.pop %v2247
    %v2250 = vsub.f32 1.0, %v2235
    %v2251 = vsub.f32 1.0, %v2237
    %v2252 = vmul.f32 %v2250, %v2248
    %v2253 = vmul.f32 %v2251, %v2249
    %v2254 = vrot.slane %v1977, 7
    %v2255 = vrot.slane %v1978, 7
    %v2258 = vmul.f32 %v2235, %v2254
    %v2259 = vmul.f32 %v2237, %v2255
    %v2260 = vadd.f32 %v2252, %v2258
    %v2261 = vadd.f32 %v2253, %v2259
    %v2264 = vrot.slane %v2260, 4
    %v2265 = vrot.slane %v2261, 4
    %2268 = vmatprep.subr.mxu0 %v657
    %2269 = vmatpush1.msra.mxu0 %v656
    %2270 = vmatprep.subr.mxu0 %v663
    %2271 = vmatpush1.msra.mxu0 %v662
    %2272 = vmatprep.subr.mxu0 %v669
    %2273 = vmatpush1.msra.mxu0 %v668
    %2274 = vmatprep.subr.mxu0 %v675
    %2275 = vmatpush1.msra.mxu0 %v674
    %2276 = vmatprep.subr.mxu0 %v681
    %2277 = vmatpush1.msra.mxu0 %v680
    %2278 = vmatprep.subr.mxu0 %v687
    %2279 = vmatpush1.msra.mxu0 %v686
    %2280 = vmatprep.subr.mxu0 %v693
    %2281 = vmatpush1.msra.mxu0 %v692
    %2282 = vmatprep.subr.mxu0 %v699
    %2283 = vmatpush1.msra.mxu0 %v698
    %2284 = vmatprep.subr.mxu0 %v705
    %2285 = vmatpush1.msra.mxu0 %v704
    %2286 = vmatprep.subr.mxu0 %v711
    %2287 = vmatpush1.msra.mxu0 %v710
    %2288 = vmatprep.subr.mxu0 %v717
    %2289 = vmatpush1.msra.mxu0 %v716
    %2290 = vmatprep.subr.mxu0 %v723
    %2291 = vmatpush1.msra.mxu0 %v722
    %2292 = vmatprep.subr.mxu0 %v729
    %2293 = vmatpush1.msra.mxu0 %v728
    %2294 = vmatprep.subr.mxu0 %v735
    %2295 = vmatpush1.msra.mxu0 %v734
    %2296 = vmatprep.subr.mxu0 %v741
    %2297 = vmatpush1.msra.mxu0 %v740
    %2298 = vmatprep.subr.mxu0 %v747
    %2299 = vmatpush1.msra.mxu0 %v746
    %2300 = vmatprep.subr.mxu0 %v753
    %2301 = vmatpush1.msra.mxu0 %v752
    %2302 = vmatprep.subr.mxu0 %v759
    %2303 = vmatpush1.msra.mxu0 %v758
    %2304 = vmatprep.subr.mxu0 %v765
    %2305 = vmatpush1.msra.mxu0 %v764
    %2306 = vmatprep.subr.mxu0 %v771
    %2307 = vmatpush1.msra.mxu0 %v770
    %2308 = vmatprep.subr.mxu0 %v777
    %2309 = vmatpush1.msra.mxu0 %v776
    %2310 = vmatprep.subr.mxu0 %v783
    %2311 = vmatpush1.msra.mxu0 %v782
    %2312 = vmatprep.subr.mxu0 %v789
    %2313 = vmatpush1.msra.mxu0 %v788
    %2314 = vmatprep.subr.mxu0 %v795
    %2315 = vmatpush1.msra.mxu0 %v794
    %2316 = vmatprep.subr.mxu0 %v801
    %2317 = vmatpush1.msra.mxu0 %v800
    %2318 = vmatprep.subr.mxu0 %v807
    %2319 = vmatpush1.msra.mxu0 %v806
    %2320 = vmatprep.subr.mxu0 %v813
    %2321 = vmatpush1.msra.mxu0 %v812
    %2322 = vmatprep.subr.mxu0 %v819
    %2323 = vmatpush1.msra.mxu0 %v818
    %2324 = vmatprep.subr.mxu0 %v825
    %2325 = vmatpush1.msra.mxu0 %v824
    %2326 = vmatprep.subr.mxu0 %v831
    %2327 = vmatpush1.msra.mxu0 %v830
    %2328 = vmatprep.subr.mxu0 %v837
    %2329 = vmatpush1.msra.mxu0 %v836
    %2330 = vmatprep.subr.mxu0 %v843
    %2331 = vmatpush1.msra.mxu0 %v842
    %2332 = vmatprep.mubr.f32.mxu0 %v2265
    %2333 = vmatmul.mubr.f32.gmra.mrb[0].mxu0 %v2264
    %v2334 = vpop.f32.mrb[0].mxu0
    %v2335 = vadd.f32 %v852, %v2334
    %v2336 = vpop.f32.mrb[0].mxu0
    %v2337 = vadd.f32 %v856, %v2336
    %2338 = vdwg.mxu0
    %2339 = vmatprep.subr.mxu0 %v659
    %2340 = vmatpush1.msra.mxu0 %v658
    %2341 = vmatprep.subr.mxu0 %v665
    %2342 = vmatpush1.msra.mxu0 %v664
    %2343 = vmatprep.subr.mxu0 %v671
    %2344 = vmatpush1.msra.mxu0 %v670
    %2345 = vmatprep.subr.mxu0 %v677
    %2346 = vmatpush1.msra.mxu0 %v676
    %2347 = vmatprep.subr.mxu0 %v683
    %2348 = vmatpush1.msra.mxu0 %v682
    %2349 = vmatprep.subr.mxu0 %v689
    %2350 = vmatpush1.msra.mxu0 %v688
    %2351 = vmatprep.subr.mxu0 %v695
    %2352 = vmatpush1.msra.mxu0 %v694
    %2353 = vmatprep.subr.mxu0 %v701
    %2354 = vmatpush1.msra.mxu0 %v700
    %2355 = vmatprep.subr.mxu0 %v707
    %2356 = vmatpush1.msra.mxu0 %v706
    %2357 = vmatprep.subr.mxu0 %v713
    %2358 = vmatpush1.msra.mxu0 %v712
    %2359 = vmatprep.subr.mxu0 %v719
    %2360 = vmatpush1.msra.mxu0 %v718
    %2361 = vmatprep.subr.mxu0 %v725
    %2362 = vmatpush1.msra.mxu0 %v724
    %2363 = vmatprep.subr.mxu0 %v731
    %2364 = vmatpush1.msra.mxu0 %v730
    %2365 = vmatprep.subr.mxu0 %v737
    %2366 = vmatpush1.msra.mxu0 %v736
    %2367 = vmatprep.subr.mxu0 %v743
    %2368 = vmatpush1.msra.mxu0 %v742
    %2369 = vmatprep.subr.mxu0 %v749
    %2370 = vmatpush1.msra.mxu0 %v748
    %2371 = vmatprep.subr.mxu0 %v755
    %2372 = vmatpush1.msra.mxu0 %v754
    %2373 = vmatprep.subr.mxu0 %v761
    %2374 = vmatpush1.msra.mxu0 %v760
    %2375 = vmatprep.subr.mxu0 %v767
    %2376 = vmatpush1.msra.mxu0 %v766
    %2377 = vmatprep.subr.mxu0 %v773
    %2378 = vmatpush1.msra.mxu0 %v772
    %2379 = vmatprep.subr.mxu0 %v779
    %2380 = vmatpush1.msra.mxu0 %v778
    %2381 = vmatprep.subr.mxu0 %v785
    %2382 = vmatpush1.msra.mxu0 %v784
    %2383 = vmatprep.subr.mxu0 %v791
    %2384 = vmatpush1.msra.mxu0 %v790
    %2385 = vmatprep.subr.mxu0 %v797
    %2386 = vmatpush1.msra.mxu0 %v796
    %2387 = vmatprep.subr.mxu0 %v803
    %2388 = vmatpush1.msra.mxu0 %v802
    %2389 = vmatprep.subr.mxu0 %v809
    %2390 = vmatpush1.msra.mxu0 %v808
    %2391 = vmatprep.subr.mxu0 %v815
    %2392 = vmatpush1.msra.mxu0 %v814
    %2393 = vmatprep.subr.mxu0 %v821
    %2394 = vmatpush1.msra.mxu0 %v820
    %2395 = vmatprep.subr.mxu0 %v827
    %2396 = vmatpush1.msra.mxu0 %v826
    %2397 = vmatprep.subr.mxu0 %v833
    %2398 = vmatpush1.msra.mxu0 %v832
    %2399 = vmatprep.subr.mxu0 %v839
    %2400 = vmatpush1.msra.mxu0 %v838
    %2401 = vmatprep.subr.mxu0 %v845
    %2402 = vmatpush1.msra.mxu0 %v844
    %2403 = vmatprep.mubr.f32.mxu0 %v2265
    %2404 = vmatmul.mubr.f32.gmra.mrb[0].mxu0 %v2264
    %v2405 = vpop.f32.mrb[0].mxu0
    %v2406 = vadd.f32 %v860, %v2405
    %v2407 = vpop.f32.mrb[0].mxu0
    %v2408 = vadd.f32 %v864, %v2407
    %2409 = vdwg.mxu0
    %2410 = vmatprep.subr.mxu0 %v661
    %2411 = vmatpush1.msra.mxu0 %v660
    %2412 = vmatprep.subr.mxu0 %v667
    %2413 = vmatpush1.msra.mxu0 %v666
    %2414 = vmatprep.subr.mxu0 %v673
    %2415 = vmatpush1.msra.mxu0 %v672
    %2416 = vmatprep.subr.mxu0 %v679
    %2417 = vmatpush1.msra.mxu0 %v678
    %2418 = vmatprep.subr.mxu0 %v685
    %2419 = vmatpush1.msra.mxu0 %v684
    %2420 = vmatprep.subr.mxu0 %v691
    %2421 = vmatpush1.msra.mxu0 %v690
    %2422 = vmatprep.subr.mxu0 %v697
    %2423 = vmatpush1.msra.mxu0 %v696
    %2424 = vmatprep.subr.mxu0 %v703
    %2425 = vmatpush1.msra.mxu0 %v702
    %2426 = vmatprep.subr.mxu0 %v709
    %2427 = vmatpush1.msra.mxu0 %v708
    %2428 = vmatprep.subr.mxu0 %v715
    %2429 = vmatpush1.msra.mxu0 %v714
    %2430 = vmatprep.subr.mxu0 %v721
    %2431 = vmatpush1.msra.mxu0 %v720
    %2432 = vmatprep.subr.mxu0 %v727
    %2433 = vmatpush1.msra.mxu0 %v726
    %2434 = vmatprep.subr.mxu0 %v733
    %2435 = vmatpush1.msra.mxu0 %v732
    %2436 = vmatprep.subr.mxu0 %v739
    %2437 = vmatpush1.msra.mxu0 %v738
    %2438 = vmatprep.subr.mxu0 %v745
    %2439 = vmatpush1.msra.mxu0 %v744
    %2440 = vmatprep.subr.mxu0 %v751
    %2441 = vmatpush1.msra.mxu0 %v750
    %2442 = vmatprep.subr.mxu0 %v757
    %2443 = vmatpush1.msra.mxu0 %v756
    %2444 = vmatprep.subr.mxu0 %v763
    %2445 = vmatpush1.msra.mxu0 %v762
    %2446 = vmatprep.subr.mxu0 %v769
    %2447 = vmatpush1.msra.mxu0 %v768
    %2448 = vmatprep.subr.mxu0 %v775
    %2449 = vmatpush1.msra.mxu0 %v774
    %2450 = vmatprep.subr.mxu0 %v781
    %2451 = vmatpush1.msra.mxu0 %v780
    %2452 = vmatprep.subr.mxu0 %v787
    %2453 = vmatpush1.msra.mxu0 %v786
    %2454 = vmatprep.subr.mxu0 %v793
    %2455 = vmatpush1.msra.mxu0 %v792
    %2456 = vmatprep.subr.mxu0 %v799
    %2457 = vmatpush1.msra.mxu0 %v798
    %2458 = vmatprep.subr.mxu0 %v805
    %2459 = vmatpush1.msra.mxu0 %v804
    %2460 = vmatprep.subr.mxu0 %v811
    %2461 = vmatpush1.msra.mxu0 %v810
    %2462 = vmatprep.subr.mxu0 %v817
    %2463 = vmatpush1.msra.mxu0 %v816
    %2464 = vmatprep.subr.mxu0 %v823
    %2465 = vmatpush1.msra.mxu0 %v822
    %2466 = vmatprep.subr.mxu0 %v829
    %2467 = vmatpush1.msra.mxu0 %v828
    %2468 = vmatprep.subr.mxu0 %v835
    %2469 = vmatpush1.msra.mxu0 %v834
    %2470 = vmatprep.subr.mxu0 %v841
    %2471 = vmatpush1.msra.mxu0 %v840
    %2472 = vmatprep.subr.mxu0 %v847
    %2473 = vmatpush1.msra.mxu0 %v846
    %2474 = vmatprep.mubr.f32.mxu0 %v2265
    %2475 = vmatmul.mubr.f32.gmra.mrb[0].mxu0 %v2264
    %v2476 = vpop.f32.mrb[0].mxu0
    %v2477 = vadd.f32 %v868, %v2476
    %v2478 = vpop.f32.mrb[0].mxu0
    %v2479 = vadd.f32 %v872, %v2478
    %2480 = vdwg.mxu0
    %v2483 = vrot.slane %v2335, 3
    %v2484 = vrot.slane %v2337, 3
    %v2487 = vadd.f32 %v650, %v2483
    %v2488 = vadd.f32 %v651, %v2484
    %v2489 = vxor.u32 %v2487, 2147483648
    %v2490 = vxor.u32 %v2488, 2147483648
    %v2491 = vmul.f32 %v2489, 1.442695
    %v2492 = vpow.pop %v2491
    %v2493 = vmul.f32 %v2490, 1.442695
    %v2494 = vpow.pop %v2493
    %v2495 = vadd.f32 %v2492, 1.0
    %v2496 = vadd.f32 %v2494, 1.0
    %v2497 = vrcp.pop %v2495
    %v2498 = vmul.f32 1.0, %v2497
    %v2499 = vrcp.pop %v2496
    %v2500 = vmul.f32 1.0, %v2499
    %v2503 = vrot.slane %v2406, 3
    %v2504 = vrot.slane %v2408, 3
    %v2507 = vadd.f32 %v652, %v2503
    %v2508 = vadd.f32 %v653, %v2504
    %v2509 = vxor.u32 %v2507, 2147483648
    %v2510 = vxor.u32 %v2508, 2147483648
    %v2511 = vmul.f32 %v2509, 1.442695
    %v2512 = vpow.pop %v2511
    %v2513 = vmul.f32 %v2510, 1.442695
    %v2514 = vpow.pop %v2513
    %v2515 = vadd.f32 %v2512, 1.0
    %v2516 = vadd.f32 %v2514, 1.0
    %v2517 = vrcp.pop %v2515
    %v2518 = vmul.f32 1.0, %v2517
    %v2519 = vrcp.pop %v2516
    %v2520 = vmul.f32 1.0, %v2519
    %v2523 = vrot.slane %v2477, 3
    %v2524 = vrot.slane %v2479, 3
    %v2527 = vmul.f32 %v2498, %v2523
    %v2528 = vmul.f32 %v2500, %v2524
    %v2529 = vadd.f32 %v654, %v2527
    %v2530 = vadd.f32 %v655, %v2528
    %v2531 = vtanh.pop %v2529
    %v2532 = vtanh.pop %v2530
    %v2533 = vsub.f32 1.0, %v2518
    %v2534 = vsub.f32 1.0, %v2520
    %v2535 = vmul.f32 %v2533, %v2531
    %v2536 = vmul.f32 %v2534, %v2532
    %v2537 = vrot.slane %v2260, 7
    %v2538 = vrot.slane %v2261, 7
    %v2541 = vmul.f32 %v2518, %v2537
    %v2542 = vmul.f32 %v2520, %v2538
    %v2543 = vadd.f32 %v2535, %v2541
    %v2544 = vadd.f32 %v2536, %v2542
    %v2547 = vrot.slane %v2543, 5
    %v2548 = vrot.slane %v2544, 5
    %2551 = vmatprep.subr.mxu0 %v657
    %2552 = vmatpush1.msra.mxu0 %v656
    %2553 = vmatprep.subr.mxu0 %v663
    %2554 = vmatpush1.msra.mxu0 %v662
    %2555 = vmatprep.subr.mxu0 %v669
    %2556 = vmatpush1.msra.mxu0 %v668
    %2557 = vmatprep.subr.mxu0 %v675
    %2558 = vmatpush1.msra.mxu0 %v674
    %2559 = vmatprep.subr.mxu0 %v681
    %2560 = vmatpush1.msra.mxu0 %v680
    %2561 = vmatprep.subr.mxu0 %v687
    %2562 = vmatpush1.msra.mxu0 %v686
    %2563 = vmatprep.subr.mxu0 %v693
    %2564 = vmatpush1.msra.mxu0 %v692
    %2565 = vmatprep.subr.mxu0 %v699
    %2566 = vmatpush1.msra.mxu0 %v698
    %2567 = vmatprep.subr.mxu0 %v705
    %2568 = vmatpush1.msra.mxu0 %v704
    %2569 = vmatprep.subr.mxu0 %v711
    %2570 = vmatpush1.msra.mxu0 %v710
    %2571 = vmatprep.subr.mxu0 %v717
    %2572 = vmatpush1.msra.mxu0 %v716
    %2573 = vmatprep.subr.mxu0 %v723
    %2574 = vmatpush1.msra.mxu0 %v722
    %2575 = vmatprep.subr.mxu0 %v729
    %2576 = vmatpush1.msra.mxu0 %v728
    %2577 = vmatprep.subr.mxu0 %v735
    %2578 = vmatpush1.msra.mxu0 %v734
    %2579 = vmatprep.subr.mxu0 %v741
    %2580 = vmatpush1.msra.mxu0 %v740
    %2581 = vmatprep.subr.mxu0 %v747
    %2582 = vmatpush1.msra.mxu0 %v746
    %2583 = vmatprep.subr.mxu0 %v753
    %2584 = vmatpush1.msra.mxu0 %v752
    %2585 = vmatprep.subr.mxu0 %v759
    %2586 = vmatpush1.msra.mxu0 %v758
    %2587 = vmatprep.subr.mxu0 %v765
    %2588 = vmatpush1.msra.mxu0 %v764
    %2589 = vmatprep.subr.mxu0 %v771
    %2590 = vmatpush1.msra.mxu0 %v770
    %2591 = vmatprep.subr.mxu0 %v777
    %2592 = vmatpush1.msra.mxu0 %v776
    %2593 = vmatprep.subr.mxu0 %v783
    %2594 = vmatpush1.msra.mxu0 %v782
    %2595 = vmatprep.subr.mxu0 %v789
    %2596 = vmatpush1.msra.mxu0 %v788
    %2597 = vmatprep.subr.mxu0 %v795
    %2598 = vmatpush1.msra.mxu0 %v794
    %2599 = vmatprep.subr.mxu0 %v801
    %2600 = vmatpush1.msra.mxu0 %v800
    %2601 = vmatprep.subr.mxu0 %v807
    %2602 = vmatpush1.msra.mxu0 %v806
    %2603 = vmatprep.subr.mxu0 %v813
    %2604 = vmatpush1.msra.mxu0 %v812
    %2605 = vmatprep.subr.mxu0 %v819
    %2606 = vmatpush1.msra.mxu0 %v818
    %2607 = vmatprep.subr.mxu0 %v825
    %2608 = vmatpush1.msra.mxu0 %v824
    %2609 = vmatprep.subr.mxu0 %v831
    %2610 = vmatpush1.msra.mxu0 %v830
    %2611 = vmatprep.subr.mxu0 %v837
    %2612 = vmatpush1.msra.mxu0 %v836
    %2613 = vmatprep.subr.mxu0 %v843
    %2614 = vmatpush1.msra.mxu0 %v842
    %2615 = vmatprep.mubr.f32.mxu0 %v2548
    %2616 = vmatmul.mubr.f32.gmra.mrb[0].mxu0 %v2547
    %v2617 = vpop.f32.mrb[0].mxu0
    %v2618 = vadd.f32 %v852, %v2617
    %v2619 = vpop.f32.mrb[0].mxu0
    %v2620 = vadd.f32 %v856, %v2619
    %2621 = vdwg.mxu0
    %2622 = vmatprep.subr.mxu0 %v659
    %2623 = vmatpush1.msra.mxu0 %v658
    %2624 = vmatprep.subr.mxu0 %v665
    %2625 = vmatpush1.msra.mxu0 %v664
    %2626 = vmatprep.subr.mxu0 %v671
    %2627 = vmatpush1.msra.mxu0 %v670
    %2628 = vmatprep.subr.mxu0 %v677
    %2629 = vmatpush1.msra.mxu0 %v676
    %2630 = vmatprep.subr.mxu0 %v683
    %2631 = vmatpush1.msra.mxu0 %v682
    %2632 = vmatprep.subr.mxu0 %v689
    %2633 = vmatpush1.msra.mxu0 %v688
    %2634 = vmatprep.subr.mxu0 %v695
    %2635 = vmatpush1.msra.mxu0 %v694
    %2636 = vmatprep.subr.mxu0 %v701
    %2637 = vmatpush1.msra.mxu0 %v700
    %2638 = vmatprep.subr.mxu0 %v707
    %2639 = vmatpush1.msra.mxu0 %v706
    %2640 = vmatprep.subr.mxu0 %v713
    %2641 = vmatpush1.msra.mxu0 %v712
    %2642 = vmatprep.subr.mxu0 %v719
    %2643 = vmatpush1.msra.mxu0 %v718
    %2644 = vmatprep.subr.mxu0 %v725
    %2645 = vmatpush1.msra.mxu0 %v724
    %2646 = vmatprep.subr.mxu0 %v731
    %2647 = vmatpush1.msra.mxu0 %v730
    %2648 = vmatprep.subr.mxu0 %v737
    %2649 = vmatpush1.msra.mxu0 %v736
    %2650 = vmatprep.subr.mxu0 %v743
    %2651 = vmatpush1.msra.mxu0 %v742
    %2652 = vmatprep.subr.mxu0 %v749
    %2653 = vmatpush1.msra.mxu0 %v748
    %2654 = vmatprep.subr.mxu0 %v755
    %2655 = vmatpush1.msra.mxu0 %v754
    %2656 = vmatprep.subr.mxu0 %v761
    %2657 = vmatpush1.msra.mxu0 %v760
    %2658 = vmatprep.subr.mxu0 %v767
    %2659 = vmatpush1.msra.mxu0 %v766
    %2660 = vmatprep.subr.mxu0 %v773
    %2661 = vmatpush1.msra.mxu0 %v772
    %2662 = vmatprep.subr.mxu0 %v779
    %2663 = vmatpush1.msra.mxu0 %v778
    %2664 = vmatprep.subr.mxu0 %v785
    %2665 = vmatpush1.msra.mxu0 %v784
    %2666 = vmatprep.subr.mxu0 %v791
    %2667 = vmatpush1.msra.mxu0 %v790
    %2668 = vmatprep.subr.mxu0 %v797
    %2669 = vmatpush1.msra.mxu0 %v796
    %2670 = vmatprep.subr.mxu0 %v803
    %2671 = vmatpush1.msra.mxu0 %v802
    %2672 = vmatprep.subr.mxu0 %v809
    %2673 = vmatpush1.msra.mxu0 %v808
    %2674 = vmatprep.subr.mxu0 %v815
    %2675 = vmatpush1.msra.mxu0 %v814
    %2676 = vmatprep.subr.mxu0 %v821
    %2677 = vmatpush1.msra.mxu0 %v820
    %2678 = vmatprep.subr.mxu0 %v827
    %2679 = vmatpush1.msra.mxu0 %v826
    %2680 = vmatprep.subr.mxu0 %v833
    %2681 = vmatpush1.msra.mxu0 %v832
    %2682 = vmatprep.subr.mxu0 %v839
    %2683 = vmatpush1.msra.mxu0 %v838
    %2684 = vmatprep.subr.mxu0 %v845
    %2685 = vmatpush1.msra.mxu0 %v844
    %2686 = vmatprep.mubr.f32.mxu0 %v2548
    %2687 = vmatmul.mubr.f32.gmra.mrb[0].mxu0 %v2547
    %v2688 = vpop.f32.mrb[0].mxu0
    %v2689 = vadd.f32 %v860, %v2688
    %v2690 = vpop.f32.mrb[0].mxu0
    %v2691 = vadd.f32 %v864, %v2690
    %2692 = vdwg.mxu0
    %2693 = vmatprep.subr.mxu0 %v661
    %2694 = vmatpush1.msra.mxu0 %v660
    %2695 = vmatprep.subr.mxu0 %v667
    %2696 = vmatpush1.msra.mxu0 %v666
    %2697 = vmatprep.subr.mxu0 %v673
    %2698 = vmatpush1.msra.mxu0 %v672
    %2699 = vmatprep.subr.mxu0 %v679
    %2700 = vmatpush1.msra.mxu0 %v678
    %2701 = vmatprep.subr.mxu0 %v685
    %2702 = vmatpush1.msra.mxu0 %v684
    %2703 = vmatprep.subr.mxu0 %v691
    %2704 = vmatpush1.msra.mxu0 %v690
    %2705 = vmatprep.subr.mxu0 %v697
    %2706 = vmatpush1.msra.mxu0 %v696
    %2707 = vmatprep.subr.mxu0 %v703
    %2708 = vmatpush1.msra.mxu0 %v702
    %2709 = vmatprep.subr.mxu0 %v709
    %2710 = vmatpush1.msra.mxu0 %v708
    %2711 = vmatprep.subr.mxu0 %v715
    %2712 = vmatpush1.msra.mxu0 %v714
    %2713 = vmatprep.subr.mxu0 %v721
    %2714 = vmatpush1.msra.mxu0 %v720
    %2715 = vmatprep.subr.mxu0 %v727
    %2716 = vmatpush1.msra.mxu0 %v726
    %2717 = vmatprep.subr.mxu0 %v733
    %2718 = vmatpush1.msra.mxu0 %v732
    %2719 = vmatprep.subr.mxu0 %v739
    %2720 = vmatpush1.msra.mxu0 %v738
    %2721 = vmatprep.subr.mxu0 %v745
    %2722 = vmatpush1.msra.mxu0 %v744
    %2723 = vmatprep.subr.mxu0 %v751
    %2724 = vmatpush1.msra.mxu0 %v750
    %2725 = vmatprep.subr.mxu0 %v757
    %2726 = vmatpush1.msra.mxu0 %v756
    %2727 = vmatprep.subr.mxu0 %v763
    %2728 = vmatpush1.msra.mxu0 %v762
    %2729 = vmatprep.subr.mxu0 %v769
    %2730 = vmatpush1.msra.mxu0 %v768
    %2731 = vmatprep.subr.mxu0 %v775
    %2732 = vmatpush1.msra.mxu0 %v774
    %2733 = vmatprep.subr.mxu0 %v781
    %2734 = vmatpush1.msra.mxu0 %v780
    %2735 = vmatprep.subr.mxu0 %v787
    %2736 = vmatpush1.msra.mxu0 %v786
    %2737 = vmatprep.subr.mxu0 %v793
    %2738 = vmatpush1.msra.mxu0 %v792
    %2739 = vmatprep.subr.mxu0 %v799
    %2740 = vmatpush1.msra.mxu0 %v798
    %2741 = vmatprep.subr.mxu0 %v805
    %2742 = vmatpush1.msra.mxu0 %v804
    %2743 = vmatprep.subr.mxu0 %v811
    %2744 = vmatpush1.msra.mxu0 %v810
    %2745 = vmatprep.subr.mxu0 %v817
    %2746 = vmatpush1.msra.mxu0 %v816
    %2747 = vmatprep.subr.mxu0 %v823
    %2748 = vmatpush1.msra.mxu0 %v822
    %2749 = vmatprep.subr.mxu0 %v829
    %2750 = vmatpush1.msra.mxu0 %v828
    %2751 = vmatprep.subr.mxu0 %v835
    %2752 = vmatpush1.msra.mxu0 %v834
    %2753 = vmatprep.subr.mxu0 %v841
    %2754 = vmatpush1.msra.mxu0 %v840
    %2755 = vmatprep.subr.mxu0 %v847
    %2756 = vmatpush1.msra.mxu0 %v846
    %2757 = vmatprep.mubr.f32.mxu0 %v2548
    %2758 = vmatmul.mubr.f32.gmra.mrb[0].mxu0 %v2547
    %v2759 = vpop.f32.mrb[0].mxu0
    %v2760 = vadd.f32 %v868, %v2759
    %v2761 = vpop.f32.mrb[0].mxu0
    %v2762 = vadd.f32 %v872, %v2761
    %2763 = vdwg.mxu0
    %v2766 = vrot.slane %v2618, 2
    %v2767 = vrot.slane %v2620, 2
    %v2770 = vadd.f32 %v650, %v2766
    %v2771 = vadd.f32 %v651, %v2767
    %v2772 = vxor.u32 %v2770, 2147483648
    %v2773 = vxor.u32 %v2771, 2147483648
    %v2774 = vmul.f32 %v2772, 1.442695
    %v2775 = vpow.pop %v2774
    %v2776 = vmul.f32 %v2773, 1.442695
    %v2777 = vpow.pop %v2776
    %v2778 = vadd.f32 %v2775, 1.0
    %v2779 = vadd.f32 %v2777, 1.0
    %v2780 = vrcp.pop %v2778
    %v2781 = vmul.f32 1.0, %v2780
    %v2782 = vrcp.pop %v2779
    %v2783 = vmul.f32 1.0, %v2782
    %v2786 = vrot.slane %v2689, 2
    %v2787 = vrot.slane %v2691, 2
    %v2790 = vadd.f32 %v652, %v2786
    %v2791 = vadd.f32 %v653, %v2787
    %v2792 = vxor.u32 %v2790, 2147483648
    %v2793 = vxor.u32 %v2791, 2147483648
    %v2794 = vmul.f32 %v2792, 1.442695
    %v2795 = vpow.pop %v2794
    %v2796 = vmul.f32 %v2793, 1.442695
    %v2797 = vpow.pop %v2796
    %v2798 = vadd.f32 %v2795, 1.0
    %v2799 = vadd.f32 %v2797, 1.0
    %v2800 = vrcp.pop %v2798
    %v2801 = vmul.f32 1.0, %v2800
    %v2802 = vrcp.pop %v2799
    %v2803 = vmul.f32 1.0, %v2802
    %v2806 = vrot.slane %v2760, 2
    %v2807 = vrot.slane %v2762, 2
    %v2810 = vmul.f32 %v2781, %v2806
    %v2811 = vmul.f32 %v2783, %v2807
    %v2812 = vadd.f32 %v654, %v2810
    %v2813 = vadd.f32 %v655, %v2811
    %v2814 = vtanh.pop %v2812
    %v2815 = vtanh.pop %v2813
    %v2816 = vsub.f32 1.0, %v2801
    %v2817 = vsub.f32 1.0, %v2803
    %v2818 = vmul.f32 %v2816, %v2814
    %v2819 = vmul.f32 %v2817, %v2815
    %v2820 = vrot.slane %v2543, 7
    %v2821 = vrot.slane %v2544, 7
    %v2824 = vmul.f32 %v2801, %v2820
    %v2825 = vmul.f32 %v2803, %v2821
    %v2826 = vadd.f32 %v2818, %v2824
    %v2827 = vadd.f32 %v2819, %v2825
    %v2830 = vrot.slane %v2826, 6
    %v2831 = vrot.slane %v2827, 6
    %2834 = vmatprep.subr.mxu0 %v657
    %2835 = vmatpush1.msra.mxu0 %v656
    %2836 = vmatprep.subr.mxu0 %v663
    %2837 = vmatpush1.msra.mxu0 %v662
    %2838 = vmatprep.subr.mxu0 %v669
    %2839 = vmatpush1.msra.mxu0 %v668
    %2840 = vmatprep.subr.mxu0 %v675
    %2841 = vmatpush1.msra.mxu0 %v674
    %2842 = vmatprep.subr.mxu0 %v681
    %2843 = vmatpush1.msra.mxu0 %v680
    %2844 = vmatprep.subr.mxu0 %v687
    %2845 = vmatpush1.msra.mxu0 %v686
    %2846 = vmatprep.subr.mxu0 %v693
    %2847 = vmatpush1.msra.mxu0 %v692
    %2848 = vmatprep.subr.mxu0 %v699
    %2849 = vmatpush1.msra.mxu0 %v698
    %2850 = vmatprep.subr.mxu0 %v705
    %2851 = vmatpush1.msra.mxu0 %v704
    %2852 = vmatprep.subr.mxu0 %v711
    %2853 = vmatpush1.msra.mxu0 %v710
    %2854 = vmatprep.subr.mxu0 %v717
    %2855 = vmatpush1.msra.mxu0 %v716
    %2856 = vmatprep.subr.mxu0 %v723
    %2857 = vmatpush1.msra.mxu0 %v722
    %2858 = vmatprep.subr.mxu0 %v729
    %2859 = vmatpush1.msra.mxu0 %v728
    %2860 = vmatprep.subr.mxu0 %v735
    %2861 = vmatpush1.msra.mxu0 %v734
    %2862 = vmatprep.subr.mxu0 %v741
    %2863 = vmatpush1.msra.mxu0 %v740
    %2864 = vmatprep.subr.mxu0 %v747
    %2865 = vmatpush1.msra.mxu0 %v746
    %2866 = vmatprep.subr.mxu0 %v753
    %2867 = vmatpush1.msra.mxu0 %v752
    %2868 = vmatprep.subr.mxu0 %v759
    %2869 = vmatpush1.msra.mxu0 %v758
    %2870 = vmatprep.subr.mxu0 %v765
    %2871 = vmatpush1.msra.mxu0 %v764
    %2872 = vmatprep.subr.mxu0 %v771
    %2873 = vmatpush1.msra.mxu0 %v770
    %2874 = vmatprep.subr.mxu0 %v777
    %2875 = vmatpush1.msra.mxu0 %v776
    %2876 = vmatprep.subr.mxu0 %v783
    %2877 = vmatpush1.msra.mxu0 %v782
    %2878 = vmatprep.subr.mxu0 %v789
    %2879 = vmatpush1.msra.mxu0 %v788
    %2880 = vmatprep.subr.mxu0 %v795
    %2881 = vmatpush1.msra.mxu0 %v794
    %2882 = vmatprep.subr.mxu0 %v801
    %2883 = vmatpush1.msra.mxu0 %v800
    %2884 = vmatprep.subr.mxu0 %v807
    %2885 = vmatpush1.msra.mxu0 %v806
    %2886 = vmatprep.subr.mxu0 %v813
    %2887 = vmatpush1.msra.mxu0 %v812
    %2888 = vmatprep.subr.mxu0 %v819
    %2889 = vmatpush1.msra.mxu0 %v818
    %2890 = vmatprep.subr.mxu0 %v825
    %2891 = vmatpush1.msra.mxu0 %v824
    %2892 = vmatprep.subr.mxu0 %v831
    %2893 = vmatpush1.msra.mxu0 %v830
    %2894 = vmatprep.subr.mxu0 %v837
    %2895 = vmatpush1.msra.mxu0 %v836
    %2896 = vmatprep.subr.mxu0 %v843
    %2897 = vmatpush1.msra.mxu0 %v842
    %2898 = vmatprep.mubr.f32.mxu0 %v2831
    %2899 = vmatmul.mubr.f32.gmra.mrb[0].mxu0 %v2830
    %v2900 = vpop.f32.mrb[0].mxu0
    %v2901 = vadd.f32 %v852, %v2900
    %v2902 = vpop.f32.mrb[0].mxu0
    %v2903 = vadd.f32 %v856, %v2902
    %2904 = vdwg.mxu0
    %2905 = vmatprep.subr.mxu0 %v659
    %2906 = vmatpush1.msra.mxu0 %v658
    %2907 = vmatprep.subr.mxu0 %v665
    %2908 = vmatpush1.msra.mxu0 %v664
    %2909 = vmatprep.subr.mxu0 %v671
    %2910 = vmatpush1.msra.mxu0 %v670
    %2911 = vmatprep.subr.mxu0 %v677
    %2912 = vmatpush1.msra.mxu0 %v676
    %2913 = vmatprep.subr.mxu0 %v683
    %2914 = vmatpush1.msra.mxu0 %v682
    %2915 = vmatprep.subr.mxu0 %v689
    %2916 = vmatpush1.msra.mxu0 %v688
    %2917 = vmatprep.subr.mxu0 %v695
    %2918 = vmatpush1.msra.mxu0 %v694
    %2919 = vmatprep.subr.mxu0 %v701
    %2920 = vmatpush1.msra.mxu0 %v700
    %2921 = vmatprep.subr.mxu0 %v707
    %2922 = vmatpush1.msra.mxu0 %v706
    %2923 = vmatprep.subr.mxu0 %v713
    %2924 = vmatpush1.msra.mxu0 %v712
    %2925 = vmatprep.subr.mxu0 %v719
    %2926 = vmatpush1.msra.mxu0 %v718
    %2927 = vmatprep.subr.mxu0 %v725
    %2928 = vmatpush1.msra.mxu0 %v724
    %2929 = vmatprep.subr.mxu0 %v731
    %2930 = vmatpush1.msra.mxu0 %v730
    %2931 = vmatprep.subr.mxu0 %v737
    %2932 = vmatpush1.msra.mxu0 %v736
    %2933 = vmatprep.subr.mxu0 %v743
    %2934 = vmatpush1.msra.mxu0 %v742
    %2935 = vmatprep.subr.mxu0 %v749
    %2936 = vmatpush1.msra.mxu0 %v748
    %2937 = vmatprep.subr.mxu0 %v755
    %2938 = vmatpush1.msra.mxu0 %v754
    %2939 = vmatprep.subr.mxu0 %v761
    %2940 = vmatpush1.msra.mxu0 %v760
    %2941 = vmatprep.subr.mxu0 %v767
    %2942 = vmatpush1.msra.mxu0 %v766
    %2943 = vmatprep.subr.mxu0 %v773
    %2944 = vmatpush1.msra.mxu0 %v772
    %2945 = vmatprep.subr.mxu0 %v779
    %2946 = vmatpush1.msra.mxu0 %v778
    %2947 = vmatprep.subr.mxu0 %v785
    %2948 = vmatpush1.msra.mxu0 %v784
    %2949 = vmatprep.subr.mxu0 %v791
    %2950 = vmatpush1.msra.mxu0 %v790
    %2951 = vmatprep.subr.mxu0 %v797
    %2952 = vmatpush1.msra.mxu0 %v796
    %2953 = vmatprep.subr.mxu0 %v803
    %2954 = vmatpush1.msra.mxu0 %v802
    %2955 = vmatprep.subr.mxu0 %v809
    %2956 = vmatpush1.msra.mxu0 %v808
    %2957 = vmatprep.subr.mxu0 %v815
    %2958 = vmatpush1.msra.mxu0 %v814
    %2959 = vmatprep.subr.mxu0 %v821
    %2960 = vmatpush1.msra.mxu0 %v820
    %2961 = vmatprep.subr.mxu0 %v827
    %2962 = vmatpush1.msra.mxu0 %v826
    %2963 = vmatprep.subr.mxu0 %v833
    %2964 = vmatpush1.msra.mxu0 %v832
    %2965 = vmatprep.subr.mxu0 %v839
    %2966 = vmatpush1.msra.mxu0 %v838
    %2967 = vmatprep.subr.mxu0 %v845
    %2968 = vmatpush1.msra.mxu0 %v844
    %2969 = vmatprep.mubr.f32.mxu0 %v2831
    %2970 = vmatmul.mubr.f32.gmra.mrb[0].mxu0 %v2830
    %v2971 = vpop.f32.mrb[0].mxu0
    %v2972 = vadd.f32 %v860, %v2971
    %v2973 = vpop.f32.mrb[0].mxu0
    %v2974 = vadd.f32 %v864, %v2973
    %2975 = vdwg.mxu0
    %2976 = vmatprep.subr.mxu0 %v661
    %2977 = vmatpush1.msra.mxu0 %v660
    %2978 = vmatprep.subr.mxu0 %v667
    %2979 = vmatpush1.msra.mxu0 %v666
    %2980 = vmatprep.subr.mxu0 %v673
    %2981 = vmatpush1.msra.mxu0 %v672
    %2982 = vmatprep.subr.mxu0 %v679
    %2983 = vmatpush1.msra.mxu0 %v678
    %2984 = vmatprep.subr.mxu0 %v685
    %2985 = vmatpush1.msra.mxu0 %v684
    %2986 = vmatprep.subr.mxu0 %v691
    %2987 = vmatpush1.msra.mxu0 %v690
    %2988 = vmatprep.subr.mxu0 %v697
    %2989 = vmatpush1.msra.mxu0 %v696
    %2990 = vmatprep.subr.mxu0 %v703
    %2991 = vmatpush1.msra.mxu0 %v702
    %2992 = vmatprep.subr.mxu0 %v709
    %2993 = vmatpush1.msra.mxu0 %v708
    %2994 = vmatprep.subr.mxu0 %v715
    %2995 = vmatpush1.msra.mxu0 %v714
    %2996 = vmatprep.subr.mxu0 %v721
    %2997 = vmatpush1.msra.mxu0 %v720
    %2998 = vmatprep.subr.mxu0 %v727
    %2999 = vmatpush1.msra.mxu0 %v726
    %3000 = vmatprep.subr.mxu0 %v733
    %3001 = vmatpush1.msra.mxu0 %v732
    %3002 = vmatprep.subr.mxu0 %v739
    %3003 = vmatpush1.msra.mxu0 %v738
    %3004 = vmatprep.subr.mxu0 %v745
    %3005 = vmatpush1.msra.mxu0 %v744
    %3006 = vmatprep.subr.mxu0 %v751
    %3007 = vmatpush1.msra.mxu0 %v750
    %3008 = vmatprep.subr.mxu0 %v757
    %3009 = vmatpush1.msra.mxu0 %v756
    %3010 = vmatprep.subr.mxu0 %v763
    %3011 = vmatpush1.msra.mxu0 %v762
    %3012 = vmatprep.subr.mxu0 %v769
    %3013 = vmatpush1.msra.mxu0 %v768
    %3014 = vmatprep.subr.mxu0 %v775
    %3015 = vmatpush1.msra.mxu0 %v774
    %3016 = vmatprep.subr.mxu0 %v781
    %3017 = vmatpush1.msra.mxu0 %v780
    %3018 = vmatprep.subr.mxu0 %v787
    %3019 = vmatpush1.msra.mxu0 %v786
    %3020 = vmatprep.subr.mxu0 %v793
    %3021 = vmatpush1.msra.mxu0 %v792
    %3022 = vmatprep.subr.mxu0 %v799
    %3023 = vmatpush1.msra.mxu0 %v798
    %3024 = vmatprep.subr.mxu0 %v805
    %3025 = vmatpush1.msra.mxu0 %v804
    %3026 = vmatprep.subr.mxu0 %v811
    %3027 = vmatpush1.msra.mxu0 %v810
    %3028 = vmatprep.subr.mxu0 %v817
    %3029 = vmatpush1.msra.mxu0 %v816
    %3030 = vmatprep.subr.mxu0 %v823
    %3031 = vmatpush1.msra.mxu0 %v822
    %3032 = vmatprep.subr.mxu0 %v829
    %3033 = vmatpush1.msra.mxu0 %v828
    %3034 = vmatprep.subr.mxu0 %v835
    %3035 = vmatpush1.msra.mxu0 %v834
    %3036 = vmatprep.subr.mxu0 %v841
    %3037 = vmatpush1.msra.mxu0 %v840
    %3038 = vmatprep.subr.mxu0 %v847
    %3039 = vmatpush1.msra.mxu0 %v846
    %3040 = vmatprep.mubr.f32.mxu0 %v2831
    %3041 = vmatmul.mubr.f32.gmra.mrb[0].mxu0 %v2830
    %v3042 = vpop.f32.mrb[0].mxu0
    %v3043 = vadd.f32 %v868, %v3042
    %v3044 = vpop.f32.mrb[0].mxu0
    %v3045 = vadd.f32 %v872, %v3044
    %3046 = vdwg.mxu0
    %v3049 = vrot.slane %v2901, 1
    %v3050 = vrot.slane %v2903, 1
    %v3053 = vadd.f32 %v650, %v3049
    %v3054 = vadd.f32 %v651, %v3050
    %v3055 = vxor.u32 %v3053, 2147483648
    %v3056 = vxor.u32 %v3054, 2147483648
    %v3057 = vmul.f32 %v3055, 1.442695
    %v3058 = vpow.pop %v3057
    %v3059 = vmul.f32 %v3056, 1.442695
    %v3060 = vpow.pop %v3059
    %v3061 = vadd.f32 %v3058, 1.0
    %v3062 = vadd.f32 %v3060, 1.0
    %v3063 = vrcp.pop %v3061
    %v3064 = vmul.f32 1.0, %v3063
    %v3065 = vrcp.pop %v3062
    %v3066 = vmul.f32 1.0, %v3065
    %v3069 = vrot.slane %v2972, 1
    %v3070 = vrot.slane %v2974, 1
    %v3073 = vadd.f32 %v652, %v3069
    %v3074 = vadd.f32 %v653, %v3070
    %v3075 = vxor.u32 %v3073, 2147483648
    %v3076 = vxor.u32 %v3074, 2147483648
    %v3077 = vmul.f32 %v3075, 1.442695
    %v3078 = vpow.pop %v3077
    %v3079 = vmul.f32 %v3076, 1.442695
    %v3080 = vpow.pop %v3079
    %v3081 = vadd.f32 %v3078, 1.0
    %v3082 = vadd.f32 %v3080, 1.0
    %v3083 = vrcp.pop %v3081
    %v3084 = vmul.f32 1.0, %v3083
    %v3085 = vrcp.pop %v3082
    %v3086 = vmul.f32 1.0, %v3085
    %v3089 = vrot.slane %v3043, 1
    %v3090 = vrot.slane %v3045, 1
    %v3093 = vmul.f32 %v3064, %v3089
    %v3094 = vmul.f32 %v3066, %v3090
    %v3095 = vadd.f32 %v654, %v3093
    %v3096 = vadd.f32 %v655, %v3094
    %v3097 = vtanh.pop %v3095
    %v3098 = vtanh.pop %v3096
    %v3099 = vsub.f32 1.0, %v3084
    %v3100 = vsub.f32 1.0, %v3086
    %v3101 = vmul.f32 %v3099, %v3097
    %v3102 = vmul.f32 %v3100, %v3098
    %v3103 = vrot.slane %v2826, 7
    %v3104 = vrot.slane %v2827, 7
    %v3107 = vmul.f32 %v3084, %v3103
    %v3108 = vmul.f32 %v3086, %v3104
    %v3109 = vadd.f32 %v3101, %v3107
    %v3110 = vadd.f32 %v3102, %v3108
    %v3111 = vsel %vm504, %v1132, %v1411
    %v3112 = vsel %vm511, %v3111, %v1694
    %v3113 = vsel %vm518, %v3112, %v1977
    %v3114 = vsel %vm525, %v3113, %v2260
    %v3115 = vsel %vm532, %v3114, %v2543
    %v3116 = vsel %vm539, %v3115, %v2826
    %v3117 = vsel %vm546, %v3116, %v3109
    %v3119 = vrot.slane %v3110, 7
    %v3121 = vrot.slane %v2827, 5
    %v3123 = vrot.slane %v2544, 3
    %v3125 = vrot.slane %v2261, 1
    %v3127 = vrot.slane %v1695, 5
    %v3129 = vrot.slane %v1412, 3
    %v3131 = vrot.slane %v1133, 1
    %v3133 = vsel %vm504, %v3119, %v3121
    %v3134 = vsel %vm511, %v3133, %v3123
    %v3135 = vsel %vm518, %v3134, %v3125
    %v3136 = vsel %vm525, %v3135, %v2255
    %v3137 = vsel %vm532, %v3136, %v3127
    %v3138 = vsel %vm539, %v3137, %v3129
    %v3139 = vsel %vm546, %v3138, %v3131
    %v3140 = vld [vmem:[%s7] sm:$0x3f]
    %v3141 = vld [vmem:[%s8] sm:$0x3f]
    %v3142 = vld [vmem:[#allocation7] sm:$0xff]
    %v3143 = vld [vmem:[#allocation7 + $0x8] sm:$0xff]
    %v3144 = vld [vmem:[#allocation7 + $0x10] sm:$0xff]
    %v3145 = vld [vmem:[#allocation7 + $0x18] sm:$0xff]
    %v3146 = vld [vmem:[#allocation7 + $0x20] sm:$0xff]
    %v3147 = vld [vmem:[#allocation7 + $0x28] sm:$0xff]
    %v3148 = vld [vmem:[#allocation7 + $0x30] sm:$0xff]
    %v3149 = vld [vmem:[#allocation7 + $0x38] sm:$0xff]
    %v3150 = vld [vmem:[#allocation7 + $0x40] sm:$0xff]
    %v3151 = vld [vmem:[#allocation7 + $0x48] sm:$0xff]
    %v3152 = vld [vmem:[#allocation7 + $0x50] sm:$0xff]
    %v3153 = vld [vmem:[#allocation7 + $0x58] sm:$0xff]
    %v3154 = vld [vmem:[#allocation7 + $0x60] sm:$0xff]
    %v3155 = vld [vmem:[#allocation7 + $0x68] sm:$0xff]
    %v3156 = vld [vmem:[#allocation7 + $0x70] sm:$0xff]
    %v3157 = vld [vmem:[#allocation7 + $0x78] sm:$0xff]
    %v3158 = vld [vmem:[#allocation7 + $0x80] sm:$0xff]
    %v3159 = vld [vmem:[#allocation7 + $0x88] sm:$0xff]
    %v3160 = vld [vmem:[#allocation7 + $0x90] sm:$0xff]
    %v3161 = vld [vmem:[#allocation7 + $0x98] sm:$0xff]
    %v3162 = vld [vmem:[#allocation7 + $0xa0] sm:$0xff]
    %v3163 = vld [vmem:[#allocation7 + $0xa8] sm:$0xff]
    %v3164 = vld [vmem:[#allocation7 + $0xb0] sm:$0xff]
    %v3165 = vld [vmem:[#allocation7 + $0xb8] sm:$0xff]
    %v3166 = vld [vmem:[#allocation7 + $0xc0] sm:$0xff]
    %v3167 = vld [vmem:[#allocation7 + $0xc8] sm:$0xff]
    %v3168 = vld [vmem:[#allocation7 + $0xd0] sm:$0xff]
    %v3169 = vld [vmem:[#allocation7 + $0xd8] sm:$0xff]
    %v3170 = vld [vmem:[#allocation7 + $0xe0] sm:$0xff]
    %v3171 = vld [vmem:[#allocation7 + $0xe8] sm:$0xff]
    %v3172 = vld [vmem:[#allocation7 + $0xf0] sm:$0xff]
    %v3173 = vld [vmem:[#allocation7 + $0xf8] sm:$0xff]
    %v3174 = vld [vmem:[#allocation7 + $0x100] sm:$0xff]
    %v3175 = vld [vmem:[#allocation7 + $0x108] sm:$0xff]
    %v3176 = vld [vmem:[#allocation7 + $0x110] sm:$0xff]
    %v3177 = vld [vmem:[#allocation7 + $0x118] sm:$0xff]
    %v3178 = vld [vmem:[#allocation7 + $0x120] sm:$0xff]
    %v3179 = vld [vmem:[#allocation7 + $0x128] sm:$0xff]
    %v3180 = vld [vmem:[#allocation7 + $0x130] sm:$0xff]
    %v3181 = vld [vmem:[#allocation7 + $0x138] sm:$0xff]
    %v3182 = vld [vmem:[#allocation7 + $0x140] sm:$0xff]
    %v3183 = vld [vmem:[#allocation7 + $0x148] sm:$0xff]
    %v3184 = vld [vmem:[#allocation7 + $0x150] sm:$0xff]
    %v3185 = vld [vmem:[#allocation7 + $0x158] sm:$0xff]
    %v3186 = vld [vmem:[#allocation7 + $0x160] sm:$0xff]
    %v3187 = vld [vmem:[#allocation7 + $0x168] sm:$0xff]
    %v3188 = vld [vmem:[#allocation7 + $0x170] sm:$0xff]
    %v3189 = vld [vmem:[#allocation7 + $0x178] sm:$0xff]
    %v3190 = vld [vmem:[#allocation7 + $0x180] sm:$0xff]
    %v3191 = vld [vmem:[#allocation7 + $0x188] sm:$0xff]
    %v3192 = vld [vmem:[#allocation7 + $0x190] sm:$0xff]
    %v3193 = vld [vmem:[#allocation7 + $0x198] sm:$0xff]
    %v3194 = vld [vmem:[#allocation7 + $0x1a0] sm:$0xff]
    %v3195 = vld [vmem:[#allocation7 + $0x1a8] sm:$0xff]
    %v3196 = vld [vmem:[#allocation7 + $0x1b0] sm:$0xff]
    %v3197 = vld [vmem:[#allocation7 + $0x1b8] sm:$0xff]
    %v3198 = vld [vmem:[#allocation7 + $0x1c0] sm:$0xff]
    %v3199 = vld [vmem:[#allocation7 + $0x1c8] sm:$0xff]
    %v3200 = vld [vmem:[#allocation7 + $0x1d0] sm:$0xff]
    %v3201 = vld [vmem:[#allocation7 + $0x1d8] sm:$0xff]
    %v3202 = vld [vmem:[#allocation7 + $0x1e0] sm:$0xff]
    %v3203 = vld [vmem:[#allocation7 + $0x1e8] sm:$0xff]
    %v3204 = vld [vmem:[#allocation7 + $0x1f0] sm:$0xff]
    %v3205 = vld [vmem:[#allocation7 + $0x1f8] sm:$0xff]
    %v3206 = vld [vmem:[#allocation7 + $0x200] sm:$0xff]
    %v3207 = vld [vmem:[#allocation7 + $0x208] sm:$0xff]
    %v3208 = vld [vmem:[#allocation7 + $0x210] sm:$0xff]
    %v3209 = vld [vmem:[#allocation7 + $0x218] sm:$0xff]
    %v3210 = vld [vmem:[#allocation7 + $0x220] sm:$0xff]
    %v3211 = vld [vmem:[#allocation7 + $0x228] sm:$0xff]
    %v3212 = vld [vmem:[#allocation7 + $0x230] sm:$0xff]
    %v3213 = vld [vmem:[#allocation7 + $0x238] sm:$0xff]
    %v3214 = vld [vmem:[#allocation7 + $0x240] sm:$0xff]
    %v3215 = vld [vmem:[#allocation7 + $0x248] sm:$0xff]
    %v3216 = vld [vmem:[#allocation7 + $0x250] sm:$0xff]
    %v3217 = vld [vmem:[#allocation7 + $0x258] sm:$0xff]
    %v3218 = vld [vmem:[#allocation7 + $0x260] sm:$0xff]
    %v3219 = vld [vmem:[#allocation7 + $0x268] sm:$0xff]
    %v3220 = vld [vmem:[#allocation7 + $0x270] sm:$0xff]
    %v3221 = vld [vmem:[#allocation7 + $0x278] sm:$0xff]
    %v3222 = vld [vmem:[#allocation7 + $0x280] sm:$0xff]
    %v3223 = vld [vmem:[#allocation7 + $0x288] sm:$0xff]
    %v3224 = vld [vmem:[#allocation7 + $0x290] sm:$0xff]
    %v3225 = vld [vmem:[#allocation7 + $0x298] sm:$0xff]
    %v3226 = vld [vmem:[#allocation7 + $0x2a0] sm:$0xff]
    %v3227 = vld [vmem:[#allocation7 + $0x2a8] sm:$0xff]
    %v3228 = vld [vmem:[#allocation7 + $0x2b0] sm:$0xff]
    %v3229 = vld [vmem:[#allocation7 + $0x2b8] sm:$0xff]
    %v3230 = vld [vmem:[#allocation7 + $0x2c0] sm:$0xff]
    %v3231 = vld [vmem:[#allocation7 + $0x2c8] sm:$0xff]
    %v3232 = vld [vmem:[#allocation7 + $0x2d0] sm:$0xff]
    %v3233 = vld [vmem:[#allocation7 + $0x2d8] sm:$0xff]
    %v3234 = vld [vmem:[#allocation7 + $0x2e0] sm:$0xff]
    %v3235 = vld [vmem:[#allocation7 + $0x2e8] sm:$0xff]
    %v3236 = vld [vmem:[#allocation7 + $0x2f0] sm:$0xff]
    %v3237 = vld [vmem:[#allocation7 + $0x2f8] sm:$0xff]
    %v3238 = vld [vmem:[#allocation7 + $0x300] sm:$0xff]
    %v3239 = vld [vmem:[#allocation7 + $0x308] sm:$0xff]
    %v3240 = vld [vmem:[#allocation7 + $0x310] sm:$0xff]
    %v3241 = vld [vmem:[#allocation7 + $0x318] sm:$0xff]
    %v3242 = vld [vmem:[#allocation7 + $0x320] sm:$0xff]
    %v3243 = vld [vmem:[#allocation7 + $0x328] sm:$0xff]
    %v3244 = vld [vmem:[#allocation7 + $0x330] sm:$0xff]
    %v3245 = vld [vmem:[#allocation7 + $0x338] sm:$0xff]
    %v3246 = vld [vmem:[#allocation7 + $0x340] sm:$0xff]
    %v3247 = vld [vmem:[#allocation7 + $0x348] sm:$0xff]
    %v3248 = vld [vmem:[#allocation7 + $0x350] sm:$0xff]
    %v3249 = vld [vmem:[#allocation7 + $0x358] sm:$0xff]
    %v3250 = vld [vmem:[#allocation7 + $0x360] sm:$0xff]
    %v3251 = vld [vmem:[#allocation7 + $0x368] sm:$0xff]
    %v3252 = vld [vmem:[#allocation7 + $0x370] sm:$0xff]
    %v3253 = vld [vmem:[#allocation7 + $0x378] sm:$0xff]
    %v3254 = vld [vmem:[#allocation7 + $0x380] sm:$0xff]
    %v3255 = vld [vmem:[#allocation7 + $0x388] sm:$0xff]
    %v3256 = vld [vmem:[#allocation7 + $0x390] sm:$0xff]
    %v3257 = vld [vmem:[#allocation7 + $0x398] sm:$0xff]
    %v3258 = vld [vmem:[#allocation7 + $0x3a0] sm:$0xff]
    %v3259 = vld [vmem:[#allocation7 + $0x3a8] sm:$0xff]
    %v3260 = vld [vmem:[#allocation7 + $0x3b0] sm:$0xff]
    %v3261 = vld [vmem:[#allocation7 + $0x3b8] sm:$0xff]
    %v3262 = vld [vmem:[#allocation7 + $0x3c0] sm:$0xff]
    %v3263 = vld [vmem:[#allocation7 + $0x3c8] sm:$0xff]
    %v3264 = vld [vmem:[#allocation7 + $0x3d0] sm:$0xff]
    %v3265 = vld [vmem:[#allocation7 + $0x3d8] sm:$0xff]
    %v3266 = vld [vmem:[#allocation7 + $0x3e0] sm:$0xff]
    %v3267 = vld [vmem:[#allocation7 + $0x3e8] sm:$0xff]
    %v3268 = vld [vmem:[#allocation7 + $0x3f0] sm:$0xff]
    %v3269 = vld [vmem:[#allocation7 + $0x3f8] sm:$0xff]
    %v3270 = vld [vmem:[#allocation7 + $0x400] sm:$0xff]
    %v3271 = vld [vmem:[#allocation7 + $0x408] sm:$0xff]
    %v3272 = vld [vmem:[#allocation7 + $0x410] sm:$0xff]
    %v3273 = vld [vmem:[#allocation7 + $0x418] sm:$0xff]
    %v3274 = vld [vmem:[#allocation7 + $0x420] sm:$0xff]
    %v3275 = vld [vmem:[#allocation7 + $0x428] sm:$0xff]
    %v3276 = vld [vmem:[#allocation7 + $0x430] sm:$0xff]
    %v3277 = vld [vmem:[#allocation7 + $0x438] sm:$0xff]
    %v3278 = vld [vmem:[#allocation7 + $0x440] sm:$0xff]
    %v3279 = vld [vmem:[#allocation7 + $0x448] sm:$0xff]
    %v3280 = vld [vmem:[#allocation7 + $0x450] sm:$0xff]
    %v3281 = vld [vmem:[#allocation7 + $0x458] sm:$0xff]
    %v3282 = vld [vmem:[#allocation7 + $0x460] sm:$0xff]
    %v3283 = vld [vmem:[#allocation7 + $0x468] sm:$0xff]
    %v3284 = vld [vmem:[#allocation7 + $0x470] sm:$0xff]
    %v3285 = vld [vmem:[#allocation7 + $0x478] sm:$0xff]
    %v3286 = vld [vmem:[#allocation7 + $0x480] sm:$0xff]
    %v3287 = vld [vmem:[#allocation7 + $0x488] sm:$0xff]
    %v3288 = vld [vmem:[#allocation7 + $0x490] sm:$0xff]
    %v3289 = vld [vmem:[#allocation7 + $0x498] sm:$0xff]
    %v3290 = vld [vmem:[#allocation7 + $0x4a0] sm:$0xff]
    %v3291 = vld [vmem:[#allocation7 + $0x4a8] sm:$0xff]
    %v3292 = vld [vmem:[#allocation7 + $0x4b0] sm:$0xff]
    %v3293 = vld [vmem:[#allocation7 + $0x4b8] sm:$0xff]
    %v3294 = vld [vmem:[#allocation7 + $0x4c0] sm:$0xff]
    %v3295 = vld [vmem:[#allocation7 + $0x4c8] sm:$0xff]
    %v3296 = vld [vmem:[#allocation7 + $0x4d0] sm:$0xff]
    %v3297 = vld [vmem:[#allocation7 + $0x4d8] sm:$0xff]
    %v3298 = vld [vmem:[#allocation7 + $0x4e0] sm:$0xff]
    %v3299 = vld [vmem:[#allocation7 + $0x4e8] sm:$0xff]
    %v3300 = vld [vmem:[#allocation7 + $0x4f0] sm:$0xff]
    %v3301 = vld [vmem:[#allocation7 + $0x4f8] sm:$0xff]
    %v3302 = vld [vmem:[#allocation7 + $0x500] sm:$0xff]
    %v3303 = vld [vmem:[#allocation7 + $0x508] sm:$0xff]
    %v3304 = vld [vmem:[#allocation7 + $0x510] sm:$0xff]
    %v3305 = vld [vmem:[#allocation7 + $0x518] sm:$0xff]
    %v3306 = vld [vmem:[#allocation7 + $0x520] sm:$0xff]
    %v3307 = vld [vmem:[#allocation7 + $0x528] sm:$0xff]
    %v3308 = vld [vmem:[#allocation7 + $0x530] sm:$0xff]
    %v3309 = vld [vmem:[#allocation7 + $0x538] sm:$0xff]
    %v3310 = vld [vmem:[#allocation7 + $0x540] sm:$0xff]
    %v3311 = vld [vmem:[#allocation7 + $0x548] sm:$0xff]
    %v3312 = vld [vmem:[#allocation7 + $0x550] sm:$0xff]
    %v3313 = vld [vmem:[#allocation7 + $0x558] sm:$0xff]
    %v3314 = vld [vmem:[#allocation7 + $0x560] sm:$0xff]
    %v3315 = vld [vmem:[#allocation7 + $0x568] sm:$0xff]
    %v3316 = vld [vmem:[#allocation7 + $0x570] sm:$0xff]
    %v3317 = vld [vmem:[#allocation7 + $0x578] sm:$0xff]
    %v3318 = vld [vmem:[#allocation7 + $0x580] sm:$0xff]
    %v3319 = vld [vmem:[#allocation7 + $0x588] sm:$0xff]
    %v3320 = vld [vmem:[#allocation7 + $0x590] sm:$0xff]
    %v3321 = vld [vmem:[#allocation7 + $0x598] sm:$0xff]
    %v3322 = vld [vmem:[#allocation7 + $0x5a0] sm:$0xff]
    %v3323 = vld [vmem:[#allocation7 + $0x5a8] sm:$0xff]
    %v3324 = vld [vmem:[#allocation7 + $0x5b0] sm:$0xff]
    %v3325 = vld [vmem:[#allocation7 + $0x5b8] sm:$0xff]
    %v3326 = vld [vmem:[#allocation7 + $0x5c0] sm:$0xff]
    %v3327 = vld [vmem:[#allocation7 + $0x5c8] sm:$0xff]
    %v3328 = vld [vmem:[#allocation7 + $0x5d0] sm:$0xff]
    %v3329 = vld [vmem:[#allocation7 + $0x5d8] sm:$0xff]
    %v3330 = vld [vmem:[#allocation7 + $0x5e0] sm:$0xff]
    %v3331 = vld [vmem:[#allocation7 + $0x5e8] sm:$0xff]
    %v3332 = vld [vmem:[#allocation7 + $0x5f0] sm:$0xff]
    %v3333 = vld [vmem:[#allocation7 + $0x5f8] sm:$0xff]
    %v3335 = vlaneseq
    %v3336 = vshrl.u32 %v3335, 7
    %v3337 = vsub.s32 0, %v3336
    %v3338 = vrot.slane %v3140, %v3337
    %v3339 = vlaneseq
    %v3340 = vshrl.u32 %v3339, 7
    %v3341 = vsub.s32 1, %v3340
    %v3342 = vrot.slane %v3140, %v3341
    %v3343 = vlaneseq
    %v3344 = vshrl.u32 %v3343, 7
    %v3345 = vsub.s32 2, %v3344
    %v3346 = vrot.slane %v3140, %v3345
    %v3347 = vlaneseq
    %v3348 = vshrl.u32 %v3347, 7
    %v3349 = vsub.s32 3, %v3348
    %v3350 = vrot.slane %v3140, %v3349
    %v3351 = vlaneseq
    %v3352 = vshrl.u32 %v3351, 7
    %v3353 = vsub.s32 4, %v3352
    %v3354 = vrot.slane %v3140, %v3353
    %v3355 = vlaneseq
    %v3356 = vshrl.u32 %v3355, 7
    %v3357 = vsub.s32 5, %v3356
    %v3358 = vrot.slane %v3140, %v3357
    %3365 = vmatprep.subr.mxu0 %v3143
    %3366 = vmatpush1.msra.mxu0 %v3142
    %3367 = vmatprep.subr.mxu0 %v3149
    %3368 = vmatpush1.msra.mxu0 %v3148
    %3369 = vmatprep.subr.mxu0 %v3155
    %3370 = vmatpush1.msra.mxu0 %v3154
    %3371 = vmatprep.subr.mxu0 %v3161
    %3372 = vmatpush1.msra.mxu0 %v3160
    %3373 = vmatprep.subr.mxu0 %v3167
    %3374 = vmatpush1.msra.mxu0 %v3166
    %3375 = vmatprep.subr.mxu0 %v3173
    %3376 = vmatpush1.msra.mxu0 %v3172
    %3377 = vmatprep.subr.mxu0 %v3179
    %3378 = vmatpush1.msra.mxu0 %v3178
    %3379 = vmatprep.subr.mxu0 %v3185
    %3380 = vmatpush1.msra.mxu0 %v3184
    %3381 = vmatprep.subr.mxu0 %v3191
    %3382 = vmatpush1.msra.mxu0 %v3190
    %3383 = vmatprep.subr.mxu0 %v3197
    %3384 = vmatpush1.msra.mxu0 %v3196
    %3385 = vmatprep.subr.mxu0 %v3203
    %3386 = vmatpush1.msra.mxu0 %v3202
    %3387 = vmatprep.subr.mxu0 %v3209
    %3388 = vmatpush1.msra.mxu0 %v3208
    %3389 = vmatprep.subr.mxu0 %v3215
    %3390 = vmatpush1.msra.mxu0 %v3214
    %3391 = vmatprep.subr.mxu0 %v3221
    %3392 = vmatpush1.msra.mxu0 %v3220
    %3393 = vmatprep.subr.mxu0 %v3227
    %3394 = vmatpush1.msra.mxu0 %v3226
    %3395 = vmatprep.subr.mxu0 %v3233
    %3396 = vmatpush1.msra.mxu0 %v3232
    %3397 = vmatprep.subr.mxu0 %v3239
    %3398 = vmatpush1.msra.mxu0 %v3238
    %3399 = vmatprep.subr.mxu0 %v3245
    %3400 = vmatpush1.msra.mxu0 %v3244
    %3401 = vmatprep.subr.mxu0 %v3251
    %3402 = vmatpush1.msra.mxu0 %v3250
    %3403 = vmatprep.subr.mxu0 %v3257
    %3404 = vmatpush1.msra.mxu0 %v3256
    %3405 = vmatprep.subr.mxu0 %v3263
    %3406 = vmatpush1.msra.mxu0 %v3262
    %3407 = vmatprep.subr.mxu0 %v3269
    %3408 = vmatpush1.msra.mxu0 %v3268
    %3409 = vmatprep.subr.mxu0 %v3275
    %3410 = vmatpush1.msra.mxu0 %v3274
    %3411 = vmatprep.subr.mxu0 %v3281
    %3412 = vmatpush1.msra.mxu0 %v3280
    %3413 = vmatprep.subr.mxu0 %v3287
    %3414 = vmatpush1.msra.mxu0 %v3286
    %3415 = vmatprep.subr.mxu0 %v3293
    %3416 = vmatpush1.msra.mxu0 %v3292
    %3417 = vmatprep.subr.mxu0 %v3299
    %3418 = vmatpush1.msra.mxu0 %v3298
    %3419 = vmatprep.subr.mxu0 %v3305
    %3420 = vmatpush1.msra.mxu0 %v3304
    %3421 = vmatprep.subr.mxu0 %v3311
    %3422 = vmatpush1.msra.mxu0 %v3310
    %3423 = vmatprep.subr.mxu0 %v3317
    %3424 = vmatpush1.msra.mxu0 %v3316
    %3425 = vmatprep.subr.mxu0 %v3323
    %3426 = vmatpush1.msra.mxu0 %v3322
    %3427 = vmatprep.subr.mxu0 %v3329
    %3428 = vmatpush1.msra.mxu0 %v3328
    %3429 = vmatprep.mubr.f32.mxu0 %v3139
    %3430 = vmatmul.mubr.f32.gmra.mrb[0].mxu0 %v3117
    %v3431 = vpop.f32.mrb[0].mxu0
    %v3432 = vadd.f32 %v3338, %v3431
    %v3433 = vpop.f32.mrb[0].mxu0
    %v3434 = vadd.f32 %v3342, %v3433
    %3435 = vdwg.mxu0
    %3436 = vmatprep.subr.mxu0 %v3145
    %3437 = vmatpush1.msra.mxu0 %v3144
    %3438 = vmatprep.subr.mxu0 %v3151
    %3439 = vmatpush1.msra.mxu0 %v3150
    %3440 = vmatprep.subr.mxu0 %v3157
    %3441 = vmatpush1.msra.mxu0 %v3156
    %3442 = vmatprep.subr.mxu0 %v3163
    %3443 = vmatpush1.msra.mxu0 %v3162
    %3444 = vmatprep.subr.mxu0 %v3169
    %3445 = vmatpush1.msra.mxu0 %v3168
    %3446 = vmatprep.subr.mxu0 %v3175
    %3447 = vmatpush1.msra.mxu0 %v3174
    %3448 = vmatprep.subr.mxu0 %v3181
    %3449 = vmatpush1.msra.mxu0 %v3180
    %3450 = vmatprep.subr.mxu0 %v3187
    %3451 = vmatpush1.msra.mxu0 %v3186
    %3452 = vmatprep.subr.mxu0 %v3193
    %3453 = vmatpush1.msra.mxu0 %v3192
    %3454 = vmatprep.subr.mxu0 %v3199
    %3455 = vmatpush1.msra.mxu0 %v3198
    %3456 = vmatprep.subr.mxu0 %v3205
    %3457 = vmatpush1.msra.mxu0 %v3204
    %3458 = vmatprep.subr.mxu0 %v3211
    %3459 = vmatpush1.msra.mxu0 %v3210
    %3460 = vmatprep.subr.mxu0 %v3217
    %3461 = vmatpush1.msra.mxu0 %v3216
    %3462 = vmatprep.subr.mxu0 %v3223
    %3463 = vmatpush1.msra.mxu0 %v3222
    %3464 = vmatprep.subr.mxu0 %v3229
    %3465 = vmatpush1.msra.mxu0 %v3228
    %3466 = vmatprep.subr.mxu0 %v3235
    %3467 = vmatpush1.msra.mxu0 %v3234
    %3468 = vmatprep.subr.mxu0 %v3241
    %3469 = vmatpush1.msra.mxu0 %v3240
    %3470 = vmatprep.subr.mxu0 %v3247
    %3471 = vmatpush1.msra.mxu0 %v3246
    %3472 = vmatprep.subr.mxu0 %v3253
    %3473 = vmatpush1.msra.mxu0 %v3252
    %3474 = vmatprep.subr.mxu0 %v3259
    %3475 = vmatpush1.msra.mxu0 %v3258
    %3476 = vmatprep.subr.mxu0 %v3265
    %3477 = vmatpush1.msra.mxu0 %v3264
    %3478 = vmatprep.subr.mxu0 %v3271
    %3479 = vmatpush1.msra.mxu0 %v3270
    %3480 = vmatprep.subr.mxu0 %v3277
    %3481 = vmatpush1.msra.mxu0 %v3276
    %3482 = vmatprep.subr.mxu0 %v3283
    %3483 = vmatpush1.msra.mxu0 %v3282
    %3484 = vmatprep.subr.mxu0 %v3289
    %3485 = vmatpush1.msra.mxu0 %v3288
    %3486 = vmatprep.subr.mxu0 %v3295
    %3487 = vmatpush1.msra.mxu0 %v3294
    %3488 = vmatprep.subr.mxu0 %v3301
    %3489 = vmatpush1.msra.mxu0 %v3300
    %3490 = vmatprep.subr.mxu0 %v3307
    %3491 = vmatpush1.msra.mxu0 %v3306
    %3492 = vmatprep.subr.mxu0 %v3313
    %3493 = vmatpush1.msra.mxu0 %v3312
    %3494 = vmatprep.subr.mxu0 %v3319
    %3495 = vmatpush1.msra.mxu0 %v3318
    %3496 = vmatprep.subr.mxu0 %v3325
    %3497 = vmatpush1.msra.mxu0 %v3324
    %3498 = vmatprep.subr.mxu0 %v3331
    %3499 = vmatpush1.msra.mxu0 %v3330
    %3500 = vmatprep.mubr.f32.mxu0 %v3139
    %3501 = vmatmul.mubr.f32.gmra.mrb[0].mxu0 %v3117
    %v3502 = vpop.f32.mrb[0].mxu0
    %v3503 = vadd.f32 %v3346, %v3502
    %v3504 = vpop.f32.mrb[0].mxu0
    %v3505 = vadd.f32 %v3350, %v3504
    %3506 = vdwg.mxu0
    %3507 = vmatprep.subr.mxu0 %v3147
    %3508 = vmatpush1.msra.mxu0 %v3146
    %3509 = vmatprep.subr.mxu0 %v3153
    %3510 = vmatpush1.msra.mxu0 %v3152
    %3511 = vmatprep.subr.mxu0 %v3159
    %3512 = vmatpush1.msra.mxu0 %v3158
    %3513 = vmatprep.subr.mxu0 %v3165
    %3514 = vmatpush1.msra.mxu0 %v3164
    %3515 = vmatprep.subr.mxu0 %v3171
    %3516 = vmatpush1.msra.mxu0 %v3170
    %3517 = vmatprep.subr.mxu0 %v3177
    %3518 = vmatpush1.msra.mxu0 %v3176
    %3519 = vmatprep.subr.mxu0 %v3183
    %3520 = vmatpush1.msra.mxu0 %v3182
    %3521 = vmatprep.subr.mxu0 %v3189
    %3522 = vmatpush1.msra.mxu0 %v3188
    %3523 = vmatprep.subr.mxu0 %v3195
    %3524 = vmatpush1.msra.mxu0 %v3194
    %3525 = vmatprep.subr.mxu0 %v3201
    %3526 = vmatpush1.msra.mxu0 %v3200
    %3527 = vmatprep.subr.mxu0 %v3207
    %3528 = vmatpush1.msra.mxu0 %v3206
    %3529 = vmatprep.subr.mxu0 %v3213
    %3530 = vmatpush1.msra.mxu0 %v3212
    %3531 = vmatprep.subr.mxu0 %v3219
    %3532 = vmatpush1.msra.mxu0 %v3218
    %3533 = vmatprep.subr.mxu0 %v3225
    %3534 = vmatpush1.msra.mxu0 %v3224
    %3535 = vmatprep.subr.mxu0 %v3231
    %3536 = vmatpush1.msra.mxu0 %v3230
    %3537 = vmatprep.subr.mxu0 %v3237
    %3538 = vmatpush1.msra.mxu0 %v3236
    %3539 = vmatprep.subr.mxu0 %v3243
    %3540 = vmatpush1.msra.mxu0 %v3242
    %3541 = vmatprep.subr.mxu0 %v3249
    %3542 = vmatpush1.msra.mxu0 %v3248
    %3543 = vmatprep.subr.mxu0 %v3255
    %3544 = vmatpush1.msra.mxu0 %v3254
    %3545 = vmatprep.subr.mxu0 %v3261
    %3546 = vmatpush1.msra.mxu0 %v3260
    %3547 = vmatprep.subr.mxu0 %v3267
    %3548 = vmatpush1.msra.mxu0 %v3266
    %3549 = vmatprep.subr.mxu0 %v3273
    %3550 = vmatpush1.msra.mxu0 %v3272
    %3551 = vmatprep.subr.mxu0 %v3279
    %3552 = vmatpush1.msra.mxu0 %v3278
    %3553 = vmatprep.subr.mxu0 %v3285
    %3554 = vmatpush1.msra.mxu0 %v3284
    %3555 = vmatprep.subr.mxu0 %v3291
    %3556 = vmatpush1.msra.mxu0 %v3290
    %3557 = vmatprep.subr.mxu0 %v3297
    %3558 = vmatpush1.msra.mxu0 %v3296
    %3559 = vmatprep.subr.mxu0 %v3303
    %3560 = vmatpush1.msra.mxu0 %v3302
    %3561 = vmatprep.subr.mxu0 %v3309
    %3562 = vmatpush1.msra.mxu0 %v3308
    %3563 = vmatprep.subr.mxu0 %v3315
    %3564 = vmatpush1.msra.mxu0 %v3314
    %3565 = vmatprep.subr.mxu0 %v3321
    %3566 = vmatpush1.msra.mxu0 %v3320
    %3567 = vmatprep.subr.mxu0 %v3327
    %3568 = vmatpush1.msra.mxu0 %v3326
    %3569 = vmatprep.subr.mxu0 %v3333
    %3570 = vmatpush1.msra.mxu0 %v3332
    %3571 = vmatprep.mubr.f32.mxu0 %v3139
    %3572 = vmatmul.mubr.f32.gmra.mrb[0].mxu0 %v3117
    %v3573 = vpop.f32.mrb[0].mxu0
    %v3574 = vadd.f32 %v3354, %v3573
    %v3575 = vpop.f32.mrb[0].mxu0
    %v3576 = vadd.f32 %v3358, %v3575
    %3577 = vdwg.mxu0
    %v3584 = vrot.slane %v3432, 7
    %v3585 = vrot.slane %v3434, 7
    %v3586 = vrot.slane %v3503, 7
    %v3587 = vrot.slane %v3505, 7
    %v3588 = vrot.slane %v3574, 7
    %v3589 = vrot.slane %v3576, 7
    %v3596 = vrot.slane %v3432, 5
    %v3597 = vrot.slane %v3434, 5
    %v3598 = vrot.slane %v3503, 5
    %v3599 = vrot.slane %v3505, 5
    %v3600 = vrot.slane %v3574, 5
    %v3601 = vrot.slane %v3576, 5
    %v3608 = vrot.slane %v3432, 3
    %v3609 = vrot.slane %v3434, 3
    %v3610 = vrot.slane %v3503, 3
    %v3611 = vrot.slane %v3505, 3
    %v3612 = vrot.slane %v3574, 3
    %v3613 = vrot.slane %v3576, 3
    %v3620 = vrot.slane %v3432, 1
    %v3621 = vrot.slane %v3434, 1
    %v3622 = vrot.slane %v3503, 1
    %v3623 = vrot.slane %v3505, 1
    %v3624 = vrot.slane %v3574, 1
    %v3625 = vrot.slane %v3576, 1
    %v3632 = vsel %vm504, %v3584, %v3596
    %v3633 = vsel %vm504, %v3585, %v3597
    %v3634 = vsel %vm504, %v3586, %v3598
    %v3635 = vsel %vm504, %v3587, %v3599
    %v3636 = vsel %vm504, %v3588, %v3600
    %v3637 = vsel %vm504, %v3589, %v3601
    %v3638 = vsel %vm511, %v3632, %v3608
    %v3639 = vsel %vm511, %v3633, %v3609
    %v3640 = vsel %vm511, %v3634, %v3610
    %v3641 = vsel %vm511, %v3635, %v3611
    %v3642 = vsel %vm511, %v3636, %v3612
    %v3643 = vsel %vm511, %v3637, %v3613
    %v3644 = vsel %vm518, %v3638, %v3620
    %v3645 = vsel %vm518, %v3639, %v3621
    %v3646 = vsel %vm518, %v3640, %v3622
    %v3647 = vsel %vm518, %v3641, %v3623
    %v3648 = vsel %vm518, %v3642, %v3624
    %v3649 = vsel %vm518, %v3643, %v3625
    %v3650 = vsel %vm525, %v3644, %v3584
    %v3651 = vsel %vm525, %v3645, %v3585
    %v3652 = vsel %vm525, %v3646, %v3586
    %v3653 = vsel %vm525, %v3647, %v3587
    %v3654 = vsel %vm525, %v3648, %v3588
    %v3655 = vsel %vm525, %v3649, %v3589
    %v3656 = vsel %vm532, %v3650, %v3596
    %v3657 = vsel %vm532, %v3651, %v3597
    %v3658 = vsel %vm532, %v3652, %v3598
    %v3659 = vsel %vm532, %v3653, %v3599
    %v3660 = vsel %vm532, %v3654, %v3600
    %v3661 = vsel %vm532, %v3655, %v3601
    %v3662 = vsel %vm539, %v3656, %v3608
    %v3663 = vsel %vm539, %v3657, %v3609
    %v3664 = vsel %vm539, %v3658, %v3610
    %v3665 = vsel %vm539, %v3659, %v3611
    %v3666 = vsel %vm539, %v3660, %v3612
    %v3667 = vsel %vm539, %v3661, %v3613
    %v3668 = vsel %vm546, %v3662, %v3620
    %v3669 = vsel %vm546, %v3663, %v3621
    %v3670 = vsel %vm546, %v3664, %v3622
    %v3671 = vsel %vm546, %v3665, %v3623
    %v3672 = vsel %vm546, %v3666, %v3624
    %v3673 = vsel %vm546, %v3667, %v3625
    %v3674 = vsel %vm644, %v3432, %v3668
    %v3675 = vsel %vm645, %v3434, %v3669
    %v3676 = vsel %vm646, %v3503, %v3670
    %v3677 = vsel %vm647, %v3505, %v3671
    %v3678 = vsel %vm648, %v3574, %v3672
    %v3679 = vsel %vm649, %v3576, %v3673
    %v3680 = vld [vmem:[#allocation8] sm:$0xff]
    %v3681 = vld [vmem:[#allocation8 + $0x8] sm:$0xff]
    %v3682 = vld [vmem:[#allocation8 + $0x10] sm:$0xff]
    %v3683 = vld [vmem:[#allocation8 + $0x18] sm:$0xff]
    %v3684 = vld [vmem:[#allocation8 + $0x20] sm:$0xff]
    %v3685 = vld [vmem:[#allocation8 + $0x28] sm:$0xff]
    %v3686 = vld [vmem:[#allocation8 + $0x30] sm:$0xff]
    %v3687 = vld [vmem:[#allocation8 + $0x38] sm:$0xff]
    %v3688 = vld [vmem:[#allocation8 + $0x40] sm:$0xff]
    %v3689 = vld [vmem:[#allocation8 + $0x48] sm:$0xff]
    %v3690 = vld [vmem:[#allocation8 + $0x50] sm:$0xff]
    %v3691 = vld [vmem:[#allocation8 + $0x58] sm:$0xff]
    %v3692 = vld [vmem:[#allocation8 + $0x60] sm:$0xff]
    %v3693 = vld [vmem:[#allocation8 + $0x68] sm:$0xff]
    %v3694 = vld [vmem:[#allocation8 + $0x70] sm:$0xff]
    %v3695 = vld [vmem:[#allocation8 + $0x78] sm:$0xff]
    %v3696 = vld [vmem:[#allocation8 + $0x80] sm:$0xff]
    %v3697 = vld [vmem:[#allocation8 + $0x88] sm:$0xff]
    %v3698 = vld [vmem:[#allocation8 + $0x90] sm:$0xff]
    %v3699 = vld [vmem:[#allocation8 + $0x98] sm:$0xff]
    %v3700 = vld [vmem:[#allocation8 + $0xa0] sm:$0xff]
    %v3701 = vld [vmem:[#allocation8 + $0xa8] sm:$0xff]
    %v3702 = vld [vmem:[#allocation8 + $0xb0] sm:$0xff]
    %v3703 = vld [vmem:[#allocation8 + $0xb8] sm:$0xff]
    %v3704 = vld [vmem:[#allocation8 + $0xc0] sm:$0xff]
    %v3705 = vld [vmem:[#allocation8 + $0xc8] sm:$0xff]
    %v3706 = vld [vmem:[#allocation8 + $0xd0] sm:$0xff]
    %v3707 = vld [vmem:[#allocation8 + $0xd8] sm:$0xff]
    %v3708 = vld [vmem:[#allocation8 + $0xe0] sm:$0xff]
    %v3709 = vld [vmem:[#allocation8 + $0xe8] sm:$0xff]
    %v3710 = vld [vmem:[#allocation8 + $0xf0] sm:$0xff]
    %v3711 = vld [vmem:[#allocation8 + $0xf8] sm:$0xff]
    %v3712 = vld [vmem:[#allocation8 + $0x100] sm:$0xff]
    %v3713 = vld [vmem:[#allocation8 + $0x108] sm:$0xff]
    %v3714 = vld [vmem:[#allocation8 + $0x110] sm:$0xff]
    %v3715 = vld [vmem:[#allocation8 + $0x118] sm:$0xff]
    %v3716 = vld [vmem:[#allocation8 + $0x120] sm:$0xff]
    %v3717 = vld [vmem:[#allocation8 + $0x128] sm:$0xff]
    %v3718 = vld [vmem:[#allocation8 + $0x130] sm:$0xff]
    %v3719 = vld [vmem:[#allocation8 + $0x138] sm:$0xff]
    %v3720 = vld [vmem:[#allocation8 + $0x140] sm:$0xff]
    %v3721 = vld [vmem:[#allocation8 + $0x148] sm:$0xff]
    %v3722 = vld [vmem:[#allocation8 + $0x150] sm:$0xff]
    %v3723 = vld [vmem:[#allocation8 + $0x158] sm:$0xff]
    %v3724 = vld [vmem:[#allocation8 + $0x160] sm:$0xff]
    %v3725 = vld [vmem:[#allocation8 + $0x168] sm:$0xff]
    %v3726 = vld [vmem:[#allocation8 + $0x170] sm:$0xff]
    %v3727 = vld [vmem:[#allocation8 + $0x178] sm:$0xff]
    %v3728 = vld [vmem:[#allocation8 + $0x180] sm:$0xff]
    %v3729 = vld [vmem:[#allocation8 + $0x188] sm:$0xff]
    %v3730 = vld [vmem:[#allocation8 + $0x190] sm:$0xff]
    %v3731 = vld [vmem:[#allocation8 + $0x198] sm:$0xff]
    %v3732 = vld [vmem:[#allocation8 + $0x1a0] sm:$0xff]
    %v3733 = vld [vmem:[#allocation8 + $0x1a8] sm:$0xff]
    %v3734 = vld [vmem:[#allocation8 + $0x1b0] sm:$0xff]
    %v3735 = vld [vmem:[#allocation8 + $0x1b8] sm:$0xff]
    %v3736 = vld [vmem:[#allocation8 + $0x1c0] sm:$0xff]
    %v3737 = vld [vmem:[#allocation8 + $0x1c8] sm:$0xff]
    %v3738 = vld [vmem:[#allocation8 + $0x1d0] sm:$0xff]
    %v3739 = vld [vmem:[#allocation8 + $0x1d8] sm:$0xff]
    %v3740 = vld [vmem:[#allocation8 + $0x1e0] sm:$0xff]
    %v3741 = vld [vmem:[#allocation8 + $0x1e8] sm:$0xff]
    %v3742 = vld [vmem:[#allocation8 + $0x1f0] sm:$0xff]
    %v3743 = vld [vmem:[#allocation8 + $0x1f8] sm:$0xff]
    %v3744 = vld [vmem:[#allocation8 + $0x200] sm:$0xff]
    %v3745 = vld [vmem:[#allocation8 + $0x208] sm:$0xff]
    %v3746 = vld [vmem:[#allocation8 + $0x210] sm:$0xff]
    %v3747 = vld [vmem:[#allocation8 + $0x218] sm:$0xff]
    %v3748 = vld [vmem:[#allocation8 + $0x220] sm:$0xff]
    %v3749 = vld [vmem:[#allocation8 + $0x228] sm:$0xff]
    %v3750 = vld [vmem:[#allocation8 + $0x230] sm:$0xff]
    %v3751 = vld [vmem:[#allocation8 + $0x238] sm:$0xff]
    %v3752 = vld [vmem:[#allocation8 + $0x240] sm:$0xff]
    %v3753 = vld [vmem:[#allocation8 + $0x248] sm:$0xff]
    %v3754 = vld [vmem:[#allocation8 + $0x250] sm:$0xff]
    %v3755 = vld [vmem:[#allocation8 + $0x258] sm:$0xff]
    %v3756 = vld [vmem:[#allocation8 + $0x260] sm:$0xff]
    %v3757 = vld [vmem:[#allocation8 + $0x268] sm:$0xff]
    %v3758 = vld [vmem:[#allocation8 + $0x270] sm:$0xff]
    %v3759 = vld [vmem:[#allocation8 + $0x278] sm:$0xff]
    %v3760 = vld [vmem:[#allocation8 + $0x280] sm:$0xff]
    %v3761 = vld [vmem:[#allocation8 + $0x288] sm:$0xff]
    %v3762 = vld [vmem:[#allocation8 + $0x290] sm:$0xff]
    %v3763 = vld [vmem:[#allocation8 + $0x298] sm:$0xff]
    %v3764 = vld [vmem:[#allocation8 + $0x2a0] sm:$0xff]
    %v3765 = vld [vmem:[#allocation8 + $0x2a8] sm:$0xff]
    %v3766 = vld [vmem:[#allocation8 + $0x2b0] sm:$0xff]
    %v3767 = vld [vmem:[#allocation8 + $0x2b8] sm:$0xff]
    %v3768 = vld [vmem:[#allocation8 + $0x2c0] sm:$0xff]
    %v3769 = vld [vmem:[#allocation8 + $0x2c8] sm:$0xff]
    %v3770 = vld [vmem:[#allocation8 + $0x2d0] sm:$0xff]
    %v3771 = vld [vmem:[#allocation8 + $0x2d8] sm:$0xff]
    %v3772 = vld [vmem:[#allocation8 + $0x2e0] sm:$0xff]
    %v3773 = vld [vmem:[#allocation8 + $0x2e8] sm:$0xff]
    %v3774 = vld [vmem:[#allocation8 + $0x2f0] sm:$0xff]
    %v3775 = vld [vmem:[#allocation8 + $0x2f8] sm:$0xff]
    %v3776 = vld [vmem:[#allocation8 + $0x300] sm:$0xff]
    %v3777 = vld [vmem:[#allocation8 + $0x308] sm:$0xff]
    %v3778 = vld [vmem:[#allocation8 + $0x310] sm:$0xff]
    %v3779 = vld [vmem:[#allocation8 + $0x318] sm:$0xff]
    %v3780 = vld [vmem:[#allocation8 + $0x320] sm:$0xff]
    %v3781 = vld [vmem:[#allocation8 + $0x328] sm:$0xff]
    %v3782 = vld [vmem:[#allocation8 + $0x330] sm:$0xff]
    %v3783 = vld [vmem:[#allocation8 + $0x338] sm:$0xff]
    %v3784 = vld [vmem:[#allocation8 + $0x340] sm:$0xff]
    %v3785 = vld [vmem:[#allocation8 + $0x348] sm:$0xff]
    %v3786 = vld [vmem:[#allocation8 + $0x350] sm:$0xff]
    %v3787 = vld [vmem:[#allocation8 + $0x358] sm:$0xff]
    %v3788 = vld [vmem:[#allocation8 + $0x360] sm:$0xff]
    %v3789 = vld [vmem:[#allocation8 + $0x368] sm:$0xff]
    %v3790 = vld [vmem:[#allocation8 + $0x370] sm:$0xff]
    %v3791 = vld [vmem:[#allocation8 + $0x378] sm:$0xff]
    %v3792 = vld [vmem:[#allocation8 + $0x380] sm:$0xff]
    %v3793 = vld [vmem:[#allocation8 + $0x388] sm:$0xff]
    %v3794 = vld [vmem:[#allocation8 + $0x390] sm:$0xff]
    %v3795 = vld [vmem:[#allocation8 + $0x398] sm:$0xff]
    %v3796 = vld [vmem:[#allocation8 + $0x3a0] sm:$0xff]
    %v3797 = vld [vmem:[#allocation8 + $0x3a8] sm:$0xff]
    %v3798 = vld [vmem:[#allocation8 + $0x3b0] sm:$0xff]
    %v3799 = vld [vmem:[#allocation8 + $0x3b8] sm:$0xff]
    %v3800 = vld [vmem:[#allocation8 + $0x3c0] sm:$0xff]
    %v3801 = vld [vmem:[#allocation8 + $0x3c8] sm:$0xff]
    %v3802 = vld [vmem:[#allocation8 + $0x3d0] sm:$0xff]
    %v3803 = vld [vmem:[#allocation8 + $0x3d8] sm:$0xff]
    %v3804 = vld [vmem:[#allocation8 + $0x3e0] sm:$0xff]
    %v3805 = vld [vmem:[#allocation8 + $0x3e8] sm:$0xff]
    %v3806 = vld [vmem:[#allocation8 + $0x3f0] sm:$0xff]
    %v3807 = vld [vmem:[#allocation8 + $0x3f8] sm:$0xff]
    %v3808 = vld [vmem:[#allocation8 + $0x400] sm:$0xff]
    %v3809 = vld [vmem:[#allocation8 + $0x408] sm:$0xff]
    %v3810 = vld [vmem:[#allocation8 + $0x410] sm:$0xff]
    %v3811 = vld [vmem:[#allocation8 + $0x418] sm:$0xff]
    %v3812 = vld [vmem:[#allocation8 + $0x420] sm:$0xff]
    %v3813 = vld [vmem:[#allocation8 + $0x428] sm:$0xff]
    %v3814 = vld [vmem:[#allocation8 + $0x430] sm:$0xff]
    %v3815 = vld [vmem:[#allocation8 + $0x438] sm:$0xff]
    %v3816 = vld [vmem:[#allocation8 + $0x440] sm:$0xff]
    %v3817 = vld [vmem:[#allocation8 + $0x448] sm:$0xff]
    %v3818 = vld [vmem:[#allocation8 + $0x450] sm:$0xff]
    %v3819 = vld [vmem:[#allocation8 + $0x458] sm:$0xff]
    %v3820 = vld [vmem:[#allocation8 + $0x460] sm:$0xff]
    %v3821 = vld [vmem:[#allocation8 + $0x468] sm:$0xff]
    %v3822 = vld [vmem:[#allocation8 + $0x470] sm:$0xff]
    %v3823 = vld [vmem:[#allocation8 + $0x478] sm:$0xff]
    %v3824 = vld [vmem:[#allocation8 + $0x480] sm:$0xff]
    %v3825 = vld [vmem:[#allocation8 + $0x488] sm:$0xff]
    %v3826 = vld [vmem:[#allocation8 + $0x490] sm:$0xff]
    %v3827 = vld [vmem:[#allocation8 + $0x498] sm:$0xff]
    %v3828 = vld [vmem:[#allocation8 + $0x4a0] sm:$0xff]
    %v3829 = vld [vmem:[#allocation8 + $0x4a8] sm:$0xff]
    %v3830 = vld [vmem:[#allocation8 + $0x4b0] sm:$0xff]
    %v3831 = vld [vmem:[#allocation8 + $0x4b8] sm:$0xff]
    %v3832 = vld [vmem:[#allocation8 + $0x4c0] sm:$0xff]
    %v3833 = vld [vmem:[#allocation8 + $0x4c8] sm:$0xff]
    %v3834 = vld [vmem:[#allocation8 + $0x4d0] sm:$0xff]
    %v3835 = vld [vmem:[#allocation8 + $0x4d8] sm:$0xff]
    %v3836 = vld [vmem:[#allocation8 + $0x4e0] sm:$0xff]
    %v3837 = vld [vmem:[#allocation8 + $0x4e8] sm:$0xff]
    %v3838 = vld [vmem:[#allocation8 + $0x4f0] sm:$0xff]
    %v3839 = vld [vmem:[#allocation8 + $0x4f8] sm:$0xff]
    %v3840 = vld [vmem:[#allocation8 + $0x500] sm:$0xff]
    %v3841 = vld [vmem:[#allocation8 + $0x508] sm:$0xff]
    %v3842 = vld [vmem:[#allocation8 + $0x510] sm:$0xff]
    %v3843 = vld [vmem:[#allocation8 + $0x518] sm:$0xff]
    %v3844 = vld [vmem:[#allocation8 + $0x520] sm:$0xff]
    %v3845 = vld [vmem:[#allocation8 + $0x528] sm:$0xff]
    %v3846 = vld [vmem:[#allocation8 + $0x530] sm:$0xff]
    %v3847 = vld [vmem:[#allocation8 + $0x538] sm:$0xff]
    %v3848 = vld [vmem:[#allocation8 + $0x540] sm:$0xff]
    %v3849 = vld [vmem:[#allocation8 + $0x548] sm:$0xff]
    %v3850 = vld [vmem:[#allocation8 + $0x550] sm:$0xff]
    %v3851 = vld [vmem:[#allocation8 + $0x558] sm:$0xff]
    %v3852 = vld [vmem:[#allocation8 + $0x560] sm:$0xff]
    %v3853 = vld [vmem:[#allocation8 + $0x568] sm:$0xff]
    %v3854 = vld [vmem:[#allocation8 + $0x570] sm:$0xff]
    %v3855 = vld [vmem:[#allocation8 + $0x578] sm:$0xff]
    %v3856 = vld [vmem:[#allocation8 + $0x580] sm:$0xff]
    %v3857 = vld [vmem:[#allocation8 + $0x588] sm:$0xff]
    %v3858 = vld [vmem:[#allocation8 + $0x590] sm:$0xff]
    %v3859 = vld [vmem:[#allocation8 + $0x598] sm:$0xff]
    %v3860 = vld [vmem:[#allocation8 + $0x5a0] sm:$0xff]
    %v3861 = vld [vmem:[#allocation8 + $0x5a8] sm:$0xff]
    %v3862 = vld [vmem:[#allocation8 + $0x5b0] sm:$0xff]
    %v3863 = vld [vmem:[#allocation8 + $0x5b8] sm:$0xff]
    %v3864 = vld [vmem:[#allocation8 + $0x5c0] sm:$0xff]
    %v3865 = vld [vmem:[#allocation8 + $0x5c8] sm:$0xff]
    %v3866 = vld [vmem:[#allocation8 + $0x5d0] sm:$0xff]
    %v3867 = vld [vmem:[#allocation8 + $0x5d8] sm:$0xff]
    %v3868 = vld [vmem:[#allocation8 + $0x5e0] sm:$0xff]
    %v3869 = vld [vmem:[#allocation8 + $0x5e8] sm:$0xff]
    %v3870 = vld [vmem:[#allocation8 + $0x5f0] sm:$0xff]
    %v3871 = vld [vmem:[#allocation8 + $0x5f8] sm:$0xff]
    %v3873 = vlaneseq
    %v3874 = vshrl.u32 %v3873, 7
    %v3875 = vsub.s32 0, %v3874
    %v3876 = vrot.slane %v3141, %v3875
    %v3877 = vlaneseq
    %v3878 = vshrl.u32 %v3877, 7
    %v3879 = vsub.s32 1, %v3878
    %v3880 = vrot.slane %v3141, %v3879
    %v3881 = vlaneseq
    %v3882 = vshrl.u32 %v3881, 7
    %v3883 = vsub.s32 2, %v3882
    %v3884 = vrot.slane %v3141, %v3883
    %v3885 = vlaneseq
    %v3886 = vshrl.u32 %v3885, 7
    %v3887 = vsub.s32 3, %v3886
    %v3888 = vrot.slane %v3141, %v3887
    %v3889 = vlaneseq
    %v3890 = vshrl.u32 %v3889, 7
    %v3891 = vsub.s32 4, %v3890
    %v3892 = vrot.slane %v3141, %v3891
    %v3893 = vlaneseq
    %v3894 = vshrl.u32 %v3893, 7
    %v3895 = vsub.s32 5, %v3894
    %v3896 = vrot.slane %v3141, %v3895
    %3903 = vmatprep.subr.mxu0 %v3681
    %3904 = vmatpush1.msra.mxu0 %v3680
    %3905 = vmatprep.subr.mxu0 %v3687
    %3906 = vmatpush1.msra.mxu0 %v3686
    %3907 = vmatprep.subr.mxu0 %v3693
    %3908 = vmatpush1.msra.mxu0 %v3692
    %3909 = vmatprep.subr.mxu0 %v3699
    %3910 = vmatpush1.msra.mxu0 %v3698
    %3911 = vmatprep.subr.mxu0 %v3705
    %3912 = vmatpush1.msra.mxu0 %v3704
    %3913 = vmatprep.subr.mxu0 %v3711
    %3914 = vmatpush1.msra.mxu0 %v3710
    %3915 = vmatprep.subr.mxu0 %v3717
    %3916 = vmatpush1.msra.mxu0 %v3716
    %3917 = vmatprep.subr.mxu0 %v3723
    %3918 = vmatpush1.msra.mxu0 %v3722
    %3919 = vmatprep.subr.mxu0 %v3729
    %3920 = vmatpush1.msra.mxu0 %v3728
    %3921 = vmatprep.subr.mxu0 %v3735
    %3922 = vmatpush1.msra.mxu0 %v3734
    %3923 = vmatprep.subr.mxu0 %v3741
    %3924 = vmatpush1.msra.mxu0 %v3740
    %3925 = vmatprep.subr.mxu0 %v3747
    %3926 = vmatpush1.msra.mxu0 %v3746
    %3927 = vmatprep.subr.mxu0 %v3753
    %3928 = vmatpush1.msra.mxu0 %v3752
    %3929 = vmatprep.subr.mxu0 %v3759
    %3930 = vmatpush1.msra.mxu0 %v3758
    %3931 = vmatprep.subr.mxu0 %v3765
    %3932 = vmatpush1.msra.mxu0 %v3764
    %3933 = vmatprep.subr.mxu0 %v3771
    %3934 = vmatpush1.msra.mxu0 %v3770
    %3935 = vmatprep.subr.mxu0 %v3777
    %3936 = vmatpush1.msra.mxu0 %v3776
    %3937 = vmatprep.subr.mxu0 %v3783
    %3938 = vmatpush1.msra.mxu0 %v3782
    %3939 = vmatprep.subr.mxu0 %v3789
    %3940 = vmatpush1.msra.mxu0 %v3788
    %3941 = vmatprep.subr.mxu0 %v3795
    %3942 = vmatpush1.msra.mxu0 %v3794
    %3943 = vmatprep.subr.mxu0 %v3801
    %3944 = vmatpush1.msra.mxu0 %v3800
    %3945 = vmatprep.subr.mxu0 %v3807
    %3946 = vmatpush1.msra.mxu0 %v3806
    %3947 = vmatprep.subr.mxu0 %v3813
    %3948 = vmatpush1.msra.mxu0 %v3812
    %3949 = vmatprep.subr.mxu0 %v3819
    %3950 = vmatpush1.msra.mxu0 %v3818
    %3951 = vmatprep.subr.mxu0 %v3825
    %3952 = vmatpush1.msra.mxu0 %v3824
    %3953 = vmatprep.subr.mxu0 %v3831
    %3954 = vmatpush1.msra.mxu0 %v3830
    %3955 = vmatprep.subr.mxu0 %v3837
    %3956 = vmatpush1.msra.mxu0 %v3836
    %3957 = vmatprep.subr.mxu0 %v3843
    %3958 = vmatpush1.msra.mxu0 %v3842
    %3959 = vmatprep.subr.mxu0 %v3849
    %3960 = vmatpush1.msra.mxu0 %v3848
    %3961 = vmatprep.subr.mxu0 %v3855
    %3962 = vmatpush1.msra.mxu0 %v3854
    %3963 = vmatprep.subr.mxu0 %v3861
    %3964 = vmatpush1.msra.mxu0 %v3860
    %3965 = vmatprep.subr.mxu0 %v3867
    %3966 = vmatpush1.msra.mxu0 %v3866
    %3967 = vmatprep.mubr.f32.mxu0 0.0
    %3968 = vmatmul.mubr.f32.gmra.mrb[0].mxu0 0.0
    %v3969 = vpop.f32.mrb[0].mxu0
    %v3970 = vadd.f32 %v3876, %v3969
    %v3971 = vpop.f32.mrb[0].mxu0
    %v3972 = vadd.f32 %v3880, %v3971
    %3973 = vdwg.mxu0
    %3974 = vmatprep.subr.mxu0 %v3683
    %3975 = vmatpush1.msra.mxu0 %v3682
    %3976 = vmatprep.subr.mxu0 %v3689
    %3977 = vmatpush1.msra.mxu0 %v3688
    %3978 = vmatprep.subr.mxu0 %v3695
    %3979 = vmatpush1.msra.mxu0 %v3694
    %3980 = vmatprep.subr.mxu0 %v3701
    %3981 = vmatpush1.msra.mxu0 %v3700
    %3982 = vmatprep.subr.mxu0 %v3707
    %3983 = vmatpush1.msra.mxu0 %v3706
    %3984 = vmatprep.subr.mxu0 %v3713
    %3985 = vmatpush1.msra.mxu0 %v3712
    %3986 = vmatprep.subr.mxu0 %v3719
    %3987 = vmatpush1.msra.mxu0 %v3718
    %3988 = vmatprep.subr.mxu0 %v3725
    %3989 = vmatpush1.msra.mxu0 %v3724
    %3990 = vmatprep.subr.mxu0 %v3731
    %3991 = vmatpush1.msra.mxu0 %v3730
    %3992 = vmatprep.subr.mxu0 %v3737
    %3993 = vmatpush1.msra.mxu0 %v3736
    %3994 = vmatprep.subr.mxu0 %v3743
    %3995 = vmatpush1.msra.mxu0 %v3742
    %3996 = vmatprep.subr.mxu0 %v3749
    %3997 = vmatpush1.msra.mxu0 %v3748
    %3998 = vmatprep.subr.mxu0 %v3755
    %3999 = vmatpush1.msra.mxu0 %v3754
    %4000 = vmatprep.subr.mxu0 %v3761
    %4001 = vmatpush1.msra.mxu0 %v3760
    %4002 = vmatprep.subr.mxu0 %v3767
    %4003 = vmatpush1.msra.mxu0 %v3766
    %4004 = vmatprep.subr.mxu0 %v3773
    %4005 = vmatpush1.msra.mxu0 %v3772
    %4006 = vmatprep.subr.mxu0 %v3779
    %4007 = vmatpush1.msra.mxu0 %v3778
    %4008 = vmatprep.subr.mxu0 %v3785
    %4009 = vmatpush1.msra.mxu0 %v3784
    %4010 = vmatprep.subr.mxu0 %v3791
    %4011 = vmatpush1.msra.mxu0 %v3790
    %4012 = vmatprep.subr.mxu0 %v3797
    %4013 = vmatpush1.msra.mxu0 %v3796
    %4014 = vmatprep.subr.mxu0 %v3803
    %4015 = vmatpush1.msra.mxu0 %v3802
    %4016 = vmatprep.subr.mxu0 %v3809
    %4017 = vmatpush1.msra.mxu0 %v3808
    %4018 = vmatprep.subr.mxu0 %v3815
    %4019 = vmatpush1.msra.mxu0 %v3814
    %4020 = vmatprep.subr.mxu0 %v3821
    %4021 = vmatpush1.msra.mxu0 %v3820
    %4022 = vmatprep.subr.mxu0 %v3827
    %4023 = vmatpush1.msra.mxu0 %v3826
    %4024 = vmatprep.subr.mxu0 %v3833
    %4025 = vmatpush1.msra.mxu0 %v3832
    %4026 = vmatprep.subr.mxu0 %v3839
    %4027 = vmatpush1.msra.mxu0 %v3838
    %4028 = vmatprep.subr.mxu0 %v3845
    %4029 = vmatpush1.msra.mxu0 %v3844
    %4030 = vmatprep.subr.mxu0 %v3851
    %4031 = vmatpush1.msra.mxu0 %v3850
    %4032 = vmatprep.subr.mxu0 %v3857
    %4033 = vmatpush1.msra.mxu0 %v3856
    %4034 = vmatprep.subr.mxu0 %v3863
    %4035 = vmatpush1.msra.mxu0 %v3862
    %4036 = vmatprep.subr.mxu0 %v3869
    %4037 = vmatpush1.msra.mxu0 %v3868
    %4038 = vmatprep.mubr.f32.mxu0 0.0
    %4039 = vmatmul.mubr.f32.gmra.mrb[0].mxu0 0.0
    %v4040 = vpop.f32.mrb[0].mxu0
    %v4041 = vadd.f32 %v3884, %v4040
    %v4042 = vpop.f32.mrb[0].mxu0
    %v4043 = vadd.f32 %v3888, %v4042
    %4044 = vdwg.mxu0
    %4045 = vmatprep.subr.mxu0 %v3685
    %4046 = vmatpush1.msra.mxu0 %v3684
    %4047 = vmatprep.subr.mxu0 %v3691
    %4048 = vmatpush1.msra.mxu0 %v3690
    %4049 = vmatprep.subr.mxu0 %v3697
    %4050 = vmatpush1.msra.mxu0 %v3696
    %4051 = vmatprep.subr.mxu0 %v3703
    %4052 = vmatpush1.msra.mxu0 %v3702
    %4053 = vmatprep.subr.mxu0 %v3709
    %4054 = vmatpush1.msra.mxu0 %v3708
    %4055 = vmatprep.subr.mxu0 %v3715
    %4056 = vmatpush1.msra.mxu0 %v3714
    %4057 = vmatprep.subr.mxu0 %v3721
    %4058 = vmatpush1.msra.mxu0 %v3720
    %4059 = vmatprep.subr.mxu0 %v3727
    %4060 = vmatpush1.msra.mxu0 %v3726
    %4061 = vmatprep.subr.mxu0 %v3733
    %4062 = vmatpush1.msra.mxu0 %v3732
    %4063 = vmatprep.subr.mxu0 %v3739
    %4064 = vmatpush1.msra.mxu0 %v3738
    %4065 = vmatprep.subr.mxu0 %v3745
    %4066 = vmatpush1.msra.mxu0 %v3744
    %4067 = vmatprep.subr.mxu0 %v3751
    %4068 = vmatpush1.msra.mxu0 %v3750
    %4069 = vmatprep.subr.mxu0 %v3757
    %4070 = vmatpush1.msra.mxu0 %v3756
    %4071 = vmatprep.subr.mxu0 %v3763
    %4072 = vmatpush1.msra.mxu0 %v3762
    %4073 = vmatprep.subr.mxu0 %v3769
    %4074 = vmatpush1.msra.mxu0 %v3768
    %4075 = vmatprep.subr.mxu0 %v3775
    %4076 = vmatpush1.msra.mxu0 %v3774
    %4077 = vmatprep.subr.mxu0 %v3781
    %4078 = vmatpush1.msra.mxu0 %v3780
    %4079 = vmatprep.subr.mxu0 %v3787
    %4080 = vmatpush1.msra.mxu0 %v3786
    %4081 = vmatprep.subr.mxu0 %v3793
    %4082 = vmatpush1.msra.mxu0 %v3792
    %4083 = vmatprep.subr.mxu0 %v3799
    %4084 = vmatpush1.msra.mxu0 %v3798
    %4085 = vmatprep.subr.mxu0 %v3805
    %4086 = vmatpush1.msra.mxu0 %v3804
    %4087 = vmatprep.subr.mxu0 %v3811
    %4088 = vmatpush1.msra.mxu0 %v3810
    %4089 = vmatprep.subr.mxu0 %v3817
    %4090 = vmatpush1.msra.mxu0 %v3816
    %4091 = vmatprep.subr.mxu0 %v3823
    %4092 = vmatpush1.msra.mxu0 %v3822
    %4093 = vmatprep.subr.mxu0 %v3829
    %4094 = vmatpush1.msra.mxu0 %v3828
    %4095 = vmatprep.subr.mxu0 %v3835
    %4096 = vmatpush1.msra.mxu0 %v3834
    %4097 = vmatprep.subr.mxu0 %v3841
    %4098 = vmatpush1.msra.mxu0 %v3840
    %4099 = vmatprep.subr.mxu0 %v3847
    %4100 = vmatpush1.msra.mxu0 %v3846
    %4101 = vmatprep.subr.mxu0 %v3853
    %4102 = vmatpush1.msra.mxu0 %v3852
    %4103 = vmatprep.subr.mxu0 %v3859
    %4104 = vmatpush1.msra.mxu0 %v3858
    %4105 = vmatprep.subr.mxu0 %v3865
    %4106 = vmatpush1.msra.mxu0 %v3864
    %4107 = vmatprep.subr.mxu0 %v3871
    %4108 = vmatpush1.msra.mxu0 %v3870
    %4109 = vmatprep.mubr.f32.mxu0 0.0
    %4110 = vmatmul.mubr.f32.gmra.mrb[0].mxu0 0.0
    %v4111 = vpop.f32.mrb[0].mxu0
    %v4112 = vadd.f32 %v3892, %v4111
    %v4113 = vpop.f32.mrb[0].mxu0
    %v4114 = vadd.f32 %v3896, %v4113
    %4115 = vdwg.mxu0
    %v4116 = vadd.f32 %v3674, %v3970
    %v4117 = vadd.f32 %v3675, %v3972
    %v4118 = vxor.u32 %v4116, 2147483648
    %v4119 = vxor.u32 %v4117, 2147483648
    %v4120 = vmul.f32 %v4118, 1.442695
    %v4121 = vpow.pop %v4120
    %v4122 = vmul.f32 %v4119, 1.442695
    %v4123 = vpow.pop %v4122
    %v4124 = vadd.f32 %v4121, 1.0
    %v4125 = vadd.f32 %v4123, 1.0
    %v4126 = vrcp.pop %v4124
    %v4127 = vmul.f32 1.0, %v4126
    %v4128 = vrcp.pop %v4125
    %v4129 = vmul.f32 1.0, %v4128
    %v4130 = vadd.f32 %v3676, %v4041
    %v4131 = vadd.f32 %v3677, %v4043
    %v4132 = vxor.u32 %v4130, 2147483648
    %v4133 = vxor.u32 %v4131, 2147483648
    %v4134 = vmul.f32 %v4132, 1.442695
    %v4135 = vpow.pop %v4134
    %v4136 = vmul.f32 %v4133, 1.442695
    %v4137 = vpow.pop %v4136
    %v4138 = vadd.f32 %v4135, 1.0
    %v4139 = vadd.f32 %v4137, 1.0
    %v4140 = vrcp.pop %v4138
    %v4141 = vmul.f32 1.0, %v4140
    %v4142 = vrcp.pop %v4139
    %v4143 = vmul.f32 1.0, %v4142
    %v4144 = vmul.f32 %v4127, %v4112
    %v4145 = vmul.f32 %v4129, %v4114
    %v4146 = vadd.f32 %v3678, %v4144
    %v4147 = vadd.f32 %v3679, %v4145
    %v4148 = vtanh.pop %v4146
    %v4149 = vtanh.pop %v4147
    %v4150 = vsub.f32 1.0, %v4141
    %v4151 = vsub.f32 1.0, %v4143
    %v4152 = vmul.f32 %v4150, %v4148
    %v4153 = vmul.f32 %v4151, %v4149
    %v4154 = vmul.f32 %v4141, 0.0
    %v4155 = vmul.f32 %v4143, 0.0
    %v4156 = vadd.f32 %v4152, %v4154
    %v4157 = vadd.f32 %v4153, %v4155
    %4158 = vmatprep.subr.mxu0 %v3681
    %4159 = vmatpush1.msra.mxu0 %v3680
    %4160 = vmatprep.subr.mxu0 %v3687
    %4161 = vmatpush1.msra.mxu0 %v3686
    %4162 = vmatprep.subr.mxu0 %v3693
    %4163 = vmatpush1.msra.mxu0 %v3692
    %4164 = vmatprep.subr.mxu0 %v3699
    %4165 = vmatpush1.msra.mxu0 %v3698
    %4166 = vmatprep.subr.mxu0 %v3705
    %4167 = vmatpush1.msra.mxu0 %v3704
    %4168 = vmatprep.subr.mxu0 %v3711
    %4169 = vmatpush1.msra.mxu0 %v3710
    %4170 = vmatprep.subr.mxu0 %v3717
    %4171 = vmatpush1.msra.mxu0 %v3716
    %4172 = vmatprep.subr.mxu0 %v3723
    %4173 = vmatpush1.msra.mxu0 %v3722
    %4174 = vmatprep.subr.mxu0 %v3729
    %4175 = vmatpush1.msra.mxu0 %v3728
    %4176 = vmatprep.subr.mxu0 %v3735
    %4177 = vmatpush1.msra.mxu0 %v3734
    %4178 = vmatprep.subr.mxu0 %v3741
    %4179 = vmatpush1.msra.mxu0 %v3740
    %4180 = vmatprep.subr.mxu0 %v3747
    %4181 = vmatpush1.msra.mxu0 %v3746
    %4182 = vmatprep.subr.mxu0 %v3753
    %4183 = vmatpush1.msra.mxu0 %v3752
    %4184 = vmatprep.subr.mxu0 %v3759
    %4185 = vmatpush1.msra.mxu0 %v3758
    %4186 = vmatprep.subr.mxu0 %v3765
    %4187 = vmatpush1.msra.mxu0 %v3764
    %4188 = vmatprep.subr.mxu0 %v3771
    %4189 = vmatpush1.msra.mxu0 %v3770
    %4190 = vmatprep.subr.mxu0 %v3777
    %4191 = vmatpush1.msra.mxu0 %v3776
    %4192 = vmatprep.subr.mxu0 %v3783
    %4193 = vmatpush1.msra.mxu0 %v3782
    %4194 = vmatprep.subr.mxu0 %v3789
    %4195 = vmatpush1.msra.mxu0 %v3788
    %4196 = vmatprep.subr.mxu0 %v3795
    %4197 = vmatpush1.msra.mxu0 %v3794
    %4198 = vmatprep.subr.mxu0 %v3801
    %4199 = vmatpush1.msra.mxu0 %v3800
    %4200 = vmatprep.subr.mxu0 %v3807
    %4201 = vmatpush1.msra.mxu0 %v3806
    %4202 = vmatprep.subr.mxu0 %v3813
    %4203 = vmatpush1.msra.mxu0 %v3812
    %4204 = vmatprep.subr.mxu0 %v3819
    %4205 = vmatpush1.msra.mxu0 %v3818
    %4206 = vmatprep.subr.mxu0 %v3825
    %4207 = vmatpush1.msra.mxu0 %v3824
    %4208 = vmatprep.subr.mxu0 %v3831
    %4209 = vmatpush1.msra.mxu0 %v3830
    %4210 = vmatprep.subr.mxu0 %v3837
    %4211 = vmatpush1.msra.mxu0 %v3836
    %4212 = vmatprep.subr.mxu0 %v3843
    %4213 = vmatpush1.msra.mxu0 %v3842
    %4214 = vmatprep.subr.mxu0 %v3849
    %4215 = vmatpush1.msra.mxu0 %v3848
    %4216 = vmatprep.subr.mxu0 %v3855
    %4217 = vmatpush1.msra.mxu0 %v3854
    %4218 = vmatprep.subr.mxu0 %v3861
    %4219 = vmatpush1.msra.mxu0 %v3860
    %4220 = vmatprep.subr.mxu0 %v3867
    %4221 = vmatpush1.msra.mxu0 %v3866
    %4222 = vmatprep.mubr.f32.mxu0 %v4157
    %4223 = vmatmul.mubr.f32.gmra.mrb[0].mxu0 %v4156
    %v4224 = vpop.f32.mrb[0].mxu0
    %v4225 = vadd.f32 %v3876, %v4224
    %v4226 = vpop.f32.mrb[0].mxu0
    %v4227 = vadd.f32 %v3880, %v4226
    %4228 = vdwg.mxu0
    %4229 = vmatprep.subr.mxu0 %v3683
    %4230 = vmatpush1.msra.mxu0 %v3682
    %4231 = vmatprep.subr.mxu0 %v3689
    %4232 = vmatpush1.msra.mxu0 %v3688
    %4233 = vmatprep.subr.mxu0 %v3695
    %4234 = vmatpush1.msra.mxu0 %v3694
    %4235 = vmatprep.subr.mxu0 %v3701
    %4236 = vmatpush1.msra.mxu0 %v3700
    %4237 = vmatprep.subr.mxu0 %v3707
    %4238 = vmatpush1.msra.mxu0 %v3706
    %4239 = vmatprep.subr.mxu0 %v3713
    %4240 = vmatpush1.msra.mxu0 %v3712
    %4241 = vmatprep.subr.mxu0 %v3719
    %4242 = vmatpush1.msra.mxu0 %v3718
    %4243 = vmatprep.subr.mxu0 %v3725
    %4244 = vmatpush1.msra.mxu0 %v3724
    %4245 = vmatprep.subr.mxu0 %v3731
    %4246 = vmatpush1.msra.mxu0 %v3730
    %4247 = vmatprep.subr.mxu0 %v3737
    %4248 = vmatpush1.msra.mxu0 %v3736
    %4249 = vmatprep.subr.mxu0 %v3743
    %4250 = vmatpush1.msra.mxu0 %v3742
    %4251 = vmatprep.subr.mxu0 %v3749
    %4252 = vmatpush1.msra.mxu0 %v3748
    %4253 = vmatprep.subr.mxu0 %v3755
    %4254 = vmatpush1.msra.mxu0 %v3754
    %4255 = vmatprep.subr.mxu0 %v3761
    %4256 = vmatpush1.msra.mxu0 %v3760
    %4257 = vmatprep.subr.mxu0 %v3767
    %4258 = vmatpush1.msra.mxu0 %v3766
    %4259 = vmatprep.subr.mxu0 %v3773
    %4260 = vmatpush1.msra.mxu0 %v3772
    %4261 = vmatprep.subr.mxu0 %v3779
    %4262 = vmatpush1.msra.mxu0 %v3778
    %4263 = vmatprep.subr.mxu0 %v3785
    %4264 = vmatpush1.msra.mxu0 %v3784
    %4265 = vmatprep.subr.mxu0 %v3791
    %4266 = vmatpush1.msra.mxu0 %v3790
    %4267 = vmatprep.subr.mxu0 %v3797
    %4268 = vmatpush1.msra.mxu0 %v3796
    %4269 = vmatprep.subr.mxu0 %v3803
    %4270 = vmatpush1.msra.mxu0 %v3802
    %4271 = vmatprep.subr.mxu0 %v3809
    %4272 = vmatpush1.msra.mxu0 %v3808
    %4273 = vmatprep.subr.mxu0 %v3815
    %4274 = vmatpush1.msra.mxu0 %v3814
    %4275 = vmatprep.subr.mxu0 %v3821
    %4276 = vmatpush1.msra.mxu0 %v3820
    %4277 = vmatprep.subr.mxu0 %v3827
    %4278 = vmatpush1.msra.mxu0 %v3826
    %4279 = vmatprep.subr.mxu0 %v3833
    %4280 = vmatpush1.msra.mxu0 %v3832
    %4281 = vmatprep.subr.mxu0 %v3839
    %4282 = vmatpush1.msra.mxu0 %v3838
    %4283 = vmatprep.subr.mxu0 %v3845
    %4284 = vmatpush1.msra.mxu0 %v3844
    %4285 = vmatprep.subr.mxu0 %v3851
    %4286 = vmatpush1.msra.mxu0 %v3850
    %4287 = vmatprep.subr.mxu0 %v3857
    %4288 = vmatpush1.msra.mxu0 %v3856
    %4289 = vmatprep.subr.mxu0 %v3863
    %4290 = vmatpush1.msra.mxu0 %v3862
    %4291 = vmatprep.subr.mxu0 %v3869
    %4292 = vmatpush1.msra.mxu0 %v3868
    %4293 = vmatprep.mubr.f32.mxu0 %v4157
    %4294 = vmatmul.mubr.f32.gmra.mrb[0].mxu0 %v4156
    %v4295 = vpop.f32.mrb[0].mxu0
    %v4296 = vadd.f32 %v3884, %v4295
    %v4297 = vpop.f32.mrb[0].mxu0
    %v4298 = vadd.f32 %v3888, %v4297
    %4299 = vdwg.mxu0
    %4300 = vmatprep.subr.mxu0 %v3685
    %4301 = vmatpush1.msra.mxu0 %v3684
    %4302 = vmatprep.subr.mxu0 %v3691
    %4303 = vmatpush1.msra.mxu0 %v3690
    %4304 = vmatprep.subr.mxu0 %v3697
    %4305 = vmatpush1.msra.mxu0 %v3696
    %4306 = vmatprep.subr.mxu0 %v3703
    %4307 = vmatpush1.msra.mxu0 %v3702
    %4308 = vmatprep.subr.mxu0 %v3709
    %4309 = vmatpush1.msra.mxu0 %v3708
    %4310 = vmatprep.subr.mxu0 %v3715
    %4311 = vmatpush1.msra.mxu0 %v3714
    %4312 = vmatprep.subr.mxu0 %v3721
    %4313 = vmatpush1.msra.mxu0 %v3720
    %4314 = vmatprep.subr.mxu0 %v3727
    %4315 = vmatpush1.msra.mxu0 %v3726
    %4316 = vmatprep.subr.mxu0 %v3733
    %4317 = vmatpush1.msra.mxu0 %v3732
    %4318 = vmatprep.subr.mxu0 %v3739
    %4319 = vmatpush1.msra.mxu0 %v3738
    %4320 = vmatprep.subr.mxu0 %v3745
    %4321 = vmatpush1.msra.mxu0 %v3744
    %4322 = vmatprep.subr.mxu0 %v3751
    %4323 = vmatpush1.msra.mxu0 %v3750
    %4324 = vmatprep.subr.mxu0 %v3757
    %4325 = vmatpush1.msra.mxu0 %v3756
    %4326 = vmatprep.subr.mxu0 %v3763
    %4327 = vmatpush1.msra.mxu0 %v3762
    %4328 = vmatprep.subr.mxu0 %v3769
    %4329 = vmatpush1.msra.mxu0 %v3768
    %4330 = vmatprep.subr.mxu0 %v3775
    %4331 = vmatpush1.msra.mxu0 %v3774
    %4332 = vmatprep.subr.mxu0 %v3781
    %4333 = vmatpush1.msra.mxu0 %v3780
    %4334 = vmatprep.subr.mxu0 %v3787
    %4335 = vmatpush1.msra.mxu0 %v3786
    %4336 = vmatprep.subr.mxu0 %v3793
    %4337 = vmatpush1.msra.mxu0 %v3792
    %4338 = vmatprep.subr.mxu0 %v3799
    %4339 = vmatpush1.msra.mxu0 %v3798
    %4340 = vmatprep.subr.mxu0 %v3805
    %4341 = vmatpush1.msra.mxu0 %v3804
    %4342 = vmatprep.subr.mxu0 %v3811
    %4343 = vmatpush1.msra.mxu0 %v3810
    %4344 = vmatprep.subr.mxu0 %v3817
    %4345 = vmatpush1.msra.mxu0 %v3816
    %4346 = vmatprep.subr.mxu0 %v3823
    %4347 = vmatpush1.msra.mxu0 %v3822
    %4348 = vmatprep.subr.mxu0 %v3829
    %4349 = vmatpush1.msra.mxu0 %v3828
    %4350 = vmatprep.subr.mxu0 %v3835
    %4351 = vmatpush1.msra.mxu0 %v3834
    %4352 = vmatprep.subr.mxu0 %v3841
    %4353 = vmatpush1.msra.mxu0 %v3840
    %4354 = vmatprep.subr.mxu0 %v3847
    %4355 = vmatpush1.msra.mxu0 %v3846
    %4356 = vmatprep.subr.mxu0 %v3853
    %4357 = vmatpush1.msra.mxu0 %v3852
    %4358 = vmatprep.subr.mxu0 %v3859
    %4359 = vmatpush1.msra.mxu0 %v3858
    %4360 = vmatprep.subr.mxu0 %v3865
    %4361 = vmatpush1.msra.mxu0 %v3864
    %4362 = vmatprep.subr.mxu0 %v3871
    %4363 = vmatpush1.msra.mxu0 %v3870
    %4364 = vmatprep.mubr.f32.mxu0 %v4157
    %4365 = vmatmul.mubr.f32.gmra.mrb[0].mxu0 %v4156
    %v4366 = vpop.f32.mrb[0].mxu0
    %v4367 = vadd.f32 %v3892, %v4366
    %v4368 = vpop.f32.mrb[0].mxu0
    %v4369 = vadd.f32 %v3896, %v4368
    %4370 = vdwg.mxu0
    %v4373 = vrot.slane %v4225, 7
    %v4374 = vrot.slane %v4227, 7
    %v4377 = vadd.f32 %v3674, %v4373
    %v4378 = vadd.f32 %v3675, %v4374
    %v4379 = vxor.u32 %v4377, 2147483648
    %v4380 = vxor.u32 %v4378, 2147483648
    %v4381 = vmul.f32 %v4379, 1.442695
    %v4382 = vpow.pop %v4381
    %v4383 = vmul.f32 %v4380, 1.442695
    %v4384 = vpow.pop %v4383
    %v4385 = vadd.f32 %v4382, 1.0
    %v4386 = vadd.f32 %v4384, 1.0
    %v4387 = vrcp.pop %v4385
    %v4388 = vmul.f32 1.0, %v4387
    %v4389 = vrcp.pop %v4386
    %v4390 = vmul.f32 1.0, %v4389
    %v4393 = vrot.slane %v4296, 7
    %v4394 = vrot.slane %v4298, 7
    %v4397 = vadd.f32 %v3676, %v4393
    %v4398 = vadd.f32 %v3677, %v4394
    %v4399 = vxor.u32 %v4397, 2147483648
    %v4400 = vxor.u32 %v4398, 2147483648
    %v4401 = vmul.f32 %v4399, 1.442695
    %v4402 = vpow.pop %v4401
    %v4403 = vmul.f32 %v4400, 1.442695
    %v4404 = vpow.pop %v4403
    %v4405 = vadd.f32 %v4402, 1.0
    %v4406 = vadd.f32 %v4404, 1.0
    %v4407 = vrcp.pop %v4405
    %v4408 = vmul.f32 1.0, %v4407
    %v4409 = vrcp.pop %v4406
    %v4410 = vmul.f32 1.0, %v4409
    %v4413 = vrot.slane %v4367, 7
    %v4414 = vrot.slane %v4369, 7
    %v4417 = vmul.f32 %v4388, %v4413
    %v4418 = vmul.f32 %v4390, %v4414
    %v4419 = vadd.f32 %v3678, %v4417
    %v4420 = vadd.f32 %v3679, %v4418
    %v4421 = vtanh.pop %v4419
    %v4422 = vtanh.pop %v4420
    %v4423 = vsub.f32 1.0, %v4408
    %v4424 = vsub.f32 1.0, %v4410
    %v4425 = vmul.f32 %v4423, %v4421
    %v4426 = vmul.f32 %v4424, %v4422
    %v4429 = vrot.slane %v4156, 7
    %v4430 = vrot.slane %v4157, 7
    %v4433 = vmul.f32 %v4408, %v4429
    %v4434 = vmul.f32 %v4410, %v4430
    %v4435 = vadd.f32 %v4425, %v4433
    %v4436 = vadd.f32 %v4426, %v4434
    %v4439 = vrot.slane %v4435, 1
    %v4440 = vrot.slane %v4436, 1
    %4443 = vmatprep.subr.mxu0 %v3681
    %4444 = vmatpush1.msra.mxu0 %v3680
    %4445 = vmatprep.subr.mxu0 %v3687
    %4446 = vmatpush1.msra.mxu0 %v3686
    %4447 = vmatprep.subr.mxu0 %v3693
    %4448 = vmatpush1.msra.mxu0 %v3692
    %4449 = vmatprep.subr.mxu0 %v3699
    %4450 = vmatpush1.msra.mxu0 %v3698
    %4451 = vmatprep.subr.mxu0 %v3705
    %4452 = vmatpush1.msra.mxu0 %v3704
    %4453 = vmatprep.subr.mxu0 %v3711
    %4454 = vmatpush1.msra.mxu0 %v3710
    %4455 = vmatprep.subr.mxu0 %v3717
    %4456 = vmatpush1.msra.mxu0 %v3716
    %4457 = vmatprep.subr.mxu0 %v3723
    %4458 = vmatpush1.msra.mxu0 %v3722
    %4459 = vmatprep.subr.mxu0 %v3729
    %4460 = vmatpush1.msra.mxu0 %v3728
    %4461 = vmatprep.subr.mxu0 %v3735
    %4462 = vmatpush1.msra.mxu0 %v3734
    %4463 = vmatprep.subr.mxu0 %v3741
    %4464 = vmatpush1.msra.mxu0 %v3740
    %4465 = vmatprep.subr.mxu0 %v3747
    %4466 = vmatpush1.msra.mxu0 %v3746
    %4467 = vmatprep.subr.mxu0 %v3753
    %4468 = vmatpush1.msra.mxu0 %v3752
    %4469 = vmatprep.subr.mxu0 %v3759
    %4470 = vmatpush1.msra.mxu0 %v3758
    %4471 = vmatprep.subr.mxu0 %v3765
    %4472 = vmatpush1.msra.mxu0 %v3764
    %4473 = vmatprep.subr.mxu0 %v3771
    %4474 = vmatpush1.msra.mxu0 %v3770
    %4475 = vmatprep.subr.mxu0 %v3777
    %4476 = vmatpush1.msra.mxu0 %v3776
    %4477 = vmatprep.subr.mxu0 %v3783
    %4478 = vmatpush1.msra.mxu0 %v3782
    %4479 = vmatprep.subr.mxu0 %v3789
    %4480 = vmatpush1.msra.mxu0 %v3788
    %4481 = vmatprep.subr.mxu0 %v3795
    %4482 = vmatpush1.msra.mxu0 %v3794
    %4483 = vmatprep.subr.mxu0 %v3801
    %4484 = vmatpush1.msra.mxu0 %v3800
    %4485 = vmatprep.subr.mxu0 %v3807
    %4486 = vmatpush1.msra.mxu0 %v3806
    %4487 = vmatprep.subr.mxu0 %v3813
    %4488 = vmatpush1.msra.mxu0 %v3812
    %4489 = vmatprep.subr.mxu0 %v3819
    %4490 = vmatpush1.msra.mxu0 %v3818
    %4491 = vmatprep.subr.mxu0 %v3825
    %4492 = vmatpush1.msra.mxu0 %v3824
    %4493 = vmatprep.subr.mxu0 %v3831
    %4494 = vmatpush1.msra.mxu0 %v3830
    %4495 = vmatprep.subr.mxu0 %v3837
    %4496 = vmatpush1.msra.mxu0 %v3836
    %4497 = vmatprep.subr.mxu0 %v3843
    %4498 = vmatpush1.msra.mxu0 %v3842
    %4499 = vmatprep.subr.mxu0 %v3849
    %4500 = vmatpush1.msra.mxu0 %v3848
    %4501 = vmatprep.subr.mxu0 %v3855
    %4502 = vmatpush1.msra.mxu0 %v3854
    %4503 = vmatprep.subr.mxu0 %v3861
    %4504 = vmatpush1.msra.mxu0 %v3860
    %4505 = vmatprep.subr.mxu0 %v3867
    %4506 = vmatpush1.msra.mxu0 %v3866
    %4507 = vmatprep.mubr.f32.mxu0 %v4440
    %4508 = vmatmul.mubr.f32.gmra.mrb[0].mxu0 %v4439
    %v4509 = vpop.f32.mrb[0].mxu0
    %v4510 = vadd.f32 %v3876, %v4509
    %v4511 = vpop.f32.mrb[0].mxu0
    %v4512 = vadd.f32 %v3880, %v4511
    %4513 = vdwg.mxu0
    %4514 = vmatprep.subr.mxu0 %v3683
    %4515 = vmatpush1.msra.mxu0 %v3682
    %4516 = vmatprep.subr.mxu0 %v3689
    %4517 = vmatpush1.msra.mxu0 %v3688
    %4518 = vmatprep.subr.mxu0 %v3695
    %4519 = vmatpush1.msra.mxu0 %v3694
    %4520 = vmatprep.subr.mxu0 %v3701
    %4521 = vmatpush1.msra.mxu0 %v3700
    %4522 = vmatprep.subr.mxu0 %v3707
    %4523 = vmatpush1.msra.mxu0 %v3706
    %4524 = vmatprep.subr.mxu0 %v3713
    %4525 = vmatpush1.msra.mxu0 %v3712
    %4526 = vmatprep.subr.mxu0 %v3719
    %4527 = vmatpush1.msra.mxu0 %v3718
    %4528 = vmatprep.subr.mxu0 %v3725
    %4529 = vmatpush1.msra.mxu0 %v3724
    %4530 = vmatprep.subr.mxu0 %v3731
    %4531 = vmatpush1.msra.mxu0 %v3730
    %4532 = vmatprep.subr.mxu0 %v3737
    %4533 = vmatpush1.msra.mxu0 %v3736
    %4534 = vmatprep.subr.mxu0 %v3743
    %4535 = vmatpush1.msra.mxu0 %v3742
    %4536 = vmatprep.subr.mxu0 %v3749
    %4537 = vmatpush1.msra.mxu0 %v3748
    %4538 = vmatprep.subr.mxu0 %v3755
    %4539 = vmatpush1.msra.mxu0 %v3754
    %4540 = vmatprep.subr.mxu0 %v3761
    %4541 = vmatpush1.msra.mxu0 %v3760
    %4542 = vmatprep.subr.mxu0 %v3767
    %4543 = vmatpush1.msra.mxu0 %v3766
    %4544 = vmatprep.subr.mxu0 %v3773
    %4545 = vmatpush1.msra.mxu0 %v3772
    %4546 = vmatprep.subr.mxu0 %v3779
    %4547 = vmatpush1.msra.mxu0 %v3778
    %4548 = vmatprep.subr.mxu0 %v3785
    %4549 = vmatpush1.msra.mxu0 %v3784
    %4550 = vmatprep.subr.mxu0 %v3791
    %4551 = vmatpush1.msra.mxu0 %v3790
    %4552 = vmatprep.subr.mxu0 %v3797
    %4553 = vmatpush1.msra.mxu0 %v3796
    %4554 = vmatprep.subr.mxu0 %v3803
    %4555 = vmatpush1.msra.mxu0 %v3802
    %4556 = vmatprep.subr.mxu0 %v3809
    %4557 = vmatpush1.msra.mxu0 %v3808
    %4558 = vmatprep.subr.mxu0 %v3815
    %4559 = vmatpush1.msra.mxu0 %v3814
    %4560 = vmatprep.subr.mxu0 %v3821
    %4561 = vmatpush1.msra.mxu0 %v3820
    %4562 = vmatprep.subr.mxu0 %v3827
    %4563 = vmatpush1.msra.mxu0 %v3826
    %4564 = vmatprep.subr.mxu0 %v3833
    %4565 = vmatpush1.msra.mxu0 %v3832
    %4566 = vmatprep.subr.mxu0 %v3839
    %4567 = vmatpush1.msra.mxu0 %v3838
    %4568 = vmatprep.subr.mxu0 %v3845
    %4569 = vmatpush1.msra.mxu0 %v3844
    %4570 = vmatprep.subr.mxu0 %v3851
    %4571 = vmatpush1.msra.mxu0 %v3850
    %4572 = vmatprep.subr.mxu0 %v3857
    %4573 = vmatpush1.msra.mxu0 %v3856
    %4574 = vmatprep.subr.mxu0 %v3863
    %4575 = vmatpush1.msra.mxu0 %v3862
    %4576 = vmatprep.subr.mxu0 %v3869
    %4577 = vmatpush1.msra.mxu0 %v3868
    %4578 = vmatprep.mubr.f32.mxu0 %v4440
    %4579 = vmatmul.mubr.f32.gmra.mrb[0].mxu0 %v4439
    %v4580 = vpop.f32.mrb[0].mxu0
    %v4581 = vadd.f32 %v3884, %v4580
    %v4582 = vpop.f32.mrb[0].mxu0
    %v4583 = vadd.f32 %v3888, %v4582
    %4584 = vdwg.mxu0
    %4585 = vmatprep.subr.mxu0 %v3685
    %4586 = vmatpush1.msra.mxu0 %v3684
    %4587 = vmatprep.subr.mxu0 %v3691
    %4588 = vmatpush1.msra.mxu0 %v3690
    %4589 = vmatprep.subr.mxu0 %v3697
    %4590 = vmatpush1.msra.mxu0 %v3696
    %4591 = vmatprep.subr.mxu0 %v3703
    %4592 = vmatpush1.msra.mxu0 %v3702
    %4593 = vmatprep.subr.mxu0 %v3709
    %4594 = vmatpush1.msra.mxu0 %v3708
    %4595 = vmatprep.subr.mxu0 %v3715
    %4596 = vmatpush1.msra.mxu0 %v3714
    %4597 = vmatprep.subr.mxu0 %v3721
    %4598 = vmatpush1.msra.mxu0 %v3720
    %4599 = vmatprep.subr.mxu0 %v3727
    %4600 = vmatpush1.msra.mxu0 %v3726
    %4601 = vmatprep.subr.mxu0 %v3733
    %4602 = vmatpush1.msra.mxu0 %v3732
    %4603 = vmatprep.subr.mxu0 %v3739
    %4604 = vmatpush1.msra.mxu0 %v3738
    %4605 = vmatprep.subr.mxu0 %v3745
    %4606 = vmatpush1.msra.mxu0 %v3744
    %4607 = vmatprep.subr.mxu0 %v3751
    %4608 = vmatpush1.msra.mxu0 %v3750
    %4609 = vmatprep.subr.mxu0 %v3757
    %4610 = vmatpush1.msra.mxu0 %v3756
    %4611 = vmatprep.subr.mxu0 %v3763
    %4612 = vmatpush1.msra.mxu0 %v3762
    %4613 = vmatprep.subr.mxu0 %v3769
    %4614 = vmatpush1.msra.mxu0 %v3768
    %4615 = vmatprep.subr.mxu0 %v3775
    %4616 = vmatpush1.msra.mxu0 %v3774
    %4617 = vmatprep.subr.mxu0 %v3781
    %4618 = vmatpush1.msra.mxu0 %v3780
    %4619 = vmatprep.subr.mxu0 %v3787
    %4620 = vmatpush1.msra.mxu0 %v3786
    %4621 = vmatprep.subr.mxu0 %v3793
    %4622 = vmatpush1.msra.mxu0 %v3792
    %4623 = vmatprep.subr.mxu0 %v3799
    %4624 = vmatpush1.msra.mxu0 %v3798
    %4625 = vmatprep.subr.mxu0 %v3805
    %4626 = vmatpush1.msra.mxu0 %v3804
    %4627 = vmatprep.subr.mxu0 %v3811
    %4628 = vmatpush1.msra.mxu0 %v3810
    %4629 = vmatprep.subr.mxu0 %v3817
    %4630 = vmatpush1.msra.mxu0 %v3816
    %4631 = vmatprep.subr.mxu0 %v3823
    %4632 = vmatpush1.msra.mxu0 %v3822
    %4633 = vmatprep.subr.mxu0 %v3829
    %4634 = vmatpush1.msra.mxu0 %v3828
    %4635 = vmatprep.subr.mxu0 %v3835
    %4636 = vmatpush1.msra.mxu0 %v3834
    %4637 = vmatprep.subr.mxu0 %v3841
    %4638 = vmatpush1.msra.mxu0 %v3840
    %4639 = vmatprep.subr.mxu0 %v3847
    %4640 = vmatpush1.msra.mxu0 %v3846
    %4641 = vmatprep.subr.mxu0 %v3853
    %4642 = vmatpush1.msra.mxu0 %v3852
    %4643 = vmatprep.subr.mxu0 %v3859
    %4644 = vmatpush1.msra.mxu0 %v3858
    %4645 = vmatprep.subr.mxu0 %v3865
    %4646 = vmatpush1.msra.mxu0 %v3864
    %4647 = vmatprep.subr.mxu0 %v3871
    %4648 = vmatpush1.msra.mxu0 %v3870
    %4649 = vmatprep.mubr.f32.mxu0 %v4440
    %4650 = vmatmul.mubr.f32.gmra.mrb[0].mxu0 %v4439
    %v4651 = vpop.f32.mrb[0].mxu0
    %v4652 = vadd.f32 %v3892, %v4651
    %v4653 = vpop.f32.mrb[0].mxu0
    %v4654 = vadd.f32 %v3896, %v4653
    %4655 = vdwg.mxu0
    %v4658 = vrot.slane %v4510, 6
    %v4659 = vrot.slane %v4512, 6
    %v4662 = vadd.f32 %v3674, %v4658
    %v4663 = vadd.f32 %v3675, %v4659
    %v4664 = vxor.u32 %v4662, 2147483648
    %v4665 = vxor.u32 %v4663, 2147483648
    %v4666 = vmul.f32 %v4664, 1.442695
    %v4667 = vpow.pop %v4666
    %v4668 = vmul.f32 %v4665, 1.442695
    %v4669 = vpow.pop %v4668
    %v4670 = vadd.f32 %v4667, 1.0
    %v4671 = vadd.f32 %v4669, 1.0
    %v4672 = vrcp.pop %v4670
    %v4673 = vmul.f32 1.0, %v4672
    %v4674 = vrcp.pop %v4671
    %v4675 = vmul.f32 1.0, %v4674
    %v4678 = vrot.slane %v4581, 6
    %v4679 = vrot.slane %v4583, 6
    %v4682 = vadd.f32 %v3676, %v4678
    %v4683 = vadd.f32 %v3677, %v4679
    %v4684 = vxor.u32 %v4682, 2147483648
    %v4685 = vxor.u32 %v4683, 2147483648
    %v4686 = vmul.f32 %v4684, 1.442695
    %v4687 = vpow.pop %v4686
    %v4688 = vmul.f32 %v4685, 1.442695
    %v4689 = vpow.pop %v4688
    %v4690 = vadd.f32 %v4687, 1.0
    %v4691 = vadd.f32 %v4689, 1.0
    %v4692 = vrcp.pop %v4690
    %v4693 = vmul.f32 1.0, %v4692
    %v4694 = vrcp.pop %v4691
    %v4695 = vmul.f32 1.0, %v4694
    %v4698 = vrot.slane %v4652, 6
    %v4699 = vrot.slane %v4654, 6
    %v4702 = vmul.f32 %v4673, %v4698
    %v4703 = vmul.f32 %v4675, %v4699
    %v4704 = vadd.f32 %v3678, %v4702
    %v4705 = vadd.f32 %v3679, %v4703
    %v4706 = vtanh.pop %v4704
    %v4707 = vtanh.pop %v4705
    %v4708 = vsub.f32 1.0, %v4693
    %v4709 = vsub.f32 1.0, %v4695
    %v4710 = vmul.f32 %v4708, %v4706
    %v4711 = vmul.f32 %v4709, %v4707
    %v4712 = vrot.slane %v4435, 7
    %v4713 = vrot.slane %v4436, 7
    %v4716 = vmul.f32 %v4693, %v4712
    %v4717 = vmul.f32 %v4695, %v4713
    %v4718 = vadd.f32 %v4710, %v4716
    %v4719 = vadd.f32 %v4711, %v4717
    %v4722 = vrot.slane %v4718, 2
    %v4723 = vrot.slane %v4719, 2
    %4726 = vmatprep.subr.mxu0 %v3681
    %4727 = vmatpush1.msra.mxu0 %v3680
    %4728 = vmatprep.subr.mxu0 %v3687
    %4729 = vmatpush1.msra.mxu0 %v3686
    %4730 = vmatprep.subr.mxu0 %v3693
    %4731 = vmatpush1.msra.mxu0 %v3692
    %4732 = vmatprep.subr.mxu0 %v3699
    %4733 = vmatpush1.msra.mxu0 %v3698
    %4734 = vmatprep.subr.mxu0 %v3705
    %4735 = vmatpush1.msra.mxu0 %v3704
    %4736 = vmatprep.subr.mxu0 %v3711
    %4737 = vmatpush1.msra.mxu0 %v3710
    %4738 = vmatprep.subr.mxu0 %v3717
    %4739 = vmatpush1.msra.mxu0 %v3716
    %4740 = vmatprep.subr.mxu0 %v3723
    %4741 = vmatpush1.msra.mxu0 %v3722
    %4742 = vmatprep.subr.mxu0 %v3729
    %4743 = vmatpush1.msra.mxu0 %v3728
    %4744 = vmatprep.subr.mxu0 %v3735
    %4745 = vmatpush1.msra.mxu0 %v3734
    %4746 = vmatprep.subr.mxu0 %v3741
    %4747 = vmatpush1.msra.mxu0 %v3740
    %4748 = vmatprep.subr.mxu0 %v3747
    %4749 = vmatpush1.msra.mxu0 %v3746
    %4750 = vmatprep.subr.mxu0 %v3753
    %4751 = vmatpush1.msra.mxu0 %v3752
    %4752 = vmatprep.subr.mxu0 %v3759
    %4753 = vmatpush1.msra.mxu0 %v3758
    %4754 = vmatprep.subr.mxu0 %v3765
    %4755 = vmatpush1.msra.mxu0 %v3764
    %4756 = vmatprep.subr.mxu0 %v3771
    %4757 = vmatpush1.msra.mxu0 %v3770
    %4758 = vmatprep.subr.mxu0 %v3777
    %4759 = vmatpush1.msra.mxu0 %v3776
    %4760 = vmatprep.subr.mxu0 %v3783
    %4761 = vmatpush1.msra.mxu0 %v3782
    %4762 = vmatprep.subr.mxu0 %v3789
    %4763 = vmatpush1.msra.mxu0 %v3788
    %4764 = vmatprep.subr.mxu0 %v3795
    %4765 = vmatpush1.msra.mxu0 %v3794
    %4766 = vmatprep.subr.mxu0 %v3801
    %4767 = vmatpush1.msra.mxu0 %v3800
    %4768 = vmatprep.subr.mxu0 %v3807
    %4769 = vmatpush1.msra.mxu0 %v3806
    %4770 = vmatprep.subr.mxu0 %v3813
    %4771 = vmatpush1.msra.mxu0 %v3812
    %4772 = vmatprep.subr.mxu0 %v3819
    %4773 = vmatpush1.msra.mxu0 %v3818
    %4774 = vmatprep.subr.mxu0 %v3825
    %4775 = vmatpush1.msra.mxu0 %v3824
    %4776 = vmatprep.subr.mxu0 %v3831
    %4777 = vmatpush1.msra.mxu0 %v3830
    %4778 = vmatprep.subr.mxu0 %v3837
    %4779 = vmatpush1.msra.mxu0 %v3836
    %4780 = vmatprep.subr.mxu0 %v3843
    %4781 = vmatpush1.msra.mxu0 %v3842
    %4782 = vmatprep.subr.mxu0 %v3849
    %4783 = vmatpush1.msra.mxu0 %v3848
    %4784 = vmatprep.subr.mxu0 %v3855
    %4785 = vmatpush1.msra.mxu0 %v3854
    %4786 = vmatprep.subr.mxu0 %v3861
    %4787 = vmatpush1.msra.mxu0 %v3860
    %4788 = vmatprep.subr.mxu0 %v3867
    %4789 = vmatpush1.msra.mxu0 %v3866
    %4790 = vmatprep.mubr.f32.mxu0 %v4723
    %4791 = vmatmul.mubr.f32.gmra.mrb[0].mxu0 %v4722
    %v4792 = vpop.f32.mrb[0].mxu0
    %v4793 = vadd.f32 %v3876, %v4792
    %v4794 = vpop.f32.mrb[0].mxu0
    %v4795 = vadd.f32 %v3880, %v4794
    %4796 = vdwg.mxu0
    %4797 = vmatprep.subr.mxu0 %v3683
    %4798 = vmatpush1.msra.mxu0 %v3682
    %4799 = vmatprep.subr.mxu0 %v3689
    %4800 = vmatpush1.msra.mxu0 %v3688
    %4801 = vmatprep.subr.mxu0 %v3695
    %4802 = vmatpush1.msra.mxu0 %v3694
    %4803 = vmatprep.subr.mxu0 %v3701
    %4804 = vmatpush1.msra.mxu0 %v3700
    %4805 = vmatprep.subr.mxu0 %v3707
    %4806 = vmatpush1.msra.mxu0 %v3706
    %4807 = vmatprep.subr.mxu0 %v3713
    %4808 = vmatpush1.msra.mxu0 %v3712
    %4809 = vmatprep.subr.mxu0 %v3719
    %4810 = vmatpush1.msra.mxu0 %v3718
    %4811 = vmatprep.subr.mxu0 %v3725
    %4812 = vmatpush1.msra.mxu0 %v3724
    %4813 = vmatprep.subr.mxu0 %v3731
    %4814 = vmatpush1.msra.mxu0 %v3730
    %4815 = vmatprep.subr.mxu0 %v3737
    %4816 = vmatpush1.msra.mxu0 %v3736
    %4817 = vmatprep.subr.mxu0 %v3743
    %4818 = vmatpush1.msra.mxu0 %v3742
    %4819 = vmatprep.subr.mxu0 %v3749
    %4820 = vmatpush1.msra.mxu0 %v3748
    %4821 = vmatprep.subr.mxu0 %v3755
    %4822 = vmatpush1.msra.mxu0 %v3754
    %4823 = vmatprep.subr.mxu0 %v3761
    %4824 = vmatpush1.msra.mxu0 %v3760
    %4825 = vmatprep.subr.mxu0 %v3767
    %4826 = vmatpush1.msra.mxu0 %v3766
    %4827 = vmatprep.subr.mxu0 %v3773
    %4828 = vmatpush1.msra.mxu0 %v3772
    %4829 = vmatprep.subr.mxu0 %v3779
    %4830 = vmatpush1.msra.mxu0 %v3778
    %4831 = vmatprep.subr.mxu0 %v3785
    %4832 = vmatpush1.msra.mxu0 %v3784
    %4833 = vmatprep.subr.mxu0 %v3791
    %4834 = vmatpush1.msra.mxu0 %v3790
    %4835 = vmatprep.subr.mxu0 %v3797
    %4836 = vmatpush1.msra.mxu0 %v3796
    %4837 = vmatprep.subr.mxu0 %v3803
    %4838 = vmatpush1.msra.mxu0 %v3802
    %4839 = vmatprep.subr.mxu0 %v3809
    %4840 = vmatpush1.msra.mxu0 %v3808
    %4841 = vmatprep.subr.mxu0 %v3815
    %4842 = vmatpush1.msra.mxu0 %v3814
    %4843 = vmatprep.subr.mxu0 %v3821
    %4844 = vmatpush1.msra.mxu0 %v3820
    %4845 = vmatprep.subr.mxu0 %v3827
    %4846 = vmatpush1.msra.mxu0 %v3826
    %4847 = vmatprep.subr.mxu0 %v3833
    %4848 = vmatpush1.msra.mxu0 %v3832
    %4849 = vmatprep.subr.mxu0 %v3839
    %4850 = vmatpush1.msra.mxu0 %v3838
    %4851 = vmatprep.subr.mxu0 %v3845
    %4852 = vmatpush1.msra.mxu0 %v3844
    %4853 = vmatprep.subr.mxu0 %v3851
    %4854 = vmatpush1.msra.mxu0 %v3850
    %4855 = vmatprep.subr.mxu0 %v3857
    %4856 = vmatpush1.msra.mxu0 %v3856
    %4857 = vmatprep.subr.mxu0 %v3863
    %4858 = vmatpush1.msra.mxu0 %v3862
    %4859 = vmatprep.subr.mxu0 %v3869
    %4860 = vmatpush1.msra.mxu0 %v3868
    %4861 = vmatprep.mubr.f32.mxu0 %v4723
    %4862 = vmatmul.mubr.f32.gmra.mrb[0].mxu0 %v4722
    %v4863 = vpop.f32.mrb[0].mxu0
    %v4864 = vadd.f32 %v3884, %v4863
    %v4865 = vpop.f32.mrb[0].mxu0
    %v4866 = vadd.f32 %v3888, %v4865
    %4867 = vdwg.mxu0
    %4868 = vmatprep.subr.mxu0 %v3685
    %4869 = vmatpush1.msra.mxu0 %v3684
    %4870 = vmatprep.subr.mxu0 %v3691
    %4871 = vmatpush1.msra.mxu0 %v3690
    %4872 = vmatprep.subr.mxu0 %v3697
    %4873 = vmatpush1.msra.mxu0 %v3696
    %4874 = vmatprep.subr.mxu0 %v3703
    %4875 = vmatpush1.msra.mxu0 %v3702
    %4876 = vmatprep.subr.mxu0 %v3709
    %4877 = vmatpush1.msra.mxu0 %v3708
    %4878 = vmatprep.subr.mxu0 %v3715
    %4879 = vmatpush1.msra.mxu0 %v3714
    %4880 = vmatprep.subr.mxu0 %v3721
    %4881 = vmatpush1.msra.mxu0 %v3720
    %4882 = vmatprep.subr.mxu0 %v3727
    %4883 = vmatpush1.msra.mxu0 %v3726
    %4884 = vmatprep.subr.mxu0 %v3733
    %4885 = vmatpush1.msra.mxu0 %v3732
    %4886 = vmatprep.subr.mxu0 %v3739
    %4887 = vmatpush1.msra.mxu0 %v3738
    %4888 = vmatprep.subr.mxu0 %v3745
    %4889 = vmatpush1.msra.mxu0 %v3744
    %4890 = vmatprep.subr.mxu0 %v3751
    %4891 = vmatpush1.msra.mxu0 %v3750
    %4892 = vmatprep.subr.mxu0 %v3757
    %4893 = vmatpush1.msra.mxu0 %v3756
    %4894 = vmatprep.subr.mxu0 %v3763
    %4895 = vmatpush1.msra.mxu0 %v3762
    %4896 = vmatprep.subr.mxu0 %v3769
    %4897 = vmatpush1.msra.mxu0 %v3768
    %4898 = vmatprep.subr.mxu0 %v3775
    %4899 = vmatpush1.msra.mxu0 %v3774
    %4900 = vmatprep.subr.mxu0 %v3781
    %4901 = vmatpush1.msra.mxu0 %v3780
    %4902 = vmatprep.subr.mxu0 %v3787
    %4903 = vmatpush1.msra.mxu0 %v3786
    %4904 = vmatprep.subr.mxu0 %v3793
    %4905 = vmatpush1.msra.mxu0 %v3792
    %4906 = vmatprep.subr.mxu0 %v3799
    %4907 = vmatpush1.msra.mxu0 %v3798
    %4908 = vmatprep.subr.mxu0 %v3805
    %4909 = vmatpush1.msra.mxu0 %v3804
    %4910 = vmatprep.subr.mxu0 %v3811
    %4911 = vmatpush1.msra.mxu0 %v3810
    %4912 = vmatprep.subr.mxu0 %v3817
    %4913 = vmatpush1.msra.mxu0 %v3816
    %4914 = vmatprep.subr.mxu0 %v3823
    %4915 = vmatpush1.msra.mxu0 %v3822
    %4916 = vmatprep.subr.mxu0 %v3829
    %4917 = vmatpush1.msra.mxu0 %v3828
    %4918 = vmatprep.subr.mxu0 %v3835
    %4919 = vmatpush1.msra.mxu0 %v3834
    %4920 = vmatprep.subr.mxu0 %v3841
    %4921 = vmatpush1.msra.mxu0 %v3840
    %4922 = vmatprep.subr.mxu0 %v3847
    %4923 = vmatpush1.msra.mxu0 %v3846
    %4924 = vmatprep.subr.mxu0 %v3853
    %4925 = vmatpush1.msra.mxu0 %v3852
    %4926 = vmatprep.subr.mxu0 %v3859
    %4927 = vmatpush1.msra.mxu0 %v3858
    %4928 = vmatprep.subr.mxu0 %v3865
    %4929 = vmatpush1.msra.mxu0 %v3864
    %4930 = vmatprep.subr.mxu0 %v3871
    %4931 = vmatpush1.msra.mxu0 %v3870
    %4932 = vmatprep.mubr.f32.mxu0 %v4723
    %4933 = vmatmul.mubr.f32.gmra.mrb[0].mxu0 %v4722
    %v4934 = vpop.f32.mrb[0].mxu0
    %v4935 = vadd.f32 %v3892, %v4934
    %v4936 = vpop.f32.mrb[0].mxu0
    %v4937 = vadd.f32 %v3896, %v4936
    %4938 = vdwg.mxu0
    %v4941 = vrot.slane %v4793, 5
    %v4942 = vrot.slane %v4795, 5
    %v4945 = vadd.f32 %v3674, %v4941
    %v4946 = vadd.f32 %v3675, %v4942
    %v4947 = vxor.u32 %v4945, 2147483648
    %v4948 = vxor.u32 %v4946, 2147483648
    %v4949 = vmul.f32 %v4947, 1.442695
    %v4950 = vpow.pop %v4949
    %v4951 = vmul.f32 %v4948, 1.442695
    %v4952 = vpow.pop %v4951
    %v4953 = vadd.f32 %v4950, 1.0
    %v4954 = vadd.f32 %v4952, 1.0
    %v4955 = vrcp.pop %v4953
    %v4956 = vmul.f32 1.0, %v4955
    %v4957 = vrcp.pop %v4954
    %v4958 = vmul.f32 1.0, %v4957
    %v4961 = vrot.slane %v4864, 5
    %v4962 = vrot.slane %v4866, 5
    %v4965 = vadd.f32 %v3676, %v4961
    %v4966 = vadd.f32 %v3677, %v4962
    %v4967 = vxor.u32 %v4965, 2147483648
    %v4968 = vxor.u32 %v4966, 2147483648
    %v4969 = vmul.f32 %v4967, 1.442695
    %v4970 = vpow.pop %v4969
    %v4971 = vmul.f32 %v4968, 1.442695
    %v4972 = vpow.pop %v4971
    %v4973 = vadd.f32 %v4970, 1.0
    %v4974 = vadd.f32 %v4972, 1.0
    %v4975 = vrcp.pop %v4973
    %v4976 = vmul.f32 1.0, %v4975
    %v4977 = vrcp.pop %v4974
    %v4978 = vmul.f32 1.0, %v4977
    %v4981 = vrot.slane %v4935, 5
    %v4982 = vrot.slane %v4937, 5
    %v4985 = vmul.f32 %v4956, %v4981
    %v4986 = vmul.f32 %v4958, %v4982
    %v4987 = vadd.f32 %v3678, %v4985
    %v4988 = vadd.f32 %v3679, %v4986
    %v4989 = vtanh.pop %v4987
    %v4990 = vtanh.pop %v4988
    %v4991 = vsub.f32 1.0, %v4976
    %v4992 = vsub.f32 1.0, %v4978
    %v4993 = vmul.f32 %v4991, %v4989
    %v4994 = vmul.f32 %v4992, %v4990
    %v4995 = vrot.slane %v4718, 7
    %v4996 = vrot.slane %v4719, 7
    %v4999 = vmul.f32 %v4976, %v4995
    %v5000 = vmul.f32 %v4978, %v4996
    %v5001 = vadd.f32 %v4993, %v4999
    %v5002 = vadd.f32 %v4994, %v5000
    %v5005 = vrot.slane %v5001, 3
    %v5006 = vrot.slane %v5002, 3
    %5009 = vmatprep.subr.mxu0 %v3681
    %5010 = vmatpush1.msra.mxu0 %v3680
    %5011 = vmatprep.subr.mxu0 %v3687
    %5012 = vmatpush1.msra.mxu0 %v3686
    %5013 = vmatprep.subr.mxu0 %v3693
    %5014 = vmatpush1.msra.mxu0 %v3692
    %5015 = vmatprep.subr.mxu0 %v3699
    %5016 = vmatpush1.msra.mxu0 %v3698
    %5017 = vmatprep.subr.mxu0 %v3705
    %5018 = vmatpush1.msra.mxu0 %v3704
    %5019 = vmatprep.subr.mxu0 %v3711
    %5020 = vmatpush1.msra.mxu0 %v3710
    %5021 = vmatprep.subr.mxu0 %v3717
    %5022 = vmatpush1.msra.mxu0 %v3716
    %5023 = vmatprep.subr.mxu0 %v3723
    %5024 = vmatpush1.msra.mxu0 %v3722
    %5025 = vmatprep.subr.mxu0 %v3729
    %5026 = vmatpush1.msra.mxu0 %v3728
    %5027 = vmatprep.subr.mxu0 %v3735
    %5028 = vmatpush1.msra.mxu0 %v3734
    %5029 = vmatprep.subr.mxu0 %v3741
    %5030 = vmatpush1.msra.mxu0 %v3740
    %5031 = vmatprep.subr.mxu0 %v3747
    %5032 = vmatpush1.msra.mxu0 %v3746
    %5033 = vmatprep.subr.mxu0 %v3753
    %5034 = vmatpush1.msra.mxu0 %v3752
    %5035 = vmatprep.subr.mxu0 %v3759
    %5036 = vmatpush1.msra.mxu0 %v3758
    %5037 = vmatprep.subr.mxu0 %v3765
    %5038 = vmatpush1.msra.mxu0 %v3764
    %5039 = vmatprep.subr.mxu0 %v3771
    %5040 = vmatpush1.msra.mxu0 %v3770
    %5041 = vmatprep.subr.mxu0 %v3777
    %5042 = vmatpush1.msra.mxu0 %v3776
    %5043 = vmatprep.subr.mxu0 %v3783
    %5044 = vmatpush1.msra.mxu0 %v3782
    %5045 = vmatprep.subr.mxu0 %v3789
    %5046 = vmatpush1.msra.mxu0 %v3788
    %5047 = vmatprep.subr.mxu0 %v3795
    %5048 = vmatpush1.msra.mxu0 %v3794
    %5049 = vmatprep.subr.mxu0 %v3801
    %5050 = vmatpush1.msra.mxu0 %v3800
    %5051 = vmatprep.subr.mxu0 %v3807
    %5052 = vmatpush1.msra.mxu0 %v3806
    %5053 = vmatprep.subr.mxu0 %v3813
    %5054 = vmatpush1.msra.mxu0 %v3812
    %5055 = vmatprep.subr.mxu0 %v3819
    %5056 = vmatpush1.msra.mxu0 %v3818
    %5057 = vmatprep.subr.mxu0 %v3825
    %5058 = vmatpush1.msra.mxu0 %v3824
    %5059 = vmatprep.subr.mxu0 %v3831
    %5060 = vmatpush1.msra.mxu0 %v3830
    %5061 = vmatprep.subr.mxu0 %v3837
    %5062 = vmatpush1.msra.mxu0 %v3836
    %5063 = vmatprep.subr.mxu0 %v3843
    %5064 = vmatpush1.msra.mxu0 %v3842
    %5065 = vmatprep.subr.mxu0 %v3849
    %5066 = vmatpush1.msra.mxu0 %v3848
    %5067 = vmatprep.subr.mxu0 %v3855
    %5068 = vmatpush1.msra.mxu0 %v3854
    %5069 = vmatprep.subr.mxu0 %v3861
    %5070 = vmatpush1.msra.mxu0 %v3860
    %5071 = vmatprep.subr.mxu0 %v3867
    %5072 = vmatpush1.msra.mxu0 %v3866
    %5073 = vmatprep.mubr.f32.mxu0 %v5006
    %5074 = vmatmul.mubr.f32.gmra.mrb[0].mxu0 %v5005
    %v5075 = vpop.f32.mrb[0].mxu0
    %v5076 = vadd.f32 %v3876, %v5075
    %v5077 = vpop.f32.mrb[0].mxu0
    %v5078 = vadd.f32 %v3880, %v5077
    %5079 = vdwg.mxu0
    %5080 = vmatprep.subr.mxu0 %v3683
    %5081 = vmatpush1.msra.mxu0 %v3682
    %5082 = vmatprep.subr.mxu0 %v3689
    %5083 = vmatpush1.msra.mxu0 %v3688
    %5084 = vmatprep.subr.mxu0 %v3695
    %5085 = vmatpush1.msra.mxu0 %v3694
    %5086 = vmatprep.subr.mxu0 %v3701
    %5087 = vmatpush1.msra.mxu0 %v3700
    %5088 = vmatprep.subr.mxu0 %v3707
    %5089 = vmatpush1.msra.mxu0 %v3706
    %5090 = vmatprep.subr.mxu0 %v3713
    %5091 = vmatpush1.msra.mxu0 %v3712
    %5092 = vmatprep.subr.mxu0 %v3719
    %5093 = vmatpush1.msra.mxu0 %v3718
    %5094 = vmatprep.subr.mxu0 %v3725
    %5095 = vmatpush1.msra.mxu0 %v3724
    %5096 = vmatprep.subr.mxu0 %v3731
    %5097 = vmatpush1.msra.mxu0 %v3730
    %5098 = vmatprep.subr.mxu0 %v3737
    %5099 = vmatpush1.msra.mxu0 %v3736
    %5100 = vmatprep.subr.mxu0 %v3743
    %5101 = vmatpush1.msra.mxu0 %v3742
    %5102 = vmatprep.subr.mxu0 %v3749
    %5103 = vmatpush1.msra.mxu0 %v3748
    %5104 = vmatprep.subr.mxu0 %v3755
    %5105 = vmatpush1.msra.mxu0 %v3754
    %5106 = vmatprep.subr.mxu0 %v3761
    %5107 = vmatpush1.msra.mxu0 %v3760
    %5108 = vmatprep.subr.mxu0 %v3767
    %5109 = vmatpush1.msra.mxu0 %v3766
    %5110 = vmatprep.subr.mxu0 %v3773
    %5111 = vmatpush1.msra.mxu0 %v3772
    %5112 = vmatprep.subr.mxu0 %v3779
    %5113 = vmatpush1.msra.mxu0 %v3778
    %5114 = vmatprep.subr.mxu0 %v3785
    %5115 = vmatpush1.msra.mxu0 %v3784
    %5116 = vmatprep.subr.mxu0 %v3791
    %5117 = vmatpush1.msra.mxu0 %v3790
    %5118 = vmatprep.subr.mxu0 %v3797
    %5119 = vmatpush1.msra.mxu0 %v3796
    %5120 = vmatprep.subr.mxu0 %v3803
    %5121 = vmatpush1.msra.mxu0 %v3802
    %5122 = vmatprep.subr.mxu0 %v3809
    %5123 = vmatpush1.msra.mxu0 %v3808
    %5124 = vmatprep.subr.mxu0 %v3815
    %5125 = vmatpush1.msra.mxu0 %v3814
    %5126 = vmatprep.subr.mxu0 %v3821
    %5127 = vmatpush1.msra.mxu0 %v3820
    %5128 = vmatprep.subr.mxu0 %v3827
    %5129 = vmatpush1.msra.mxu0 %v3826
    %5130 = vmatprep.subr.mxu0 %v3833
    %5131 = vmatpush1.msra.mxu0 %v3832
    %5132 = vmatprep.subr.mxu0 %v3839
    %5133 = vmatpush1.msra.mxu0 %v3838
    %5134 = vmatprep.subr.mxu0 %v3845
    %5135 = vmatpush1.msra.mxu0 %v3844
    %5136 = vmatprep.subr.mxu0 %v3851
    %5137 = vmatpush1.msra.mxu0 %v3850
    %5138 = vmatprep.subr.mxu0 %v3857
    %5139 = vmatpush1.msra.mxu0 %v3856
    %5140 = vmatprep.subr.mxu0 %v3863
    %5141 = vmatpush1.msra.mxu0 %v3862
    %5142 = vmatprep.subr.mxu0 %v3869
    %5143 = vmatpush1.msra.mxu0 %v3868
    %5144 = vmatprep.mubr.f32.mxu0 %v5006
    %5145 = vmatmul.mubr.f32.gmra.mrb[0].mxu0 %v5005
    %v5146 = vpop.f32.mrb[0].mxu0
    %v5147 = vadd.f32 %v3884, %v5146
    %v5148 = vpop.f32.mrb[0].mxu0
    %v5149 = vadd.f32 %v3888, %v5148
    %5150 = vdwg.mxu0
    %5151 = vmatprep.subr.mxu0 %v3685
    %5152 = vmatpush1.msra.mxu0 %v3684
    %5153 = vmatprep.subr.mxu0 %v3691
    %5154 = vmatpush1.msra.mxu0 %v3690
    %5155 = vmatprep.subr.mxu0 %v3697
    %5156 = vmatpush1.msra.mxu0 %v3696
    %5157 = vmatprep.subr.mxu0 %v3703
    %5158 = vmatpush1.msra.mxu0 %v3702
    %5159 = vmatprep.subr.mxu0 %v3709
    %5160 = vmatpush1.msra.mxu0 %v3708
    %5161 = vmatprep.subr.mxu0 %v3715
    %5162 = vmatpush1.msra.mxu0 %v3714
    %5163 = vmatprep.subr.mxu0 %v3721
    %5164 = vmatpush1.msra.mxu0 %v3720
    %5165 = vmatprep.subr.mxu0 %v3727
    %5166 = vmatpush1.msra.mxu0 %v3726
    %5167 = vmatprep.subr.mxu0 %v3733
    %5168 = vmatpush1.msra.mxu0 %v3732
    %5169 = vmatprep.subr.mxu0 %v3739
    %5170 = vmatpush1.msra.mxu0 %v3738
    %5171 = vmatprep.subr.mxu0 %v3745
    %5172 = vmatpush1.msra.mxu0 %v3744
    %5173 = vmatprep.subr.mxu0 %v3751
    %5174 = vmatpush1.msra.mxu0 %v3750
    %5175 = vmatprep.subr.mxu0 %v3757
    %5176 = vmatpush1.msra.mxu0 %v3756
    %5177 = vmatprep.subr.mxu0 %v3763
    %5178 = vmatpush1.msra.mxu0 %v3762
    %5179 = vmatprep.subr.mxu0 %v3769
    %5180 = vmatpush1.msra.mxu0 %v3768
    %5181 = vmatprep.subr.mxu0 %v3775
    %5182 = vmatpush1.msra.mxu0 %v3774
    %5183 = vmatprep.subr.mxu0 %v3781
    %5184 = vmatpush1.msra.mxu0 %v3780
    %5185 = vmatprep.subr.mxu0 %v3787
    %5186 = vmatpush1.msra.mxu0 %v3786
    %5187 = vmatprep.subr.mxu0 %v3793
    %5188 = vmatpush1.msra.mxu0 %v3792
    %5189 = vmatprep.subr.mxu0 %v3799
    %5190 = vmatpush1.msra.mxu0 %v3798
    %5191 = vmatprep.subr.mxu0 %v3805
    %5192 = vmatpush1.msra.mxu0 %v3804
    %5193 = vmatprep.subr.mxu0 %v3811
    %5194 = vmatpush1.msra.mxu0 %v3810
    %5195 = vmatprep.subr.mxu0 %v3817
    %5196 = vmatpush1.msra.mxu0 %v3816
    %5197 = vmatprep.subr.mxu0 %v3823
    %5198 = vmatpush1.msra.mxu0 %v3822
    %5199 = vmatprep.subr.mxu0 %v3829
    %5200 = vmatpush1.msra.mxu0 %v3828
    %5201 = vmatprep.subr.mxu0 %v3835
    %5202 = vmatpush1.msra.mxu0 %v3834
    %5203 = vmatprep.subr.mxu0 %v3841
    %5204 = vmatpush1.msra.mxu0 %v3840
    %5205 = vmatprep.subr.mxu0 %v3847
    %5206 = vmatpush1.msra.mxu0 %v3846
    %5207 = vmatprep.subr.mxu0 %v3853
    %5208 = vmatpush1.msra.mxu0 %v3852
    %5209 = vmatprep.subr.mxu0 %v3859
    %5210 = vmatpush1.msra.mxu0 %v3858
    %5211 = vmatprep.subr.mxu0 %v3865
    %5212 = vmatpush1.msra.mxu0 %v3864
    %5213 = vmatprep.subr.mxu0 %v3871
    %5214 = vmatpush1.msra.mxu0 %v3870
    %5215 = vmatprep.mubr.f32.mxu0 %v5006
    %5216 = vmatmul.mubr.f32.gmra.mrb[0].mxu0 %v5005
    %v5217 = vpop.f32.mrb[0].mxu0
    %v5218 = vadd.f32 %v3892, %v5217
    %v5219 = vpop.f32.mrb[0].mxu0
    %v5220 = vadd.f32 %v3896, %v5219
    %5221 = vdwg.mxu0
    %v5224 = vrot.slane %v5076, 4
    %v5225 = vrot.slane %v5078, 4
    %v5228 = vadd.f32 %v3674, %v5224
    %v5229 = vadd.f32 %v3675, %v5225
    %v5230 = vxor.u32 %v5228, 2147483648
    %v5231 = vxor.u32 %v5229, 2147483648
    %v5232 = vmul.f32 %v5230, 1.442695
    %v5233 = vpow.pop %v5232
    %v5234 = vmul.f32 %v5231, 1.442695
    %v5235 = vpow.pop %v5234
    %v5236 = vadd.f32 %v5233, 1.0
    %v5237 = vadd.f32 %v5235, 1.0
    %v5238 = vrcp.pop %v5236
    %v5239 = vmul.f32 1.0, %v5238
    %v5240 = vrcp.pop %v5237
    %v5241 = vmul.f32 1.0, %v5240
    %v5244 = vrot.slane %v5147, 4
    %v5245 = vrot.slane %v5149, 4
    %v5248 = vadd.f32 %v3676, %v5244
    %v5249 = vadd.f32 %v3677, %v5245
    %v5250 = vxor.u32 %v5248, 2147483648
    %v5251 = vxor.u32 %v5249, 2147483648
    %v5252 = vmul.f32 %v5250, 1.442695
    %v5253 = vpow.pop %v5252
    %v5254 = vmul.f32 %v5251, 1.442695
    %v5255 = vpow.pop %v5254
    %v5256 = vadd.f32 %v5253, 1.0
    %v5257 = vadd.f32 %v5255, 1.0
    %v5258 = vrcp.pop %v5256
    %v5259 = vmul.f32 1.0, %v5258
    %v5260 = vrcp.pop %v5257
    %v5261 = vmul.f32 1.0, %v5260
    %v5264 = vrot.slane %v5218, 4
    %v5265 = vrot.slane %v5220, 4
    %v5268 = vmul.f32 %v5239, %v5264
    %v5269 = vmul.f32 %v5241, %v5265
    %v5270 = vadd.f32 %v3678, %v5268
    %v5271 = vadd.f32 %v3679, %v5269
    %v5272 = vtanh.pop %v5270
    %v5273 = vtanh.pop %v5271
    %v5274 = vsub.f32 1.0, %v5259
    %v5275 = vsub.f32 1.0, %v5261
    %v5276 = vmul.f32 %v5274, %v5272
    %v5277 = vmul.f32 %v5275, %v5273
    %v5278 = vrot.slane %v5001, 7
    %v5279 = vrot.slane %v5002, 7
    %v5282 = vmul.f32 %v5259, %v5278
    %v5283 = vmul.f32 %v5261, %v5279
    %v5284 = vadd.f32 %v5276, %v5282
    %v5285 = vadd.f32 %v5277, %v5283
    %v5288 = vrot.slane %v5284, 4
    %v5289 = vrot.slane %v5285, 4
    %5292 = vmatprep.subr.mxu0 %v3681
    %5293 = vmatpush1.msra.mxu0 %v3680
    %5294 = vmatprep.subr.mxu0 %v3687
    %5295 = vmatpush1.msra.mxu0 %v3686
    %5296 = vmatprep.subr.mxu0 %v3693
    %5297 = vmatpush1.msra.mxu0 %v3692
    %5298 = vmatprep.subr.mxu0 %v3699
    %5299 = vmatpush1.msra.mxu0 %v3698
    %5300 = vmatprep.subr.mxu0 %v3705
    %5301 = vmatpush1.msra.mxu0 %v3704
    %5302 = vmatprep.subr.mxu0 %v3711
    %5303 = vmatpush1.msra.mxu0 %v3710
    %5304 = vmatprep.subr.mxu0 %v3717
    %5305 = vmatpush1.msra.mxu0 %v3716
    %5306 = vmatprep.subr.mxu0 %v3723
    %5307 = vmatpush1.msra.mxu0 %v3722
    %5308 = vmatprep.subr.mxu0 %v3729
    %5309 = vmatpush1.msra.mxu0 %v3728
    %5310 = vmatprep.subr.mxu0 %v3735
    %5311 = vmatpush1.msra.mxu0 %v3734
    %5312 = vmatprep.subr.mxu0 %v3741
    %5313 = vmatpush1.msra.mxu0 %v3740
    %5314 = vmatprep.subr.mxu0 %v3747
    %5315 = vmatpush1.msra.mxu0 %v3746
    %5316 = vmatprep.subr.mxu0 %v3753
    %5317 = vmatpush1.msra.mxu0 %v3752
    %5318 = vmatprep.subr.mxu0 %v3759
    %5319 = vmatpush1.msra.mxu0 %v3758
    %5320 = vmatprep.subr.mxu0 %v3765
    %5321 = vmatpush1.msra.mxu0 %v3764
    %5322 = vmatprep.subr.mxu0 %v3771
    %5323 = vmatpush1.msra.mxu0 %v3770
    %5324 = vmatprep.subr.mxu0 %v3777
    %5325 = vmatpush1.msra.mxu0 %v3776
    %5326 = vmatprep.subr.mxu0 %v3783
    %5327 = vmatpush1.msra.mxu0 %v3782
    %5328 = vmatprep.subr.mxu0 %v3789
    %5329 = vmatpush1.msra.mxu0 %v3788
    %5330 = vmatprep.subr.mxu0 %v3795
    %5331 = vmatpush1.msra.mxu0 %v3794
    %5332 = vmatprep.subr.mxu0 %v3801
    %5333 = vmatpush1.msra.mxu0 %v3800
    %5334 = vmatprep.subr.mxu0 %v3807
    %5335 = vmatpush1.msra.mxu0 %v3806
    %5336 = vmatprep.subr.mxu0 %v3813
    %5337 = vmatpush1.msra.mxu0 %v3812
    %5338 = vmatprep.subr.mxu0 %v3819
    %5339 = vmatpush1.msra.mxu0 %v3818
    %5340 = vmatprep.subr.mxu0 %v3825
    %5341 = vmatpush1.msra.mxu0 %v3824
    %5342 = vmatprep.subr.mxu0 %v3831
    %5343 = vmatpush1.msra.mxu0 %v3830
    %5344 = vmatprep.subr.mxu0 %v3837
    %5345 = vmatpush1.msra.mxu0 %v3836
    %5346 = vmatprep.subr.mxu0 %v3843
    %5347 = vmatpush1.msra.mxu0 %v3842
    %5348 = vmatprep.subr.mxu0 %v3849
    %5349 = vmatpush1.msra.mxu0 %v3848
    %5350 = vmatprep.subr.mxu0 %v3855
    %5351 = vmatpush1.msra.mxu0 %v3854
    %5352 = vmatprep.subr.mxu0 %v3861
    %5353 = vmatpush1.msra.mxu0 %v3860
    %5354 = vmatprep.subr.mxu0 %v3867
    %5355 = vmatpush1.msra.mxu0 %v3866
    %5356 = vmatprep.mubr.f32.mxu0 %v5289
    %5357 = vmatmul.mubr.f32.gmra.mrb[0].mxu0 %v5288
    %v5358 = vpop.f32.mrb[0].mxu0
    %v5359 = vadd.f32 %v3876, %v5358
    %v5360 = vpop.f32.mrb[0].mxu0
    %v5361 = vadd.f32 %v3880, %v5360
    %5362 = vdwg.mxu0
    %5363 = vmatprep.subr.mxu0 %v3683
    %5364 = vmatpush1.msra.mxu0 %v3682
    %5365 = vmatprep.subr.mxu0 %v3689
    %5366 = vmatpush1.msra.mxu0 %v3688
    %5367 = vmatprep.subr.mxu0 %v3695
    %5368 = vmatpush1.msra.mxu0 %v3694
    %5369 = vmatprep.subr.mxu0 %v3701
    %5370 = vmatpush1.msra.mxu0 %v3700
    %5371 = vmatprep.subr.mxu0 %v3707
    %5372 = vmatpush1.msra.mxu0 %v3706
    %5373 = vmatprep.subr.mxu0 %v3713
    %5374 = vmatpush1.msra.mxu0 %v3712
    %5375 = vmatprep.subr.mxu0 %v3719
    %5376 = vmatpush1.msra.mxu0 %v3718
    %5377 = vmatprep.subr.mxu0 %v3725
    %5378 = vmatpush1.msra.mxu0 %v3724
    %5379 = vmatprep.subr.mxu0 %v3731
    %5380 = vmatpush1.msra.mxu0 %v3730
    %5381 = vmatprep.subr.mxu0 %v3737
    %5382 = vmatpush1.msra.mxu0 %v3736
    %5383 = vmatprep.subr.mxu0 %v3743
    %5384 = vmatpush1.msra.mxu0 %v3742
    %5385 = vmatprep.subr.mxu0 %v3749
    %5386 = vmatpush1.msra.mxu0 %v3748
    %5387 = vmatprep.subr.mxu0 %v3755
    %5388 = vmatpush1.msra.mxu0 %v3754
    %5389 = vmatprep.subr.mxu0 %v3761
    %5390 = vmatpush1.msra.mxu0 %v3760
    %5391 = vmatprep.subr.mxu0 %v3767
    %5392 = vmatpush1.msra.mxu0 %v3766
    %5393 = vmatprep.subr.mxu0 %v3773
    %5394 = vmatpush1.msra.mxu0 %v3772
    %5395 = vmatprep.subr.mxu0 %v3779
    %5396 = vmatpush1.msra.mxu0 %v3778
    %5397 = vmatprep.subr.mxu0 %v3785
    %5398 = vmatpush1.msra.mxu0 %v3784
    %5399 = vmatprep.subr.mxu0 %v3791
    %5400 = vmatpush1.msra.mxu0 %v3790
    %5401 = vmatprep.subr.mxu0 %v3797
    %5402 = vmatpush1.msra.mxu0 %v3796
    %5403 = vmatprep.subr.mxu0 %v3803
    %5404 = vmatpush1.msra.mxu0 %v3802
    %5405 = vmatprep.subr.mxu0 %v3809
    %5406 = vmatpush1.msra.mxu0 %v3808
    %5407 = vmatprep.subr.mxu0 %v3815
    %5408 = vmatpush1.msra.mxu0 %v3814
    %5409 = vmatprep.subr.mxu0 %v3821
    %5410 = vmatpush1.msra.mxu0 %v3820
    %5411 = vmatprep.subr.mxu0 %v3827
    %5412 = vmatpush1.msra.mxu0 %v3826
    %5413 = vmatprep.subr.mxu0 %v3833
    %5414 = vmatpush1.msra.mxu0 %v3832
    %5415 = vmatprep.subr.mxu0 %v3839
    %5416 = vmatpush1.msra.mxu0 %v3838
    %5417 = vmatprep.subr.mxu0 %v3845
    %5418 = vmatpush1.msra.mxu0 %v3844
    %5419 = vmatprep.subr.mxu0 %v3851
    %5420 = vmatpush1.msra.mxu0 %v3850
    %5421 = vmatprep.subr.mxu0 %v3857
    %5422 = vmatpush1.msra.mxu0 %v3856
    %5423 = vmatprep.subr.mxu0 %v3863
    %5424 = vmatpush1.msra.mxu0 %v3862
    %5425 = vmatprep.subr.mxu0 %v3869
    %5426 = vmatpush1.msra.mxu0 %v3868
    %5427 = vmatprep.mubr.f32.mxu0 %v5289
    %5428 = vmatmul.mubr.f32.gmra.mrb[0].mxu0 %v5288
    %v5429 = vpop.f32.mrb[0].mxu0
    %v5430 = vadd.f32 %v3884, %v5429
    %v5431 = vpop.f32.mrb[0].mxu0
    %v5432 = vadd.f32 %v3888, %v5431
    %5433 = vdwg.mxu0
    %5434 = vmatprep.subr.mxu0 %v3685
    %5435 = vmatpush1.msra.mxu0 %v3684
    %5436 = vmatprep.subr.mxu0 %v3691
    %5437 = vmatpush1.msra.mxu0 %v3690
    %5438 = vmatprep.subr.mxu0 %v3697
    %5439 = vmatpush1.msra.mxu0 %v3696
    %5440 = vmatprep.subr.mxu0 %v3703
    %5441 = vmatpush1.msra.mxu0 %v3702
    %5442 = vmatprep.subr.mxu0 %v3709
    %5443 = vmatpush1.msra.mxu0 %v3708
    %5444 = vmatprep.subr.mxu0 %v3715
    %5445 = vmatpush1.msra.mxu0 %v3714
    %5446 = vmatprep.subr.mxu0 %v3721
    %5447 = vmatpush1.msra.mxu0 %v3720
    %5448 = vmatprep.subr.mxu0 %v3727
    %5449 = vmatpush1.msra.mxu0 %v3726
    %5450 = vmatprep.subr.mxu0 %v3733
    %5451 = vmatpush1.msra.mxu0 %v3732
    %5452 = vmatprep.subr.mxu0 %v3739
    %5453 = vmatpush1.msra.mxu0 %v3738
    %5454 = vmatprep.subr.mxu0 %v3745
    %5455 = vmatpush1.msra.mxu0 %v3744
    %5456 = vmatprep.subr.mxu0 %v3751
    %5457 = vmatpush1.msra.mxu0 %v3750
    %5458 = vmatprep.subr.mxu0 %v3757
    %5459 = vmatpush1.msra.mxu0 %v3756
    %5460 = vmatprep.subr.mxu0 %v3763
    %5461 = vmatpush1.msra.mxu0 %v3762
    %5462 = vmatprep.subr.mxu0 %v3769
    %5463 = vmatpush1.msra.mxu0 %v3768
    %5464 = vmatprep.subr.mxu0 %v3775
    %5465 = vmatpush1.msra.mxu0 %v3774
    %5466 = vmatprep.subr.mxu0 %v3781
    %5467 = vmatpush1.msra.mxu0 %v3780
    %5468 = vmatprep.subr.mxu0 %v3787
    %5469 = vmatpush1.msra.mxu0 %v3786
    %5470 = vmatprep.subr.mxu0 %v3793
    %5471 = vmatpush1.msra.mxu0 %v3792
    %5472 = vmatprep.subr.mxu0 %v3799
    %5473 = vmatpush1.msra.mxu0 %v3798
    %5474 = vmatprep.subr.mxu0 %v3805
    %5475 = vmatpush1.msra.mxu0 %v3804
    %5476 = vmatprep.subr.mxu0 %v3811
    %5477 = vmatpush1.msra.mxu0 %v3810
    %5478 = vmatprep.subr.mxu0 %v3817
    %5479 = vmatpush1.msra.mxu0 %v3816
    %5480 = vmatprep.subr.mxu0 %v3823
    %5481 = vmatpush1.msra.mxu0 %v3822
    %5482 = vmatprep.subr.mxu0 %v3829
    %5483 = vmatpush1.msra.mxu0 %v3828
    %5484 = vmatprep.subr.mxu0 %v3835
    %5485 = vmatpush1.msra.mxu0 %v3834
    %5486 = vmatprep.subr.mxu0 %v3841
    %5487 = vmatpush1.msra.mxu0 %v3840
    %5488 = vmatprep.subr.mxu0 %v3847
    %5489 = vmatpush1.msra.mxu0 %v3846
    %5490 = vmatprep.subr.mxu0 %v3853
    %5491 = vmatpush1.msra.mxu0 %v3852
    %5492 = vmatprep.subr.mxu0 %v3859
    %5493 = vmatpush1.msra.mxu0 %v3858
    %5494 = vmatprep.subr.mxu0 %v3865
    %5495 = vmatpush1.msra.mxu0 %v3864
    %5496 = vmatprep.subr.mxu0 %v3871
    %5497 = vmatpush1.msra.mxu0 %v3870
    %5498 = vmatprep.mubr.f32.mxu0 %v5289
    %5499 = vmatmul.mubr.f32.gmra.mrb[0].mxu0 %v5288
    %v5500 = vpop.f32.mrb[0].mxu0
    %v5501 = vadd.f32 %v3892, %v5500
    %v5502 = vpop.f32.mrb[0].mxu0
    %v5503 = vadd.f32 %v3896, %v5502
    %5504 = vdwg.mxu0
    %v5507 = vrot.slane %v5359, 3
    %v5508 = vrot.slane %v5361, 3
    %v5511 = vadd.f32 %v3674, %v5507
    %v5512 = vadd.f32 %v3675, %v5508
    %v5513 = vxor.u32 %v5511, 2147483648
    %v5514 = vxor.u32 %v5512, 2147483648
    %v5515 = vmul.f32 %v5513, 1.442695
    %v5516 = vpow.pop %v5515
    %v5517 = vmul.f32 %v5514, 1.442695
    %v5518 = vpow.pop %v5517
    %v5519 = vadd.f32 %v5516, 1.0
    %v5520 = vadd.f32 %v5518, 1.0
    %v5521 = vrcp.pop %v5519
    %v5522 = vmul.f32 1.0, %v5521
    %v5523 = vrcp.pop %v5520
    %v5524 = vmul.f32 1.0, %v5523
    %v5527 = vrot.slane %v5430, 3
    %v5528 = vrot.slane %v5432, 3
    %v5531 = vadd.f32 %v3676, %v5527
    %v5532 = vadd.f32 %v3677, %v5528
    %v5533 = vxor.u32 %v5531, 2147483648
    %v5534 = vxor.u32 %v5532, 2147483648
    %v5535 = vmul.f32 %v5533, 1.442695
    %v5536 = vpow.pop %v5535
    %v5537 = vmul.f32 %v5534, 1.442695
    %v5538 = vpow.pop %v5537
    %v5539 = vadd.f32 %v5536, 1.0
    %v5540 = vadd.f32 %v5538, 1.0
    %v5541 = vrcp.pop %v5539
    %v5542 = vmul.f32 1.0, %v5541
    %v5543 = vrcp.pop %v5540
    %v5544 = vmul.f32 1.0, %v5543
    %v5547 = vrot.slane %v5501, 3
    %v5548 = vrot.slane %v5503, 3
    %v5551 = vmul.f32 %v5522, %v5547
    %v5552 = vmul.f32 %v5524, %v5548
    %v5553 = vadd.f32 %v3678, %v5551
    %v5554 = vadd.f32 %v3679, %v5552
    %v5555 = vtanh.pop %v5553
    %v5556 = vtanh.pop %v5554
    %v5557 = vsub.f32 1.0, %v5542
    %v5558 = vsub.f32 1.0, %v5544
    %v5559 = vmul.f32 %v5557, %v5555
    %v5560 = vmul.f32 %v5558, %v5556
    %v5561 = vrot.slane %v5284, 7
    %v5562 = vrot.slane %v5285, 7
    %v5565 = vmul.f32 %v5542, %v5561
    %v5566 = vmul.f32 %v5544, %v5562
    %v5567 = vadd.f32 %v5559, %v5565
    %v5568 = vadd.f32 %v5560, %v5566
    %v5571 = vrot.slane %v5567, 5
    %v5572 = vrot.slane %v5568, 5
    %5575 = vmatprep.subr.mxu0 %v3681
    %5576 = vmatpush1.msra.mxu0 %v3680
    %5577 = vmatprep.subr.mxu0 %v3687
    %5578 = vmatpush1.msra.mxu0 %v3686
    %5579 = vmatprep.subr.mxu0 %v3693
    %5580 = vmatpush1.msra.mxu0 %v3692
    %5581 = vmatprep.subr.mxu0 %v3699
    %5582 = vmatpush1.msra.mxu0 %v3698
    %5583 = vmatprep.subr.mxu0 %v3705
    %5584 = vmatpush1.msra.mxu0 %v3704
    %5585 = vmatprep.subr.mxu0 %v3711
    %5586 = vmatpush1.msra.mxu0 %v3710
    %5587 = vmatprep.subr.mxu0 %v3717
    %5588 = vmatpush1.msra.mxu0 %v3716
    %5589 = vmatprep.subr.mxu0 %v3723
    %5590 = vmatpush1.msra.mxu0 %v3722
    %5591 = vmatprep.subr.mxu0 %v3729
    %5592 = vmatpush1.msra.mxu0 %v3728
    %5593 = vmatprep.subr.mxu0 %v3735
    %5594 = vmatpush1.msra.mxu0 %v3734
    %5595 = vmatprep.subr.mxu0 %v3741
    %5596 = vmatpush1.msra.mxu0 %v3740
    %5597 = vmatprep.subr.mxu0 %v3747
    %5598 = vmatpush1.msra.mxu0 %v3746
    %5599 = vmatprep.subr.mxu0 %v3753
    %5600 = vmatpush1.msra.mxu0 %v3752
    %5601 = vmatprep.subr.mxu0 %v3759
    %5602 = vmatpush1.msra.mxu0 %v3758
    %5603 = vmatprep.subr.mxu0 %v3765
    %5604 = vmatpush1.msra.mxu0 %v3764
    %5605 = vmatprep.subr.mxu0 %v3771
    %5606 = vmatpush1.msra.mxu0 %v3770
    %5607 = vmatprep.subr.mxu0 %v3777
    %5608 = vmatpush1.msra.mxu0 %v3776
    %5609 = vmatprep.subr.mxu0 %v3783
    %5610 = vmatpush1.msra.mxu0 %v3782
    %5611 = vmatprep.subr.mxu0 %v3789
    %5612 = vmatpush1.msra.mxu0 %v3788
    %5613 = vmatprep.subr.mxu0 %v3795
    %5614 = vmatpush1.msra.mxu0 %v3794
    %5615 = vmatprep.subr.mxu0 %v3801
    %5616 = vmatpush1.msra.mxu0 %v3800
    %5617 = vmatprep.subr.mxu0 %v3807
    %5618 = vmatpush1.msra.mxu0 %v3806
    %5619 = vmatprep.subr.mxu0 %v3813
    %5620 = vmatpush1.msra.mxu0 %v3812
    %5621 = vmatprep.subr.mxu0 %v3819
    %5622 = vmatpush1.msra.mxu0 %v3818
    %5623 = vmatprep.subr.mxu0 %v3825
    %5624 = vmatpush1.msra.mxu0 %v3824
    %5625 = vmatprep.subr.mxu0 %v3831
    %5626 = vmatpush1.msra.mxu0 %v3830
    %5627 = vmatprep.subr.mxu0 %v3837
    %5628 = vmatpush1.msra.mxu0 %v3836
    %5629 = vmatprep.subr.mxu0 %v3843
    %5630 = vmatpush1.msra.mxu0 %v3842
    %5631 = vmatprep.subr.mxu0 %v3849
    %5632 = vmatpush1.msra.mxu0 %v3848
    %5633 = vmatprep.subr.mxu0 %v3855
    %5634 = vmatpush1.msra.mxu0 %v3854
    %5635 = vmatprep.subr.mxu0 %v3861
    %5636 = vmatpush1.msra.mxu0 %v3860
    %5637 = vmatprep.subr.mxu0 %v3867
    %5638 = vmatpush1.msra.mxu0 %v3866
    %5639 = vmatprep.mubr.f32.mxu0 %v5572
    %5640 = vmatmul.mubr.f32.gmra.mrb[0].mxu0 %v5571
    %v5641 = vpop.f32.mrb[0].mxu0
    %v5642 = vadd.f32 %v3876, %v5641
    %v5643 = vpop.f32.mrb[0].mxu0
    %v5644 = vadd.f32 %v3880, %v5643
    %5645 = vdwg.mxu0
    %5646 = vmatprep.subr.mxu0 %v3683
    %5647 = vmatpush1.msra.mxu0 %v3682
    %5648 = vmatprep.subr.mxu0 %v3689
    %5649 = vmatpush1.msra.mxu0 %v3688
    %5650 = vmatprep.subr.mxu0 %v3695
    %5651 = vmatpush1.msra.mxu0 %v3694
    %5652 = vmatprep.subr.mxu0 %v3701
    %5653 = vmatpush1.msra.mxu0 %v3700
    %5654 = vmatprep.subr.mxu0 %v3707
    %5655 = vmatpush1.msra.mxu0 %v3706
    %5656 = vmatprep.subr.mxu0 %v3713
    %5657 = vmatpush1.msra.mxu0 %v3712
    %5658 = vmatprep.subr.mxu0 %v3719
    %5659 = vmatpush1.msra.mxu0 %v3718
    %5660 = vmatprep.subr.mxu0 %v3725
    %5661 = vmatpush1.msra.mxu0 %v3724
    %5662 = vmatprep.subr.mxu0 %v3731
    %5663 = vmatpush1.msra.mxu0 %v3730
    %5664 = vmatprep.subr.mxu0 %v3737
    %5665 = vmatpush1.msra.mxu0 %v3736
    %5666 = vmatprep.subr.mxu0 %v3743
    %5667 = vmatpush1.msra.mxu0 %v3742
    %5668 = vmatprep.subr.mxu0 %v3749
    %5669 = vmatpush1.msra.mxu0 %v3748
    %5670 = vmatprep.subr.mxu0 %v3755
    %5671 = vmatpush1.msra.mxu0 %v3754
    %5672 = vmatprep.subr.mxu0 %v3761
    %5673 = vmatpush1.msra.mxu0 %v3760
    %5674 = vmatprep.subr.mxu0 %v3767
    %5675 = vmatpush1.msra.mxu0 %v3766
    %5676 = vmatprep.subr.mxu0 %v3773
    %5677 = vmatpush1.msra.mxu0 %v3772
    %5678 = vmatprep.subr.mxu0 %v3779
    %5679 = vmatpush1.msra.mxu0 %v3778
    %5680 = vmatprep.subr.mxu0 %v3785
    %5681 = vmatpush1.msra.mxu0 %v3784
    %5682 = vmatprep.subr.mxu0 %v3791
    %5683 = vmatpush1.msra.mxu0 %v3790
    %5684 = vmatprep.subr.mxu0 %v3797
    %5685 = vmatpush1.msra.mxu0 %v3796
    %5686 = vmatprep.subr.mxu0 %v3803
    %5687 = vmatpush1.msra.mxu0 %v3802
    %5688 = vmatprep.subr.mxu0 %v3809
    %5689 = vmatpush1.msra.mxu0 %v3808
    %5690 = vmatprep.subr.mxu0 %v3815
    %5691 = vmatpush1.msra.mxu0 %v3814
    %5692 = vmatprep.subr.mxu0 %v3821
    %5693 = vmatpush1.msra.mxu0 %v3820
    %5694 = vmatprep.subr.mxu0 %v3827
    %5695 = vmatpush1.msra.mxu0 %v3826
    %5696 = vmatprep.subr.mxu0 %v3833
    %5697 = vmatpush1.msra.mxu0 %v3832
    %5698 = vmatprep.subr.mxu0 %v3839
    %5699 = vmatpush1.msra.mxu0 %v3838
    %5700 = vmatprep.subr.mxu0 %v3845
    %5701 = vmatpush1.msra.mxu0 %v3844
    %5702 = vmatprep.subr.mxu0 %v3851
    %5703 = vmatpush1.msra.mxu0 %v3850
    %5704 = vmatprep.subr.mxu0 %v3857
    %5705 = vmatpush1.msra.mxu0 %v3856
    %5706 = vmatprep.subr.mxu0 %v3863
    %5707 = vmatpush1.msra.mxu0 %v3862
    %5708 = vmatprep.subr.mxu0 %v3869
    %5709 = vmatpush1.msra.mxu0 %v3868
    %5710 = vmatprep.mubr.f32.mxu0 %v5572
    %5711 = vmatmul.mubr.f32.gmra.mrb[0].mxu0 %v5571
    %v5712 = vpop.f32.mrb[0].mxu0
    %v5713 = vadd.f32 %v3884, %v5712
    %v5714 = vpop.f32.mrb[0].mxu0
    %v5715 = vadd.f32 %v3888, %v5714
    %5716 = vdwg.mxu0
    %5717 = vmatprep.subr.mxu0 %v3685
    %5718 = vmatpush1.msra.mxu0 %v3684
    %5719 = vmatprep.subr.mxu0 %v3691
    %5720 = vmatpush1.msra.mxu0 %v3690
    %5721 = vmatprep.subr.mxu0 %v3697
    %5722 = vmatpush1.msra.mxu0 %v3696
    %5723 = vmatprep.subr.mxu0 %v3703
    %5724 = vmatpush1.msra.mxu0 %v3702
    %5725 = vmatprep.subr.mxu0 %v3709
    %5726 = vmatpush1.msra.mxu0 %v3708
    %5727 = vmatprep.subr.mxu0 %v3715
    %5728 = vmatpush1.msra.mxu0 %v3714
    %5729 = vmatprep.subr.mxu0 %v3721
    %5730 = vmatpush1.msra.mxu0 %v3720
    %5731 = vmatprep.subr.mxu0 %v3727
    %5732 = vmatpush1.msra.mxu0 %v3726
    %5733 = vmatprep.subr.mxu0 %v3733
    %5734 = vmatpush1.msra.mxu0 %v3732
    %5735 = vmatprep.subr.mxu0 %v3739
    %5736 = vmatpush1.msra.mxu0 %v3738
    %5737 = vmatprep.subr.mxu0 %v3745
    %5738 = vmatpush1.msra.mxu0 %v3744
    %5739 = vmatprep.subr.mxu0 %v3751
    %5740 = vmatpush1.msra.mxu0 %v3750
    %5741 = vmatprep.subr.mxu0 %v3757
    %5742 = vmatpush1.msra.mxu0 %v3756
    %5743 = vmatprep.subr.mxu0 %v3763
    %5744 = vmatpush1.msra.mxu0 %v3762
    %5745 = vmatprep.subr.mxu0 %v3769
    %5746 = vmatpush1.msra.mxu0 %v3768
    %5747 = vmatprep.subr.mxu0 %v3775
    %5748 = vmatpush1.msra.mxu0 %v3774
    %5749 = vmatprep.subr.mxu0 %v3781
    %5750 = vmatpush1.msra.mxu0 %v3780
    %5751 = vmatprep.subr.mxu0 %v3787
    %5752 = vmatpush1.msra.mxu0 %v3786
    %5753 = vmatprep.subr.mxu0 %v3793
    %5754 = vmatpush1.msra.mxu0 %v3792
    %5755 = vmatprep.subr.mxu0 %v3799
    %5756 = vmatpush1.msra.mxu0 %v3798
    %5757 = vmatprep.subr.mxu0 %v3805
    %5758 = vmatpush1.msra.mxu0 %v3804
    %5759 = vmatprep.subr.mxu0 %v3811
    %5760 = vmatpush1.msra.mxu0 %v3810
    %5761 = vmatprep.subr.mxu0 %v3817
    %5762 = vmatpush1.msra.mxu0 %v3816
    %5763 = vmatprep.subr.mxu0 %v3823
    %5764 = vmatpush1.msra.mxu0 %v3822
    %5765 = vmatprep.subr.mxu0 %v3829
    %5766 = vmatpush1.msra.mxu0 %v3828
    %5767 = vmatprep.subr.mxu0 %v3835
    %5768 = vmatpush1.msra.mxu0 %v3834
    %5769 = vmatprep.subr.mxu0 %v3841
    %5770 = vmatpush1.msra.mxu0 %v3840
    %5771 = vmatprep.subr.mxu0 %v3847
    %5772 = vmatpush1.msra.mxu0 %v3846
    %5773 = vmatprep.subr.mxu0 %v3853
    %5774 = vmatpush1.msra.mxu0 %v3852
    %5775 = vmatprep.subr.mxu0 %v3859
    %5776 = vmatpush1.msra.mxu0 %v3858
    %5777 = vmatprep.subr.mxu0 %v3865
    %5778 = vmatpush1.msra.mxu0 %v3864
    %5779 = vmatprep.subr.mxu0 %v3871
    %5780 = vmatpush1.msra.mxu0 %v3870
    %5781 = vmatprep.mubr.f32.mxu0 %v5572
    %5782 = vmatmul.mubr.f32.gmra.mrb[0].mxu0 %v5571
    %v5783 = vpop.f32.mrb[0].mxu0
    %v5784 = vadd.f32 %v3892, %v5783
    %v5785 = vpop.f32.mrb[0].mxu0
    %v5786 = vadd.f32 %v3896, %v5785
    %5787 = vdwg.mxu0
    %v5790 = vrot.slane %v5642, 2
    %v5791 = vrot.slane %v5644, 2
    %v5794 = vadd.f32 %v3674, %v5790
    %v5795 = vadd.f32 %v3675, %v5791
    %v5796 = vxor.u32 %v5794, 2147483648
    %v5797 = vxor.u32 %v5795, 2147483648
    %v5798 = vmul.f32 %v5796, 1.442695
    %v5799 = vpow.pop %v5798
    %v5800 = vmul.f32 %v5797, 1.442695
    %v5801 = vpow.pop %v5800
    %v5802 = vadd.f32 %v5799, 1.0
    %v5803 = vadd.f32 %v5801, 1.0
    %v5804 = vrcp.pop %v5802
    %v5805 = vmul.f32 1.0, %v5804
    %v5806 = vrcp.pop %v5803
    %v5807 = vmul.f32 1.0, %v5806
    %v5810 = vrot.slane %v5713, 2
    %v5811 = vrot.slane %v5715, 2
    %v5814 = vadd.f32 %v3676, %v5810
    %v5815 = vadd.f32 %v3677, %v5811
    %v5816 = vxor.u32 %v5814, 2147483648
    %v5817 = vxor.u32 %v5815, 2147483648
    %v5818 = vmul.f32 %v5816, 1.442695
    %v5819 = vpow.pop %v5818
    %v5820 = vmul.f32 %v5817, 1.442695
    %v5821 = vpow.pop %v5820
    %v5822 = vadd.f32 %v5819, 1.0
    %v5823 = vadd.f32 %v5821, 1.0
    %v5824 = vrcp.pop %v5822
    %v5825 = vmul.f32 1.0, %v5824
    %v5826 = vrcp.pop %v5823
    %v5827 = vmul.f32 1.0, %v5826
    %v5830 = vrot.slane %v5784, 2
    %v5831 = vrot.slane %v5786, 2
    %v5834 = vmul.f32 %v5805, %v5830
    %v5835 = vmul.f32 %v5807, %v5831
    %v5836 = vadd.f32 %v3678, %v5834
    %v5837 = vadd.f32 %v3679, %v5835
    %v5838 = vtanh.pop %v5836
    %v5839 = vtanh.pop %v5837
    %v5840 = vsub.f32 1.0, %v5825
    %v5841 = vsub.f32 1.0, %v5827
    %v5842 = vmul.f32 %v5840, %v5838
    %v5843 = vmul.f32 %v5841, %v5839
    %v5844 = vrot.slane %v5567, 7
    %v5845 = vrot.slane %v5568, 7
    %v5848 = vmul.f32 %v5825, %v5844
    %v5849 = vmul.f32 %v5827, %v5845
    %v5850 = vadd.f32 %v5842, %v5848
    %v5851 = vadd.f32 %v5843, %v5849
    %v5854 = vrot.slane %v5850, 6
    %v5855 = vrot.slane %v5851, 6
    %5858 = vmatprep.subr.mxu0 %v3681
    %5859 = vmatpush1.msra.mxu0 %v3680
    %5860 = vmatprep.subr.mxu0 %v3687
    %5861 = vmatpush1.msra.mxu0 %v3686
    %5862 = vmatprep.subr.mxu0 %v3693
    %5863 = vmatpush1.msra.mxu0 %v3692
    %5864 = vmatprep.subr.mxu0 %v3699
    %5865 = vmatpush1.msra.mxu0 %v3698
    %5866 = vmatprep.subr.mxu0 %v3705
    %5867 = vmatpush1.msra.mxu0 %v3704
    %5868 = vmatprep.subr.mxu0 %v3711
    %5869 = vmatpush1.msra.mxu0 %v3710
    %5870 = vmatprep.subr.mxu0 %v3717
    %5871 = vmatpush1.msra.mxu0 %v3716
    %5872 = vmatprep.subr.mxu0 %v3723
    %5873 = vmatpush1.msra.mxu0 %v3722
    %5874 = vmatprep.subr.mxu0 %v3729
    %5875 = vmatpush1.msra.mxu0 %v3728
    %5876 = vmatprep.subr.mxu0 %v3735
    %5877 = vmatpush1.msra.mxu0 %v3734
    %5878 = vmatprep.subr.mxu0 %v3741
    %5879 = vmatpush1.msra.mxu0 %v3740
    %5880 = vmatprep.subr.mxu0 %v3747
    %5881 = vmatpush1.msra.mxu0 %v3746
    %5882 = vmatprep.subr.mxu0 %v3753
    %5883 = vmatpush1.msra.mxu0 %v3752
    %5884 = vmatprep.subr.mxu0 %v3759
    %5885 = vmatpush1.msra.mxu0 %v3758
    %5886 = vmatprep.subr.mxu0 %v3765
    %5887 = vmatpush1.msra.mxu0 %v3764
    %5888 = vmatprep.subr.mxu0 %v3771
    %5889 = vmatpush1.msra.mxu0 %v3770
    %5890 = vmatprep.subr.mxu0 %v3777
    %5891 = vmatpush1.msra.mxu0 %v3776
    %5892 = vmatprep.subr.mxu0 %v3783
    %5893 = vmatpush1.msra.mxu0 %v3782
    %5894 = vmatprep.subr.mxu0 %v3789
    %5895 = vmatpush1.msra.mxu0 %v3788
    %5896 = vmatprep.subr.mxu0 %v3795
    %5897 = vmatpush1.msra.mxu0 %v3794
    %5898 = vmatprep.subr.mxu0 %v3801
    %5899 = vmatpush1.msra.mxu0 %v3800
    %5900 = vmatprep.subr.mxu0 %v3807
    %5901 = vmatpush1.msra.mxu0 %v3806
    %5902 = vmatprep.subr.mxu0 %v3813
    %5903 = vmatpush1.msra.mxu0 %v3812
    %5904 = vmatprep.subr.mxu0 %v3819
    %5905 = vmatpush1.msra.mxu0 %v3818
    %5906 = vmatprep.subr.mxu0 %v3825
    %5907 = vmatpush1.msra.mxu0 %v3824
    %5908 = vmatprep.subr.mxu0 %v3831
    %5909 = vmatpush1.msra.mxu0 %v3830
    %5910 = vmatprep.subr.mxu0 %v3837
    %5911 = vmatpush1.msra.mxu0 %v3836
    %5912 = vmatprep.subr.mxu0 %v3843
    %5913 = vmatpush1.msra.mxu0 %v3842
    %5914 = vmatprep.subr.mxu0 %v3849
    %5915 = vmatpush1.msra.mxu0 %v3848
    %5916 = vmatprep.subr.mxu0 %v3855
    %5917 = vmatpush1.msra.mxu0 %v3854
    %5918 = vmatprep.subr.mxu0 %v3861
    %5919 = vmatpush1.msra.mxu0 %v3860
    %5920 = vmatprep.subr.mxu0 %v3867
    %5921 = vmatpush1.msra.mxu0 %v3866
    %5922 = vmatprep.mubr.f32.mxu0 %v5855
    %5923 = vmatmul.mubr.f32.gmra.mrb[0].mxu0 %v5854
    %v5924 = vpop.f32.mrb[0].mxu0
    %v5925 = vadd.f32 %v3876, %v5924
    %v5926 = vpop.f32.mrb[0].mxu0
    %v5927 = vadd.f32 %v3880, %v5926
    %5928 = vdwg.mxu0
    %5929 = vmatprep.subr.mxu0 %v3683
    %5930 = vmatpush1.msra.mxu0 %v3682
    %5931 = vmatprep.subr.mxu0 %v3689
    %5932 = vmatpush1.msra.mxu0 %v3688
    %5933 = vmatprep.subr.mxu0 %v3695
    %5934 = vmatpush1.msra.mxu0 %v3694
    %5935 = vmatprep.subr.mxu0 %v3701
    %5936 = vmatpush1.msra.mxu0 %v3700
    %5937 = vmatprep.subr.mxu0 %v3707
    %5938 = vmatpush1.msra.mxu0 %v3706
    %5939 = vmatprep.subr.mxu0 %v3713
    %5940 = vmatpush1.msra.mxu0 %v3712
    %5941 = vmatprep.subr.mxu0 %v3719
    %5942 = vmatpush1.msra.mxu0 %v3718
    %5943 = vmatprep.subr.mxu0 %v3725
    %5944 = vmatpush1.msra.mxu0 %v3724
    %5945 = vmatprep.subr.mxu0 %v3731
    %5946 = vmatpush1.msra.mxu0 %v3730
    %5947 = vmatprep.subr.mxu0 %v3737
    %5948 = vmatpush1.msra.mxu0 %v3736
    %5949 = vmatprep.subr.mxu0 %v3743
    %5950 = vmatpush1.msra.mxu0 %v3742
    %5951 = vmatprep.subr.mxu0 %v3749
    %5952 = vmatpush1.msra.mxu0 %v3748
    %5953 = vmatprep.subr.mxu0 %v3755
    %5954 = vmatpush1.msra.mxu0 %v3754
    %5955 = vmatprep.subr.mxu0 %v3761
    %5956 = vmatpush1.msra.mxu0 %v3760
    %5957 = vmatprep.subr.mxu0 %v3767
    %5958 = vmatpush1.msra.mxu0 %v3766
    %5959 = vmatprep.subr.mxu0 %v3773
    %5960 = vmatpush1.msra.mxu0 %v3772
    %5961 = vmatprep.subr.mxu0 %v3779
    %5962 = vmatpush1.msra.mxu0 %v3778
    %5963 = vmatprep.subr.mxu0 %v3785
    %5964 = vmatpush1.msra.mxu0 %v3784
    %5965 = vmatprep.subr.mxu0 %v3791
    %5966 = vmatpush1.msra.mxu0 %v3790
    %5967 = vmatprep.subr.mxu0 %v3797
    %5968 = vmatpush1.msra.mxu0 %v3796
    %5969 = vmatprep.subr.mxu0 %v3803
    %5970 = vmatpush1.msra.mxu0 %v3802
    %5971 = vmatprep.subr.mxu0 %v3809
    %5972 = vmatpush1.msra.mxu0 %v3808
    %5973 = vmatprep.subr.mxu0 %v3815
    %5974 = vmatpush1.msra.mxu0 %v3814
    %5975 = vmatprep.subr.mxu0 %v3821
    %5976 = vmatpush1.msra.mxu0 %v3820
    %5977 = vmatprep.subr.mxu0 %v3827
    %5978 = vmatpush1.msra.mxu0 %v3826
    %5979 = vmatprep.subr.mxu0 %v3833
    %5980 = vmatpush1.msra.mxu0 %v3832
    %5981 = vmatprep.subr.mxu0 %v3839
    %5982 = vmatpush1.msra.mxu0 %v3838
    %5983 = vmatprep.subr.mxu0 %v3845
    %5984 = vmatpush1.msra.mxu0 %v3844
    %5985 = vmatprep.subr.mxu0 %v3851
    %5986 = vmatpush1.msra.mxu0 %v3850
    %5987 = vmatprep.subr.mxu0 %v3857
    %5988 = vmatpush1.msra.mxu0 %v3856
    %5989 = vmatprep.subr.mxu0 %v3863
    %5990 = vmatpush1.msra.mxu0 %v3862
    %5991 = vmatprep.subr.mxu0 %v3869
    %5992 = vmatpush1.msra.mxu0 %v3868
    %5993 = vmatprep.mubr.f32.mxu0 %v5855
    %5994 = vmatmul.mubr.f32.gmra.mrb[0].mxu0 %v5854
    %v5995 = vpop.f32.mrb[0].mxu0
    %v5996 = vadd.f32 %v3884, %v5995
    %v5997 = vpop.f32.mrb[0].mxu0
    %v5998 = vadd.f32 %v3888, %v5997
    %5999 = vdwg.mxu0
    %6000 = vmatprep.subr.mxu0 %v3685
    %6001 = vmatpush1.msra.mxu0 %v3684
    %6002 = vmatprep.subr.mxu0 %v3691
    %6003 = vmatpush1.msra.mxu0 %v3690
    %6004 = vmatprep.subr.mxu0 %v3697
    %6005 = vmatpush1.msra.mxu0 %v3696
    %6006 = vmatprep.subr.mxu0 %v3703
    %6007 = vmatpush1.msra.mxu0 %v3702
    %6008 = vmatprep.subr.mxu0 %v3709
    %6009 = vmatpush1.msra.mxu0 %v3708
    %6010 = vmatprep.subr.mxu0 %v3715
    %6011 = vmatpush1.msra.mxu0 %v3714
    %6012 = vmatprep.subr.mxu0 %v3721
    %6013 = vmatpush1.msra.mxu0 %v3720
    %6014 = vmatprep.subr.mxu0 %v3727
    %6015 = vmatpush1.msra.mxu0 %v3726
    %6016 = vmatprep.subr.mxu0 %v3733
    %6017 = vmatpush1.msra.mxu0 %v3732
    %6018 = vmatprep.subr.mxu0 %v3739
    %6019 = vmatpush1.msra.mxu0 %v3738
    %6020 = vmatprep.subr.mxu0 %v3745
    %6021 = vmatpush1.msra.mxu0 %v3744
    %6022 = vmatprep.subr.mxu0 %v3751
    %6023 = vmatpush1.msra.mxu0 %v3750
    %6024 = vmatprep.subr.mxu0 %v3757
    %6025 = vmatpush1.msra.mxu0 %v3756
    %6026 = vmatprep.subr.mxu0 %v3763
    %6027 = vmatpush1.msra.mxu0 %v3762
    %6028 = vmatprep.subr.mxu0 %v3769
    %6029 = vmatpush1.msra.mxu0 %v3768
    %6030 = vmatprep.subr.mxu0 %v3775
    %6031 = vmatpush1.msra.mxu0 %v3774
    %6032 = vmatprep.subr.mxu0 %v3781
    %6033 = vmatpush1.msra.mxu0 %v3780
    %6034 = vmatprep.subr.mxu0 %v3787
    %6035 = vmatpush1.msra.mxu0 %v3786
    %6036 = vmatprep.subr.mxu0 %v3793
    %6037 = vmatpush1.msra.mxu0 %v3792
    %6038 = vmatprep.subr.mxu0 %v3799
    %6039 = vmatpush1.msra.mxu0 %v3798
    %6040 = vmatprep.subr.mxu0 %v3805
    %6041 = vmatpush1.msra.mxu0 %v3804
    %6042 = vmatprep.subr.mxu0 %v3811
    %6043 = vmatpush1.msra.mxu0 %v3810
    %6044 = vmatprep.subr.mxu0 %v3817
    %6045 = vmatpush1.msra.mxu0 %v3816
    %6046 = vmatprep.subr.mxu0 %v3823
    %6047 = vmatpush1.msra.mxu0 %v3822
    %6048 = vmatprep.subr.mxu0 %v3829
    %6049 = vmatpush1.msra.mxu0 %v3828
    %6050 = vmatprep.subr.mxu0 %v3835
    %6051 = vmatpush1.msra.mxu0 %v3834
    %6052 = vmatprep.subr.mxu0 %v3841
    %6053 = vmatpush1.msra.mxu0 %v3840
    %6054 = vmatprep.subr.mxu0 %v3847
    %6055 = vmatpush1.msra.mxu0 %v3846
    %6056 = vmatprep.subr.mxu0 %v3853
    %6057 = vmatpush1.msra.mxu0 %v3852
    %6058 = vmatprep.subr.mxu0 %v3859
    %6059 = vmatpush1.msra.mxu0 %v3858
    %6060 = vmatprep.subr.mxu0 %v3865
    %6061 = vmatpush1.msra.mxu0 %v3864
    %6062 = vmatprep.subr.mxu0 %v3871
    %6063 = vmatpush1.msra.mxu0 %v3870
    %6064 = vmatprep.mubr.f32.mxu0 %v5855
    %6065 = vmatmul.mubr.f32.gmra.mrb[0].mxu0 %v5854
    %v6066 = vpop.f32.mrb[0].mxu0
    %v6067 = vadd.f32 %v3892, %v6066
    %v6068 = vpop.f32.mrb[0].mxu0
    %v6069 = vadd.f32 %v3896, %v6068
    %6070 = vdwg.mxu0
    %v6073 = vrot.slane %v5925, 1
    %v6074 = vrot.slane %v5927, 1
    %v6077 = vadd.f32 %v3674, %v6073
    %v6078 = vadd.f32 %v3675, %v6074
    %v6079 = vxor.u32 %v6077, 2147483648
    %v6080 = vxor.u32 %v6078, 2147483648
    %v6081 = vmul.f32 %v6079, 1.442695
    %v6082 = vpow.pop %v6081
    %v6083 = vmul.f32 %v6080, 1.442695
    %v6084 = vpow.pop %v6083
    %v6085 = vadd.f32 %v6082, 1.0
    %v6086 = vadd.f32 %v6084, 1.0
    %v6087 = vrcp.pop %v6085
    %v6088 = vmul.f32 1.0, %v6087
    %v6089 = vrcp.pop %v6086
    %v6090 = vmul.f32 1.0, %v6089
    %v6093 = vrot.slane %v5996, 1
    %v6094 = vrot.slane %v5998, 1
    %v6097 = vadd.f32 %v3676, %v6093
    %v6098 = vadd.f32 %v3677, %v6094
    %v6099 = vxor.u32 %v6097, 2147483648
    %v6100 = vxor.u32 %v6098, 2147483648
    %v6101 = vmul.f32 %v6099, 1.442695
    %v6102 = vpow.pop %v6101
    %v6103 = vmul.f32 %v6100, 1.442695
    %v6104 = vpow.pop %v6103
    %v6105 = vadd.f32 %v6102, 1.0
    %v6106 = vadd.f32 %v6104, 1.0
    %v6107 = vrcp.pop %v6105
    %v6108 = vmul.f32 1.0, %v6107
    %v6109 = vrcp.pop %v6106
    %v6110 = vmul.f32 1.0, %v6109
    %v6113 = vrot.slane %v6067, 1
    %v6114 = vrot.slane %v6069, 1
    %v6117 = vmul.f32 %v6088, %v6113
    %v6118 = vmul.f32 %v6090, %v6114
    %v6119 = vadd.f32 %v3678, %v6117
    %v6120 = vadd.f32 %v3679, %v6118
    %v6121 = vtanh.pop %v6119
    %v6122 = vtanh.pop %v6120
    %v6123 = vsub.f32 1.0, %v6108
    %v6124 = vsub.f32 1.0, %v6110
    %v6125 = vmul.f32 %v6123, %v6121
    %v6126 = vmul.f32 %v6124, %v6122
    %v6127 = vrot.slane %v5850, 7
    %v6128 = vrot.slane %v5851, 7
    %v6131 = vmul.f32 %v6108, %v6127
    %v6132 = vmul.f32 %v6110, %v6128
    %v6133 = vadd.f32 %v6125, %v6131
    %v6134 = vadd.f32 %v6126, %v6132
    %v6135 = vsel %vm504, %v4156, %v4435
    %v6136 = vsel %vm511, %v6135, %v4718
    %v6137 = vsel %vm518, %v6136, %v5001
    %v6138 = vsel %vm525, %v6137, %v5284
    %v6139 = vsel %vm532, %v6138, %v5567
    %v6140 = vsel %vm539, %v6139, %v5850
    %v6141 = vsel %vm546, %v6140, %v6133
    %v6143 = vrot.slane %v6134, 7
    %v6145 = vrot.slane %v5851, 5
    %v6147 = vrot.slane %v5568, 3
    %v6149 = vrot.slane %v5285, 1
    %v6151 = vrot.slane %v4719, 5
    %v6153 = vrot.slane %v4436, 3
    %v6155 = vrot.slane %v4157, 1
    %v6157 = vsel %vm504, %v6143, %v6145
    %v6158 = vsel %vm511, %v6157, %v6147
    %v6159 = vsel %vm518, %v6158, %v6149
    %v6160 = vsel %vm525, %v6159, %v5279
    %v6161 = vsel %vm532, %v6160, %v6151
    %v6162 = vsel %vm539, %v6161, %v6153
    %v6163 = vsel %vm546, %v6162, %v6155
    %v6164 = vld [vmem:[#allocation10] sm:$0xff]
    %v6165 = vld [vmem:[#allocation10 + $0x8] sm:$0xff]
    %v6166 = vld [vmem:[#allocation10 + $0x10] sm:$0xff]
    %v6167 = vld [vmem:[#allocation10 + $0x18] sm:$0xff]
    %v6168 = vld [vmem:[#allocation10 + $0x20] sm:$0xff]
    %v6169 = vld [vmem:[#allocation10 + $0x28] sm:$0xff]
    %v6170 = vld [vmem:[#allocation10 + $0x30] sm:$0xff]
    %v6171 = vld [vmem:[#allocation10 + $0x38] sm:$0xff]
    %v6172 = vld [vmem:[#allocation10 + $0x40] sm:$0xff]
    %v6173 = vld [vmem:[#allocation10 + $0x48] sm:$0xff]
    %v6174 = vld [vmem:[#allocation10 + $0x50] sm:$0xff]
    %v6175 = vld [vmem:[#allocation10 + $0x58] sm:$0xff]
    %v6176 = vld [vmem:[#allocation10 + $0x60] sm:$0xff]
    %v6177 = vld [vmem:[#allocation10 + $0x68] sm:$0xff]
    %v6178 = vld [vmem:[#allocation10 + $0x70] sm:$0xff]
    %v6179 = vld [vmem:[#allocation10 + $0x78] sm:$0xff]
    %v6180 = vld [vmem:[#allocation10 + $0x80] sm:$0xff]
    %v6181 = vld [vmem:[#allocation10 + $0x88] sm:$0xff]
    %v6182 = vld [vmem:[#allocation10 + $0x90] sm:$0xff]
    %v6183 = vld [vmem:[#allocation10 + $0x98] sm:$0xff]
    %v6184 = vld [vmem:[#allocation10 + $0xa0] sm:$0xff]
    %v6185 = vld [vmem:[#allocation10 + $0xa8] sm:$0xff]
    %v6186 = vld [vmem:[#allocation10 + $0xb0] sm:$0xff]
    %v6187 = vld [vmem:[#allocation10 + $0xb8] sm:$0xff]
    %v6188 = vld [vmem:[#allocation10 + $0xc0] sm:$0xff]
    %v6189 = vld [vmem:[#allocation10 + $0xc8] sm:$0xff]
    %v6190 = vld [vmem:[#allocation10 + $0xd0] sm:$0xff]
    %v6191 = vld [vmem:[#allocation10 + $0xd8] sm:$0xff]
    %v6192 = vld [vmem:[#allocation10 + $0xe0] sm:$0xff]
    %v6193 = vld [vmem:[#allocation10 + $0xe8] sm:$0xff]
    %v6194 = vld [vmem:[#allocation10 + $0xf0] sm:$0xff]
    %v6195 = vld [vmem:[#allocation10 + $0xf8] sm:$0xff]
    %v6196 = vld [vmem:[%s10] sm:$0x1]
    %v6198 = vlaneseq
    %v6199 = vshrl.u32 %v6198, 7
    %v6200 = vsub.s32 0, %v6199
    %v6201 = vrot.slane %v6196, %v6200
    %6203 = vmatprep.subr.mxu0 0.0
    %6204 = vmatpush1.msra.mxu0 %v6164
    %6205 = vmatprep.subr.mxu0 0.0
    %6206 = vmatpush1.msra.mxu0 %v6165
    %6207 = vmatprep.subr.mxu0 0.0
    %6208 = vmatpush1.msra.mxu0 %v6166
    %6209 = vmatprep.subr.mxu0 0.0
    %6210 = vmatpush1.msra.mxu0 %v6167
    %6211 = vmatprep.subr.mxu0 0.0
    %6212 = vmatpush1.msra.mxu0 %v6168
    %6213 = vmatprep.subr.mxu0 0.0
    %6214 = vmatpush1.msra.mxu0 %v6169
    %6215 = vmatprep.subr.mxu0 0.0
    %6216 = vmatpush1.msra.mxu0 %v6170
    %6217 = vmatprep.subr.mxu0 0.0
    %6218 = vmatpush1.msra.mxu0 %v6171
    %6219 = vmatprep.subr.mxu0 0.0
    %6220 = vmatpush1.msra.mxu0 %v6172
    %6221 = vmatprep.subr.mxu0 0.0
    %6222 = vmatpush1.msra.mxu0 %v6173
    %6223 = vmatprep.subr.mxu0 0.0
    %6224 = vmatpush1.msra.mxu0 %v6174
    %6225 = vmatprep.subr.mxu0 0.0
    %6226 = vmatpush1.msra.mxu0 %v6175
    %6227 = vmatprep.subr.mxu0 0.0
    %6228 = vmatpush1.msra.mxu0 %v6176
    %6229 = vmatprep.subr.mxu0 0.0
    %6230 = vmatpush1.msra.mxu0 %v6177
    %6231 = vmatprep.subr.mxu0 0.0
    %6232 = vmatpush1.msra.mxu0 %v6178
    %6233 = vmatprep.subr.mxu0 0.0
    %6234 = vmatpush1.msra.mxu0 %v6179
    %6235 = vmatprep.subr.mxu0 0.0
    %6236 = vmatpush1.msra.mxu0 %v6180
    %6237 = vmatprep.subr.mxu0 0.0
    %6238 = vmatpush1.msra.mxu0 %v6181
    %6239 = vmatprep.subr.mxu0 0.0
    %6240 = vmatpush1.msra.mxu0 %v6182
    %6241 = vmatprep.subr.mxu0 0.0
    %6242 = vmatpush1.msra.mxu0 %v6183
    %6243 = vmatprep.subr.mxu0 0.0
    %6244 = vmatpush1.msra.mxu0 %v6184
    %6245 = vmatprep.subr.mxu0 0.0
    %6246 = vmatpush1.msra.mxu0 %v6185
    %6247 = vmatprep.subr.mxu0 0.0
    %6248 = vmatpush1.msra.mxu0 %v6186
    %6249 = vmatprep.subr.mxu0 0.0
    %6250 = vmatpush1.msra.mxu0 %v6187
    %6251 = vmatprep.subr.mxu0 0.0
    %6252 = vmatpush1.msra.mxu0 %v6188
    %6253 = vmatprep.subr.mxu0 0.0
    %6254 = vmatpush1.msra.mxu0 %v6189
    %6255 = vmatprep.subr.mxu0 0.0
    %6256 = vmatpush1.msra.mxu0 %v6190
    %6257 = vmatprep.subr.mxu0 0.0
    %6258 = vmatpush1.msra.mxu0 %v6191
    %6259 = vmatprep.subr.mxu0 0.0
    %6260 = vmatpush1.msra.mxu0 %v6192
    %6261 = vmatprep.subr.mxu0 0.0
    %6262 = vmatpush1.msra.mxu0 %v6193
    %6263 = vmatprep.subr.mxu0 0.0
    %6264 = vmatpush1.msra.mxu0 %v6194
    %6265 = vmatprep.subr.mxu0 0.0
    %6266 = vmatpush1.msra.mxu0 %v6195
    %6267 = vmatprep.mubr.f32.mxu0 %v6163
    %6268 = vmatmul.mubr.f32.gmra.mrb[0].mxu0 %v6141
    %v6269 = vpop.f32.mrb[0].mxu0
    %v6270 = vadd.f32 %v6201, %v6269
    %v6271 = vpop.f32.mrb[0].mxu0
    %6272 = vdwg.mxu0
    %vm6273 = vcmp.lt.s32.totalorder %v554, 16
    %v6274 = vsel %vm6273, %v6270, -1e+30
    %6275 = vmax.xlane.f32.xlu0 %v6274
    %v6276 = vpop.xlane.xlu0 %6275
    %v6277 = vsub.f32 %v6274, %v6276
    %v6278 = vmul.f32 %v6277, 1.442695
    %v6279 = vpow.pop %v6278
    %6280 = vadd.xlane.f32.xlu0 %v6279
    %v6281 = vpop.xlane.xlu0 %6280
    %v6282 = vlog2.pop %v6281
    %v6283 = vmul.f32 %v6282, 0.6931472
    %v6284 = vadd.f32 %v6276, %v6283
    %v6285 = vsub.f32 %v6274, %v6284
    %vm6286 = vcmask 130048
    %6287 = vst.msk [vmem:[#allocation11] sm:$0xff] %vm6286, %v6285
    // Predicated region
    $region66: #{seq_tagger_forward.1} parent=1 // pred_check
      _
    $region67: #{seq_tagger_forward.1} parent=1 // pred_check_branch
      %6289 = sbr.rel (0) target = $region69
    $region68: #{seq_tagger_forward.1} parent=1 // pred_region
      %s6291 = ssub.s32 128, 128
      %6292 = vsyncadd [#allocation4], %s6291
      %s6294 = sshll.u32 [#allocation11], 4
      %s6295 = int_to_ptr.vmem [resolvable:$true] %s6294
      %6297 = dma.vmem_to_hbm [thread:$0]  %s6295, 128, %s11, [#allocation4]
    $region69: #{seq_tagger_forward.1} parent=1 // pred_fallthru
      _
    // Predicated region
    $region70: #{seq_tagger_forward.1} parent=1 // pred_check
      _
    $region71: #{seq_tagger_forward.1} parent=1 // pred_check_branch
      %6299 = sbr.rel (0) target = $region73
    $region72: #{seq_tagger_forward.1} parent=1 // pred_region
      %6300 = dma.done [#allocation4], 128
    $region73: #{seq_tagger_forward.1} parent=1 // pred_fallthru
      _
    %6301 = vsyncpa [#allocation3], 1
    %6302 = vsyncpa [#allocation6], 1
    %6303 = vsyncpa [#allocation9], 1
    %6304 = vsyncpa [#allocation4], 1

</llo_original>
